<compile_context>
chip_gen: v7x
topology: tpu7x:2x2x1
jax: 0.10.0
libtpu: 0.0.40
codegen_flags: <defaults>
</compile_context>

<pallas_src>
import functools

import jax
import jax.numpy as jnp
from jax import lax
from jax.experimental import pallas as pl
from jax.experimental.pallas import tpu as pltpu

EPS = 1e-5          # PyTorch BatchNorm2d default eps
LANE = 128          # TPU lane width; all channel dims are padded to this


def _rup(x, m=LANE):
    return ((x + m - 1) // m) * m


# ----------------------------------------------------------------------------
# Fused conv kernel
#   inputs  : one spatially-padded (and, for stride 2, phase-split) image block
#   prologue: optional relu(x * pro_scale + pro_bias) with the conv zero-halo
#             re-applied via an interior mask (this is bn0+relu of the block)
#   body    : kh*kw taps, each a static slice -> bf16 MXU matmul, f32 accumulate
#   epilogue: acc * post_scale + post_bias  (conv bias / folded BN1),
#             optional relu, optional residual add, cast + store (lane dense)
# ----------------------------------------------------------------------------
def _conv_kernel(x_ref, w_ref, ps_ref, pb_ref, qs_ref, qb_ref, *rest,
                 stride, kh, kw, hh, halo, pro_act, post_act, has_res):
    if has_res:
        res_ref, o_ref = rest
    else:
        (o_ref,) = rest

    _, ho, wo, cout = o_ref.shape
    x = x_ref[...]                                  # (1, S2*Hh, Wh, Cin)
    _, _, wh, cin = x.shape

    if pro_act is not None:
        # bn0 + relu applied in-kernel (recomputed, never materialized in HBM)
        z = (x.astype(jnp.float32)
             * ps_ref[...].reshape(1, 1, 1, cin)
             + pb_ref[...].reshape(1, 1, 1, cin))
        z = jnp.maximum(z, 0.0)
        if halo:
            # The conv zero-pads *after* bn0+relu; re-zero the halo positions.
            i1 = lax.broadcasted_iota(jnp.int32, z.shape, 1)
            i2 = lax.broadcasted_iota(jnp.int32, z.shape, 2)
            if stride == 1:
                r, c = i1, i2
                hp, wp = hh, wh
            else:
                ph = i1 // hh
                r = stride * (i1 % hh) + ph // stride
                c = stride * i2 + ph % stride
                hp, wp = stride * hh, stride * wh
            interior = ((r >= 1) & (r <= hp - 2) &
                        (c >= 1) & (c <= wp - 2))
            z = jnp.where(interior, z, 0.0)
        x = z.astype(jnp.bfloat16)

    m = ho * wo
    acc = jnp.zeros((m, cout), jnp.float32)
    for dy in range(kh):
        for dx in range(kw):
            ph_i = (dy % stride) * stride + (dx % stride)
            r0 = ph_i * hh + dy // stride
            c0 = dx // stride
            tap = x[:, r0:r0 + ho, c0:c0 + wo, :].reshape(m, cin)
            acc = acc + jnp.dot(tap, w_ref[dy * kw + dx],
                                preferred_element_type=jnp.float32)

    # Epilogue in f32 (VPU math stays f32 on all generations, incl. v5e).
    y = acc * qs_ref[...] + qb_ref[...]
    if post_act == "relu":
        y = jnp.maximum(y, 0.0)
    if has_res:
        y = y + res_ref[...].reshape(m, cout).astype(jnp.float32)
    o_ref[...] = y.reshape(1, ho, wo, cout).astype(o_ref.dtype)


def _conv_call(x, w, pro_scale, pro_bias, post_scale, post_bias, *,
               stride, kh, kw, halo, pro_act, post_act, residual=None,
               out_dtype=jnp.bfloat16):
    """x: (N, H, W, Cin_pad) bf16; w: (kh*kw, Cin_pad, Cout_pad) bf16."""
    n, h, wdim, cin = x.shape
    khw, cin_w, cout = w.shape
    assert cin_w == cin and khw == kh * kw

    if halo:
        ho = (h + 2 - kh) // stride + 1
        wo = (wdim + 2 - kw) // stride + 1
        xp = jnp.pad(x, ((0, 0), (1, 1), (1, 1), (0, 0)))
        hp, wp = h + 2, wdim + 2
        if stride == 1:
            xin, hh, wh = xp, hp, wp
        else:
            assert hp % stride == 0 and wp % stride == 0
            hh, wh = hp // stride, wp // stride
            xin = xp.reshape(n, hh, stride, wh, stride, cin)
            xin = jnp.transpose(xin, (0, 2, 4, 1, 3, 5))     # (n, p, q, a, b, c)
            xin = xin.reshape(n, stride * stride * hh, wh, cin)
    else:
        assert kh == 1 and kw == 1 and stride == 1
        ho, wo, hh, wh = h, wdim, h, wdim
        xin = x

    rdim = xin.shape[1]
    kern = functools.partial(
        _conv_kernel, stride=stride, kh=kh, kw=kw, hh=hh, halo=halo,
        pro_act=pro_act, post_act=post_act, has_res=residual is not None)

    in_specs = [
        pl.BlockSpec((1, rdim, wh, cin), lambda i: (i, 0, 0, 0)),
        pl.BlockSpec((khw, cin, cout), lambda i: (0, 0, 0)),
        pl.BlockSpec((1, cin), lambda i: (0, 0)),
        pl.BlockSpec((1, cin), lambda i: (0, 0)),
        pl.BlockSpec((1, cout), lambda i: (0, 0)),
        pl.BlockSpec((1, cout), lambda i: (0, 0)),
    ]
    args = [xin, w,
            pro_scale.reshape(1, cin), pro_bias.reshape(1, cin),
            post_scale.reshape(1, cout), post_bias.reshape(1, cout)]
    if residual is not None:
        in_specs.append(pl.BlockSpec((1, ho, wo, cout), lambda i: (i, 0, 0, 0)))
        args.append(residual)

    return pl.pallas_call(
        kern,
        out_shape=jax.ShapeDtypeStruct((n, ho, wo, cout), out_dtype),
        grid=(n,),
        in_specs=in_specs,
        out_specs=pl.BlockSpec((1, ho, wo, cout), lambda i: (i, 0, 0, 0)),
        compiler_params=pltpu.CompilerParams(
            dimension_semantics=("parallel",)),
    )(*args)


# ----------------------------------------------------------------------------
# Fused head: global average pool + BN(eval) + tanh + Linear(bias=False)
# ----------------------------------------------------------------------------
def _head_kernel(x_ref, s_ref, b_ref, w_ref, o_ref):
    x = x_ref[...].astype(jnp.float32)              # (1, Ho, Wo, C)
    _, ho, wo, c = x.shape
    pooled = jnp.sum(x.reshape(ho * wo, c), axis=0, keepdims=True)
    pooled = pooled * (1.0 / (ho * wo))             # (1, C)
    feat = jnp.tanh(pooled * s_ref[...] + b_ref[...])
    feat8 = jnp.broadcast_to(feat, (8, c))          # keep the MXU M-dim >= 8
    out = jnp.dot(feat8, w_ref[...], preferred_element_type=jnp.float32)
    o_ref[...] = out[0:1, :].reshape(1, 1, -1)


def _head_call(x, bn_scale, bn_bias, w):
    n, ho, wo, c = x.shape
    ncls_p = w.shape[1]
    out = pl.pallas_call(
        _head_kernel,
        out_shape=jax.ShapeDtypeStruct((n, 1, ncls_p), jnp.float32),
        grid=(n,),
        in_specs=[
            pl.BlockSpec((1, ho, wo, c), lambda i: (i, 0, 0, 0)),
            pl.BlockSpec((1, c), lambda i: (0, 0)),
            pl.BlockSpec((1, c), lambda i: (0, 0)),
            pl.BlockSpec((c, ncls_p), lambda i: (0, 0)),
        ],
        out_specs=pl.BlockSpec((1, 1, ncls_p), lambda i: (i, 0, 0)),
        compiler_params=pltpu.CompilerParams(
            dimension_semantics=("parallel",)),
    )(x, bn_scale.reshape(1, c), bn_bias.reshape(1, c), w)
    return out.reshape(n, ncls_p)


# ----------------------------------------------------------------------------
# Parameters (deterministic, matching the PyTorch __init__ shapes / inits),
# stored pre-padded (channels -> multiple of 128) and pre-folded (eval BN).
# ----------------------------------------------------------------------------
def _bn_fold(c, cp):
    gamma = jnp.ones((c,), jnp.float32)     # nn.init.constant_(weight, 1)
    beta = jnp.zeros((c,), jnp.float32)     # nn.init.constant_(bias, 0)
    mean = jnp.zeros((c,), jnp.float32)
    var = jnp.ones((c,), jnp.float32)
    scale = gamma / jnp.sqrt(var + EPS)
    bias = beta - mean * scale
    return jnp.pad(scale, (0, cp - c)), jnp.pad(bias, (0, cp - c))


def _conv_params(key, cin, cout, kh, kw):
    k1, k2 = jax.random.split(key)
    fan_out = cout * kh * kw
    std = (2.0 / fan_out) ** 0.5            # kaiming_normal_(mode='fan_out')
    w = jax.random.normal(k1, (cout, cin, kh, kw), jnp.float32) * std
    bound = 1.0 / ((cin * kh * kw) ** 0.5)  # default Conv2d bias init
    b = jax.random.uniform(k2, (cout,), jnp.float32, -bound, bound)
    cin_p, cout_p = _rup(cin), _rup(cout)
    w_taps = jnp.transpose(w, (2, 3, 1, 0)).reshape(kh * kw, cin, cout)
    w_p = jnp.zeros((kh * kw, cin_p, cout_p), jnp.float32)
    w_p = w_p.at[:, :cin, :cout].set(w_taps)
    return {"w": w_p.astype(jnp.bfloat16),
            "b": jnp.pad(b, (0, cout_p - cout))}


def _block_params(key, cin, cout, stride):
    k0, k1, k2 = jax.random.split(key, 3)
    cin_p, cout_p = _rup(cin), _rup(cout)
    bn0_s, bn0_b = _bn_fold(cin, cin_p)
    bn1_s, bn1_b = _bn_fold(cout, cout_p)
    conv0 = _conv_params(k0, cin, cout, 3, 3)
    conv1 = _conv_params(k1, cout, cout, 3, 3)
    p = {
        "stride": stride,
        "pro_scale": bn0_s, "pro_bias": bn0_b,                  # bn0 (folded)
        "conv0_w": conv0["w"],
        "conv0_scale": bn1_s,                                   # bn1 folded over
        "conv0_bias": bn1_s * conv0["b"] + bn1_b,               # conv0 bias
        "conv1_w": conv1["w"],
        "conv1_scale": jnp.ones((cout_p,), jnp.float32),
        "conv1_bias": conv1["b"],
        "shortcut": None,
    }
    if stride != 1 or cin != cout:
        sc = _conv_params(k2, cin, cout, 1, 1)
        p["shortcut"] = {"w": sc["w"],
                         "scale": jnp.ones((cout_p,), jnp.float32),
                         "bias": sc["b"]}
    return p


def make_params(key, depth=10, width=2, num_classes=10):
    assert (depth - 4) % 6 == 0, "depth should be 6n+4"
    num_blocks = (depth - 4) // 6
    keys = jax.random.split(key, 6)
    stem = _conv_params(keys[0], 3, 16, 3, 3)
    params = {
        "stem_w": stem["w"],
        "stem_scale": jnp.ones((_rup(16),), jnp.float32),
        "stem_bias": stem["b"],
    }
    cur = 16
    for gi, (cout, stride) in enumerate(
            [(16 * width, 1), (32 * width, 2), (64 * width, 2)]):
        gkeys = jax.random.split(keys[1 + gi], num_blocks)
        blocks = []
        for b in range(num_blocks):
            s = stride if b == 0 else 1
            cin = cur if b == 0 else cout
            blocks.append(_block_params(gkeys[b], cin, cout, s))
        cur = cout
        params[f"group{gi + 1}"] = blocks
    c_final = 64 * width
    cfp = _rup(c_final)
    params["bn_scale"], params["bn_bias"] = _bn_fold(c_final, cfp)
    ncls_p = _rup(num_classes)
    bound = 1.0 / (c_final ** 0.5)          # default Linear init, bias=False
    w = jax.random.uniform(keys[4], (c_final, num_classes), jnp.float32,
                           -bound, bound)
    params["rbc_w"] = jnp.zeros((cfp, ncls_p), jnp.float32
                                ).at[:c_final, :num_classes].set(w)
    return params


# ----------------------------------------------------------------------------
# Forward pass (eval mode: logits only, as with training=False, addition=False)
# ----------------------------------------------------------------------------
def _block_forward(x, bp):
    s = bp["stride"]
    # conv0 with bn0+relu prologue and bn1+relu epilogue, all fused.
    c0 = _conv_call(
        x, bp["conv0_w"], bp["pro_scale"], bp["pro_bias"],
        bp["conv0_scale"], bp["conv0_bias"],
        stride=s, kh=3, kw=3, halo=True, pro_act="relu", post_act="relu")
    # residual branch
    if bp["shortcut"] is not None:
        sc = bp["shortcut"]
        xs = x if s == 1 else x[:, ::s, ::s, :]
        res = _conv_call(
            xs, sc["w"], bp["pro_scale"], bp["pro_bias"],
            sc["scale"], sc["bias"],
            stride=1, kh=1, kw=1, halo=False, pro_act="relu", post_act=None)
    else:
        res = x
    # conv1 + bias, residual added in the epilogue, no activation.
    dummy = jnp.zeros((c0.shape[-1],), jnp.float32)
    return _conv_call(
        c0, bp["conv1_w"], dummy, dummy,
        bp["conv1_scale"], bp["conv1_bias"],
        stride=1, kh=3, kw=3, halo=True, pro_act=None, post_act=None,
        residual=res)


def wide_resnet_forward(x_nchw, params, num_classes=10):
    x = jnp.transpose(x_nchw, (0, 2, 3, 1)).astype(jnp.bfloat16)  # NCHW->NHWC
    n, h, w, c = x.shape
    cin_p = params["stem_w"].shape[1]
    x = jnp.pad(x, ((0, 0), (0, 0), (0, 0), (0, cin_p - c)))
    dummy = jnp.zeros((cin_p,), jnp.float32)
    h_act = _conv_call(
        x, params["stem_w"], dummy, dummy,
        params["stem_scale"], params["stem_bias"],
        stride=1, kh=3, kw=3, halo=True, pro_act=None, post_act=None)
    for gname in ("group1", "group2", "group3"):
        for bp in params[gname]:
            h_act = _block_forward(h_act, bp)
    logits_p = _head_call(h_act, params["bn_scale"], params["bn_bias"],
                          params["rbc_w"])
    return logits_p[:, :num_classes]


if __name__ == "__main__":
    key = jax.random.PRNGKey(0)
    k_params, k_x = jax.random.split(key)

    # Small config consistent with the module: depth=10 (1 block/group),
    # width=2, 10 classes, CIFAR-like 3x32x32 input, batch 2.
    params = make_params(k_params, depth=10, width=2, num_classes=10)
    x = jax.random.normal(k_x, (2, 3, 32, 32), jnp.float32)  # NCHW like PyTorch

    logits = wide_resnet_forward(x, params, num_classes=10)
    jax.block_until_ready(logits)
    assert logits.shape == (2, 10), logits.shape
    print("KERNEL_OK")
</pallas_src>

<mosaic_0001>
module attributes {stable_mosaic.version = 11 : i64} {
  func.func @_conv_kernel(%arg0: i32, %arg1: memref<1x34x34x128xbf16, #tpu.memory_space<vmem>>, %arg2: memref<9x128x128xbf16, #tpu.memory_space<vmem>>, %arg3: memref<1x128xf32, #tpu.memory_space<vmem>>, %arg4: memref<1x128xf32, #tpu.memory_space<vmem>>, %arg5: memref<1x128xf32, #tpu.memory_space<vmem>>, %arg6: memref<1x128xf32, #tpu.memory_space<vmem>>, %arg7: memref<1x32x32x128xbf16, #tpu.memory_space<vmem>>) attributes {dimension_semantics = [#tpu.dimension_semantics<parallel>], iteration_bounds = array<i64: 2>, scalar_prefetch = 0 : i64, scratch_operands = 0 : i64, tpu.core_type = #tpu.core_type<tc>, window_params = [{transform_indices = @transform_0, window_bounds = array<i64: 1, 34, 34, 128>}, {pipeline_mode = #tpu.pipeline_mode<synchronous>, transform_indices = @transform_1, window_bounds = array<i64: 9, 128, 128>}, {pipeline_mode = #tpu.pipeline_mode<synchronous>, transform_indices = @transform_2, window_bounds = array<i64: 1, 128>}, {pipeline_mode = #tpu.pipeline_mode<synchronous>, transform_indices = @transform_3, window_bounds = array<i64: 1, 128>}, {pipeline_mode = #tpu.pipeline_mode<synchronous>, transform_indices = @transform_4, window_bounds = array<i64: 1, 128>}, {pipeline_mode = #tpu.pipeline_mode<synchronous>, transform_indices = @transform_5, window_bounds = array<i64: 1, 128>}, {transform_indices = @transform_6, window_bounds = array<i64: 1, 32, 32, 128>}]} {
    %c0 = arith.constant 0 : index
    %c0_0 = arith.constant 0 : index
    %c0_1 = arith.constant 0 : index
    %c0_2 = arith.constant 0 : index
    %0 = vector.load %arg1[%c0, %c0_0, %c0_1, %c0_2] : memref<1x34x34x128xbf16, #tpu.memory_space<vmem>>, vector<1x34x34x128xbf16>
    %cst = arith.constant 0.000000e+00 : f32
    %1 = vector.broadcast %cst : f32 to vector<1024x128xf32>
    %2 = vector.extract_strided_slice %0 {offsets = [0, 0, 0, 0], sizes = [1, 32, 32, 128], strides = [1, 1, 1, 1]} : vector<1x34x34x128xbf16> to vector<1x32x32x128xbf16>
    %3 = vector.shape_cast %2 : vector<1x32x32x128xbf16> to vector<1024x128xbf16>
    %c0_3 = arith.constant 0 : index
    %c0_4 = arith.constant 0 : index
    %c0_5 = arith.constant 0 : index
    %4 = vector.load %arg2[%c0_3, %c0_4, %c0_5] : memref<9x128x128xbf16, #tpu.memory_space<vmem>>, vector<1x128x128xbf16>
    %5 = vector.shape_cast %4 : vector<1x128x128xbf16> to vector<128x128xbf16>
    %cst_6 = arith.constant dense<0.000000e+00> : vector<1024x128xf32>
    %6 = tpu.matmul %3, %5, %cst_6 {dimension_numbers = #tpu.dot_dimension_numbers<[1], [0], [0], [1], [0, 0, 1, 1], [], []>} : vector<1024x128xbf16>, vector<128x128xbf16>, vector<1024x128xf32> -> vector<1024x128xf32>
    %7 = arith.addf %1, %6 : vector<1024x128xf32>
    %8 = vector.extract_strided_slice %0 {offsets = [0, 0, 1, 0], sizes = [1, 32, 32, 128], strides = [1, 1, 1, 1]} : vector<1x34x34x128xbf16> to vector<1x32x32x128xbf16>
    %9 = vector.shape_cast %8 : vector<1x32x32x128xbf16> to vector<1024x128xbf16>
    %c1 = arith.constant 1 : index
    %c0_7 = arith.constant 0 : index
    %c0_8 = arith.constant 0 : index
    %10 = vector.load %arg2[%c1, %c0_7, %c0_8] : memref<9x128x128xbf16, #tpu.memory_space<vmem>>, vector<1x128x128xbf16>
    %11 = vector.shape_cast %10 : vector<1x128x128xbf16> to vector<128x128xbf16>
    %cst_9 = arith.constant dense<0.000000e+00> : vector<1024x128xf32>
    %12 = tpu.matmul %9, %11, %cst_9 {dimension_numbers = #tpu.dot_dimension_numbers<[1], [0], [0], [1], [0, 0, 1, 1], [], []>} : vector<1024x128xbf16>, vector<128x128xbf16>, vector<1024x128xf32> -> vector<1024x128xf32>
    %13 = arith.addf %7, %12 : vector<1024x128xf32>
    %14 = vector.extract_strided_slice %0 {offsets = [0, 0, 2, 0], sizes = [1, 32, 32, 128], strides = [1, 1, 1, 1]} : vector<1x34x34x128xbf16> to vector<1x32x32x128xbf16>
    %15 = vector.shape_cast %14 : vector<1x32x32x128xbf16> to vector<1024x128xbf16>
    %c2 = arith.constant 2 : index
    %c0_10 = arith.constant 0 : index
    %c0_11 = arith.constant 0 : index
    %16 = vector.load %arg2[%c2, %c0_10, %c0_11] : memref<9x128x128xbf16, #tpu.memory_space<vmem>>, vector<1x128x128xbf16>
    %17 = vector.shape_cast %16 : vector<1x128x128xbf16> to vector<128x128xbf16>
    %cst_12 = arith.constant dense<0.000000e+00> : vector<1024x128xf32>
    %18 = tpu.matmul %15, %17, %cst_12 {dimension_numbers = #tpu.dot_dimension_numbers<[1], [0], [0], [1], [0, 0, 1, 1], [], []>} : vector<1024x128xbf16>, vector<128x128xbf16>, vector<1024x128xf32> -> vector<1024x128xf32>
    %19 = arith.addf %13, %18 : vector<1024x128xf32>
    %20 = vector.extract_strided_slice %0 {offsets = [0, 1, 0, 0], sizes = [1, 32, 32, 128], strides = [1, 1, 1, 1]} : vector<1x34x34x128xbf16> to vector<1x32x32x128xbf16>
    %21 = vector.shape_cast %20 : vector<1x32x32x128xbf16> to vector<1024x128xbf16>
    %c3 = arith.constant 3 : index
    %c0_13 = arith.constant 0 : index
    %c0_14 = arith.constant 0 : index
    %22 = vector.load %arg2[%c3, %c0_13, %c0_14] : memref<9x128x128xbf16, #tpu.memory_space<vmem>>, vector<1x128x128xbf16>
    %23 = vector.shape_cast %22 : vector<1x128x128xbf16> to vector<128x128xbf16>
    %cst_15 = arith.constant dense<0.000000e+00> : vector<1024x128xf32>
    %24 = tpu.matmul %21, %23, %cst_15 {dimension_numbers = #tpu.dot_dimension_numbers<[1], [0], [0], [1], [0, 0, 1, 1], [], []>} : vector<1024x128xbf16>, vector<128x128xbf16>, vector<1024x128xf32> -> vector<1024x128xf32>
    %25 = arith.addf %19, %24 : vector<1024x128xf32>
    %26 = vector.extract_strided_slice %0 {offsets = [0, 1, 1, 0], sizes = [1, 32, 32, 128], strides = [1, 1, 1, 1]} : vector<1x34x34x128xbf16> to vector<1x32x32x128xbf16>
    %27 = vector.shape_cast %26 : vector<1x32x32x128xbf16> to vector<1024x128xbf16>
    %c4 = arith.constant 4 : index
    %c0_16 = arith.constant 0 : index
    %c0_17 = arith.constant 0 : index
    %28 = vector.load %arg2[%c4, %c0_16, %c0_17] : memref<9x128x128xbf16, #tpu.memory_space<vmem>>, vector<1x128x128xbf16>
    %29 = vector.shape_cast %28 : vector<1x128x128xbf16> to vector<128x128xbf16>
    %cst_18 = arith.constant dense<0.000000e+00> : vector<1024x128xf32>
    %30 = tpu.matmul %27, %29, %cst_18 {dimension_numbers = #tpu.dot_dimension_numbers<[1], [0], [0], [1], [0, 0, 1, 1], [], []>} : vector<1024x128xbf16>, vector<128x128xbf16>, vector<1024x128xf32> -> vector<1024x128xf32>
    %31 = arith.addf %25, %30 : vector<1024x128xf32>
    %32 = vector.extract_strided_slice %0 {offsets = [0, 1, 2, 0], sizes = [1, 32, 32, 128], strides = [1, 1, 1, 1]} : vector<1x34x34x128xbf16> to vector<1x32x32x128xbf16>
    %33 = vector.shape_cast %32 : vector<1x32x32x128xbf16> to vector<1024x128xbf16>
    %c5 = arith.constant 5 : index
    %c0_19 = arith.constant 0 : index
    %c0_20 = arith.constant 0 : index
    %34 = vector.load %arg2[%c5, %c0_19, %c0_20] : memref<9x128x128xbf16, #tpu.memory_space<vmem>>, vector<1x128x128xbf16>
    %35 = vector.shape_cast %34 : vector<1x128x128xbf16> to vector<128x128xbf16>
    %cst_21 = arith.constant dense<0.000000e+00> : vector<1024x128xf32>
    %36 = tpu.matmul %33, %35, %cst_21 {dimension_numbers = #tpu.dot_dimension_numbers<[1], [0], [0], [1], [0, 0, 1, 1], [], []>} : vector<1024x128xbf16>, vector<128x128xbf16>, vector<1024x128xf32> -> vector<1024x128xf32>
    %37 = arith.addf %31, %36 : vector<1024x128xf32>
    %38 = vector.extract_strided_slice %0 {offsets = [0, 2, 0, 0], sizes = [1, 32, 32, 128], strides = [1, 1, 1, 1]} : vector<1x34x34x128xbf16> to vector<1x32x32x128xbf16>
    %39 = vector.shape_cast %38 : vector<1x32x32x128xbf16> to vector<1024x128xbf16>
    %c6 = arith.constant 6 : index
    %c0_22 = arith.constant 0 : index
    %c0_23 = arith.constant 0 : index
    %40 = vector.load %arg2[%c6, %c0_22, %c0_23] : memref<9x128x128xbf16, #tpu.memory_space<vmem>>, vector<1x128x128xbf16>
    %41 = vector.shape_cast %40 : vector<1x128x128xbf16> to vector<128x128xbf16>
    %cst_24 = arith.constant dense<0.000000e+00> : vector<1024x128xf32>
    %42 = tpu.matmul %39, %41, %cst_24 {dimension_numbers = #tpu.dot_dimension_numbers<[1], [0], [0], [1], [0, 0, 1, 1], [], []>} : vector<1024x128xbf16>, vector<128x128xbf16>, vector<1024x128xf32> -> vector<1024x128xf32>
    %43 = arith.addf %37, %42 : vector<1024x128xf32>
    %44 = vector.extract_strided_slice %0 {offsets = [0, 2, 1, 0], sizes = [1, 32, 32, 128], strides = [1, 1, 1, 1]} : vector<1x34x34x128xbf16> to vector<1x32x32x128xbf16>
    %45 = vector.shape_cast %44 : vector<1x32x32x128xbf16> to vector<1024x128xbf16>
    %c7 = arith.constant 7 : index
    %c0_25 = arith.constant 0 : index
    %c0_26 = arith.constant 0 : index
    %46 = vector.load %arg2[%c7, %c0_25, %c0_26] : memref<9x128x128xbf16, #tpu.memory_space<vmem>>, vector<1x128x128xbf16>
    %47 = vector.shape_cast %46 : vector<1x128x128xbf16> to vector<128x128xbf16>
    %cst_27 = arith.constant dense<0.000000e+00> : vector<1024x128xf32>
    %48 = tpu.matmul %45, %47, %cst_27 {dimension_numbers = #tpu.dot_dimension_numbers<[1], [0], [0], [1], [0, 0, 1, 1], [], []>} : vector<1024x128xbf16>, vector<128x128xbf16>, vector<1024x128xf32> -> vector<1024x128xf32>
    %49 = arith.addf %43, %48 : vector<1024x128xf32>
    %50 = vector.extract_strided_slice %0 {offsets = [0, 2, 2, 0], sizes = [1, 32, 32, 128], strides = [1, 1, 1, 1]} : vector<1x34x34x128xbf16> to vector<1x32x32x128xbf16>
    %51 = vector.shape_cast %50 : vector<1x32x32x128xbf16> to vector<1024x128xbf16>
    %c8 = arith.constant 8 : index
    %c0_28 = arith.constant 0 : index
    %c0_29 = arith.constant 0 : index
    %52 = vector.load %arg2[%c8, %c0_28, %c0_29] : memref<9x128x128xbf16, #tpu.memory_space<vmem>>, vector<1x128x128xbf16>
    %53 = vector.shape_cast %52 : vector<1x128x128xbf16> to vector<128x128xbf16>
    %cst_30 = arith.constant dense<0.000000e+00> : vector<1024x128xf32>
    %54 = tpu.matmul %51, %53, %cst_30 {dimension_numbers = #tpu.dot_dimension_numbers<[1], [0], [0], [1], [0, 0, 1, 1], [], []>} : vector<1024x128xbf16>, vector<128x128xbf16>, vector<1024x128xf32> -> vector<1024x128xf32>
    %55 = arith.addf %49, %54 : vector<1024x128xf32>
    %c0_31 = arith.constant 0 : index
    %c0_32 = arith.constant 0 : index
    %56 = vector.load %arg5[%c0_31, %c0_32] : memref<1x128xf32, #tpu.memory_space<vmem>>, vector<1x128xf32>
    %57 = vector.broadcast %56 : vector<1x128xf32> to vector<1024x128xf32>
    %58 = arith.mulf %55, %57 : vector<1024x128xf32>
    %c0_33 = arith.constant 0 : index
    %c0_34 = arith.constant 0 : index
    %59 = vector.load %arg6[%c0_33, %c0_34] : memref<1x128xf32, #tpu.memory_space<vmem>>, vector<1x128xf32>
    %60 = vector.broadcast %59 : vector<1x128xf32> to vector<1024x128xf32>
    %61 = arith.addf %58, %60 : vector<1024x128xf32>
    %62 = vector.shape_cast %61 : vector<1024x128xf32> to vector<1x32x32x128xf32>
    %63 = arith.truncf %62 : vector<1x32x32x128xf32> to vector<1x32x32x128xbf16>
    %c0_35 = arith.constant 0 : index
    %c0_36 = arith.constant 0 : index
    %c0_37 = arith.constant 0 : index
    %c0_38 = arith.constant 0 : index
    %64 = vector.load %arg7[%c0_35, %c0_36, %c0_37, %c0_38] : memref<1x32x32x128xbf16, #tpu.memory_space<vmem>>, vector<1x32x32x128xbf16>
    tpu.vector_store %arg7[%c0_35, %c0_36, %c0_37, %c0_38], %63 {strides = array<i32>} : memref<1x32x32x128xbf16, #tpu.memory_space<vmem>>, vector<1x32x32x128xbf16>,
    return
  }
  func.func @transform_0(%arg0: i32) -> (i32, i32, i32, i32) {
    %c0_i32 = arith.constant 0 : i32
    %c0_i32_0 = arith.constant 0 : i32
    %c0_i32_1 = arith.constant 0 : i32
    %c0_i32_2 = arith.constant 0 : i32
    return %arg0, %c0_i32, %c0_i32_0, %c0_i32_1 : i32, i32, i32, i32
  }
  func.func @transform_1(%arg0: i32) -> (i32, i32, i32) {
    %c0_i32 = arith.constant 0 : i32
    %c0_i32_0 = arith.constant 0 : i32
    %c0_i32_1 = arith.constant 0 : i32
    %c0_i32_2 = arith.constant 0 : i32
    return %c0_i32, %c0_i32_0, %c0_i32_1 : i32, i32, i32
  }
  func.func @transform_2(%arg0: i32) -> (i32, i32) {
    %c0_i32 = arith.constant 0 : i32
    %c0_i32_0 = arith.constant 0 : i32
    %c0_i32_1 = arith.constant 0 : i32
    return %c0_i32, %c0_i32_0 : i32, i32
  }
  func.func @transform_3(%arg0: i32) -> (i32, i32) {
    %c0_i32 = arith.constant 0 : i32
    %c0_i32_0 = arith.constant 0 : i32
    %c0_i32_1 = arith.constant 0 : i32
    return %c0_i32, %c0_i32_0 : i32, i32
  }
  func.func @transform_4(%arg0: i32) -> (i32, i32) {
    %c0_i32 = arith.constant 0 : i32
    %c0_i32_0 = arith.constant 0 : i32
    %c0_i32_1 = arith.constant 0 : i32
    return %c0_i32, %c0_i32_0 : i32, i32
  }
  func.func @transform_5(%arg0: i32) -> (i32, i32) {
    %c0_i32 = arith.constant 0 : i32
    %c0_i32_0 = arith.constant 0 : i32
    %c0_i32_1 = arith.constant 0 : i32
    return %c0_i32, %c0_i32_0 : i32, i32
  }
  func.func @transform_6(%arg0: i32) -> (i32, i32, i32, i32) {
    %c0_i32 = arith.constant 0 : i32
    %c0_i32_0 = arith.constant 0 : i32
    %c0_i32_1 = arith.constant 0 : i32
    %c0_i32_2 = arith.constant 0 : i32
    return %arg0, %c0_i32, %c0_i32_0, %c0_i32_1 : i32, i32, i32, i32
  }
}

</mosaic_0001>

<llo_original>
// kernel: tpu_custom_call.1
$region0: #{tpu_custom_call.1}
  #allocation0 [shape = 'u32[]', space=smem, size = 0x4, offset = 0x4, fixed_abs, tag = 'smem constant byte address 0x4 - core index']
  #allocation1 [shape = 'u32[144,128]{1,0:T(1,128)}', space=vmem, size = 0x12000, scoped, tag = 'internal scratch']
  %s0 = inlined_call_operand.vmem [shape: bf16[2,34,34,128], index: 0, kind: input, shape index: {}]
  %s1 = inlined_call_operand.vmem [shape: bf16[9,128,128], index: 1, kind: input, shape index: {}]
  %s2 = inlined_call_operand.vmem [shape: f32[1,128], index: 2, kind: input, shape index: {}]
  %s3 = inlined_call_operand.vmem [shape: f32[1,128], index: 3, kind: input, shape index: {}]
  %s4 = inlined_call_operand.vmem [shape: f32[1,128], index: 4, kind: input, shape index: {}]
  %s5 = inlined_call_operand.vmem [shape: f32[1,128], index: 5, kind: input, shape index: {}]
  %s6 = inlined_call_operand.hbm [shape: bf16[2,32,32,128], index: 6, kind: output, shape index: {}]
  %s7 = sld [smem:[#allocation0]]
  $region57: #{tpu_custom_call.1} parent=0
    _
  %s9 = ssub.s32 1, %s7
  %s10 = scalar_select 0, %s9, %s7
  $region1: #{tpu_custom_call.1} parent=0
    #allocation2 [shape = 'u8[524288]{0}', space=vmem, size = 0x80000, scoped, tag = 'output window, operand 0']
    #allocation3 [shape = 's32[2]{0}', space=sflag, size = 0x8, scoped, tag = 'scoped memory for tpu_custom_call.1']
    %11 = vsyncpa [#allocation3], 0
    %s12 = scalar_lea.sflag [#allocation3], 1
    %13 = vsyncpa %s12, 0
    loop: start=0, step=1, limit=4
    $region2: #{tpu_custom_call.1} parent=1 // loop_pre_header
      _
    $region3: #{tpu_custom_call.1} parent=1 // loop_header
      %s15 = sphi 0, %s19
      %p16 = scmp.ge.s32.totalorder %s15, 4
      %s25 = sphi 0, %s27
      %s28 = sphi 0, %s25
      %s29 = sphi 0, %s28
      %s45 = sphi 0, %s29
      %s49 = sphi 0, %s49
      %s51 = sphi 0, %s49
      %s52 = sphi 0, %s51
      %s66 = sphi 0, %s52
      %s70 = sphi 0, %s70
      %s72 = sphi 0, %s70
      %s73 = sphi 0, %s72
      %s87 = sphi 0, %s73
      %s91 = sphi 0, %s91
      %s93 = sphi 0, %s91
      %s94 = sphi 0, %s93
      %s108 = sphi 0, %s94
      %s112 = sphi 0, %s112
      %s114 = sphi 0, %s112
      %s115 = sphi 0, %s114
      %s129 = sphi 0, %s115
      %s133 = sphi 0, %s133
      %s135 = sphi 0, %s133
      %s136 = sphi 0, %s135
      %s150 = sphi 0, %s136
      %s156 = sphi 0, %s158
      %s159 = sphi 0, %s156
      %s160 = sphi 0, %s159
      %s176 = sphi 0, %s160
    $region4: #{tpu_custom_call.1} parent=1 // loop_header_branch
      %18 = sbr.rel (%p16) target = $region8
    $region5: #{tpu_custom_call.1} parent=1 // loop_body
      %s20 = ssub.s32 %s15, 1
      %s21 = ssub.s32 %s15, 2
      %s22 = sadd.s32 %s15, 1
      %s23 = ssub.s32 %s15, %s22
      %p24 = scmp.eq.s32.totalorder %s23, 0
      %s26 = sadd.s32 %s25, 1
      %s27 = scalar_select %p24, %s25, %s26
      %p30 = pneg %p24
      %p31 = scmp.eq.s32.totalorder %s15, 1
      %p32 = por %p30, %p31
      %p33 = scmp.ne.s32.totalorder %s25, %s28
      %p34 = scmp.eq.s32.totalorder %s15, 0
      %p35 = por %p33, %p34
      %p36 = scmp.ne.s32.totalorder %s25, %s28
      %p37 = scmp.eq.s32.totalorder %s20, 1
      %p38 = por %p36, %p37
      %p39 = scmp.ne.s32.totalorder %s28, %s29
      %p40 = scmp.eq.s32.totalorder %s20, 0
      %p41 = por %p39, %p40
      %p42 = scmp.ne.s32.totalorder %s28, %s29
      %p43 = scmp.eq.s32.totalorder %s21, 1
      %p44 = por %p42, %p43
      %p46 = scmp.ne.s32.totalorder %s29, %s45
      %p47 = scmp.eq.s32.totalorder %s21, 0
      %p48 = por %p46, %p47
      %s50 = sadd.s32 %s49, 1
      %p53 = scmp.eq.s32.totalorder %s15, 1
      %p54 = scmp.ne.s32.totalorder %s49, %s51
      %p55 = scmp.eq.s32.totalorder %s15, 0
      %p56 = por %p54, %p55
      %p57 = scmp.ne.s32.totalorder %s49, %s51
      %p58 = scmp.eq.s32.totalorder %s20, 1
      %p59 = por %p57, %p58
      %p60 = scmp.ne.s32.totalorder %s51, %s52
      %p61 = scmp.eq.s32.totalorder %s20, 0
      %p62 = por %p60, %p61
      %p63 = scmp.ne.s32.totalorder %s51, %s52
      %p64 = scmp.eq.s32.totalorder %s21, 1
      %p65 = por %p63, %p64
      %p67 = scmp.ne.s32.totalorder %s52, %s66
      %p68 = scmp.eq.s32.totalorder %s21, 0
      %p69 = por %p67, %p68
      %s71 = sadd.s32 %s70, 1
      %p74 = scmp.eq.s32.totalorder %s15, 1
      %p75 = scmp.ne.s32.totalorder %s70, %s72
      %p76 = scmp.eq.s32.totalorder %s15, 0
      %p77 = por %p75, %p76
      %p78 = scmp.ne.s32.totalorder %s70, %s72
      %p79 = scmp.eq.s32.totalorder %s20, 1
      %p80 = por %p78, %p79
      %p81 = scmp.ne.s32.totalorder %s72, %s73
      %p82 = scmp.eq.s32.totalorder %s20, 0
      %p83 = por %p81, %p82
      %p84 = scmp.ne.s32.totalorder %s72, %s73
      %p85 = scmp.eq.s32.totalorder %s21, 1
      %p86 = por %p84, %p85
      %p88 = scmp.ne.s32.totalorder %s73, %s87
      %p89 = scmp.eq.s32.totalorder %s21, 0
      %p90 = por %p88, %p89
      %s92 = sadd.s32 %s91, 1
      %p95 = scmp.eq.s32.totalorder %s15, 1
      %p96 = scmp.ne.s32.totalorder %s91, %s93
      %p97 = scmp.eq.s32.totalorder %s15, 0
      %p98 = por %p96, %p97
      %p99 = scmp.ne.s32.totalorder %s91, %s93
      %p100 = scmp.eq.s32.totalorder %s20, 1
      %p101 = por %p99, %p100
      %p102 = scmp.ne.s32.totalorder %s93, %s94
      %p103 = scmp.eq.s32.totalorder %s20, 0
      %p104 = por %p102, %p103
      %p105 = scmp.ne.s32.totalorder %s93, %s94
      %p106 = scmp.eq.s32.totalorder %s21, 1
      %p107 = por %p105, %p106
      %p109 = scmp.ne.s32.totalorder %s94, %s108
      %p110 = scmp.eq.s32.totalorder %s21, 0
      %p111 = por %p109, %p110
      %s113 = sadd.s32 %s112, 1
      %p116 = scmp.eq.s32.totalorder %s15, 1
      %p117 = scmp.ne.s32.totalorder %s112, %s114
      %p118 = scmp.eq.s32.totalorder %s15, 0
      %p119 = por %p117, %p118
      %p120 = scmp.ne.s32.totalorder %s112, %s114
      %p121 = scmp.eq.s32.totalorder %s20, 1
      %p122 = por %p120, %p121
      %p123 = scmp.ne.s32.totalorder %s114, %s115
      %p124 = scmp.eq.s32.totalorder %s20, 0
      %p125 = por %p123, %p124
      %p126 = scmp.ne.s32.totalorder %s114, %s115
      %p127 = scmp.eq.s32.totalorder %s21, 1
      %p128 = por %p126, %p127
      %p130 = scmp.ne.s32.totalorder %s115, %s129
      %p131 = scmp.eq.s32.totalorder %s21, 0
      %p132 = por %p130, %p131
      %s134 = sadd.s32 %s133, 1
      %p137 = scmp.eq.s32.totalorder %s15, 1
      %p138 = scmp.ne.s32.totalorder %s133, %s135
      %p139 = scmp.eq.s32.totalorder %s15, 0
      %p140 = por %p138, %p139
      %p141 = scmp.ne.s32.totalorder %s133, %s135
      %p142 = scmp.eq.s32.totalorder %s20, 1
      %p143 = por %p141, %p142
      %p144 = scmp.ne.s32.totalorder %s135, %s136
      %p145 = scmp.eq.s32.totalorder %s20, 0
      %p146 = por %p144, %p145
      %p147 = scmp.ne.s32.totalorder %s135, %s136
      %p148 = scmp.eq.s32.totalorder %s21, 1
      %p149 = por %p147, %p148
      %p151 = scmp.ne.s32.totalorder %s136, %s150
      %p152 = scmp.eq.s32.totalorder %s21, 0
      %p153 = por %p151, %p152
      %s154 = ssub.s32 %s15, %s22
      %p155 = scmp.eq.s32.totalorder %s154, 0
      %s157 = sadd.s32 %s156, 1
      %s158 = scalar_select %p155, %s156, %s157
      %p161 = pneg %p155
      %p162 = scmp.eq.s32.totalorder %s15, 1
      %p163 = por %p161, %p162
      %p164 = scmp.ne.s32.totalorder %s156, %s159
      %p165 = scmp.eq.s32.totalorder %s15, 0
      %p166 = por %p164, %p165
      %p167 = scmp.ne.s32.totalorder %s156, %s159
      %p168 = scmp.eq.s32.totalorder %s20, 1
      %p169 = por %p167, %p168
      %p170 = scmp.ne.s32.totalorder %s159, %s160
      %p171 = scmp.eq.s32.totalorder %s20, 0
      %p172 = por %p170, %p171
      %p173 = scmp.ne.s32.totalorder %s159, %s160
      %p174 = scmp.eq.s32.totalorder %s21, 1
      %p175 = por %p173, %p174
      %p177 = scmp.ne.s32.totalorder %s160, %s176
      %p178 = scmp.eq.s32.totalorder %s21, 0
      %p179 = por %p177, %p178
      %p180 = scmp.le.s32.totalorder 1, %s15
      %p181 = scmp.lt.s32.totalorder %s15, 3
      %p182 = pnand %p180, %p181
      %p183 = pneg %p182
      // Predicated region
      $region9: #{tpu_custom_call.1} parent=5 // pred_check
        _
      $region10: #{tpu_custom_call.1} parent=5 // pred_check_branch
        %185 = sbr.rel (%p182) target = $region12
      $region11: #{tpu_custom_call.1} parent=5 // pred_region
        %s186 = ssub.s32 %s15, 1
        // Predicated region
        $region13: #{tpu_custom_call.1} parent=11 // pred_check
          %p187 = pneg %p62
        $region14: #{tpu_custom_call.1} parent=11 // pred_check_branch
          %189 = sbr.rel (%p187) target = $region16
        $region15: #{tpu_custom_call.1} parent=11 // pred_region
          _
        $region16: #{tpu_custom_call.1} parent=11 // pred_fallthru
          _
        // Predicated region
        $region17: #{tpu_custom_call.1} parent=11 // pred_check
          %p190 = pneg %p83
        $region18: #{tpu_custom_call.1} parent=11 // pred_check_branch
          %192 = sbr.rel (%p190) target = $region20
        $region19: #{tpu_custom_call.1} parent=11 // pred_region
          _
        $region20: #{tpu_custom_call.1} parent=11 // pred_fallthru
          _
        // Predicated region
        $region21: #{tpu_custom_call.1} parent=11 // pred_check
          %p193 = pneg %p104
        $region22: #{tpu_custom_call.1} parent=11 // pred_check_branch
          %195 = sbr.rel (%p193) target = $region24
        $region23: #{tpu_custom_call.1} parent=11 // pred_region
          _
        $region24: #{tpu_custom_call.1} parent=11 // pred_fallthru
          _
        // Predicated region
        $region25: #{tpu_custom_call.1} parent=11 // pred_check
          %p196 = pneg %p125
        $region26: #{tpu_custom_call.1} parent=11 // pred_check_branch
          %198 = sbr.rel (%p196) target = $region28
        $region27: #{tpu_custom_call.1} parent=11 // pred_region
          _
        $region28: #{tpu_custom_call.1} parent=11 // pred_fallthru
          _
        // Predicated region
        $region29: #{tpu_custom_call.1} parent=11 // pred_check
          %p199 = pneg %p146
        $region30: #{tpu_custom_call.1} parent=11 // pred_check_branch
          %201 = sbr.rel (%p199) target = $region32
        $region31: #{tpu_custom_call.1} parent=11 // pred_region
          _
        $region32: #{tpu_custom_call.1} parent=11 // pred_fallthru
          _
      $region12: #{tpu_custom_call.1} parent=5 // pred_fallthru
        _
      %p202 = scmp.lt.s32.totalorder %s15, 2
      // Predicated region
      $region33: #{tpu_custom_call.1} parent=5 // pred_check
        %p203 = pneg %p202
      $region34: #{tpu_custom_call.1} parent=5 // pred_check_branch
        %205 = sbr.rel (%p203) target = $region36
      $region35: #{tpu_custom_call.1} parent=5 // pred_region
        // Predicated region
        $region37: #{tpu_custom_call.1} parent=35 // pred_check
          %p206 = pneg %p35
        $region38: #{tpu_custom_call.1} parent=35 // pred_check_branch
          %208 = sbr.rel (%p206) target = $region40
        $region39: #{tpu_custom_call.1} parent=35 // pred_region
          %p209 = scmp.lt.s32.totalorder %s15, 1
          %s210 = scalar_select %p209, %s15, 1
          %s211 = smul.addr %s210, 170
          %s212 = smul.addr %s211, 4
          %s213 = scalar_lea.vmem %s0, %s212
        $region40: #{tpu_custom_call.1} parent=35 // pred_fallthru
          _
      $region36: #{tpu_custom_call.1} parent=5 // pred_fallthru
        _
      %p214 = scmp.le.s32.totalorder 1, %s15
      %p215 = scmp.lt.s32.totalorder %s15, 3
      %p216 = pnand %p214, %p215
      %p217 = pneg %p216
      // Predicated region
      $region41: #{tpu_custom_call.1} parent=5 // pred_check
        _
      $region42: #{tpu_custom_call.1} parent=5 // pred_check_branch
        %219 = sbr.rel (%p216) target = $region44
      $region43: #{tpu_custom_call.1} parent=5 // pred_region
        %s220 = ssub.s32 %s15, 1
        %p221 = scmp.lt.s32.totalorder %s20, 1
        %s222 = scalar_select %p221, %s20, 1
        %s223 = smul.addr %s222, 170
        %s224 = smul.addr %s223, 4
        %s225 = scalar_lea.vmem %s0, %s224
        %p226 = pneg %p41
        %p227 = pneg %p38
        %p228 = pneg %p62
        %p229 = pneg %p59
        %p230 = pneg %p83
        %p231 = pneg %p80
        %p232 = pneg %p104
        %p233 = pneg %p101
        %p234 = pneg %p125
        %p235 = pneg %p122
        %p236 = pneg %p146
        %p237 = pneg %p143
        %p238 = pneg %p172
        %p239 = pneg %p169
        %s240 = sand.u32 %s159, 1
        %s241 = scalar_lea.sflag [#allocation3], %s240
        %s242 = sand.u32 %s159, 1
        %s243 = smul.addr %s242, 512
        %s244 = scalar_lea.vmem [#allocation2], %s243
        %p245 = scmp.lt.s32.totalorder %s20, 1
        %s246 = scalar_select %p245, %s20, 1
        %s247 = smul.addr %s246, 170
        %s248 = smul.addr %s247, 4
        %s249 = scalar_lea.vmem %s0, %s248
        %v251 = vld [vmem:[%s249] sm:$0xf]
        %v252 = vld [vmem:[%s249 + $0x4] sm:$0xf]
        %v253 = vld [vmem:[%s249 + $0x8] sm:$0xf]
        %v254 = vld [vmem:[%s249 + $0xc] sm:$0xf]
        %v255 = vld [vmem:[%s249 + $0x10] sm:$0x1]
        %v256 = vld [vmem:[%s249 + $0x14] sm:$0xf]
        %v257 = vld [vmem:[%s249 + $0x18] sm:$0xf]
        %v258 = vld [vmem:[%s249 + $0x1c] sm:$0xf]
        %v259 = vld [vmem:[%s249 + $0x20] sm:$0xf]
        %v260 = vld [vmem:[%s249 + $0x24] sm:$0x1]
        %v261 = vld [vmem:[%s249 + $0x28] sm:$0xf]
        %v262 = vld [vmem:[%s249 + $0x2c] sm:$0xf]
        %v263 = vld [vmem:[%s249 + $0x30] sm:$0xf]
        %v264 = vld [vmem:[%s249 + $0x34] sm:$0xf]
        %v265 = vld [vmem:[%s249 + $0x38] sm:$0x1]
        %v266 = vld [vmem:[%s249 + $0x3c] sm:$0xf]
        %v267 = vld [vmem:[%s249 + $0x40] sm:$0xf]
        %v268 = vld [vmem:[%s249 + $0x44] sm:$0xf]
        %v269 = vld [vmem:[%s249 + $0x48] sm:$0xf]
        %v270 = vld [vmem:[%s249 + $0x4c] sm:$0x1]
        %v271 = vld [vmem:[%s249 + $0x50] sm:$0xf]
        %v272 = vld [vmem:[%s249 + $0x54] sm:$0xf]
        %v273 = vld [vmem:[%s249 + $0x58] sm:$0xf]
        %v274 = vld [vmem:[%s249 + $0x5c] sm:$0xf]
        %v275 = vld [vmem:[%s249 + $0x60] sm:$0x1]
        %v276 = vld [vmem:[%s249 + $0x64] sm:$0xf]
        %v277 = vld [vmem:[%s249 + $0x68] sm:$0xf]
        %v278 = vld [vmem:[%s249 + $0x6c] sm:$0xf]
        %v279 = vld [vmem:[%s249 + $0x70] sm:$0xf]
        %v280 = vld [vmem:[%s249 + $0x74] sm:$0x1]
        %v281 = vld [vmem:[%s249 + $0x78] sm:$0xf]
        %v282 = vld [vmem:[%s249 + $0x7c] sm:$0xf]
        %v283 = vld [vmem:[%s249 + $0x80] sm:$0xf]
        %v284 = vld [vmem:[%s249 + $0x84] sm:$0xf]
        %v285 = vld [vmem:[%s249 + $0x88] sm:$0x1]
        %v286 = vld [vmem:[%s249 + $0x8c] sm:$0xf]
        %v287 = vld [vmem:[%s249 + $0x90] sm:$0xf]
        %v288 = vld [vmem:[%s249 + $0x94] sm:$0xf]
        %v289 = vld [vmem:[%s249 + $0x98] sm:$0xf]
        %v290 = vld [vmem:[%s249 + $0x9c] sm:$0x1]
        %v291 = vld [vmem:[%s249 + $0xa0] sm:$0xf]
        %v292 = vld [vmem:[%s249 + $0xa4] sm:$0xf]
        %v293 = vld [vmem:[%s249 + $0xa8] sm:$0xf]
        %v294 = vld [vmem:[%s249 + $0xac] sm:$0xf]
        %v295 = vld [vmem:[%s249 + $0xb0] sm:$0x1]
        %v296 = vld [vmem:[%s249 + $0xb4] sm:$0xf]
        %v297 = vld [vmem:[%s249 + $0xb8] sm:$0xf]
        %v298 = vld [vmem:[%s249 + $0xbc] sm:$0xf]
        %v299 = vld [vmem:[%s249 + $0xc0] sm:$0xf]
        %v300 = vld [vmem:[%s249 + $0xc4] sm:$0x1]
        %v301 = vld [vmem:[%s249 + $0xc8] sm:$0xf]
        %v302 = vld [vmem:[%s249 + $0xcc] sm:$0xf]
        %v303 = vld [vmem:[%s249 + $0xd0] sm:$0xf]
        %v304 = vld [vmem:[%s249 + $0xd4] sm:$0xf]
        %v305 = vld [vmem:[%s249 + $0xd8] sm:$0x1]
        %v306 = vld [vmem:[%s249 + $0xdc] sm:$0xf]
        %v307 = vld [vmem:[%s249 + $0xe0] sm:$0xf]
        %v308 = vld [vmem:[%s249 + $0xe4] sm:$0xf]
        %v309 = vld [vmem:[%s249 + $0xe8] sm:$0xf]
        %v310 = vld [vmem:[%s249 + $0xec] sm:$0x1]
        %v311 = vld [vmem:[%s249 + $0xf0] sm:$0xf]
        %v312 = vld [vmem:[%s249 + $0xf4] sm:$0xf]
        %v313 = vld [vmem:[%s249 + $0xf8] sm:$0xf]
        %v314 = vld [vmem:[%s249 + $0xfc] sm:$0xf]
        %v315 = vld [vmem:[%s249 + $0x100] sm:$0x1]
        %v316 = vld [vmem:[%s249 + $0x104] sm:$0xf]
        %v317 = vld [vmem:[%s249 + $0x108] sm:$0xf]
        %v318 = vld [vmem:[%s249 + $0x10c] sm:$0xf]
        %v319 = vld [vmem:[%s249 + $0x110] sm:$0xf]
        %v320 = vld [vmem:[%s249 + $0x114] sm:$0x1]
        %v321 = vld [vmem:[%s249 + $0x118] sm:$0xf]
        %v322 = vld [vmem:[%s249 + $0x11c] sm:$0xf]
        %v323 = vld [vmem:[%s249 + $0x120] sm:$0xf]
        %v324 = vld [vmem:[%s249 + $0x124] sm:$0xf]
        %v325 = vld [vmem:[%s249 + $0x128] sm:$0x1]
        %v326 = vld [vmem:[%s249 + $0x12c] sm:$0xf]
        %v327 = vld [vmem:[%s249 + $0x130] sm:$0xf]
        %v328 = vld [vmem:[%s249 + $0x134] sm:$0xf]
        %v329 = vld [vmem:[%s249 + $0x138] sm:$0xf]
        %v330 = vld [vmem:[%s249 + $0x13c] sm:$0x1]
        %v331 = vld [vmem:[%s249 + $0x140] sm:$0xf]
        %v332 = vld [vmem:[%s249 + $0x144] sm:$0xf]
        %v333 = vld [vmem:[%s249 + $0x148] sm:$0xf]
        %v334 = vld [vmem:[%s249 + $0x14c] sm:$0xf]
        %v335 = vld [vmem:[%s249 + $0x150] sm:$0x1]
        %v336 = vld [vmem:[%s249 + $0x154] sm:$0xf]
        %v337 = vld [vmem:[%s249 + $0x158] sm:$0xf]
        %v338 = vld [vmem:[%s249 + $0x15c] sm:$0xf]
        %v339 = vld [vmem:[%s249 + $0x160] sm:$0xf]
        %v340 = vld [vmem:[%s249 + $0x164] sm:$0x1]
        %v341 = vld [vmem:[%s249 + $0x168] sm:$0xf]
        %v342 = vld [vmem:[%s249 + $0x16c] sm:$0xf]
        %v343 = vld [vmem:[%s249 + $0x170] sm:$0xf]
        %v344 = vld [vmem:[%s249 + $0x174] sm:$0xf]
        %v345 = vld [vmem:[%s249 + $0x178] sm:$0x1]
        %v346 = vld [vmem:[%s249 + $0x17c] sm:$0xf]
        %v347 = vld [vmem:[%s249 + $0x180] sm:$0xf]
        %v348 = vld [vmem:[%s249 + $0x184] sm:$0xf]
        %v349 = vld [vmem:[%s249 + $0x188] sm:$0xf]
        %v350 = vld [vmem:[%s249 + $0x18c] sm:$0x1]
        %v351 = vld [vmem:[%s249 + $0x190] sm:$0xf]
        %v352 = vld [vmem:[%s249 + $0x194] sm:$0xf]
        %v353 = vld [vmem:[%s249 + $0x198] sm:$0xf]
        %v354 = vld [vmem:[%s249 + $0x19c] sm:$0xf]
        %v355 = vld [vmem:[%s249 + $0x1a0] sm:$0x1]
        %v356 = vld [vmem:[%s249 + $0x1a4] sm:$0xf]
        %v357 = vld [vmem:[%s249 + $0x1a8] sm:$0xf]
        %v358 = vld [vmem:[%s249 + $0x1ac] sm:$0xf]
        %v359 = vld [vmem:[%s249 + $0x1b0] sm:$0xf]
        %v360 = vld [vmem:[%s249 + $0x1b4] sm:$0x1]
        %v361 = vld [vmem:[%s249 + $0x1b8] sm:$0xf]
        %v362 = vld [vmem:[%s249 + $0x1bc] sm:$0xf]
        %v363 = vld [vmem:[%s249 + $0x1c0] sm:$0xf]
        %v364 = vld [vmem:[%s249 + $0x1c4] sm:$0xf]
        %v365 = vld [vmem:[%s249 + $0x1c8] sm:$0x1]
        %v366 = vld [vmem:[%s249 + $0x1cc] sm:$0xf]
        %v367 = vld [vmem:[%s249 + $0x1d0] sm:$0xf]
        %v368 = vld [vmem:[%s249 + $0x1d4] sm:$0xf]
        %v369 = vld [vmem:[%s249 + $0x1d8] sm:$0xf]
        %v370 = vld [vmem:[%s249 + $0x1dc] sm:$0x1]
        %v371 = vld [vmem:[%s249 + $0x1e0] sm:$0xf]
        %v372 = vld [vmem:[%s249 + $0x1e4] sm:$0xf]
        %v373 = vld [vmem:[%s249 + $0x1e8] sm:$0xf]
        %v374 = vld [vmem:[%s249 + $0x1ec] sm:$0xf]
        %v375 = vld [vmem:[%s249 + $0x1f0] sm:$0x1]
        %v376 = vld [vmem:[%s249 + $0x1f4] sm:$0xf]
        %v377 = vld [vmem:[%s249 + $0x1f8] sm:$0xf]
        %v378 = vld [vmem:[%s249 + $0x1fc] sm:$0xf]
        %v379 = vld [vmem:[%s249 + $0x200] sm:$0xf]
        %v380 = vld [vmem:[%s249 + $0x204] sm:$0x1]
        %v381 = vld [vmem:[%s249 + $0x208] sm:$0xf]
        %v382 = vld [vmem:[%s249 + $0x20c] sm:$0xf]
        %v383 = vld [vmem:[%s249 + $0x210] sm:$0xf]
        %v384 = vld [vmem:[%s249 + $0x214] sm:$0xf]
        %v385 = vld [vmem:[%s249 + $0x218] sm:$0x1]
        %v386 = vld [vmem:[%s249 + $0x21c] sm:$0xf]
        %v387 = vld [vmem:[%s249 + $0x220] sm:$0xf]
        %v388 = vld [vmem:[%s249 + $0x224] sm:$0xf]
        %v389 = vld [vmem:[%s249 + $0x228] sm:$0xf]
        %v390 = vld [vmem:[%s249 + $0x22c] sm:$0x1]
        %v391 = vld [vmem:[%s249 + $0x230] sm:$0xf]
        %v392 = vld [vmem:[%s249 + $0x234] sm:$0xf]
        %v393 = vld [vmem:[%s249 + $0x238] sm:$0xf]
        %v394 = vld [vmem:[%s249 + $0x23c] sm:$0xf]
        %v395 = vld [vmem:[%s249 + $0x240] sm:$0x1]
        %v396 = vld [vmem:[%s249 + $0x244] sm:$0xf]
        %v397 = vld [vmem:[%s249 + $0x248] sm:$0xf]
        %v398 = vld [vmem:[%s249 + $0x24c] sm:$0xf]
        %v399 = vld [vmem:[%s249 + $0x250] sm:$0xf]
        %v400 = vld [vmem:[%s249 + $0x254] sm:$0x1]
        %v401 = vld [vmem:[%s249 + $0x258] sm:$0xf]
        %v402 = vld [vmem:[%s249 + $0x25c] sm:$0xf]
        %v403 = vld [vmem:[%s249 + $0x260] sm:$0xf]
        %v404 = vld [vmem:[%s249 + $0x264] sm:$0xf]
        %v405 = vld [vmem:[%s249 + $0x268] sm:$0x1]
        %v406 = vld [vmem:[%s249 + $0x26c] sm:$0xf]
        %v407 = vld [vmem:[%s249 + $0x270] sm:$0xf]
        %v408 = vld [vmem:[%s249 + $0x274] sm:$0xf]
        %v409 = vld [vmem:[%s249 + $0x278] sm:$0xf]
        %v410 = vld [vmem:[%s249 + $0x27c] sm:$0x1]
        %v411 = vld [vmem:[%s249 + $0x280] sm:$0xf]
        %v412 = vld [vmem:[%s249 + $0x284] sm:$0xf]
        %v413 = vld [vmem:[%s249 + $0x288] sm:$0xf]
        %v414 = vld [vmem:[%s249 + $0x28c] sm:$0xf]
        %v415 = vld [vmem:[%s249 + $0x290] sm:$0x1]
        %v416 = vld [vmem:[%s249 + $0x294] sm:$0xf]
        %v417 = vld [vmem:[%s249 + $0x298] sm:$0xf]
        %v418 = vld [vmem:[%s249 + $0x29c] sm:$0xf]
        %v419 = vld [vmem:[%s249 + $0x2a0] sm:$0xf]
        %v420 = vld [vmem:[%s249 + $0x2a4] sm:$0x1]
        %v421 = vld [vmem:[%s1] sm:$0xf]
        %v422 = vld [vmem:[%s1 + $0x4] sm:$0xf]
        %v423 = vld [vmem:[%s1 + $0x8] sm:$0xf]
        %v424 = vld [vmem:[%s1 + $0xc] sm:$0xf]
        %v425 = vld [vmem:[%s1 + $0x10] sm:$0xf]
        %v426 = vld [vmem:[%s1 + $0x14] sm:$0xf]
        %v427 = vld [vmem:[%s1 + $0x18] sm:$0xf]
        %v428 = vld [vmem:[%s1 + $0x1c] sm:$0xf]
        %v429 = vld [vmem:[%s1 + $0x20] sm:$0xf]
        %v430 = vld [vmem:[%s1 + $0x24] sm:$0xf]
        %v431 = vld [vmem:[%s1 + $0x28] sm:$0xf]
        %v432 = vld [vmem:[%s1 + $0x2c] sm:$0xf]
        %v433 = vld [vmem:[%s1 + $0x30] sm:$0xf]
        %v434 = vld [vmem:[%s1 + $0x34] sm:$0xf]
        %v435 = vld [vmem:[%s1 + $0x38] sm:$0xf]
        %v436 = vld [vmem:[%s1 + $0x3c] sm:$0xf]
        %vm437 = vsmask.f32 3328
        %vm438 = vsmask.f32 7440
        %vm439 = vmor %vm437, %vm438
        %v441 = vshrl.u32 %v251, 16
        %v443 = vrot.slane %v441, 4
        %v444 = vshll.u32 %v251, 16
        %v446 = vrot.slane %v444, 5
        %v447 = vor.u32 %v443, %v446
        %v448 = vrot.slane %v447, 4
        %v450 = vshll.u32 %v252, 16
        %v452 = vrot.slane %v450, 5
        %v453 = vsel %vm439, %v448, %v452
        %v454 = vshrl.u32 %v252, 16
        %v456 = vrot.slane %v454, 4
        %v457 = vor.u32 %v456, %v452
        %v458 = vrot.slane %v457, 4
        %v460 = vshll.u32 %v253, 16
        %v462 = vrot.slane %v460, 5
        %v463 = vsel %vm439, %v458, %v462
        %v464 = vshrl.u32 %v253, 16
        %v466 = vrot.slane %v464, 4
        %v467 = vor.u32 %v466, %v462
        %v468 = vrot.slane %v467, 4
        %v470 = vshll.u32 %v254, 16
        %v472 = vrot.slane %v470, 5
        %v473 = vsel %vm439, %v468, %v472
        %v474 = vshrl.u32 %v254, 16
        %v476 = vrot.slane %v474, 4
        %v477 = vor.u32 %v476, %v472
        %v478 = vrot.slane %v477, 4
        %v480 = vshll.u32 %v255, 16
        %v482 = vrot.slane %v480, 5
        %v483 = vsel %vm439, %v478, %v482
        %v485 = vshrl.u32 %v256, 16
        %v487 = vrot.slane %v485, 4
        %v488 = vshll.u32 %v256, 16
        %v490 = vrot.slane %v488, 5
        %v491 = vor.u32 %v487, %v490
        %v492 = vrot.slane %v491, 4
        %v494 = vshll.u32 %v257, 16
        %v496 = vrot.slane %v494, 5
        %v497 = vsel %vm439, %v492, %v496
        %v498 = vshrl.u32 %v257, 16
        %v500 = vrot.slane %v498, 4
        %v501 = vor.u32 %v500, %v496
        %v502 = vrot.slane %v501, 4
        %v504 = vshll.u32 %v258, 16
        %v506 = vrot.slane %v504, 5
        %v507 = vsel %vm439, %v502, %v506
        %v508 = vshrl.u32 %v258, 16
        %v510 = vrot.slane %v508, 4
        %v511 = vor.u32 %v510, %v506
        %v512 = vrot.slane %v511, 4
        %v514 = vshll.u32 %v259, 16
        %v516 = vrot.slane %v514, 5
        %v517 = vsel %vm439, %v512, %v516
        %v518 = vshrl.u32 %v259, 16
        %v520 = vrot.slane %v518, 4
        %v521 = vor.u32 %v520, %v516
        %v522 = vrot.slane %v521, 4
        %v524 = vshll.u32 %v260, 16
        %v526 = vrot.slane %v524, 5
        %v527 = vsel %vm439, %v522, %v526
        %v529 = vshrl.u32 %v261, 16
        %v531 = vrot.slane %v529, 4
        %v532 = vshll.u32 %v261, 16
        %v534 = vrot.slane %v532, 5
        %v535 = vor.u32 %v531, %v534
        %v536 = vrot.slane %v535, 4
        %v538 = vshll.u32 %v262, 16
        %v540 = vrot.slane %v538, 5
        %v541 = vsel %vm439, %v536, %v540
        %v542 = vshrl.u32 %v262, 16
        %v544 = vrot.slane %v542, 4
        %v545 = vor.u32 %v544, %v540
        %v546 = vrot.slane %v545, 4
        %v548 = vshll.u32 %v263, 16
        %v550 = vrot.slane %v548, 5
        %v551 = vsel %vm439, %v546, %v550
        %v552 = vshrl.u32 %v263, 16
        %v554 = vrot.slane %v552, 4
        %v555 = vor.u32 %v554, %v550
        %v556 = vrot.slane %v555, 4
        %v558 = vshll.u32 %v264, 16
        %v560 = vrot.slane %v558, 5
        %v561 = vsel %vm439, %v556, %v560
        %v562 = vshrl.u32 %v264, 16
        %v564 = vrot.slane %v562, 4
        %v565 = vor.u32 %v564, %v560
        %v566 = vrot.slane %v565, 4
        %v568 = vshll.u32 %v265, 16
        %v570 = vrot.slane %v568, 5
        %v571 = vsel %vm439, %v566, %v570
        %v573 = vshrl.u32 %v266, 16
        %v575 = vrot.slane %v573, 4
        %v576 = vshll.u32 %v266, 16
        %v578 = vrot.slane %v576, 5
        %v579 = vor.u32 %v575, %v578
        %v580 = vrot.slane %v579, 4
        %v582 = vshll.u32 %v267, 16
        %v584 = vrot.slane %v582, 5
        %v585 = vsel %vm439, %v580, %v584
        %v586 = vshrl.u32 %v267, 16
        %v588 = vrot.slane %v586, 4
        %v589 = vor.u32 %v588, %v584
        %v590 = vrot.slane %v589, 4
        %v592 = vshll.u32 %v268, 16
        %v594 = vrot.slane %v592, 5
        %v595 = vsel %vm439, %v590, %v594
        %v596 = vshrl.u32 %v268, 16
        %v598 = vrot.slane %v596, 4
        %v599 = vor.u32 %v598, %v594
        %v600 = vrot.slane %v599, 4
        %v602 = vshll.u32 %v269, 16
        %v604 = vrot.slane %v602, 5
        %v605 = vsel %vm439, %v600, %v604
        %v606 = vshrl.u32 %v269, 16
        %v608 = vrot.slane %v606, 4
        %v609 = vor.u32 %v608, %v604
        %v610 = vrot.slane %v609, 4
        %v612 = vshll.u32 %v270, 16
        %v614 = vrot.slane %v612, 5
        %v615 = vsel %vm439, %v610, %v614
        %v617 = vshrl.u32 %v271, 16
        %v619 = vrot.slane %v617, 4
        %v620 = vshll.u32 %v271, 16
        %v622 = vrot.slane %v620, 5
        %v623 = vor.u32 %v619, %v622
        %v624 = vrot.slane %v623, 4
        %v626 = vshll.u32 %v272, 16
        %v628 = vrot.slane %v626, 5
        %v629 = vsel %vm439, %v624, %v628
        %v630 = vshrl.u32 %v272, 16
        %v632 = vrot.slane %v630, 4
        %v633 = vor.u32 %v632, %v628
        %v634 = vrot.slane %v633, 4
        %v636 = vshll.u32 %v273, 16
        %v638 = vrot.slane %v636, 5
        %v639 = vsel %vm439, %v634, %v638
        %v640 = vshrl.u32 %v273, 16
        %v642 = vrot.slane %v640, 4
        %v643 = vor.u32 %v642, %v638
        %v644 = vrot.slane %v643, 4
        %v646 = vshll.u32 %v274, 16
        %v648 = vrot.slane %v646, 5
        %v649 = vsel %vm439, %v644, %v648
        %v650 = vshrl.u32 %v274, 16
        %v652 = vrot.slane %v650, 4
        %v653 = vor.u32 %v652, %v648
        %v654 = vrot.slane %v653, 4
        %v656 = vshll.u32 %v275, 16
        %v658 = vrot.slane %v656, 5
        %v659 = vsel %vm439, %v654, %v658
        %v661 = vshrl.u32 %v276, 16
        %v663 = vrot.slane %v661, 4
        %v664 = vshll.u32 %v276, 16
        %v666 = vrot.slane %v664, 5
        %v667 = vor.u32 %v663, %v666
        %v668 = vrot.slane %v667, 4
        %v670 = vshll.u32 %v277, 16
        %v672 = vrot.slane %v670, 5
        %v673 = vsel %vm439, %v668, %v672
        %v674 = vshrl.u32 %v277, 16
        %v676 = vrot.slane %v674, 4
        %v677 = vor.u32 %v676, %v672
        %v678 = vrot.slane %v677, 4
        %v680 = vshll.u32 %v278, 16
        %v682 = vrot.slane %v680, 5
        %v683 = vsel %vm439, %v678, %v682
        %v684 = vshrl.u32 %v278, 16
        %v686 = vrot.slane %v684, 4
        %v687 = vor.u32 %v686, %v682
        %v688 = vrot.slane %v687, 4
        %v690 = vshll.u32 %v279, 16
        %v692 = vrot.slane %v690, 5
        %v693 = vsel %vm439, %v688, %v692
        %v694 = vshrl.u32 %v279, 16
        %v696 = vrot.slane %v694, 4
        %v697 = vor.u32 %v696, %v692
        %v698 = vrot.slane %v697, 4
        %v700 = vshll.u32 %v280, 16
        %v702 = vrot.slane %v700, 5
        %v703 = vsel %vm439, %v698, %v702
        %v705 = vshrl.u32 %v281, 16
        %v707 = vrot.slane %v705, 4
        %v708 = vshll.u32 %v281, 16
        %v710 = vrot.slane %v708, 5
        %v711 = vor.u32 %v707, %v710
        %v712 = vrot.slane %v711, 4
        %v714 = vshll.u32 %v282, 16
        %v716 = vrot.slane %v714, 5
        %v717 = vsel %vm439, %v712, %v716
        %v718 = vshrl.u32 %v282, 16
        %v720 = vrot.slane %v718, 4
        %v721 = vor.u32 %v720, %v716
        %v722 = vrot.slane %v721, 4
        %v724 = vshll.u32 %v283, 16
        %v726 = vrot.slane %v724, 5
        %v727 = vsel %vm439, %v722, %v726
        %v728 = vshrl.u32 %v283, 16
        %v730 = vrot.slane %v728, 4
        %v731 = vor.u32 %v730, %v726
        %v732 = vrot.slane %v731, 4
        %v734 = vshll.u32 %v284, 16
        %v736 = vrot.slane %v734, 5
        %v737 = vsel %vm439, %v732, %v736
        %v738 = vshrl.u32 %v284, 16
        %v740 = vrot.slane %v738, 4
        %v741 = vor.u32 %v740, %v736
        %v742 = vrot.slane %v741, 4
        %v744 = vshll.u32 %v285, 16
        %v746 = vrot.slane %v744, 5
        %v747 = vsel %vm439, %v742, %v746
        %v749 = vshrl.u32 %v286, 16
        %v751 = vrot.slane %v749, 4
        %v752 = vshll.u32 %v286, 16
        %v754 = vrot.slane %v752, 5
        %v755 = vor.u32 %v751, %v754
        %v756 = vrot.slane %v755, 4
        %v758 = vshll.u32 %v287, 16
        %v760 = vrot.slane %v758, 5
        %v761 = vsel %vm439, %v756, %v760
        %v762 = vshrl.u32 %v287, 16
        %v764 = vrot.slane %v762, 4
        %v765 = vor.u32 %v764, %v760
        %v766 = vrot.slane %v765, 4
        %v768 = vshll.u32 %v288, 16
        %v770 = vrot.slane %v768, 5
        %v771 = vsel %vm439, %v766, %v770
        %v772 = vshrl.u32 %v288, 16
        %v774 = vrot.slane %v772, 4
        %v775 = vor.u32 %v774, %v770
        %v776 = vrot.slane %v775, 4
        %v778 = vshll.u32 %v289, 16
        %v780 = vrot.slane %v778, 5
        %v781 = vsel %vm439, %v776, %v780
        %v782 = vshrl.u32 %v289, 16
        %v784 = vrot.slane %v782, 4
        %v785 = vor.u32 %v784, %v780
        %v786 = vrot.slane %v785, 4
        %v788 = vshll.u32 %v290, 16
        %v790 = vrot.slane %v788, 5
        %v791 = vsel %vm439, %v786, %v790
        %v793 = vshrl.u32 %v291, 16
        %v795 = vrot.slane %v793, 4
        %v796 = vshll.u32 %v291, 16
        %v798 = vrot.slane %v796, 5
        %v799 = vor.u32 %v795, %v798
        %v800 = vrot.slane %v799, 4
        %v802 = vshll.u32 %v292, 16
        %v804 = vrot.slane %v802, 5
        %v805 = vsel %vm439, %v800, %v804
        %v806 = vshrl.u32 %v292, 16
        %v808 = vrot.slane %v806, 4
        %v809 = vor.u32 %v808, %v804
        %v810 = vrot.slane %v809, 4
        %v812 = vshll.u32 %v293, 16
        %v814 = vrot.slane %v812, 5
        %v815 = vsel %vm439, %v810, %v814
        %v816 = vshrl.u32 %v293, 16
        %v818 = vrot.slane %v816, 4
        %v819 = vor.u32 %v818, %v814
        %v820 = vrot.slane %v819, 4
        %v822 = vshll.u32 %v294, 16
        %v824 = vrot.slane %v822, 5
        %v825 = vsel %vm439, %v820, %v824
        %v826 = vshrl.u32 %v294, 16
        %v828 = vrot.slane %v826, 4
        %v829 = vor.u32 %v828, %v824
        %v830 = vrot.slane %v829, 4
        %v832 = vshll.u32 %v295, 16
        %v834 = vrot.slane %v832, 5
        %v835 = vsel %vm439, %v830, %v834
        %v837 = vshrl.u32 %v296, 16
        %v839 = vrot.slane %v837, 4
        %v840 = vshll.u32 %v296, 16
        %v842 = vrot.slane %v840, 5
        %v843 = vor.u32 %v839, %v842
        %v844 = vrot.slane %v843, 4
        %v846 = vshll.u32 %v297, 16
        %v848 = vrot.slane %v846, 5
        %v849 = vsel %vm439, %v844, %v848
        %v850 = vshrl.u32 %v297, 16
        %v852 = vrot.slane %v850, 4
        %v853 = vor.u32 %v852, %v848
        %v854 = vrot.slane %v853, 4
        %v856 = vshll.u32 %v298, 16
        %v858 = vrot.slane %v856, 5
        %v859 = vsel %vm439, %v854, %v858
        %v860 = vshrl.u32 %v298, 16
        %v862 = vrot.slane %v860, 4
        %v863 = vor.u32 %v862, %v858
        %v864 = vrot.slane %v863, 4
        %v866 = vshll.u32 %v299, 16
        %v868 = vrot.slane %v866, 5
        %v869 = vsel %vm439, %v864, %v868
        %v870 = vshrl.u32 %v299, 16
        %v872 = vrot.slane %v870, 4
        %v873 = vor.u32 %v872, %v868
        %v874 = vrot.slane %v873, 4
        %v876 = vshll.u32 %v300, 16
        %v878 = vrot.slane %v876, 5
        %v879 = vsel %vm439, %v874, %v878
        %v881 = vshrl.u32 %v301, 16
        %v883 = vrot.slane %v881, 4
        %v884 = vshll.u32 %v301, 16
        %v886 = vrot.slane %v884, 5
        %v887 = vor.u32 %v883, %v886
        %v888 = vrot.slane %v887, 4
        %v890 = vshll.u32 %v302, 16
        %v892 = vrot.slane %v890, 5
        %v893 = vsel %vm439, %v888, %v892
        %v894 = vshrl.u32 %v302, 16
        %v896 = vrot.slane %v894, 4
        %v897 = vor.u32 %v896, %v892
        %v898 = vrot.slane %v897, 4
        %v900 = vshll.u32 %v303, 16
        %v902 = vrot.slane %v900, 5
        %v903 = vsel %vm439, %v898, %v902
        %v904 = vshrl.u32 %v303, 16
        %v906 = vrot.slane %v904, 4
        %v907 = vor.u32 %v906, %v902
        %v908 = vrot.slane %v907, 4
        %v910 = vshll.u32 %v304, 16
        %v912 = vrot.slane %v910, 5
        %v913 = vsel %vm439, %v908, %v912
        %v914 = vshrl.u32 %v304, 16
        %v916 = vrot.slane %v914, 4
        %v917 = vor.u32 %v916, %v912
        %v918 = vrot.slane %v917, 4
        %v920 = vshll.u32 %v305, 16
        %v922 = vrot.slane %v920, 5
        %v923 = vsel %vm439, %v918, %v922
        %v925 = vshrl.u32 %v306, 16
        %v927 = vrot.slane %v925, 4
        %v928 = vshll.u32 %v306, 16
        %v930 = vrot.slane %v928, 5
        %v931 = vor.u32 %v927, %v930
        %v932 = vrot.slane %v931, 4
        %v934 = vshll.u32 %v307, 16
        %v936 = vrot.slane %v934, 5
        %v937 = vsel %vm439, %v932, %v936
        %v938 = vshrl.u32 %v307, 16
        %v940 = vrot.slane %v938, 4
        %v941 = vor.u32 %v940, %v936
        %v942 = vrot.slane %v941, 4
        %v944 = vshll.u32 %v308, 16
        %v946 = vrot.slane %v944, 5
        %v947 = vsel %vm439, %v942, %v946
        %v948 = vshrl.u32 %v308, 16
        %v950 = vrot.slane %v948, 4
        %v951 = vor.u32 %v950, %v946
        %v952 = vrot.slane %v951, 4
        %v954 = vshll.u32 %v309, 16
        %v956 = vrot.slane %v954, 5
        %v957 = vsel %vm439, %v952, %v956
        %v958 = vshrl.u32 %v309, 16
        %v960 = vrot.slane %v958, 4
        %v961 = vor.u32 %v960, %v956
        %v962 = vrot.slane %v961, 4
        %v964 = vshll.u32 %v310, 16
        %v966 = vrot.slane %v964, 5
        %v967 = vsel %vm439, %v962, %v966
        %v969 = vshrl.u32 %v311, 16
        %v971 = vrot.slane %v969, 4
        %v972 = vshll.u32 %v311, 16
        %v974 = vrot.slane %v972, 5
        %v975 = vor.u32 %v971, %v974
        %v976 = vrot.slane %v975, 4
        %v978 = vshll.u32 %v312, 16
        %v980 = vrot.slane %v978, 5
        %v981 = vsel %vm439, %v976, %v980
        %v982 = vshrl.u32 %v312, 16
        %v984 = vrot.slane %v982, 4
        %v985 = vor.u32 %v984, %v980
        %v986 = vrot.slane %v985, 4
        %v988 = vshll.u32 %v313, 16
        %v990 = vrot.slane %v988, 5
        %v991 = vsel %vm439, %v986, %v990
        %v992 = vshrl.u32 %v313, 16
        %v994 = vrot.slane %v992, 4
        %v995 = vor.u32 %v994, %v990
        %v996 = vrot.slane %v995, 4
        %v998 = vshll.u32 %v314, 16
        %v1000 = vrot.slane %v998, 5
        %v1001 = vsel %vm439, %v996, %v1000
        %v1002 = vshrl.u32 %v314, 16
        %v1004 = vrot.slane %v1002, 4
        %v1005 = vor.u32 %v1004, %v1000
        %v1006 = vrot.slane %v1005, 4
        %v1008 = vshll.u32 %v315, 16
        %v1010 = vrot.slane %v1008, 5
        %v1011 = vsel %vm439, %v1006, %v1010
        %v1013 = vshrl.u32 %v316, 16
        %v1015 = vrot.slane %v1013, 4
        %v1016 = vshll.u32 %v316, 16
        %v1018 = vrot.slane %v1016, 5
        %v1019 = vor.u32 %v1015, %v1018
        %v1020 = vrot.slane %v1019, 4
        %v1022 = vshll.u32 %v317, 16
        %v1024 = vrot.slane %v1022, 5
        %v1025 = vsel %vm439, %v1020, %v1024
        %v1026 = vshrl.u32 %v317, 16
        %v1028 = vrot.slane %v1026, 4
        %v1029 = vor.u32 %v1028, %v1024
        %v1030 = vrot.slane %v1029, 4
        %v1032 = vshll.u32 %v318, 16
        %v1034 = vrot.slane %v1032, 5
        %v1035 = vsel %vm439, %v1030, %v1034
        %v1036 = vshrl.u32 %v318, 16
        %v1038 = vrot.slane %v1036, 4
        %v1039 = vor.u32 %v1038, %v1034
        %v1040 = vrot.slane %v1039, 4
        %v1042 = vshll.u32 %v319, 16
        %v1044 = vrot.slane %v1042, 5
        %v1045 = vsel %vm439, %v1040, %v1044
        %v1046 = vshrl.u32 %v319, 16
        %v1048 = vrot.slane %v1046, 4
        %v1049 = vor.u32 %v1048, %v1044
        %v1050 = vrot.slane %v1049, 4
        %v1052 = vshll.u32 %v320, 16
        %v1054 = vrot.slane %v1052, 5
        %v1055 = vsel %vm439, %v1050, %v1054
        %v1057 = vshrl.u32 %v321, 16
        %v1059 = vrot.slane %v1057, 4
        %v1060 = vshll.u32 %v321, 16
        %v1062 = vrot.slane %v1060, 5
        %v1063 = vor.u32 %v1059, %v1062
        %v1064 = vrot.slane %v1063, 4
        %v1066 = vshll.u32 %v322, 16
        %v1068 = vrot.slane %v1066, 5
        %v1069 = vsel %vm439, %v1064, %v1068
        %v1070 = vshrl.u32 %v322, 16
        %v1072 = vrot.slane %v1070, 4
        %v1073 = vor.u32 %v1072, %v1068
        %v1074 = vrot.slane %v1073, 4
        %v1076 = vshll.u32 %v323, 16
        %v1078 = vrot.slane %v1076, 5
        %v1079 = vsel %vm439, %v1074, %v1078
        %v1080 = vshrl.u32 %v323, 16
        %v1082 = vrot.slane %v1080, 4
        %v1083 = vor.u32 %v1082, %v1078
        %v1084 = vrot.slane %v1083, 4
        %v1086 = vshll.u32 %v324, 16
        %v1088 = vrot.slane %v1086, 5
        %v1089 = vsel %vm439, %v1084, %v1088
        %v1090 = vshrl.u32 %v324, 16
        %v1092 = vrot.slane %v1090, 4
        %v1093 = vor.u32 %v1092, %v1088
        %v1094 = vrot.slane %v1093, 4
        %v1096 = vshll.u32 %v325, 16
        %v1098 = vrot.slane %v1096, 5
        %v1099 = vsel %vm439, %v1094, %v1098
        %v1101 = vshrl.u32 %v326, 16
        %v1103 = vrot.slane %v1101, 4
        %v1104 = vshll.u32 %v326, 16
        %v1106 = vrot.slane %v1104, 5
        %v1107 = vor.u32 %v1103, %v1106
        %v1108 = vrot.slane %v1107, 4
        %v1110 = vshll.u32 %v327, 16
        %v1112 = vrot.slane %v1110, 5
        %v1113 = vsel %vm439, %v1108, %v1112
        %v1114 = vshrl.u32 %v327, 16
        %v1116 = vrot.slane %v1114, 4
        %v1117 = vor.u32 %v1116, %v1112
        %v1118 = vrot.slane %v1117, 4
        %v1120 = vshll.u32 %v328, 16
        %v1122 = vrot.slane %v1120, 5
        %v1123 = vsel %vm439, %v1118, %v1122
        %v1124 = vshrl.u32 %v328, 16
        %v1126 = vrot.slane %v1124, 4
        %v1127 = vor.u32 %v1126, %v1122
        %v1128 = vrot.slane %v1127, 4
        %v1130 = vshll.u32 %v329, 16
        %v1132 = vrot.slane %v1130, 5
        %v1133 = vsel %vm439, %v1128, %v1132
        %v1134 = vshrl.u32 %v329, 16
        %v1136 = vrot.slane %v1134, 4
        %v1137 = vor.u32 %v1136, %v1132
        %v1138 = vrot.slane %v1137, 4
        %v1140 = vshll.u32 %v330, 16
        %v1142 = vrot.slane %v1140, 5
        %v1143 = vsel %vm439, %v1138, %v1142
        %v1145 = vshrl.u32 %v331, 16
        %v1147 = vrot.slane %v1145, 4
        %v1148 = vshll.u32 %v331, 16
        %v1150 = vrot.slane %v1148, 5
        %v1151 = vor.u32 %v1147, %v1150
        %v1152 = vrot.slane %v1151, 4
        %v1154 = vshll.u32 %v332, 16
        %v1156 = vrot.slane %v1154, 5
        %v1157 = vsel %vm439, %v1152, %v1156
        %v1158 = vshrl.u32 %v332, 16
        %v1160 = vrot.slane %v1158, 4
        %v1161 = vor.u32 %v1160, %v1156
        %v1162 = vrot.slane %v1161, 4
        %v1164 = vshll.u32 %v333, 16
        %v1166 = vrot.slane %v1164, 5
        %v1167 = vsel %vm439, %v1162, %v1166
        %v1168 = vshrl.u32 %v333, 16
        %v1170 = vrot.slane %v1168, 4
        %v1171 = vor.u32 %v1170, %v1166
        %v1172 = vrot.slane %v1171, 4
        %v1174 = vshll.u32 %v334, 16
        %v1176 = vrot.slane %v1174, 5
        %v1177 = vsel %vm439, %v1172, %v1176
        %v1178 = vshrl.u32 %v334, 16
        %v1180 = vrot.slane %v1178, 4
        %v1181 = vor.u32 %v1180, %v1176
        %v1182 = vrot.slane %v1181, 4
        %v1184 = vshll.u32 %v335, 16
        %v1186 = vrot.slane %v1184, 5
        %v1187 = vsel %vm439, %v1182, %v1186
        %v1189 = vshrl.u32 %v336, 16
        %v1191 = vrot.slane %v1189, 4
        %v1192 = vshll.u32 %v336, 16
        %v1194 = vrot.slane %v1192, 5
        %v1195 = vor.u32 %v1191, %v1194
        %v1196 = vrot.slane %v1195, 4
        %v1198 = vshll.u32 %v337, 16
        %v1200 = vrot.slane %v1198, 5
        %v1201 = vsel %vm439, %v1196, %v1200
        %v1202 = vshrl.u32 %v337, 16
        %v1204 = vrot.slane %v1202, 4
        %v1205 = vor.u32 %v1204, %v1200
        %v1206 = vrot.slane %v1205, 4
        %v1208 = vshll.u32 %v338, 16
        %v1210 = vrot.slane %v1208, 5
        %v1211 = vsel %vm439, %v1206, %v1210
        %v1212 = vshrl.u32 %v338, 16
        %v1214 = vrot.slane %v1212, 4
        %v1215 = vor.u32 %v1214, %v1210
        %v1216 = vrot.slane %v1215, 4
        %v1218 = vshll.u32 %v339, 16
        %v1220 = vrot.slane %v1218, 5
        %v1221 = vsel %vm439, %v1216, %v1220
        %v1222 = vshrl.u32 %v339, 16
        %v1224 = vrot.slane %v1222, 4
        %v1225 = vor.u32 %v1224, %v1220
        %v1226 = vrot.slane %v1225, 4
        %v1228 = vshll.u32 %v340, 16
        %v1230 = vrot.slane %v1228, 5
        %v1231 = vsel %vm439, %v1226, %v1230
        %v1233 = vshrl.u32 %v341, 16
        %v1235 = vrot.slane %v1233, 4
        %v1236 = vshll.u32 %v341, 16
        %v1238 = vrot.slane %v1236, 5
        %v1239 = vor.u32 %v1235, %v1238
        %v1240 = vrot.slane %v1239, 4
        %v1242 = vshll.u32 %v342, 16
        %v1244 = vrot.slane %v1242, 5
        %v1245 = vsel %vm439, %v1240, %v1244
        %v1246 = vshrl.u32 %v342, 16
        %v1248 = vrot.slane %v1246, 4
        %v1249 = vor.u32 %v1248, %v1244
        %v1250 = vrot.slane %v1249, 4
        %v1252 = vshll.u32 %v343, 16
        %v1254 = vrot.slane %v1252, 5
        %v1255 = vsel %vm439, %v1250, %v1254
        %v1256 = vshrl.u32 %v343, 16
        %v1258 = vrot.slane %v1256, 4
        %v1259 = vor.u32 %v1258, %v1254
        %v1260 = vrot.slane %v1259, 4
        %v1262 = vshll.u32 %v344, 16
        %v1264 = vrot.slane %v1262, 5
        %v1265 = vsel %vm439, %v1260, %v1264
        %v1266 = vshrl.u32 %v344, 16
        %v1268 = vrot.slane %v1266, 4
        %v1269 = vor.u32 %v1268, %v1264
        %v1270 = vrot.slane %v1269, 4
        %v1272 = vshll.u32 %v345, 16
        %v1274 = vrot.slane %v1272, 5
        %v1275 = vsel %vm439, %v1270, %v1274
        %v1277 = vshrl.u32 %v346, 16
        %v1279 = vrot.slane %v1277, 4
        %v1280 = vshll.u32 %v346, 16
        %v1282 = vrot.slane %v1280, 5
        %v1283 = vor.u32 %v1279, %v1282
        %v1284 = vrot.slane %v1283, 4
        %v1286 = vshll.u32 %v347, 16
        %v1288 = vrot.slane %v1286, 5
        %v1289 = vsel %vm439, %v1284, %v1288
        %v1290 = vshrl.u32 %v347, 16
        %v1292 = vrot.slane %v1290, 4
        %v1293 = vor.u32 %v1292, %v1288
        %v1294 = vrot.slane %v1293, 4
        %v1296 = vshll.u32 %v348, 16
        %v1298 = vrot.slane %v1296, 5
        %v1299 = vsel %vm439, %v1294, %v1298
        %v1300 = vshrl.u32 %v348, 16
        %v1302 = vrot.slane %v1300, 4
        %v1303 = vor.u32 %v1302, %v1298
        %v1304 = vrot.slane %v1303, 4
        %v1306 = vshll.u32 %v349, 16
        %v1308 = vrot.slane %v1306, 5
        %v1309 = vsel %vm439, %v1304, %v1308
        %v1310 = vshrl.u32 %v349, 16
        %v1312 = vrot.slane %v1310, 4
        %v1313 = vor.u32 %v1312, %v1308
        %v1314 = vrot.slane %v1313, 4
        %v1316 = vshll.u32 %v350, 16
        %v1318 = vrot.slane %v1316, 5
        %v1319 = vsel %vm439, %v1314, %v1318
        %v1321 = vshrl.u32 %v351, 16
        %v1323 = vrot.slane %v1321, 4
        %v1324 = vshll.u32 %v351, 16
        %v1326 = vrot.slane %v1324, 5
        %v1327 = vor.u32 %v1323, %v1326
        %v1328 = vrot.slane %v1327, 4
        %v1330 = vshll.u32 %v352, 16
        %v1332 = vrot.slane %v1330, 5
        %v1333 = vsel %vm439, %v1328, %v1332
        %v1334 = vshrl.u32 %v352, 16
        %v1336 = vrot.slane %v1334, 4
        %v1337 = vor.u32 %v1336, %v1332
        %v1338 = vrot.slane %v1337, 4
        %v1340 = vshll.u32 %v353, 16
        %v1342 = vrot.slane %v1340, 5
        %v1343 = vsel %vm439, %v1338, %v1342
        %v1344 = vshrl.u32 %v353, 16
        %v1346 = vrot.slane %v1344, 4
        %v1347 = vor.u32 %v1346, %v1342
        %v1348 = vrot.slane %v1347, 4
        %v1350 = vshll.u32 %v354, 16
        %v1352 = vrot.slane %v1350, 5
        %v1353 = vsel %vm439, %v1348, %v1352
        %v1354 = vshrl.u32 %v354, 16
        %v1356 = vrot.slane %v1354, 4
        %v1357 = vor.u32 %v1356, %v1352
        %v1358 = vrot.slane %v1357, 4
        %v1360 = vshll.u32 %v355, 16
        %v1362 = vrot.slane %v1360, 5
        %v1363 = vsel %vm439, %v1358, %v1362
        %v1365 = vshrl.u32 %v356, 16
        %v1367 = vrot.slane %v1365, 4
        %v1368 = vshll.u32 %v356, 16
        %v1370 = vrot.slane %v1368, 5
        %v1371 = vor.u32 %v1367, %v1370
        %v1372 = vrot.slane %v1371, 4
        %v1374 = vshll.u32 %v357, 16
        %v1376 = vrot.slane %v1374, 5
        %v1377 = vsel %vm439, %v1372, %v1376
        %v1378 = vshrl.u32 %v357, 16
        %v1380 = vrot.slane %v1378, 4
        %v1381 = vor.u32 %v1380, %v1376
        %v1382 = vrot.slane %v1381, 4
        %v1384 = vshll.u32 %v358, 16
        %v1386 = vrot.slane %v1384, 5
        %v1387 = vsel %vm439, %v1382, %v1386
        %v1388 = vshrl.u32 %v358, 16
        %v1390 = vrot.slane %v1388, 4
        %v1391 = vor.u32 %v1390, %v1386
        %v1392 = vrot.slane %v1391, 4
        %v1394 = vshll.u32 %v359, 16
        %v1396 = vrot.slane %v1394, 5
        %v1397 = vsel %vm439, %v1392, %v1396
        %v1398 = vshrl.u32 %v359, 16
        %v1400 = vrot.slane %v1398, 4
        %v1401 = vor.u32 %v1400, %v1396
        %v1402 = vrot.slane %v1401, 4
        %v1404 = vshll.u32 %v360, 16
        %v1406 = vrot.slane %v1404, 5
        %v1407 = vsel %vm439, %v1402, %v1406
        %v1409 = vshrl.u32 %v361, 16
        %v1411 = vrot.slane %v1409, 4
        %v1412 = vshll.u32 %v361, 16
        %v1414 = vrot.slane %v1412, 5
        %v1415 = vor.u32 %v1411, %v1414
        %v1416 = vrot.slane %v1415, 4
        %v1418 = vshll.u32 %v362, 16
        %v1420 = vrot.slane %v1418, 5
        %v1421 = vsel %vm439, %v1416, %v1420
        %v1422 = vshrl.u32 %v362, 16
        %v1424 = vrot.slane %v1422, 4
        %v1425 = vor.u32 %v1424, %v1420
        %v1426 = vrot.slane %v1425, 4
        %v1428 = vshll.u32 %v363, 16
        %v1430 = vrot.slane %v1428, 5
        %v1431 = vsel %vm439, %v1426, %v1430
        %v1432 = vshrl.u32 %v363, 16
        %v1434 = vrot.slane %v1432, 4
        %v1435 = vor.u32 %v1434, %v1430
        %v1436 = vrot.slane %v1435, 4
        %v1438 = vshll.u32 %v364, 16
        %v1440 = vrot.slane %v1438, 5
        %v1441 = vsel %vm439, %v1436, %v1440
        %v1442 = vshrl.u32 %v364, 16
        %v1444 = vrot.slane %v1442, 4
        %v1445 = vor.u32 %v1444, %v1440
        %v1446 = vrot.slane %v1445, 4
        %v1448 = vshll.u32 %v365, 16
        %v1450 = vrot.slane %v1448, 5
        %v1451 = vsel %vm439, %v1446, %v1450
        %v1453 = vshrl.u32 %v366, 16
        %v1455 = vrot.slane %v1453, 4
        %v1456 = vshll.u32 %v366, 16
        %v1458 = vrot.slane %v1456, 5
        %v1459 = vor.u32 %v1455, %v1458
        %v1460 = vrot.slane %v1459, 4
        %v1462 = vshll.u32 %v367, 16
        %v1464 = vrot.slane %v1462, 5
        %v1465 = vsel %vm439, %v1460, %v1464
        %v1466 = vshrl.u32 %v367, 16
        %v1468 = vrot.slane %v1466, 4
        %v1469 = vor.u32 %v1468, %v1464
        %v1470 = vrot.slane %v1469, 4
        %v1472 = vshll.u32 %v368, 16
        %v1474 = vrot.slane %v1472, 5
        %v1475 = vsel %vm439, %v1470, %v1474
        %v1476 = vshrl.u32 %v368, 16
        %v1478 = vrot.slane %v1476, 4
        %v1479 = vor.u32 %v1478, %v1474
        %v1480 = vrot.slane %v1479, 4
        %v1482 = vshll.u32 %v369, 16
        %v1484 = vrot.slane %v1482, 5
        %v1485 = vsel %vm439, %v1480, %v1484
        %v1486 = vshrl.u32 %v369, 16
        %v1488 = vrot.slane %v1486, 4
        %v1489 = vor.u32 %v1488, %v1484
        %v1490 = vrot.slane %v1489, 4
        %v1492 = vshll.u32 %v370, 16
        %v1494 = vrot.slane %v1492, 5
        %v1495 = vsel %vm439, %v1490, %v1494
        %v1497 = vshrl.u32 %v371, 16
        %v1499 = vrot.slane %v1497, 4
        %v1500 = vshll.u32 %v371, 16
        %v1502 = vrot.slane %v1500, 5
        %v1503 = vor.u32 %v1499, %v1502
        %v1504 = vrot.slane %v1503, 4
        %v1506 = vshll.u32 %v372, 16
        %v1508 = vrot.slane %v1506, 5
        %v1509 = vsel %vm439, %v1504, %v1508
        %v1510 = vshrl.u32 %v372, 16
        %v1512 = vrot.slane %v1510, 4
        %v1513 = vor.u32 %v1512, %v1508
        %v1514 = vrot.slane %v1513, 4
        %v1516 = vshll.u32 %v373, 16
        %v1518 = vrot.slane %v1516, 5
        %v1519 = vsel %vm439, %v1514, %v1518
        %v1520 = vshrl.u32 %v373, 16
        %v1522 = vrot.slane %v1520, 4
        %v1523 = vor.u32 %v1522, %v1518
        %v1524 = vrot.slane %v1523, 4
        %v1526 = vshll.u32 %v374, 16
        %v1528 = vrot.slane %v1526, 5
        %v1529 = vsel %vm439, %v1524, %v1528
        %v1530 = vshrl.u32 %v374, 16
        %v1532 = vrot.slane %v1530, 4
        %v1533 = vor.u32 %v1532, %v1528
        %v1534 = vrot.slane %v1533, 4
        %v1536 = vshll.u32 %v375, 16
        %v1538 = vrot.slane %v1536, 5
        %v1539 = vsel %vm439, %v1534, %v1538
        %v1541 = vshrl.u32 %v376, 16
        %v1543 = vrot.slane %v1541, 4
        %v1544 = vshll.u32 %v376, 16
        %v1546 = vrot.slane %v1544, 5
        %v1547 = vor.u32 %v1543, %v1546
        %v1548 = vrot.slane %v1547, 4
        %v1550 = vshll.u32 %v377, 16
        %v1552 = vrot.slane %v1550, 5
        %v1553 = vsel %vm439, %v1548, %v1552
        %v1554 = vshrl.u32 %v377, 16
        %v1556 = vrot.slane %v1554, 4
        %v1557 = vor.u32 %v1556, %v1552
        %v1558 = vrot.slane %v1557, 4
        %v1560 = vshll.u32 %v378, 16
        %v1562 = vrot.slane %v1560, 5
        %v1563 = vsel %vm439, %v1558, %v1562
        %v1564 = vshrl.u32 %v378, 16
        %v1566 = vrot.slane %v1564, 4
        %v1567 = vor.u32 %v1566, %v1562
        %v1568 = vrot.slane %v1567, 4
        %v1570 = vshll.u32 %v379, 16
        %v1572 = vrot.slane %v1570, 5
        %v1573 = vsel %vm439, %v1568, %v1572
        %v1574 = vshrl.u32 %v379, 16
        %v1576 = vrot.slane %v1574, 4
        %v1577 = vor.u32 %v1576, %v1572
        %v1578 = vrot.slane %v1577, 4
        %v1580 = vshll.u32 %v380, 16
        %v1582 = vrot.slane %v1580, 5
        %v1583 = vsel %vm439, %v1578, %v1582
        %v1585 = vshrl.u32 %v381, 16
        %v1587 = vrot.slane %v1585, 4
        %v1588 = vshll.u32 %v381, 16
        %v1590 = vrot.slane %v1588, 5
        %v1591 = vor.u32 %v1587, %v1590
        %v1592 = vrot.slane %v1591, 4
        %v1594 = vshll.u32 %v382, 16
        %v1596 = vrot.slane %v1594, 5
        %v1597 = vsel %vm439, %v1592, %v1596
        %v1598 = vshrl.u32 %v382, 16
        %v1600 = vrot.slane %v1598, 4
        %v1601 = vor.u32 %v1600, %v1596
        %v1602 = vrot.slane %v1601, 4
        %v1604 = vshll.u32 %v383, 16
        %v1606 = vrot.slane %v1604, 5
        %v1607 = vsel %vm439, %v1602, %v1606
        %v1608 = vshrl.u32 %v383, 16
        %v1610 = vrot.slane %v1608, 4
        %v1611 = vor.u32 %v1610, %v1606
        %v1612 = vrot.slane %v1611, 4
        %v1614 = vshll.u32 %v384, 16
        %v1616 = vrot.slane %v1614, 5
        %v1617 = vsel %vm439, %v1612, %v1616
        %v1618 = vshrl.u32 %v384, 16
        %v1620 = vrot.slane %v1618, 4
        %v1621 = vor.u32 %v1620, %v1616
        %v1622 = vrot.slane %v1621, 4
        %v1624 = vshll.u32 %v385, 16
        %v1626 = vrot.slane %v1624, 5
        %v1627 = vsel %vm439, %v1622, %v1626
        %v1629 = vshrl.u32 %v386, 16
        %v1631 = vrot.slane %v1629, 4
        %v1632 = vshll.u32 %v386, 16
        %v1634 = vrot.slane %v1632, 5
        %v1635 = vor.u32 %v1631, %v1634
        %v1636 = vrot.slane %v1635, 4
        %v1638 = vshll.u32 %v387, 16
        %v1640 = vrot.slane %v1638, 5
        %v1641 = vsel %vm439, %v1636, %v1640
        %v1642 = vshrl.u32 %v387, 16
        %v1644 = vrot.slane %v1642, 4
        %v1645 = vor.u32 %v1644, %v1640
        %v1646 = vrot.slane %v1645, 4
        %v1648 = vshll.u32 %v388, 16
        %v1650 = vrot.slane %v1648, 5
        %v1651 = vsel %vm439, %v1646, %v1650
        %v1652 = vshrl.u32 %v388, 16
        %v1654 = vrot.slane %v1652, 4
        %v1655 = vor.u32 %v1654, %v1650
        %v1656 = vrot.slane %v1655, 4
        %v1658 = vshll.u32 %v389, 16
        %v1660 = vrot.slane %v1658, 5
        %v1661 = vsel %vm439, %v1656, %v1660
        %v1662 = vshrl.u32 %v389, 16
        %v1664 = vrot.slane %v1662, 4
        %v1665 = vor.u32 %v1664, %v1660
        %v1666 = vrot.slane %v1665, 4
        %v1668 = vshll.u32 %v390, 16
        %v1670 = vrot.slane %v1668, 5
        %v1671 = vsel %vm439, %v1666, %v1670
        %v1673 = vshrl.u32 %v391, 16
        %v1675 = vrot.slane %v1673, 4
        %v1676 = vshll.u32 %v391, 16
        %v1678 = vrot.slane %v1676, 5
        %v1679 = vor.u32 %v1675, %v1678
        %v1680 = vrot.slane %v1679, 4
        %v1682 = vshll.u32 %v392, 16
        %v1684 = vrot.slane %v1682, 5
        %v1685 = vsel %vm439, %v1680, %v1684
        %v1686 = vshrl.u32 %v392, 16
        %v1688 = vrot.slane %v1686, 4
        %v1689 = vor.u32 %v1688, %v1684
        %v1690 = vrot.slane %v1689, 4
        %v1692 = vshll.u32 %v393, 16
        %v1694 = vrot.slane %v1692, 5
        %v1695 = vsel %vm439, %v1690, %v1694
        %v1696 = vshrl.u32 %v393, 16
        %v1698 = vrot.slane %v1696, 4
        %v1699 = vor.u32 %v1698, %v1694
        %v1700 = vrot.slane %v1699, 4
        %v1702 = vshll.u32 %v394, 16
        %v1704 = vrot.slane %v1702, 5
        %v1705 = vsel %vm439, %v1700, %v1704
        %v1706 = vshrl.u32 %v394, 16
        %v1708 = vrot.slane %v1706, 4
        %v1709 = vor.u32 %v1708, %v1704
        %v1710 = vrot.slane %v1709, 4
        %v1712 = vshll.u32 %v395, 16
        %v1714 = vrot.slane %v1712, 5
        %v1715 = vsel %vm439, %v1710, %v1714
        %v1717 = vshrl.u32 %v396, 16
        %v1719 = vrot.slane %v1717, 4
        %v1720 = vshll.u32 %v396, 16
        %v1722 = vrot.slane %v1720, 5
        %v1723 = vor.u32 %v1719, %v1722
        %v1724 = vrot.slane %v1723, 4
        %v1726 = vshll.u32 %v397, 16
        %v1728 = vrot.slane %v1726, 5
        %v1729 = vsel %vm439, %v1724, %v1728
        %v1730 = vshrl.u32 %v397, 16
        %v1732 = vrot.slane %v1730, 4
        %v1733 = vor.u32 %v1732, %v1728
        %v1734 = vrot.slane %v1733, 4
        %v1736 = vshll.u32 %v398, 16
        %v1738 = vrot.slane %v1736, 5
        %v1739 = vsel %vm439, %v1734, %v1738
        %v1740 = vshrl.u32 %v398, 16
        %v1742 = vrot.slane %v1740, 4
        %v1743 = vor.u32 %v1742, %v1738
        %v1744 = vrot.slane %v1743, 4
        %v1746 = vshll.u32 %v399, 16
        %v1748 = vrot.slane %v1746, 5
        %v1749 = vsel %vm439, %v1744, %v1748
        %v1750 = vshrl.u32 %v399, 16
        %v1752 = vrot.slane %v1750, 4
        %v1753 = vor.u32 %v1752, %v1748
        %v1754 = vrot.slane %v1753, 4
        %v1756 = vshll.u32 %v400, 16
        %v1758 = vrot.slane %v1756, 5
        %v1759 = vsel %vm439, %v1754, %v1758
        %v1761 = vshrl.u32 %v401, 16
        %v1763 = vrot.slane %v1761, 4
        %v1764 = vshll.u32 %v401, 16
        %v1766 = vrot.slane %v1764, 5
        %v1767 = vor.u32 %v1763, %v1766
        %v1768 = vrot.slane %v1767, 4
        %v1770 = vshll.u32 %v402, 16
        %v1772 = vrot.slane %v1770, 5
        %v1773 = vsel %vm439, %v1768, %v1772
        %v1774 = vshrl.u32 %v402, 16
        %v1776 = vrot.slane %v1774, 4
        %v1777 = vor.u32 %v1776, %v1772
        %v1778 = vrot.slane %v1777, 4
        %v1780 = vshll.u32 %v403, 16
        %v1782 = vrot.slane %v1780, 5
        %v1783 = vsel %vm439, %v1778, %v1782
        %v1784 = vshrl.u32 %v403, 16
        %v1786 = vrot.slane %v1784, 4
        %v1787 = vor.u32 %v1786, %v1782
        %v1788 = vrot.slane %v1787, 4
        %v1790 = vshll.u32 %v404, 16
        %v1792 = vrot.slane %v1790, 5
        %v1793 = vsel %vm439, %v1788, %v1792
        %v1794 = vshrl.u32 %v404, 16
        %v1796 = vrot.slane %v1794, 4
        %v1797 = vor.u32 %v1796, %v1792
        %v1798 = vrot.slane %v1797, 4
        %v1800 = vshll.u32 %v405, 16
        %v1802 = vrot.slane %v1800, 5
        %v1803 = vsel %vm439, %v1798, %v1802
        %v1805 = vshrl.u32 %v406, 16
        %v1807 = vrot.slane %v1805, 4
        %v1808 = vshll.u32 %v406, 16
        %v1810 = vrot.slane %v1808, 5
        %v1811 = vor.u32 %v1807, %v1810
        %v1812 = vrot.slane %v1811, 4
        %v1814 = vshll.u32 %v407, 16
        %v1816 = vrot.slane %v1814, 5
        %v1817 = vsel %vm439, %v1812, %v1816
        %v1818 = vshrl.u32 %v407, 16
        %v1820 = vrot.slane %v1818, 4
        %v1821 = vor.u32 %v1820, %v1816
        %v1822 = vrot.slane %v1821, 4
        %v1824 = vshll.u32 %v408, 16
        %v1826 = vrot.slane %v1824, 5
        %v1827 = vsel %vm439, %v1822, %v1826
        %v1828 = vshrl.u32 %v408, 16
        %v1830 = vrot.slane %v1828, 4
        %v1831 = vor.u32 %v1830, %v1826
        %v1832 = vrot.slane %v1831, 4
        %v1834 = vshll.u32 %v409, 16
        %v1836 = vrot.slane %v1834, 5
        %v1837 = vsel %vm439, %v1832, %v1836
        %v1838 = vshrl.u32 %v409, 16
        %v1840 = vrot.slane %v1838, 4
        %v1841 = vor.u32 %v1840, %v1836
        %v1842 = vrot.slane %v1841, 4
        %v1844 = vshll.u32 %v410, 16
        %v1846 = vrot.slane %v1844, 5
        %v1847 = vsel %vm439, %v1842, %v1846
        %s1848 = scalar_lea.vmem %s1, 64
        %v1849 = vld [vmem:[%s1848] sm:$0xf]
        %v1850 = vld [vmem:[%s1848 + $0x4] sm:$0xf]
        %v1851 = vld [vmem:[%s1848 + $0x8] sm:$0xf]
        %v1852 = vld [vmem:[%s1848 + $0xc] sm:$0xf]
        %v1853 = vld [vmem:[%s1848 + $0x10] sm:$0xf]
        %v1854 = vld [vmem:[%s1848 + $0x14] sm:$0xf]
        %v1855 = vld [vmem:[%s1848 + $0x18] sm:$0xf]
        %v1856 = vld [vmem:[%s1848 + $0x1c] sm:$0xf]
        %v1857 = vld [vmem:[%s1848 + $0x20] sm:$0xf]
        %v1858 = vld [vmem:[%s1848 + $0x24] sm:$0xf]
        %v1859 = vld [vmem:[%s1848 + $0x28] sm:$0xf]
        %v1860 = vld [vmem:[%s1848 + $0x2c] sm:$0xf]
        %v1861 = vld [vmem:[%s1848 + $0x30] sm:$0xf]
        %v1862 = vld [vmem:[%s1848 + $0x34] sm:$0xf]
        %v1863 = vld [vmem:[%s1848 + $0x38] sm:$0xf]
        %v1864 = vld [vmem:[%s1848 + $0x3c] sm:$0xf]
        %v1865 = vunpack.c.l.b16 %v453
        %v1866 = vunpack.c.l.b16 %v463
        %v1867 = vunpack.c.l.b16 %v473
        %v1868 = vunpack.c.l.b16 %v483
        %v1869 = vunpack.c.l.b16 %v497
        %v1870 = vunpack.c.l.b16 %v507
        %v1871 = vunpack.c.l.b16 %v517
        %v1872 = vunpack.c.l.b16 %v527
        %v1873 = vunpack.c.l.b16 %v541
        %v1874 = vunpack.c.l.b16 %v551
        %v1875 = vunpack.c.l.b16 %v561
        %v1876 = vunpack.c.l.b16 %v571
        %v1877 = vunpack.c.l.b16 %v585
        %v1878 = vunpack.c.l.b16 %v595
        %v1879 = vunpack.c.l.b16 %v605
        %v1880 = vunpack.c.l.b16 %v615
        %v1881 = vunpack.c.l.b16 %v629
        %v1882 = vunpack.c.l.b16 %v639
        %v1883 = vunpack.c.l.b16 %v649
        %v1884 = vunpack.c.l.b16 %v659
        %v1885 = vunpack.c.l.b16 %v673
        %v1886 = vunpack.c.l.b16 %v683
        %v1887 = vunpack.c.l.b16 %v693
        %v1888 = vunpack.c.l.b16 %v703
        %v1889 = vunpack.c.l.b16 %v717
        %v1890 = vunpack.c.l.b16 %v727
        %v1891 = vunpack.c.l.b16 %v737
        %v1892 = vunpack.c.l.b16 %v747
        %v1893 = vunpack.c.l.b16 %v761
        %v1894 = vunpack.c.l.b16 %v771
        %v1895 = vunpack.c.l.b16 %v781
        %v1896 = vunpack.c.l.b16 %v791
        %v1897 = vunpack.c.l.b16 %v805
        %v1898 = vunpack.c.l.b16 %v815
        %v1899 = vunpack.c.l.b16 %v825
        %v1900 = vunpack.c.l.b16 %v835
        %v1901 = vunpack.c.l.b16 %v849
        %v1902 = vunpack.c.l.b16 %v859
        %v1903 = vunpack.c.l.b16 %v869
        %v1904 = vunpack.c.l.b16 %v879
        %v1905 = vunpack.c.l.b16 %v893
        %v1906 = vunpack.c.l.b16 %v903
        %v1907 = vunpack.c.l.b16 %v913
        %v1908 = vunpack.c.l.b16 %v923
        %v1909 = vunpack.c.l.b16 %v937
        %v1910 = vunpack.c.l.b16 %v947
        %v1911 = vunpack.c.l.b16 %v957
        %v1912 = vunpack.c.l.b16 %v967
        %v1913 = vunpack.c.l.b16 %v981
        %v1914 = vunpack.c.l.b16 %v991
        %v1915 = vunpack.c.l.b16 %v1001
        %v1916 = vunpack.c.l.b16 %v1011
        %v1917 = vunpack.c.l.b16 %v1025
        %v1918 = vunpack.c.l.b16 %v1035
        %v1919 = vunpack.c.l.b16 %v1045
        %v1920 = vunpack.c.l.b16 %v1055
        %v1921 = vunpack.c.l.b16 %v1069
        %v1922 = vunpack.c.l.b16 %v1079
        %v1923 = vunpack.c.l.b16 %v1089
        %v1924 = vunpack.c.l.b16 %v1099
        %v1925 = vunpack.c.l.b16 %v1113
        %v1926 = vunpack.c.l.b16 %v1123
        %v1927 = vunpack.c.l.b16 %v1133
        %v1928 = vunpack.c.l.b16 %v1143
        %v1929 = vunpack.c.l.b16 %v1157
        %v1930 = vunpack.c.l.b16 %v1167
        %v1931 = vunpack.c.l.b16 %v1177
        %v1932 = vunpack.c.l.b16 %v1187
        %v1933 = vunpack.c.l.b16 %v1201
        %v1934 = vunpack.c.l.b16 %v1211
        %v1935 = vunpack.c.l.b16 %v1221
        %v1936 = vunpack.c.l.b16 %v1231
        %v1937 = vunpack.c.l.b16 %v1245
        %v1938 = vunpack.c.l.b16 %v1255
        %v1939 = vunpack.c.l.b16 %v1265
        %v1940 = vunpack.c.l.b16 %v1275
        %v1941 = vunpack.c.l.b16 %v1289
        %v1942 = vunpack.c.l.b16 %v1299
        %v1943 = vunpack.c.l.b16 %v1309
        %v1944 = vunpack.c.l.b16 %v1319
        %v1945 = vunpack.c.l.b16 %v1333
        %v1946 = vunpack.c.l.b16 %v1343
        %v1947 = vunpack.c.l.b16 %v1353
        %v1948 = vunpack.c.l.b16 %v1363
        %v1949 = vunpack.c.l.b16 %v1377
        %v1950 = vunpack.c.l.b16 %v1387
        %v1951 = vunpack.c.l.b16 %v1397
        %v1952 = vunpack.c.l.b16 %v1407
        %v1953 = vunpack.c.l.b16 %v1421
        %v1954 = vunpack.c.l.b16 %v1431
        %v1955 = vunpack.c.l.b16 %v1441
        %v1956 = vunpack.c.l.b16 %v1451
        %v1957 = vunpack.c.l.b16 %v1465
        %v1958 = vunpack.c.l.b16 %v1475
        %v1959 = vunpack.c.l.b16 %v1485
        %v1960 = vunpack.c.l.b16 %v1495
        %v1961 = vunpack.c.l.b16 %v1509
        %v1962 = vunpack.c.l.b16 %v1519
        %v1963 = vunpack.c.l.b16 %v1529
        %v1964 = vunpack.c.l.b16 %v1539
        %v1965 = vunpack.c.l.b16 %v1553
        %v1966 = vunpack.c.l.b16 %v1563
        %v1967 = vunpack.c.l.b16 %v1573
        %v1968 = vunpack.c.l.b16 %v1583
        %v1969 = vunpack.c.l.b16 %v1597
        %v1970 = vunpack.c.l.b16 %v1607
        %v1971 = vunpack.c.l.b16 %v1617
        %v1972 = vunpack.c.l.b16 %v1627
        %v1973 = vunpack.c.l.b16 %v1641
        %v1974 = vunpack.c.l.b16 %v1651
        %v1975 = vunpack.c.l.b16 %v1661
        %v1976 = vunpack.c.l.b16 %v1671
        %v1977 = vunpack.c.l.b16 %v1685
        %v1978 = vunpack.c.l.b16 %v1695
        %v1979 = vunpack.c.l.b16 %v1705
        %v1980 = vunpack.c.l.b16 %v1715
        %v1981 = vunpack.c.l.b16 %v1729
        %v1982 = vunpack.c.l.b16 %v1739
        %v1983 = vunpack.c.l.b16 %v1749
        %v1984 = vunpack.c.l.b16 %v1759
        %v1985 = vunpack.c.l.b16 %v1773
        %v1986 = vunpack.c.l.b16 %v1783
        %v1987 = vunpack.c.l.b16 %v1793
        %v1988 = vunpack.c.l.b16 %v1803
        %v1989 = vunpack.c.l.b16 %v1817
        %v1990 = vunpack.c.l.b16 %v1827
        %v1991 = vunpack.c.l.b16 %v1837
        %v1992 = vunpack.c.l.b16 %v1847
        %v1993 = vpack.c.b16 %v1866, %v1865
        %v1994 = vpack.c.b16 %v1868, %v1867
        %v1995 = vpack.c.b16 %v1870, %v1869
        %v1996 = vpack.c.b16 %v1872, %v1871
        %v1997 = vpack.c.b16 %v1874, %v1873
        %v1998 = vpack.c.b16 %v1876, %v1875
        %v1999 = vpack.c.b16 %v1878, %v1877
        %v2000 = vpack.c.b16 %v1880, %v1879
        %v2001 = vpack.c.b16 %v1882, %v1881
        %v2002 = vpack.c.b16 %v1884, %v1883
        %v2003 = vpack.c.b16 %v1886, %v1885
        %v2004 = vpack.c.b16 %v1888, %v1887
        %v2005 = vpack.c.b16 %v1890, %v1889
        %v2006 = vpack.c.b16 %v1892, %v1891
        %v2007 = vpack.c.b16 %v1894, %v1893
        %v2008 = vpack.c.b16 %v1896, %v1895
        %v2009 = vpack.c.b16 %v1898, %v1897
        %v2010 = vpack.c.b16 %v1900, %v1899
        %v2011 = vpack.c.b16 %v1902, %v1901
        %v2012 = vpack.c.b16 %v1904, %v1903
        %v2013 = vpack.c.b16 %v1906, %v1905
        %v2014 = vpack.c.b16 %v1908, %v1907
        %v2015 = vpack.c.b16 %v1910, %v1909
        %v2016 = vpack.c.b16 %v1912, %v1911
        %v2017 = vpack.c.b16 %v1914, %v1913
        %v2018 = vpack.c.b16 %v1916, %v1915
        %v2019 = vpack.c.b16 %v1918, %v1917
        %v2020 = vpack.c.b16 %v1920, %v1919
        %v2021 = vpack.c.b16 %v1922, %v1921
        %v2022 = vpack.c.b16 %v1924, %v1923
        %v2023 = vpack.c.b16 %v1926, %v1925
        %v2024 = vpack.c.b16 %v1928, %v1927
        %v2025 = vpack.c.b16 %v1930, %v1929
        %v2026 = vpack.c.b16 %v1932, %v1931
        %v2027 = vpack.c.b16 %v1934, %v1933
        %v2028 = vpack.c.b16 %v1936, %v1935
        %v2029 = vpack.c.b16 %v1938, %v1937
        %v2030 = vpack.c.b16 %v1940, %v1939
        %v2031 = vpack.c.b16 %v1942, %v1941
        %v2032 = vpack.c.b16 %v1944, %v1943
        %v2033 = vpack.c.b16 %v1946, %v1945
        %v2034 = vpack.c.b16 %v1948, %v1947
        %v2035 = vpack.c.b16 %v1950, %v1949
        %v2036 = vpack.c.b16 %v1952, %v1951
        %v2037 = vpack.c.b16 %v1954, %v1953
        %v2038 = vpack.c.b16 %v1956, %v1955
        %v2039 = vpack.c.b16 %v1958, %v1957
        %v2040 = vpack.c.b16 %v1960, %v1959
        %v2041 = vpack.c.b16 %v1962, %v1961
        %v2042 = vpack.c.b16 %v1964, %v1963
        %v2043 = vpack.c.b16 %v1966, %v1965
        %v2044 = vpack.c.b16 %v1968, %v1967
        %v2045 = vpack.c.b16 %v1970, %v1969
        %v2046 = vpack.c.b16 %v1972, %v1971
        %v2047 = vpack.c.b16 %v1974, %v1973
        %v2048 = vpack.c.b16 %v1976, %v1975
        %v2049 = vpack.c.b16 %v1978, %v1977
        %v2050 = vpack.c.b16 %v1980, %v1979
        %v2051 = vpack.c.b16 %v1982, %v1981
        %v2052 = vpack.c.b16 %v1984, %v1983
        %v2053 = vpack.c.b16 %v1986, %v1985
        %v2054 = vpack.c.b16 %v1988, %v1987
        %v2055 = vpack.c.b16 %v1990, %v1989
        %v2056 = vpack.c.b16 %v1992, %v1991
        %v2137 = vunpack.c.l.b16 %v1849
        %v2138 = vunpack.c.l.b16 %v1850
        %v2139 = vunpack.c.l.b16 %v1851
        %v2140 = vunpack.c.l.b16 %v1852
        %v2141 = vunpack.c.l.b16 %v1853
        %v2142 = vunpack.c.l.b16 %v1854
        %v2143 = vunpack.c.l.b16 %v1855
        %v2144 = vunpack.c.l.b16 %v1856
        %v2145 = vunpack.c.l.b16 %v1857
        %v2146 = vunpack.c.l.b16 %v1858
        %v2147 = vunpack.c.l.b16 %v1859
        %v2148 = vunpack.c.l.b16 %v1860
        %v2149 = vunpack.c.l.b16 %v1861
        %v2150 = vunpack.c.l.b16 %v1862
        %v2151 = vunpack.c.l.b16 %v1863
        %v2152 = vunpack.c.l.b16 %v1864
        %v2153 = vpack.c.b16 %v2138, %v2137
        %v2154 = vpack.c.b16 %v2140, %v2139
        %v2155 = vpack.c.b16 %v2142, %v2141
        %v2156 = vpack.c.b16 %v2144, %v2143
        %v2157 = vpack.c.b16 %v2146, %v2145
        %v2158 = vpack.c.b16 %v2148, %v2147
        %v2159 = vpack.c.b16 %v2150, %v2149
        %v2160 = vpack.c.b16 %v2152, %v2151
        %2169 = vmatprep.subr.bf16.mxu0 0
        %2170 = vmatpush1.bf16.msra.mxu0 %v2153
        %2171 = vmatprep.subr.bf16.mxu0 0
        %2172 = vmatpush1.bf16.msra.mxu0 %v2154
        %2173 = vmatprep.subr.bf16.mxu0 0
        %2174 = vmatpush1.bf16.msra.mxu0 %v2155
        %2175 = vmatprep.subr.bf16.mxu0 0
        %2176 = vmatpush1.bf16.msra.mxu0 %v2156
        %2177 = vmatprep.subr.bf16.mxu0 0
        %2178 = vmatpush1.bf16.msra.mxu0 %v2157
        %2179 = vmatprep.subr.bf16.mxu0 0
        %2180 = vmatpush1.bf16.msra.mxu0 %v2158
        %2181 = vmatprep.subr.bf16.mxu0 0
        %2182 = vmatpush1.bf16.msra.mxu0 %v2159
        %2183 = vmatprep.subr.bf16.mxu0 0
        %2184 = vmatpush1.bf16.msra.mxu0 %v2160
        %2185 = vmatprep.subr.bf16.mxu0 0
        %2186 = vmatpush1.bf16.msra.mxu0 0
        %2187 = vmatprep.subr.bf16.mxu0 0
        %2188 = vmatpush1.bf16.msra.mxu0 0
        %2189 = vmatprep.subr.bf16.mxu0 0
        %2190 = vmatpush1.bf16.msra.mxu0 0
        %2191 = vmatprep.subr.bf16.mxu0 0
        %2192 = vmatpush1.bf16.msra.mxu0 0
        %2193 = vmatprep.subr.bf16.mxu0 0
        %2194 = vmatpush1.bf16.msra.mxu0 0
        %2195 = vmatprep.subr.bf16.mxu0 0
        %2196 = vmatpush1.bf16.msra.mxu0 0
        %2197 = vmatprep.subr.bf16.mxu0 0
        %2198 = vmatpush1.bf16.msra.mxu0 0
        %2199 = vmatprep.subr.bf16.mxu0 0
        %2200 = vmatpush1.bf16.msra.mxu0 0
        %2201 = vmatprep.mubr.bf16.mxu0 0
        %2202 = vmatmul.mubr.bf16.gmra.mrb[0].mxu0 %v1993
        %v2203 = vpop.f32.mrb[0].mxu0
        %v2204 = vadd.f32 0.0, %v2203
        %v2205 = vpop.f32.mrb[0].mxu0
        %v2206 = vpop.f32.mrb[0].mxu0
        %v2207 = vadd.f32 0.0, %v2206
        %v2208 = vpop.f32.mrb[0].mxu0
        %2209 = vmatprep.mubr.bf16.mxu0 0
        %2210 = vmatmul.mubr.bf16.gmra.mrb[0].mxu0 %v1994
        %v2211 = vpop.f32.mrb[0].mxu0
        %v2212 = vadd.f32 0.0, %v2211
        %v2213 = vpop.f32.mrb[0].mxu0
        %v2214 = vpop.f32.mrb[0].mxu0
        %v2215 = vadd.f32 0.0, %v2214
        %v2216 = vpop.f32.mrb[0].mxu0
        %2217 = vmatprep.mubr.bf16.mxu0 0
        %2218 = vmatmul.mubr.bf16.gmra.mrb[0].mxu0 %v1995
        %v2219 = vpop.f32.mrb[0].mxu0
        %v2220 = vadd.f32 0.0, %v2219
        %v2221 = vpop.f32.mrb[0].mxu0
        %v2222 = vpop.f32.mrb[0].mxu0
        %v2223 = vadd.f32 0.0, %v2222
        %v2224 = vpop.f32.mrb[0].mxu0
        %2225 = vmatprep.mubr.bf16.mxu0 0
        %2226 = vmatmul.mubr.bf16.gmra.mrb[0].mxu0 %v1996
        %v2227 = vpop.f32.mrb[0].mxu0
        %v2228 = vadd.f32 0.0, %v2227
        %v2229 = vpop.f32.mrb[0].mxu0
        %v2230 = vpop.f32.mrb[0].mxu0
        %v2231 = vadd.f32 0.0, %v2230
        %v2232 = vpop.f32.mrb[0].mxu0
        %2233 = vmatprep.mubr.bf16.mxu0 0
        %2234 = vmatmul.mubr.bf16.gmra.mrb[0].mxu0 %v1997
        %v2235 = vpop.f32.mrb[0].mxu0
        %v2236 = vadd.f32 0.0, %v2235
        %v2237 = vpop.f32.mrb[0].mxu0
        %v2238 = vpop.f32.mrb[0].mxu0
        %v2239 = vadd.f32 0.0, %v2238
        %v2240 = vpop.f32.mrb[0].mxu0
        %2241 = vmatprep.mubr.bf16.mxu0 0
        %2242 = vmatmul.mubr.bf16.gmra.mrb[0].mxu0 %v1998
        %v2243 = vpop.f32.mrb[0].mxu0
        %v2244 = vadd.f32 0.0, %v2243
        %v2245 = vpop.f32.mrb[0].mxu0
        %v2246 = vpop.f32.mrb[0].mxu0
        %v2247 = vadd.f32 0.0, %v2246
        %v2248 = vpop.f32.mrb[0].mxu0
        %2249 = vmatprep.mubr.bf16.mxu0 0
        %2250 = vmatmul.mubr.bf16.gmra.mrb[0].mxu0 %v1999
        %v2251 = vpop.f32.mrb[0].mxu0
        %v2252 = vadd.f32 0.0, %v2251
        %v2253 = vpop.f32.mrb[0].mxu0
        %v2254 = vpop.f32.mrb[0].mxu0
        %v2255 = vadd.f32 0.0, %v2254
        %v2256 = vpop.f32.mrb[0].mxu0
        %2257 = vmatprep.mubr.bf16.mxu0 0
        %2258 = vmatmul.mubr.bf16.gmra.mrb[0].mxu0 %v2000
        %v2259 = vpop.f32.mrb[0].mxu0
        %v2260 = vadd.f32 0.0, %v2259
        %v2261 = vpop.f32.mrb[0].mxu0
        %v2262 = vpop.f32.mrb[0].mxu0
        %v2263 = vadd.f32 0.0, %v2262
        %v2264 = vpop.f32.mrb[0].mxu0
        %2265 = vmatprep.mubr.bf16.mxu0 0
        %2266 = vmatmul.mubr.bf16.gmra.mrb[0].mxu0 %v2001
        %v2267 = vpop.f32.mrb[0].mxu0
        %v2268 = vadd.f32 0.0, %v2267
        %v2269 = vpop.f32.mrb[0].mxu0
        %v2270 = vpop.f32.mrb[0].mxu0
        %v2271 = vadd.f32 0.0, %v2270
        %v2272 = vpop.f32.mrb[0].mxu0
        %2273 = vmatprep.mubr.bf16.mxu0 0
        %2274 = vmatmul.mubr.bf16.gmra.mrb[0].mxu0 %v2002
        %v2275 = vpop.f32.mrb[0].mxu0
        %v2276 = vadd.f32 0.0, %v2275
        %v2277 = vpop.f32.mrb[0].mxu0
        %v2278 = vpop.f32.mrb[0].mxu0
        %v2279 = vadd.f32 0.0, %v2278
        %v2280 = vpop.f32.mrb[0].mxu0
        %2281 = vmatprep.mubr.bf16.mxu0 0
        %2282 = vmatmul.mubr.bf16.gmra.mrb[0].mxu0 %v2003
        %v2283 = vpop.f32.mrb[0].mxu0
        %v2284 = vadd.f32 0.0, %v2283
        %v2285 = vpop.f32.mrb[0].mxu0
        %v2286 = vpop.f32.mrb[0].mxu0
        %v2287 = vadd.f32 0.0, %v2286
        %v2288 = vpop.f32.mrb[0].mxu0
        %2289 = vmatprep.mubr.bf16.mxu0 0
        %2290 = vmatmul.mubr.bf16.gmra.mrb[0].mxu0 %v2004
        %v2291 = vpop.f32.mrb[0].mxu0
        %v2292 = vadd.f32 0.0, %v2291
        %v2293 = vpop.f32.mrb[0].mxu0
        %v2294 = vpop.f32.mrb[0].mxu0
        %v2295 = vadd.f32 0.0, %v2294
        %v2296 = vpop.f32.mrb[0].mxu0
        %2297 = vmatprep.mubr.bf16.mxu0 0
        %2298 = vmatmul.mubr.bf16.gmra.mrb[0].mxu0 %v2005
        %v2299 = vpop.f32.mrb[0].mxu0
        %v2300 = vadd.f32 0.0, %v2299
        %v2301 = vpop.f32.mrb[0].mxu0
        %v2302 = vpop.f32.mrb[0].mxu0
        %v2303 = vadd.f32 0.0, %v2302
        %v2304 = vpop.f32.mrb[0].mxu0
        %2305 = vmatprep.mubr.bf16.mxu0 0
        %2306 = vmatmul.mubr.bf16.gmra.mrb[0].mxu0 %v2006
        %v2307 = vpop.f32.mrb[0].mxu0
        %v2308 = vadd.f32 0.0, %v2307
        %v2309 = vpop.f32.mrb[0].mxu0
        %v2310 = vpop.f32.mrb[0].mxu0
        %v2311 = vadd.f32 0.0, %v2310
        %v2312 = vpop.f32.mrb[0].mxu0
        %2313 = vmatprep.mubr.bf16.mxu0 0
        %2314 = vmatmul.mubr.bf16.gmra.mrb[0].mxu0 %v2007
        %v2315 = vpop.f32.mrb[0].mxu0
        %v2316 = vadd.f32 0.0, %v2315
        %v2317 = vpop.f32.mrb[0].mxu0
        %v2318 = vpop.f32.mrb[0].mxu0
        %v2319 = vadd.f32 0.0, %v2318
        %v2320 = vpop.f32.mrb[0].mxu0
        %2321 = vmatprep.mubr.bf16.mxu0 0
        %2322 = vmatmul.mubr.bf16.gmra.mrb[0].mxu0 %v2008
        %v2323 = vpop.f32.mrb[0].mxu0
        %v2324 = vadd.f32 0.0, %v2323
        %v2325 = vpop.f32.mrb[0].mxu0
        %v2326 = vpop.f32.mrb[0].mxu0
        %v2327 = vadd.f32 0.0, %v2326
        %v2328 = vpop.f32.mrb[0].mxu0
        %2329 = vmatprep.mubr.bf16.mxu0 0
        %2330 = vmatmul.mubr.bf16.gmra.mrb[0].mxu0 %v2009
        %v2331 = vpop.f32.mrb[0].mxu0
        %v2332 = vadd.f32 0.0, %v2331
        %v2333 = vpop.f32.mrb[0].mxu0
        %v2334 = vpop.f32.mrb[0].mxu0
        %v2335 = vadd.f32 0.0, %v2334
        %v2336 = vpop.f32.mrb[0].mxu0
        %2337 = vmatprep.mubr.bf16.mxu0 0
        %2338 = vmatmul.mubr.bf16.gmra.mrb[0].mxu0 %v2010
        %v2339 = vpop.f32.mrb[0].mxu0
        %v2340 = vadd.f32 0.0, %v2339
        %v2341 = vpop.f32.mrb[0].mxu0
        %v2342 = vpop.f32.mrb[0].mxu0
        %v2343 = vadd.f32 0.0, %v2342
        %v2344 = vpop.f32.mrb[0].mxu0
        %2345 = vmatprep.mubr.bf16.mxu0 0
        %2346 = vmatmul.mubr.bf16.gmra.mrb[0].mxu0 %v2011
        %v2347 = vpop.f32.mrb[0].mxu0
        %v2348 = vadd.f32 0.0, %v2347
        %v2349 = vpop.f32.mrb[0].mxu0
        %v2350 = vpop.f32.mrb[0].mxu0
        %v2351 = vadd.f32 0.0, %v2350
        %v2352 = vpop.f32.mrb[0].mxu0
        %2353 = vmatprep.mubr.bf16.mxu0 0
        %2354 = vmatmul.mubr.bf16.gmra.mrb[0].mxu0 %v2012
        %v2355 = vpop.f32.mrb[0].mxu0
        %v2356 = vadd.f32 0.0, %v2355
        %v2357 = vpop.f32.mrb[0].mxu0
        %v2358 = vpop.f32.mrb[0].mxu0
        %v2359 = vadd.f32 0.0, %v2358
        %v2360 = vpop.f32.mrb[0].mxu0
        %2361 = vmatprep.mubr.bf16.mxu0 0
        %2362 = vmatmul.mubr.bf16.gmra.mrb[0].mxu0 %v2013
        %v2363 = vpop.f32.mrb[0].mxu0
        %v2364 = vadd.f32 0.0, %v2363
        %v2365 = vpop.f32.mrb[0].mxu0
        %v2366 = vpop.f32.mrb[0].mxu0
        %v2367 = vadd.f32 0.0, %v2366
        %v2368 = vpop.f32.mrb[0].mxu0
        %2369 = vmatprep.mubr.bf16.mxu0 0
        %2370 = vmatmul.mubr.bf16.gmra.mrb[0].mxu0 %v2014
        %v2371 = vpop.f32.mrb[0].mxu0
        %v2372 = vadd.f32 0.0, %v2371
        %v2373 = vpop.f32.mrb[0].mxu0
        %v2374 = vpop.f32.mrb[0].mxu0
        %v2375 = vadd.f32 0.0, %v2374
        %v2376 = vpop.f32.mrb[0].mxu0
        %2377 = vmatprep.mubr.bf16.mxu0 0
        %2378 = vmatmul.mubr.bf16.gmra.mrb[0].mxu0 %v2015
        %v2379 = vpop.f32.mrb[0].mxu0
        %v2380 = vadd.f32 0.0, %v2379
        %v2381 = vpop.f32.mrb[0].mxu0
        %v2382 = vpop.f32.mrb[0].mxu0
        %v2383 = vadd.f32 0.0, %v2382
        %v2384 = vpop.f32.mrb[0].mxu0
        %2385 = vmatprep.mubr.bf16.mxu0 0
        %2386 = vmatmul.mubr.bf16.gmra.mrb[0].mxu0 %v2016
        %v2387 = vpop.f32.mrb[0].mxu0
        %v2388 = vadd.f32 0.0, %v2387
        %v2389 = vpop.f32.mrb[0].mxu0
        %v2390 = vpop.f32.mrb[0].mxu0
        %v2391 = vadd.f32 0.0, %v2390
        %v2392 = vpop.f32.mrb[0].mxu0
        %2393 = vmatprep.mubr.bf16.mxu0 0
        %2394 = vmatmul.mubr.bf16.gmra.mrb[0].mxu0 %v2017
        %v2395 = vpop.f32.mrb[0].mxu0
        %v2396 = vadd.f32 0.0, %v2395
        %v2397 = vpop.f32.mrb[0].mxu0
        %v2398 = vpop.f32.mrb[0].mxu0
        %v2399 = vadd.f32 0.0, %v2398
        %v2400 = vpop.f32.mrb[0].mxu0
        %2401 = vmatprep.mubr.bf16.mxu0 0
        %2402 = vmatmul.mubr.bf16.gmra.mrb[0].mxu0 %v2018
        %v2403 = vpop.f32.mrb[0].mxu0
        %v2404 = vadd.f32 0.0, %v2403
        %v2405 = vpop.f32.mrb[0].mxu0
        %v2406 = vpop.f32.mrb[0].mxu0
        %v2407 = vadd.f32 0.0, %v2406
        %v2408 = vpop.f32.mrb[0].mxu0
        %2409 = vmatprep.mubr.bf16.mxu0 0
        %2410 = vmatmul.mubr.bf16.gmra.mrb[0].mxu0 %v2019
        %v2411 = vpop.f32.mrb[0].mxu0
        %v2412 = vadd.f32 0.0, %v2411
        %v2413 = vpop.f32.mrb[0].mxu0
        %v2414 = vpop.f32.mrb[0].mxu0
        %v2415 = vadd.f32 0.0, %v2414
        %v2416 = vpop.f32.mrb[0].mxu0
        %2417 = vmatprep.mubr.bf16.mxu0 0
        %2418 = vmatmul.mubr.bf16.gmra.mrb[0].mxu0 %v2020
        %v2419 = vpop.f32.mrb[0].mxu0
        %v2420 = vadd.f32 0.0, %v2419
        %v2421 = vpop.f32.mrb[0].mxu0
        %v2422 = vpop.f32.mrb[0].mxu0
        %v2423 = vadd.f32 0.0, %v2422
        %v2424 = vpop.f32.mrb[0].mxu0
        %2425 = vmatprep.mubr.bf16.mxu0 0
        %2426 = vmatmul.mubr.bf16.gmra.mrb[0].mxu0 %v2021
        %v2427 = vpop.f32.mrb[0].mxu0
        %v2428 = vadd.f32 0.0, %v2427
        %v2429 = vpop.f32.mrb[0].mxu0
        %v2430 = vpop.f32.mrb[0].mxu0
        %v2431 = vadd.f32 0.0, %v2430
        %v2432 = vpop.f32.mrb[0].mxu0
        %2433 = vmatprep.mubr.bf16.mxu0 0
        %2434 = vmatmul.mubr.bf16.gmra.mrb[0].mxu0 %v2022
        %v2435 = vpop.f32.mrb[0].mxu0
        %v2436 = vadd.f32 0.0, %v2435
        %v2437 = vpop.f32.mrb[0].mxu0
        %v2438 = vpop.f32.mrb[0].mxu0
        %v2439 = vadd.f32 0.0, %v2438
        %v2440 = vpop.f32.mrb[0].mxu0
        %2441 = vmatprep.mubr.bf16.mxu0 0
        %2442 = vmatmul.mubr.bf16.gmra.mrb[0].mxu0 %v2023
        %v2443 = vpop.f32.mrb[0].mxu0
        %v2444 = vadd.f32 0.0, %v2443
        %v2445 = vpop.f32.mrb[0].mxu0
        %v2446 = vpop.f32.mrb[0].mxu0
        %v2447 = vadd.f32 0.0, %v2446
        %v2448 = vpop.f32.mrb[0].mxu0
        %2449 = vmatprep.mubr.bf16.mxu0 0
        %2450 = vmatmul.mubr.bf16.gmra.mrb[0].mxu0 %v2024
        %v2451 = vpop.f32.mrb[0].mxu0
        %v2452 = vadd.f32 0.0, %v2451
        %v2453 = vpop.f32.mrb[0].mxu0
        %v2454 = vpop.f32.mrb[0].mxu0
        %v2455 = vadd.f32 0.0, %v2454
        %v2456 = vpop.f32.mrb[0].mxu0
        %2457 = vmatprep.mubr.bf16.mxu0 0
        %2458 = vmatmul.mubr.bf16.gmra.mrb[0].mxu0 %v2025
        %v2459 = vpop.f32.mrb[0].mxu0
        %v2460 = vadd.f32 0.0, %v2459
        %v2461 = vpop.f32.mrb[0].mxu0
        %v2462 = vpop.f32.mrb[0].mxu0
        %v2463 = vadd.f32 0.0, %v2462
        %v2464 = vpop.f32.mrb[0].mxu0
        %2465 = vmatprep.mubr.bf16.mxu0 0
        %2466 = vmatmul.mubr.bf16.gmra.mrb[0].mxu0 %v2026
        %v2467 = vpop.f32.mrb[0].mxu0
        %v2468 = vadd.f32 0.0, %v2467
        %v2469 = vpop.f32.mrb[0].mxu0
        %v2470 = vpop.f32.mrb[0].mxu0
        %v2471 = vadd.f32 0.0, %v2470
        %v2472 = vpop.f32.mrb[0].mxu0
        %2473 = vmatprep.mubr.bf16.mxu0 0
        %2474 = vmatmul.mubr.bf16.gmra.mrb[0].mxu0 %v2027
        %v2475 = vpop.f32.mrb[0].mxu0
        %v2476 = vadd.f32 0.0, %v2475
        %v2477 = vpop.f32.mrb[0].mxu0
        %v2478 = vpop.f32.mrb[0].mxu0
        %v2479 = vadd.f32 0.0, %v2478
        %v2480 = vpop.f32.mrb[0].mxu0
        %2481 = vmatprep.mubr.bf16.mxu0 0
        %2482 = vmatmul.mubr.bf16.gmra.mrb[0].mxu0 %v2028
        %v2483 = vpop.f32.mrb[0].mxu0
        %v2484 = vadd.f32 0.0, %v2483
        %v2485 = vpop.f32.mrb[0].mxu0
        %v2486 = vpop.f32.mrb[0].mxu0
        %v2487 = vadd.f32 0.0, %v2486
        %v2488 = vpop.f32.mrb[0].mxu0
        %2489 = vmatprep.mubr.bf16.mxu0 0
        %2490 = vmatmul.mubr.bf16.gmra.mrb[0].mxu0 %v2029
        %v2491 = vpop.f32.mrb[0].mxu0
        %v2492 = vadd.f32 0.0, %v2491
        %v2493 = vpop.f32.mrb[0].mxu0
        %v2494 = vpop.f32.mrb[0].mxu0
        %v2495 = vadd.f32 0.0, %v2494
        %v2496 = vpop.f32.mrb[0].mxu0
        %2497 = vmatprep.mubr.bf16.mxu0 0
        %2498 = vmatmul.mubr.bf16.gmra.mrb[0].mxu0 %v2030
        %v2499 = vpop.f32.mrb[0].mxu0
        %v2500 = vadd.f32 0.0, %v2499
        %v2501 = vpop.f32.mrb[0].mxu0
        %v2502 = vpop.f32.mrb[0].mxu0
        %v2503 = vadd.f32 0.0, %v2502
        %v2504 = vpop.f32.mrb[0].mxu0
        %2505 = vmatprep.mubr.bf16.mxu0 0
        %2506 = vmatmul.mubr.bf16.gmra.mrb[0].mxu0 %v2031
        %v2507 = vpop.f32.mrb[0].mxu0
        %v2508 = vadd.f32 0.0, %v2507
        %v2509 = vpop.f32.mrb[0].mxu0
        %v2510 = vpop.f32.mrb[0].mxu0
        %v2511 = vadd.f32 0.0, %v2510
        %v2512 = vpop.f32.mrb[0].mxu0
        %2513 = vmatprep.mubr.bf16.mxu0 0
        %2514 = vmatmul.mubr.bf16.gmra.mrb[0].mxu0 %v2032
        %v2515 = vpop.f32.mrb[0].mxu0
        %v2516 = vadd.f32 0.0, %v2515
        %v2517 = vpop.f32.mrb[0].mxu0
        %v2518 = vpop.f32.mrb[0].mxu0
        %v2519 = vadd.f32 0.0, %v2518
        %v2520 = vpop.f32.mrb[0].mxu0
        %2521 = vmatprep.mubr.bf16.mxu0 0
        %2522 = vmatmul.mubr.bf16.gmra.mrb[0].mxu0 %v2033
        %v2523 = vpop.f32.mrb[0].mxu0
        %v2524 = vadd.f32 0.0, %v2523
        %v2525 = vpop.f32.mrb[0].mxu0
        %v2526 = vpop.f32.mrb[0].mxu0
        %v2527 = vadd.f32 0.0, %v2526
        %v2528 = vpop.f32.mrb[0].mxu0
        %2529 = vmatprep.mubr.bf16.mxu0 0
        %2530 = vmatmul.mubr.bf16.gmra.mrb[0].mxu0 %v2034
        %v2531 = vpop.f32.mrb[0].mxu0
        %v2532 = vadd.f32 0.0, %v2531
        %v2533 = vpop.f32.mrb[0].mxu0
        %v2534 = vpop.f32.mrb[0].mxu0
        %v2535 = vadd.f32 0.0, %v2534
        %v2536 = vpop.f32.mrb[0].mxu0
        %2537 = vmatprep.mubr.bf16.mxu0 0
        %2538 = vmatmul.mubr.bf16.gmra.mrb[0].mxu0 %v2035
        %v2539 = vpop.f32.mrb[0].mxu0
        %v2540 = vadd.f32 0.0, %v2539
        %v2541 = vpop.f32.mrb[0].mxu0
        %v2542 = vpop.f32.mrb[0].mxu0
        %v2543 = vadd.f32 0.0, %v2542
        %v2544 = vpop.f32.mrb[0].mxu0
        %2545 = vmatprep.mubr.bf16.mxu0 0
        %2546 = vmatmul.mubr.bf16.gmra.mrb[0].mxu0 %v2036
        %v2547 = vpop.f32.mrb[0].mxu0
        %v2548 = vadd.f32 0.0, %v2547
        %v2549 = vpop.f32.mrb[0].mxu0
        %v2550 = vpop.f32.mrb[0].mxu0
        %v2551 = vadd.f32 0.0, %v2550
        %v2552 = vpop.f32.mrb[0].mxu0
        %2553 = vmatprep.mubr.bf16.mxu0 0
        %2554 = vmatmul.mubr.bf16.gmra.mrb[0].mxu0 %v2037
        %v2555 = vpop.f32.mrb[0].mxu0
        %v2556 = vadd.f32 0.0, %v2555
        %v2557 = vpop.f32.mrb[0].mxu0
        %v2558 = vpop.f32.mrb[0].mxu0
        %v2559 = vadd.f32 0.0, %v2558
        %v2560 = vpop.f32.mrb[0].mxu0
        %2561 = vmatprep.mubr.bf16.mxu0 0
        %2562 = vmatmul.mubr.bf16.gmra.mrb[0].mxu0 %v2038
        %v2563 = vpop.f32.mrb[0].mxu0
        %v2564 = vadd.f32 0.0, %v2563
        %v2565 = vpop.f32.mrb[0].mxu0
        %v2566 = vpop.f32.mrb[0].mxu0
        %v2567 = vadd.f32 0.0, %v2566
        %v2568 = vpop.f32.mrb[0].mxu0
        %2569 = vmatprep.mubr.bf16.mxu0 0
        %2570 = vmatmul.mubr.bf16.gmra.mrb[0].mxu0 %v2039
        %v2571 = vpop.f32.mrb[0].mxu0
        %v2572 = vadd.f32 0.0, %v2571
        %v2573 = vpop.f32.mrb[0].mxu0
        %v2574 = vpop.f32.mrb[0].mxu0
        %v2575 = vadd.f32 0.0, %v2574
        %v2576 = vpop.f32.mrb[0].mxu0
        %2577 = vmatprep.mubr.bf16.mxu0 0
        %2578 = vmatmul.mubr.bf16.gmra.mrb[0].mxu0 %v2040
        %v2579 = vpop.f32.mrb[0].mxu0
        %v2580 = vadd.f32 0.0, %v2579
        %v2581 = vpop.f32.mrb[0].mxu0
        %v2582 = vpop.f32.mrb[0].mxu0
        %v2583 = vadd.f32 0.0, %v2582
        %v2584 = vpop.f32.mrb[0].mxu0
        %2585 = vmatprep.mubr.bf16.mxu0 0
        %2586 = vmatmul.mubr.bf16.gmra.mrb[0].mxu0 %v2041
        %v2587 = vpop.f32.mrb[0].mxu0
        %v2588 = vadd.f32 0.0, %v2587
        %v2589 = vpop.f32.mrb[0].mxu0
        %v2590 = vpop.f32.mrb[0].mxu0
        %v2591 = vadd.f32 0.0, %v2590
        %v2592 = vpop.f32.mrb[0].mxu0
        %2593 = vmatprep.mubr.bf16.mxu0 0
        %2594 = vmatmul.mubr.bf16.gmra.mrb[0].mxu0 %v2042
        %v2595 = vpop.f32.mrb[0].mxu0
        %v2596 = vadd.f32 0.0, %v2595
        %v2597 = vpop.f32.mrb[0].mxu0
        %v2598 = vpop.f32.mrb[0].mxu0
        %v2599 = vadd.f32 0.0, %v2598
        %v2600 = vpop.f32.mrb[0].mxu0
        %2601 = vmatprep.mubr.bf16.mxu0 0
        %2602 = vmatmul.mubr.bf16.gmra.mrb[0].mxu0 %v2043
        %v2603 = vpop.f32.mrb[0].mxu0
        %v2604 = vadd.f32 0.0, %v2603
        %v2605 = vpop.f32.mrb[0].mxu0
        %v2606 = vpop.f32.mrb[0].mxu0
        %v2607 = vadd.f32 0.0, %v2606
        %v2608 = vpop.f32.mrb[0].mxu0
        %2609 = vmatprep.mubr.bf16.mxu0 0
        %2610 = vmatmul.mubr.bf16.gmra.mrb[0].mxu0 %v2044
        %v2611 = vpop.f32.mrb[0].mxu0
        %v2612 = vadd.f32 0.0, %v2611
        %v2613 = vpop.f32.mrb[0].mxu0
        %v2614 = vpop.f32.mrb[0].mxu0
        %v2615 = vadd.f32 0.0, %v2614
        %v2616 = vpop.f32.mrb[0].mxu0
        %2617 = vmatprep.mubr.bf16.mxu0 0
        %2618 = vmatmul.mubr.bf16.gmra.mrb[0].mxu0 %v2045
        %v2619 = vpop.f32.mrb[0].mxu0
        %v2620 = vadd.f32 0.0, %v2619
        %v2621 = vpop.f32.mrb[0].mxu0
        %v2622 = vpop.f32.mrb[0].mxu0
        %v2623 = vadd.f32 0.0, %v2622
        %v2624 = vpop.f32.mrb[0].mxu0
        %2625 = vmatprep.mubr.bf16.mxu0 0
        %2626 = vmatmul.mubr.bf16.gmra.mrb[0].mxu0 %v2046
        %v2627 = vpop.f32.mrb[0].mxu0
        %v2628 = vadd.f32 0.0, %v2627
        %v2629 = vpop.f32.mrb[0].mxu0
        %v2630 = vpop.f32.mrb[0].mxu0
        %v2631 = vadd.f32 0.0, %v2630
        %v2632 = vpop.f32.mrb[0].mxu0
        %2633 = vmatprep.mubr.bf16.mxu0 0
        %2634 = vmatmul.mubr.bf16.gmra.mrb[0].mxu0 %v2047
        %v2635 = vpop.f32.mrb[0].mxu0
        %v2636 = vadd.f32 0.0, %v2635
        %v2637 = vpop.f32.mrb[0].mxu0
        %v2638 = vpop.f32.mrb[0].mxu0
        %v2639 = vadd.f32 0.0, %v2638
        %v2640 = vpop.f32.mrb[0].mxu0
        %2641 = vmatprep.mubr.bf16.mxu0 0
        %2642 = vmatmul.mubr.bf16.gmra.mrb[0].mxu0 %v2048
        %v2643 = vpop.f32.mrb[0].mxu0
        %v2644 = vadd.f32 0.0, %v2643
        %v2645 = vpop.f32.mrb[0].mxu0
        %v2646 = vpop.f32.mrb[0].mxu0
        %v2647 = vadd.f32 0.0, %v2646
        %v2648 = vpop.f32.mrb[0].mxu0
        %2649 = vmatprep.mubr.bf16.mxu0 0
        %2650 = vmatmul.mubr.bf16.gmra.mrb[0].mxu0 %v2049
        %v2651 = vpop.f32.mrb[0].mxu0
        %v2652 = vadd.f32 0.0, %v2651
        %v2653 = vpop.f32.mrb[0].mxu0
        %v2654 = vpop.f32.mrb[0].mxu0
        %v2655 = vadd.f32 0.0, %v2654
        %v2656 = vpop.f32.mrb[0].mxu0
        %2657 = vmatprep.mubr.bf16.mxu0 0
        %2658 = vmatmul.mubr.bf16.gmra.mrb[0].mxu0 %v2050
        %v2659 = vpop.f32.mrb[0].mxu0
        %v2660 = vadd.f32 0.0, %v2659
        %v2661 = vpop.f32.mrb[0].mxu0
        %v2662 = vpop.f32.mrb[0].mxu0
        %v2663 = vadd.f32 0.0, %v2662
        %v2664 = vpop.f32.mrb[0].mxu0
        %2665 = vmatprep.mubr.bf16.mxu0 0
        %2666 = vmatmul.mubr.bf16.gmra.mrb[0].mxu0 %v2051
        %v2667 = vpop.f32.mrb[0].mxu0
        %v2668 = vadd.f32 0.0, %v2667
        %v2669 = vpop.f32.mrb[0].mxu0
        %v2670 = vpop.f32.mrb[0].mxu0
        %v2671 = vadd.f32 0.0, %v2670
        %v2672 = vpop.f32.mrb[0].mxu0
        %2673 = vmatprep.mubr.bf16.mxu0 0
        %2674 = vmatmul.mubr.bf16.gmra.mrb[0].mxu0 %v2052
        %v2675 = vpop.f32.mrb[0].mxu0
        %v2676 = vadd.f32 0.0, %v2675
        %v2677 = vpop.f32.mrb[0].mxu0
        %v2678 = vpop.f32.mrb[0].mxu0
        %v2679 = vadd.f32 0.0, %v2678
        %v2680 = vpop.f32.mrb[0].mxu0
        %2681 = vmatprep.mubr.bf16.mxu0 0
        %2682 = vmatmul.mubr.bf16.gmra.mrb[0].mxu0 %v2053
        %v2683 = vpop.f32.mrb[0].mxu0
        %v2684 = vadd.f32 0.0, %v2683
        %v2685 = vpop.f32.mrb[0].mxu0
        %v2686 = vpop.f32.mrb[0].mxu0
        %v2687 = vadd.f32 0.0, %v2686
        %v2688 = vpop.f32.mrb[0].mxu0
        %2689 = vmatprep.mubr.bf16.mxu0 0
        %2690 = vmatmul.mubr.bf16.gmra.mrb[0].mxu0 %v2054
        %v2691 = vpop.f32.mrb[0].mxu0
        %v2692 = vadd.f32 0.0, %v2691
        %v2693 = vpop.f32.mrb[0].mxu0
        %v2694 = vpop.f32.mrb[0].mxu0
        %v2695 = vadd.f32 0.0, %v2694
        %v2696 = vpop.f32.mrb[0].mxu0
        %2697 = vmatprep.mubr.bf16.mxu0 0
        %2698 = vmatmul.mubr.bf16.gmra.mrb[0].mxu0 %v2055
        %v2699 = vpop.f32.mrb[0].mxu0
        %v2700 = vadd.f32 0.0, %v2699
        %v2701 = vpop.f32.mrb[0].mxu0
        %v2702 = vpop.f32.mrb[0].mxu0
        %v2703 = vadd.f32 0.0, %v2702
        %v2704 = vpop.f32.mrb[0].mxu0
        %2705 = vmatprep.mubr.bf16.mxu0 0
        %2706 = vmatmul.mubr.bf16.gmra.mrb[0].mxu0 %v2056
        %v2707 = vpop.f32.mrb[0].mxu0
        %v2708 = vadd.f32 0.0, %v2707
        %v2709 = vpop.f32.mrb[0].mxu0
        %v2710 = vpop.f32.mrb[0].mxu0
        %v2711 = vadd.f32 0.0, %v2710
        %v2712 = vpop.f32.mrb[0].mxu0
        %2713 = vdwg.mxu0
        %v2842 = vunpack.c.l.b16 %v251
        %v2843 = vunpack.c.l.b16 %v252
        %v2844 = vunpack.c.l.b16 %v253
        %v2845 = vunpack.c.l.b16 %v254
        %v2846 = vunpack.c.l.b16 %v256
        %v2847 = vunpack.c.l.b16 %v257
        %v2848 = vunpack.c.l.b16 %v258
        %v2849 = vunpack.c.l.b16 %v259
        %v2850 = vunpack.c.l.b16 %v261
        %v2851 = vunpack.c.l.b16 %v262
        %v2852 = vunpack.c.l.b16 %v263
        %v2853 = vunpack.c.l.b16 %v264
        %v2854 = vunpack.c.l.b16 %v266
        %v2855 = vunpack.c.l.b16 %v267
        %v2856 = vunpack.c.l.b16 %v268
        %v2857 = vunpack.c.l.b16 %v269
        %v2858 = vunpack.c.l.b16 %v271
        %v2859 = vunpack.c.l.b16 %v272
        %v2860 = vunpack.c.l.b16 %v273
        %v2861 = vunpack.c.l.b16 %v274
        %v2862 = vunpack.c.l.b16 %v276
        %v2863 = vunpack.c.l.b16 %v277
        %v2864 = vunpack.c.l.b16 %v278
        %v2865 = vunpack.c.l.b16 %v279
        %v2866 = vunpack.c.l.b16 %v281
        %v2867 = vunpack.c.l.b16 %v282
        %v2868 = vunpack.c.l.b16 %v283
        %v2869 = vunpack.c.l.b16 %v284
        %v2870 = vunpack.c.l.b16 %v286
        %v2871 = vunpack.c.l.b16 %v287
        %v2872 = vunpack.c.l.b16 %v288
        %v2873 = vunpack.c.l.b16 %v289
        %v2874 = vunpack.c.l.b16 %v291
        %v2875 = vunpack.c.l.b16 %v292
        %v2876 = vunpack.c.l.b16 %v293
        %v2877 = vunpack.c.l.b16 %v294
        %v2878 = vunpack.c.l.b16 %v296
        %v2879 = vunpack.c.l.b16 %v297
        %v2880 = vunpack.c.l.b16 %v298
        %v2881 = vunpack.c.l.b16 %v299
        %v2882 = vunpack.c.l.b16 %v301
        %v2883 = vunpack.c.l.b16 %v302
        %v2884 = vunpack.c.l.b16 %v303
        %v2885 = vunpack.c.l.b16 %v304
        %v2886 = vunpack.c.l.b16 %v306
        %v2887 = vunpack.c.l.b16 %v307
        %v2888 = vunpack.c.l.b16 %v308
        %v2889 = vunpack.c.l.b16 %v309
        %v2890 = vunpack.c.l.b16 %v311
        %v2891 = vunpack.c.l.b16 %v312
        %v2892 = vunpack.c.l.b16 %v313
        %v2893 = vunpack.c.l.b16 %v314
        %v2894 = vunpack.c.l.b16 %v316
        %v2895 = vunpack.c.l.b16 %v317
        %v2896 = vunpack.c.l.b16 %v318
        %v2897 = vunpack.c.l.b16 %v319
        %v2898 = vunpack.c.l.b16 %v321
        %v2899 = vunpack.c.l.b16 %v322
        %v2900 = vunpack.c.l.b16 %v323
        %v2901 = vunpack.c.l.b16 %v324
        %v2902 = vunpack.c.l.b16 %v326
        %v2903 = vunpack.c.l.b16 %v327
        %v2904 = vunpack.c.l.b16 %v328
        %v2905 = vunpack.c.l.b16 %v329
        %v2906 = vunpack.c.l.b16 %v331
        %v2907 = vunpack.c.l.b16 %v332
        %v2908 = vunpack.c.l.b16 %v333
        %v2909 = vunpack.c.l.b16 %v334
        %v2910 = vunpack.c.l.b16 %v336
        %v2911 = vunpack.c.l.b16 %v337
        %v2912 = vunpack.c.l.b16 %v338
        %v2913 = vunpack.c.l.b16 %v339
        %v2914 = vunpack.c.l.b16 %v341
        %v2915 = vunpack.c.l.b16 %v342
        %v2916 = vunpack.c.l.b16 %v343
        %v2917 = vunpack.c.l.b16 %v344
        %v2918 = vunpack.c.l.b16 %v346
        %v2919 = vunpack.c.l.b16 %v347
        %v2920 = vunpack.c.l.b16 %v348
        %v2921 = vunpack.c.l.b16 %v349
        %v2922 = vunpack.c.l.b16 %v351
        %v2923 = vunpack.c.l.b16 %v352
        %v2924 = vunpack.c.l.b16 %v353
        %v2925 = vunpack.c.l.b16 %v354
        %v2926 = vunpack.c.l.b16 %v356
        %v2927 = vunpack.c.l.b16 %v357
        %v2928 = vunpack.c.l.b16 %v358
        %v2929 = vunpack.c.l.b16 %v359
        %v2930 = vunpack.c.l.b16 %v361
        %v2931 = vunpack.c.l.b16 %v362
        %v2932 = vunpack.c.l.b16 %v363
        %v2933 = vunpack.c.l.b16 %v364
        %v2934 = vunpack.c.l.b16 %v366
        %v2935 = vunpack.c.l.b16 %v367
        %v2936 = vunpack.c.l.b16 %v368
        %v2937 = vunpack.c.l.b16 %v369
        %v2938 = vunpack.c.l.b16 %v371
        %v2939 = vunpack.c.l.b16 %v372
        %v2940 = vunpack.c.l.b16 %v373
        %v2941 = vunpack.c.l.b16 %v374
        %v2942 = vunpack.c.l.b16 %v376
        %v2943 = vunpack.c.l.b16 %v377
        %v2944 = vunpack.c.l.b16 %v378
        %v2945 = vunpack.c.l.b16 %v379
        %v2946 = vunpack.c.l.b16 %v381
        %v2947 = vunpack.c.l.b16 %v382
        %v2948 = vunpack.c.l.b16 %v383
        %v2949 = vunpack.c.l.b16 %v384
        %v2950 = vunpack.c.l.b16 %v386
        %v2951 = vunpack.c.l.b16 %v387
        %v2952 = vunpack.c.l.b16 %v388
        %v2953 = vunpack.c.l.b16 %v389
        %v2954 = vunpack.c.l.b16 %v391
        %v2955 = vunpack.c.l.b16 %v392
        %v2956 = vunpack.c.l.b16 %v393
        %v2957 = vunpack.c.l.b16 %v394
        %v2958 = vunpack.c.l.b16 %v396
        %v2959 = vunpack.c.l.b16 %v397
        %v2960 = vunpack.c.l.b16 %v398
        %v2961 = vunpack.c.l.b16 %v399
        %v2962 = vunpack.c.l.b16 %v401
        %v2963 = vunpack.c.l.b16 %v402
        %v2964 = vunpack.c.l.b16 %v403
        %v2965 = vunpack.c.l.b16 %v404
        %v2966 = vunpack.c.l.b16 %v406
        %v2967 = vunpack.c.l.b16 %v407
        %v2968 = vunpack.c.l.b16 %v408
        %v2969 = vunpack.c.l.b16 %v409
        %v2970 = vpack.c.b16 %v2843, %v2842
        %v2971 = vpack.c.b16 %v2845, %v2844
        %v2972 = vpack.c.b16 %v2847, %v2846
        %v2973 = vpack.c.b16 %v2849, %v2848
        %v2974 = vpack.c.b16 %v2851, %v2850
        %v2975 = vpack.c.b16 %v2853, %v2852
        %v2976 = vpack.c.b16 %v2855, %v2854
        %v2977 = vpack.c.b16 %v2857, %v2856
        %v2978 = vpack.c.b16 %v2859, %v2858
        %v2979 = vpack.c.b16 %v2861, %v2860
        %v2980 = vpack.c.b16 %v2863, %v2862
        %v2981 = vpack.c.b16 %v2865, %v2864
        %v2982 = vpack.c.b16 %v2867, %v2866
        %v2983 = vpack.c.b16 %v2869, %v2868
        %v2984 = vpack.c.b16 %v2871, %v2870
        %v2985 = vpack.c.b16 %v2873, %v2872
        %v2986 = vpack.c.b16 %v2875, %v2874
        %v2987 = vpack.c.b16 %v2877, %v2876
        %v2988 = vpack.c.b16 %v2879, %v2878
        %v2989 = vpack.c.b16 %v2881, %v2880
        %v2990 = vpack.c.b16 %v2883, %v2882
        %v2991 = vpack.c.b16 %v2885, %v2884
        %v2992 = vpack.c.b16 %v2887, %v2886
        %v2993 = vpack.c.b16 %v2889, %v2888
        %v2994 = vpack.c.b16 %v2891, %v2890
        %v2995 = vpack.c.b16 %v2893, %v2892
        %v2996 = vpack.c.b16 %v2895, %v2894
        %v2997 = vpack.c.b16 %v2897, %v2896
        %v2998 = vpack.c.b16 %v2899, %v2898
        %v2999 = vpack.c.b16 %v2901, %v2900
        %v3000 = vpack.c.b16 %v2903, %v2902
        %v3001 = vpack.c.b16 %v2905, %v2904
        %v3002 = vpack.c.b16 %v2907, %v2906
        %v3003 = vpack.c.b16 %v2909, %v2908
        %v3004 = vpack.c.b16 %v2911, %v2910
        %v3005 = vpack.c.b16 %v2913, %v2912
        %v3006 = vpack.c.b16 %v2915, %v2914
        %v3007 = vpack.c.b16 %v2917, %v2916
        %v3008 = vpack.c.b16 %v2919, %v2918
        %v3009 = vpack.c.b16 %v2921, %v2920
        %v3010 = vpack.c.b16 %v2923, %v2922
        %v3011 = vpack.c.b16 %v2925, %v2924
        %v3012 = vpack.c.b16 %v2927, %v2926
        %v3013 = vpack.c.b16 %v2929, %v2928
        %v3014 = vpack.c.b16 %v2931, %v2930
        %v3015 = vpack.c.b16 %v2933, %v2932
        %v3016 = vpack.c.b16 %v2935, %v2934
        %v3017 = vpack.c.b16 %v2937, %v2936
        %v3018 = vpack.c.b16 %v2939, %v2938
        %v3019 = vpack.c.b16 %v2941, %v2940
        %v3020 = vpack.c.b16 %v2943, %v2942
        %v3021 = vpack.c.b16 %v2945, %v2944
        %v3022 = vpack.c.b16 %v2947, %v2946
        %v3023 = vpack.c.b16 %v2949, %v2948
        %v3024 = vpack.c.b16 %v2951, %v2950
        %v3025 = vpack.c.b16 %v2953, %v2952
        %v3026 = vpack.c.b16 %v2955, %v2954
        %v3027 = vpack.c.b16 %v2957, %v2956
        %v3028 = vpack.c.b16 %v2959, %v2958
        %v3029 = vpack.c.b16 %v2961, %v2960
        %v3030 = vpack.c.b16 %v2963, %v2962
        %v3031 = vpack.c.b16 %v2965, %v2964
        %v3032 = vpack.c.b16 %v2967, %v2966
        %v3033 = vpack.c.b16 %v2969, %v2968
        %v3114 = vunpack.c.l.b16 %v421
        %v3115 = vunpack.c.l.b16 %v422
        %v3116 = vunpack.c.l.b16 %v423
        %v3117 = vunpack.c.l.b16 %v424
        %v3118 = vunpack.c.l.b16 %v425
        %v3119 = vunpack.c.l.b16 %v426
        %v3120 = vunpack.c.l.b16 %v427
        %v3121 = vunpack.c.l.b16 %v428
        %v3122 = vunpack.c.l.b16 %v429
        %v3123 = vunpack.c.l.b16 %v430
        %v3124 = vunpack.c.l.b16 %v431
        %v3125 = vunpack.c.l.b16 %v432
        %v3126 = vunpack.c.l.b16 %v433
        %v3127 = vunpack.c.l.b16 %v434
        %v3128 = vunpack.c.l.b16 %v435
        %v3129 = vunpack.c.l.b16 %v436
        %v3130 = vpack.c.b16 %v3115, %v3114
        %v3131 = vpack.c.b16 %v3117, %v3116
        %v3132 = vpack.c.b16 %v3119, %v3118
        %v3133 = vpack.c.b16 %v3121, %v3120
        %v3134 = vpack.c.b16 %v3123, %v3122
        %v3135 = vpack.c.b16 %v3125, %v3124
        %v3136 = vpack.c.b16 %v3127, %v3126
        %v3137 = vpack.c.b16 %v3129, %v3128
        %3146 = vmatprep.subr.bf16.mxu0 0
        %3147 = vmatpush1.bf16.msra.mxu0 %v3130
        %3148 = vmatprep.subr.bf16.mxu0 0
        %3149 = vmatpush1.bf16.msra.mxu0 %v3131
        %3150 = vmatprep.subr.bf16.mxu0 0
        %3151 = vmatpush1.bf16.msra.mxu0 %v3132
        %3152 = vmatprep.subr.bf16.mxu0 0
        %3153 = vmatpush1.bf16.msra.mxu0 %v3133
        %3154 = vmatprep.subr.bf16.mxu0 0
        %3155 = vmatpush1.bf16.msra.mxu0 %v3134
        %3156 = vmatprep.subr.bf16.mxu0 0
        %3157 = vmatpush1.bf16.msra.mxu0 %v3135
        %3158 = vmatprep.subr.bf16.mxu0 0
        %3159 = vmatpush1.bf16.msra.mxu0 %v3136
        %3160 = vmatprep.subr.bf16.mxu0 0
        %3161 = vmatpush1.bf16.msra.mxu0 %v3137
        %3162 = vmatprep.subr.bf16.mxu0 0
        %3163 = vmatpush1.bf16.msra.mxu0 0
        %3164 = vmatprep.subr.bf16.mxu0 0
        %3165 = vmatpush1.bf16.msra.mxu0 0
        %3166 = vmatprep.subr.bf16.mxu0 0
        %3167 = vmatpush1.bf16.msra.mxu0 0
        %3168 = vmatprep.subr.bf16.mxu0 0
        %3169 = vmatpush1.bf16.msra.mxu0 0
        %3170 = vmatprep.subr.bf16.mxu0 0
        %3171 = vmatpush1.bf16.msra.mxu0 0
        %3172 = vmatprep.subr.bf16.mxu0 0
        %3173 = vmatpush1.bf16.msra.mxu0 0
        %3174 = vmatprep.subr.bf16.mxu0 0
        %3175 = vmatpush1.bf16.msra.mxu0 0
        %3176 = vmatprep.subr.bf16.mxu0 0
        %3177 = vmatpush1.bf16.msra.mxu0 0
        %3178 = vmatprep.mubr.bf16.mxu0 0
        %3179 = vmatmul.mubr.bf16.gmra.mrb[0].mxu0 %v2970
        %v3180 = vpop.f32.mrb[0].mxu0
        %v3181 = vadd.f32 %v2204, %v3180
        %v3182 = vpop.f32.mrb[0].mxu0
        %v3183 = vpop.f32.mrb[0].mxu0
        %v3184 = vadd.f32 %v2207, %v3183
        %v3185 = vpop.f32.mrb[0].mxu0
        %3186 = vmatprep.mubr.bf16.mxu0 0
        %3187 = vmatmul.mubr.bf16.gmra.mrb[0].mxu0 %v2971
        %v3188 = vpop.f32.mrb[0].mxu0
        %v3189 = vadd.f32 %v2212, %v3188
        %v3190 = vpop.f32.mrb[0].mxu0
        %v3191 = vpop.f32.mrb[0].mxu0
        %v3192 = vadd.f32 %v2215, %v3191
        %v3193 = vpop.f32.mrb[0].mxu0
        %3194 = vmatprep.mubr.bf16.mxu0 0
        %3195 = vmatmul.mubr.bf16.gmra.mrb[0].mxu0 %v2972
        %v3196 = vpop.f32.mrb[0].mxu0
        %v3197 = vadd.f32 %v2220, %v3196
        %v3198 = vpop.f32.mrb[0].mxu0
        %v3199 = vpop.f32.mrb[0].mxu0
        %v3200 = vadd.f32 %v2223, %v3199
        %v3201 = vpop.f32.mrb[0].mxu0
        %3202 = vmatprep.mubr.bf16.mxu0 0
        %3203 = vmatmul.mubr.bf16.gmra.mrb[0].mxu0 %v2973
        %v3204 = vpop.f32.mrb[0].mxu0
        %v3205 = vadd.f32 %v2228, %v3204
        %v3206 = vpop.f32.mrb[0].mxu0
        %v3207 = vpop.f32.mrb[0].mxu0
        %v3208 = vadd.f32 %v2231, %v3207
        %v3209 = vpop.f32.mrb[0].mxu0
        %3210 = vmatprep.mubr.bf16.mxu0 0
        %3211 = vmatmul.mubr.bf16.gmra.mrb[0].mxu0 %v2974
        %v3212 = vpop.f32.mrb[0].mxu0
        %v3213 = vadd.f32 %v2236, %v3212
        %v3214 = vpop.f32.mrb[0].mxu0
        %v3215 = vpop.f32.mrb[0].mxu0
        %v3216 = vadd.f32 %v2239, %v3215
        %v3217 = vpop.f32.mrb[0].mxu0
        %3218 = vmatprep.mubr.bf16.mxu0 0
        %3219 = vmatmul.mubr.bf16.gmra.mrb[0].mxu0 %v2975
        %v3220 = vpop.f32.mrb[0].mxu0
        %v3221 = vadd.f32 %v2244, %v3220
        %v3222 = vpop.f32.mrb[0].mxu0
        %v3223 = vpop.f32.mrb[0].mxu0
        %v3224 = vadd.f32 %v2247, %v3223
        %v3225 = vpop.f32.mrb[0].mxu0
        %3226 = vmatprep.mubr.bf16.mxu0 0
        %3227 = vmatmul.mubr.bf16.gmra.mrb[0].mxu0 %v2976
        %v3228 = vpop.f32.mrb[0].mxu0
        %v3229 = vadd.f32 %v2252, %v3228
        %v3230 = vpop.f32.mrb[0].mxu0
        %v3231 = vpop.f32.mrb[0].mxu0
        %v3232 = vadd.f32 %v2255, %v3231
        %v3233 = vpop.f32.mrb[0].mxu0
        %3234 = vmatprep.mubr.bf16.mxu0 0
        %3235 = vmatmul.mubr.bf16.gmra.mrb[0].mxu0 %v2977
        %v3236 = vpop.f32.mrb[0].mxu0
        %v3237 = vadd.f32 %v2260, %v3236
        %v3238 = vpop.f32.mrb[0].mxu0
        %v3239 = vpop.f32.mrb[0].mxu0
        %v3240 = vadd.f32 %v2263, %v3239
        %v3241 = vpop.f32.mrb[0].mxu0
        %3242 = vmatprep.mubr.bf16.mxu0 0
        %3243 = vmatmul.mubr.bf16.gmra.mrb[0].mxu0 %v2978
        %v3244 = vpop.f32.mrb[0].mxu0
        %v3245 = vadd.f32 %v2268, %v3244
        %v3246 = vpop.f32.mrb[0].mxu0
        %v3247 = vpop.f32.mrb[0].mxu0
        %v3248 = vadd.f32 %v2271, %v3247
        %v3249 = vpop.f32.mrb[0].mxu0
        %3250 = vmatprep.mubr.bf16.mxu0 0
        %3251 = vmatmul.mubr.bf16.gmra.mrb[0].mxu0 %v2979
        %v3252 = vpop.f32.mrb[0].mxu0
        %v3253 = vadd.f32 %v2276, %v3252
        %v3254 = vpop.f32.mrb[0].mxu0
        %v3255 = vpop.f32.mrb[0].mxu0
        %v3256 = vadd.f32 %v2279, %v3255
        %v3257 = vpop.f32.mrb[0].mxu0
        %3258 = vmatprep.mubr.bf16.mxu0 0
        %3259 = vmatmul.mubr.bf16.gmra.mrb[0].mxu0 %v2980
        %v3260 = vpop.f32.mrb[0].mxu0
        %v3261 = vadd.f32 %v2284, %v3260
        %v3262 = vpop.f32.mrb[0].mxu0
        %v3263 = vpop.f32.mrb[0].mxu0
        %v3264 = vadd.f32 %v2287, %v3263
        %v3265 = vpop.f32.mrb[0].mxu0
        %3266 = vmatprep.mubr.bf16.mxu0 0
        %3267 = vmatmul.mubr.bf16.gmra.mrb[0].mxu0 %v2981
        %v3268 = vpop.f32.mrb[0].mxu0
        %v3269 = vadd.f32 %v2292, %v3268
        %v3270 = vpop.f32.mrb[0].mxu0
        %v3271 = vpop.f32.mrb[0].mxu0
        %v3272 = vadd.f32 %v2295, %v3271
        %v3273 = vpop.f32.mrb[0].mxu0
        %3274 = vmatprep.mubr.bf16.mxu0 0
        %3275 = vmatmul.mubr.bf16.gmra.mrb[0].mxu0 %v2982
        %v3276 = vpop.f32.mrb[0].mxu0
        %v3277 = vadd.f32 %v2300, %v3276
        %v3278 = vpop.f32.mrb[0].mxu0
        %v3279 = vpop.f32.mrb[0].mxu0
        %v3280 = vadd.f32 %v2303, %v3279
        %v3281 = vpop.f32.mrb[0].mxu0
        %3282 = vmatprep.mubr.bf16.mxu0 0
        %3283 = vmatmul.mubr.bf16.gmra.mrb[0].mxu0 %v2983
        %v3284 = vpop.f32.mrb[0].mxu0
        %v3285 = vadd.f32 %v2308, %v3284
        %v3286 = vpop.f32.mrb[0].mxu0
        %v3287 = vpop.f32.mrb[0].mxu0
        %v3288 = vadd.f32 %v2311, %v3287
        %v3289 = vpop.f32.mrb[0].mxu0
        %3290 = vmatprep.mubr.bf16.mxu0 0
        %3291 = vmatmul.mubr.bf16.gmra.mrb[0].mxu0 %v2984
        %v3292 = vpop.f32.mrb[0].mxu0
        %v3293 = vadd.f32 %v2316, %v3292
        %v3294 = vpop.f32.mrb[0].mxu0
        %v3295 = vpop.f32.mrb[0].mxu0
        %v3296 = vadd.f32 %v2319, %v3295
        %v3297 = vpop.f32.mrb[0].mxu0
        %3298 = vmatprep.mubr.bf16.mxu0 0
        %3299 = vmatmul.mubr.bf16.gmra.mrb[0].mxu0 %v2985
        %v3300 = vpop.f32.mrb[0].mxu0
        %v3301 = vadd.f32 %v2324, %v3300
        %v3302 = vpop.f32.mrb[0].mxu0
        %v3303 = vpop.f32.mrb[0].mxu0
        %v3304 = vadd.f32 %v2327, %v3303
        %v3305 = vpop.f32.mrb[0].mxu0
        %3306 = vmatprep.mubr.bf16.mxu0 0
        %3307 = vmatmul.mubr.bf16.gmra.mrb[0].mxu0 %v2986
        %v3308 = vpop.f32.mrb[0].mxu0
        %v3309 = vadd.f32 %v2332, %v3308
        %v3310 = vpop.f32.mrb[0].mxu0
        %v3311 = vpop.f32.mrb[0].mxu0
        %v3312 = vadd.f32 %v2335, %v3311
        %v3313 = vpop.f32.mrb[0].mxu0
        %3314 = vmatprep.mubr.bf16.mxu0 0
        %3315 = vmatmul.mubr.bf16.gmra.mrb[0].mxu0 %v2987
        %v3316 = vpop.f32.mrb[0].mxu0
        %v3317 = vadd.f32 %v2340, %v3316
        %v3318 = vpop.f32.mrb[0].mxu0
        %v3319 = vpop.f32.mrb[0].mxu0
        %v3320 = vadd.f32 %v2343, %v3319
        %v3321 = vpop.f32.mrb[0].mxu0
        %3322 = vmatprep.mubr.bf16.mxu0 0
        %3323 = vmatmul.mubr.bf16.gmra.mrb[0].mxu0 %v2988
        %v3324 = vpop.f32.mrb[0].mxu0
        %v3325 = vadd.f32 %v2348, %v3324
        %v3326 = vpop.f32.mrb[0].mxu0
        %v3327 = vpop.f32.mrb[0].mxu0
        %v3328 = vadd.f32 %v2351, %v3327
        %v3329 = vpop.f32.mrb[0].mxu0
        %3330 = vmatprep.mubr.bf16.mxu0 0
        %3331 = vmatmul.mubr.bf16.gmra.mrb[0].mxu0 %v2989
        %v3332 = vpop.f32.mrb[0].mxu0
        %v3333 = vadd.f32 %v2356, %v3332
        %v3334 = vpop.f32.mrb[0].mxu0
        %v3335 = vpop.f32.mrb[0].mxu0
        %v3336 = vadd.f32 %v2359, %v3335
        %v3337 = vpop.f32.mrb[0].mxu0
        %3338 = vmatprep.mubr.bf16.mxu0 0
        %3339 = vmatmul.mubr.bf16.gmra.mrb[0].mxu0 %v2990
        %v3340 = vpop.f32.mrb[0].mxu0
        %v3341 = vadd.f32 %v2364, %v3340
        %v3342 = vpop.f32.mrb[0].mxu0
        %v3343 = vpop.f32.mrb[0].mxu0
        %v3344 = vadd.f32 %v2367, %v3343
        %v3345 = vpop.f32.mrb[0].mxu0
        %3346 = vmatprep.mubr.bf16.mxu0 0
        %3347 = vmatmul.mubr.bf16.gmra.mrb[0].mxu0 %v2991
        %v3348 = vpop.f32.mrb[0].mxu0
        %v3349 = vadd.f32 %v2372, %v3348
        %v3350 = vpop.f32.mrb[0].mxu0
        %v3351 = vpop.f32.mrb[0].mxu0
        %v3352 = vadd.f32 %v2375, %v3351
        %v3353 = vpop.f32.mrb[0].mxu0
        %3354 = vmatprep.mubr.bf16.mxu0 0
        %3355 = vmatmul.mubr.bf16.gmra.mrb[0].mxu0 %v2992
        %v3356 = vpop.f32.mrb[0].mxu0
        %v3357 = vadd.f32 %v2380, %v3356
        %v3358 = vpop.f32.mrb[0].mxu0
        %v3359 = vpop.f32.mrb[0].mxu0
        %v3360 = vadd.f32 %v2383, %v3359
        %v3361 = vpop.f32.mrb[0].mxu0
        %3362 = vmatprep.mubr.bf16.mxu0 0
        %3363 = vmatmul.mubr.bf16.gmra.mrb[0].mxu0 %v2993
        %v3364 = vpop.f32.mrb[0].mxu0
        %v3365 = vadd.f32 %v2388, %v3364
        %v3366 = vpop.f32.mrb[0].mxu0
        %v3367 = vpop.f32.mrb[0].mxu0
        %v3368 = vadd.f32 %v2391, %v3367
        %v3369 = vpop.f32.mrb[0].mxu0
        %3370 = vmatprep.mubr.bf16.mxu0 0
        %3371 = vmatmul.mubr.bf16.gmra.mrb[0].mxu0 %v2994
        %v3372 = vpop.f32.mrb[0].mxu0
        %v3373 = vadd.f32 %v2396, %v3372
        %v3374 = vpop.f32.mrb[0].mxu0
        %v3375 = vpop.f32.mrb[0].mxu0
        %v3376 = vadd.f32 %v2399, %v3375
        %v3377 = vpop.f32.mrb[0].mxu0
        %3378 = vmatprep.mubr.bf16.mxu0 0
        %3379 = vmatmul.mubr.bf16.gmra.mrb[0].mxu0 %v2995
        %v3380 = vpop.f32.mrb[0].mxu0
        %v3381 = vadd.f32 %v2404, %v3380
        %v3382 = vpop.f32.mrb[0].mxu0
        %v3383 = vpop.f32.mrb[0].mxu0
        %v3384 = vadd.f32 %v2407, %v3383
        %v3385 = vpop.f32.mrb[0].mxu0
        %3386 = vmatprep.mubr.bf16.mxu0 0
        %3387 = vmatmul.mubr.bf16.gmra.mrb[0].mxu0 %v2996
        %v3388 = vpop.f32.mrb[0].mxu0
        %v3389 = vadd.f32 %v2412, %v3388
        %v3390 = vpop.f32.mrb[0].mxu0
        %v3391 = vpop.f32.mrb[0].mxu0
        %v3392 = vadd.f32 %v2415, %v3391
        %v3393 = vpop.f32.mrb[0].mxu0
        %3394 = vmatprep.mubr.bf16.mxu0 0
        %3395 = vmatmul.mubr.bf16.gmra.mrb[0].mxu0 %v2997
        %v3396 = vpop.f32.mrb[0].mxu0
        %v3397 = vadd.f32 %v2420, %v3396
        %v3398 = vpop.f32.mrb[0].mxu0
        %v3399 = vpop.f32.mrb[0].mxu0
        %v3400 = vadd.f32 %v2423, %v3399
        %v3401 = vpop.f32.mrb[0].mxu0
        %3402 = vmatprep.mubr.bf16.mxu0 0
        %3403 = vmatmul.mubr.bf16.gmra.mrb[0].mxu0 %v2998
        %v3404 = vpop.f32.mrb[0].mxu0
        %v3405 = vadd.f32 %v2428, %v3404
        %v3406 = vpop.f32.mrb[0].mxu0
        %v3407 = vpop.f32.mrb[0].mxu0
        %v3408 = vadd.f32 %v2431, %v3407
        %v3409 = vpop.f32.mrb[0].mxu0
        %3410 = vmatprep.mubr.bf16.mxu0 0
        %3411 = vmatmul.mubr.bf16.gmra.mrb[0].mxu0 %v2999
        %v3412 = vpop.f32.mrb[0].mxu0
        %v3413 = vadd.f32 %v2436, %v3412
        %v3414 = vpop.f32.mrb[0].mxu0
        %v3415 = vpop.f32.mrb[0].mxu0
        %v3416 = vadd.f32 %v2439, %v3415
        %v3417 = vpop.f32.mrb[0].mxu0
        %3418 = vmatprep.mubr.bf16.mxu0 0
        %3419 = vmatmul.mubr.bf16.gmra.mrb[0].mxu0 %v3000
        %v3420 = vpop.f32.mrb[0].mxu0
        %v3421 = vadd.f32 %v2444, %v3420
        %v3422 = vpop.f32.mrb[0].mxu0
        %v3423 = vpop.f32.mrb[0].mxu0
        %v3424 = vadd.f32 %v2447, %v3423
        %v3425 = vpop.f32.mrb[0].mxu0
        %3426 = vmatprep.mubr.bf16.mxu0 0
        %3427 = vmatmul.mubr.bf16.gmra.mrb[0].mxu0 %v3001
        %v3428 = vpop.f32.mrb[0].mxu0
        %v3429 = vadd.f32 %v2452, %v3428
        %v3430 = vpop.f32.mrb[0].mxu0
        %v3431 = vpop.f32.mrb[0].mxu0
        %v3432 = vadd.f32 %v2455, %v3431
        %v3433 = vpop.f32.mrb[0].mxu0
        %3434 = vmatprep.mubr.bf16.mxu0 0
        %3435 = vmatmul.mubr.bf16.gmra.mrb[0].mxu0 %v3002
        %v3436 = vpop.f32.mrb[0].mxu0
        %v3437 = vadd.f32 %v2460, %v3436
        %v3438 = vpop.f32.mrb[0].mxu0
        %v3439 = vpop.f32.mrb[0].mxu0
        %v3440 = vadd.f32 %v2463, %v3439
        %v3441 = vpop.f32.mrb[0].mxu0
        %3442 = vmatprep.mubr.bf16.mxu0 0
        %3443 = vmatmul.mubr.bf16.gmra.mrb[0].mxu0 %v3003
        %v3444 = vpop.f32.mrb[0].mxu0
        %v3445 = vadd.f32 %v2468, %v3444
        %v3446 = vpop.f32.mrb[0].mxu0
        %v3447 = vpop.f32.mrb[0].mxu0
        %v3448 = vadd.f32 %v2471, %v3447
        %v3449 = vpop.f32.mrb[0].mxu0
        %3450 = vmatprep.mubr.bf16.mxu0 0
        %3451 = vmatmul.mubr.bf16.gmra.mrb[0].mxu0 %v3004
        %v3452 = vpop.f32.mrb[0].mxu0
        %v3453 = vadd.f32 %v2476, %v3452
        %v3454 = vpop.f32.mrb[0].mxu0
        %v3455 = vpop.f32.mrb[0].mxu0
        %v3456 = vadd.f32 %v2479, %v3455
        %v3457 = vpop.f32.mrb[0].mxu0
        %3458 = vmatprep.mubr.bf16.mxu0 0
        %3459 = vmatmul.mubr.bf16.gmra.mrb[0].mxu0 %v3005
        %v3460 = vpop.f32.mrb[0].mxu0
        %v3461 = vadd.f32 %v2484, %v3460
        %v3462 = vpop.f32.mrb[0].mxu0
        %v3463 = vpop.f32.mrb[0].mxu0
        %v3464 = vadd.f32 %v2487, %v3463
        %v3465 = vpop.f32.mrb[0].mxu0
        %3466 = vmatprep.mubr.bf16.mxu0 0
        %3467 = vmatmul.mubr.bf16.gmra.mrb[0].mxu0 %v3006
        %v3468 = vpop.f32.mrb[0].mxu0
        %v3469 = vadd.f32 %v2492, %v3468
        %v3470 = vpop.f32.mrb[0].mxu0
        %v3471 = vpop.f32.mrb[0].mxu0
        %v3472 = vadd.f32 %v2495, %v3471
        %v3473 = vpop.f32.mrb[0].mxu0
        %3474 = vmatprep.mubr.bf16.mxu0 0
        %3475 = vmatmul.mubr.bf16.gmra.mrb[0].mxu0 %v3007
        %v3476 = vpop.f32.mrb[0].mxu0
        %v3477 = vadd.f32 %v2500, %v3476
        %v3478 = vpop.f32.mrb[0].mxu0
        %v3479 = vpop.f32.mrb[0].mxu0
        %v3480 = vadd.f32 %v2503, %v3479
        %v3481 = vpop.f32.mrb[0].mxu0
        %3482 = vmatprep.mubr.bf16.mxu0 0
        %3483 = vmatmul.mubr.bf16.gmra.mrb[0].mxu0 %v3008
        %v3484 = vpop.f32.mrb[0].mxu0
        %v3485 = vadd.f32 %v2508, %v3484
        %v3486 = vpop.f32.mrb[0].mxu0
        %v3487 = vpop.f32.mrb[0].mxu0
        %v3488 = vadd.f32 %v2511, %v3487
        %v3489 = vpop.f32.mrb[0].mxu0
        %3490 = vmatprep.mubr.bf16.mxu0 0
        %3491 = vmatmul.mubr.bf16.gmra.mrb[0].mxu0 %v3009
        %v3492 = vpop.f32.mrb[0].mxu0
        %v3493 = vadd.f32 %v2516, %v3492
        %v3494 = vpop.f32.mrb[0].mxu0
        %v3495 = vpop.f32.mrb[0].mxu0
        %v3496 = vadd.f32 %v2519, %v3495
        %v3497 = vpop.f32.mrb[0].mxu0
        %3498 = vmatprep.mubr.bf16.mxu0 0
        %3499 = vmatmul.mubr.bf16.gmra.mrb[0].mxu0 %v3010
        %v3500 = vpop.f32.mrb[0].mxu0
        %v3501 = vadd.f32 %v2524, %v3500
        %v3502 = vpop.f32.mrb[0].mxu0
        %v3503 = vpop.f32.mrb[0].mxu0
        %v3504 = vadd.f32 %v2527, %v3503
        %v3505 = vpop.f32.mrb[0].mxu0
        %3506 = vmatprep.mubr.bf16.mxu0 0
        %3507 = vmatmul.mubr.bf16.gmra.mrb[0].mxu0 %v3011
        %v3508 = vpop.f32.mrb[0].mxu0
        %v3509 = vadd.f32 %v2532, %v3508
        %v3510 = vpop.f32.mrb[0].mxu0
        %v3511 = vpop.f32.mrb[0].mxu0
        %v3512 = vadd.f32 %v2535, %v3511
        %v3513 = vpop.f32.mrb[0].mxu0
        %3514 = vmatprep.mubr.bf16.mxu0 0
        %3515 = vmatmul.mubr.bf16.gmra.mrb[0].mxu0 %v3012
        %v3516 = vpop.f32.mrb[0].mxu0
        %v3517 = vadd.f32 %v2540, %v3516
        %v3518 = vpop.f32.mrb[0].mxu0
        %v3519 = vpop.f32.mrb[0].mxu0
        %v3520 = vadd.f32 %v2543, %v3519
        %v3521 = vpop.f32.mrb[0].mxu0
        %3522 = vmatprep.mubr.bf16.mxu0 0
        %3523 = vmatmul.mubr.bf16.gmra.mrb[0].mxu0 %v3013
        %v3524 = vpop.f32.mrb[0].mxu0
        %v3525 = vadd.f32 %v2548, %v3524
        %v3526 = vpop.f32.mrb[0].mxu0
        %v3527 = vpop.f32.mrb[0].mxu0
        %v3528 = vadd.f32 %v2551, %v3527
        %v3529 = vpop.f32.mrb[0].mxu0
        %3530 = vmatprep.mubr.bf16.mxu0 0
        %3531 = vmatmul.mubr.bf16.gmra.mrb[0].mxu0 %v3014
        %v3532 = vpop.f32.mrb[0].mxu0
        %v3533 = vadd.f32 %v2556, %v3532
        %v3534 = vpop.f32.mrb[0].mxu0
        %v3535 = vpop.f32.mrb[0].mxu0
        %v3536 = vadd.f32 %v2559, %v3535
        %v3537 = vpop.f32.mrb[0].mxu0
        %3538 = vmatprep.mubr.bf16.mxu0 0
        %3539 = vmatmul.mubr.bf16.gmra.mrb[0].mxu0 %v3015
        %v3540 = vpop.f32.mrb[0].mxu0
        %v3541 = vadd.f32 %v2564, %v3540
        %v3542 = vpop.f32.mrb[0].mxu0
        %v3543 = vpop.f32.mrb[0].mxu0
        %v3544 = vadd.f32 %v2567, %v3543
        %v3545 = vpop.f32.mrb[0].mxu0
        %3546 = vmatprep.mubr.bf16.mxu0 0
        %3547 = vmatmul.mubr.bf16.gmra.mrb[0].mxu0 %v3016
        %v3548 = vpop.f32.mrb[0].mxu0
        %v3549 = vadd.f32 %v2572, %v3548
        %v3550 = vpop.f32.mrb[0].mxu0
        %v3551 = vpop.f32.mrb[0].mxu0
        %v3552 = vadd.f32 %v2575, %v3551
        %v3553 = vpop.f32.mrb[0].mxu0
        %3554 = vmatprep.mubr.bf16.mxu0 0
        %3555 = vmatmul.mubr.bf16.gmra.mrb[0].mxu0 %v3017
        %v3556 = vpop.f32.mrb[0].mxu0
        %v3557 = vadd.f32 %v2580, %v3556
        %v3558 = vpop.f32.mrb[0].mxu0
        %v3559 = vpop.f32.mrb[0].mxu0
        %v3560 = vadd.f32 %v2583, %v3559
        %v3561 = vpop.f32.mrb[0].mxu0
        %3562 = vmatprep.mubr.bf16.mxu0 0
        %3563 = vmatmul.mubr.bf16.gmra.mrb[0].mxu0 %v3018
        %v3564 = vpop.f32.mrb[0].mxu0
        %v3565 = vadd.f32 %v2588, %v3564
        %v3566 = vpop.f32.mrb[0].mxu0
        %v3567 = vpop.f32.mrb[0].mxu0
        %v3568 = vadd.f32 %v2591, %v3567
        %v3569 = vpop.f32.mrb[0].mxu0
        %3570 = vmatprep.mubr.bf16.mxu0 0
        %3571 = vmatmul.mubr.bf16.gmra.mrb[0].mxu0 %v3019
        %v3572 = vpop.f32.mrb[0].mxu0
        %v3573 = vadd.f32 %v2596, %v3572
        %v3574 = vpop.f32.mrb[0].mxu0
        %v3575 = vpop.f32.mrb[0].mxu0
        %v3576 = vadd.f32 %v2599, %v3575
        %v3577 = vpop.f32.mrb[0].mxu0
        %3578 = vmatprep.mubr.bf16.mxu0 0
        %3579 = vmatmul.mubr.bf16.gmra.mrb[0].mxu0 %v3020
        %v3580 = vpop.f32.mrb[0].mxu0
        %v3581 = vadd.f32 %v2604, %v3580
        %v3582 = vpop.f32.mrb[0].mxu0
        %v3583 = vpop.f32.mrb[0].mxu0
        %v3584 = vadd.f32 %v2607, %v3583
        %v3585 = vpop.f32.mrb[0].mxu0
        %3586 = vmatprep.mubr.bf16.mxu0 0
        %3587 = vmatmul.mubr.bf16.gmra.mrb[0].mxu0 %v3021
        %v3588 = vpop.f32.mrb[0].mxu0
        %v3589 = vadd.f32 %v2612, %v3588
        %v3590 = vpop.f32.mrb[0].mxu0
        %v3591 = vpop.f32.mrb[0].mxu0
        %v3592 = vadd.f32 %v2615, %v3591
        %v3593 = vpop.f32.mrb[0].mxu0
        %3594 = vmatprep.mubr.bf16.mxu0 0
        %3595 = vmatmul.mubr.bf16.gmra.mrb[0].mxu0 %v3022
        %v3596 = vpop.f32.mrb[0].mxu0
        %v3597 = vadd.f32 %v2620, %v3596
        %v3598 = vpop.f32.mrb[0].mxu0
        %v3599 = vpop.f32.mrb[0].mxu0
        %v3600 = vadd.f32 %v2623, %v3599
        %v3601 = vpop.f32.mrb[0].mxu0
        %3602 = vmatprep.mubr.bf16.mxu0 0
        %3603 = vmatmul.mubr.bf16.gmra.mrb[0].mxu0 %v3023
        %v3604 = vpop.f32.mrb[0].mxu0
        %v3605 = vadd.f32 %v2628, %v3604
        %v3606 = vpop.f32.mrb[0].mxu0
        %v3607 = vpop.f32.mrb[0].mxu0
        %v3608 = vadd.f32 %v2631, %v3607
        %v3609 = vpop.f32.mrb[0].mxu0
        %3610 = vmatprep.mubr.bf16.mxu0 0
        %3611 = vmatmul.mubr.bf16.gmra.mrb[0].mxu0 %v3024
        %v3612 = vpop.f32.mrb[0].mxu0
        %v3613 = vadd.f32 %v2636, %v3612
        %v3614 = vpop.f32.mrb[0].mxu0
        %v3615 = vpop.f32.mrb[0].mxu0
        %v3616 = vadd.f32 %v2639, %v3615
        %v3617 = vpop.f32.mrb[0].mxu0
        %3618 = vmatprep.mubr.bf16.mxu0 0
        %3619 = vmatmul.mubr.bf16.gmra.mrb[0].mxu0 %v3025
        %v3620 = vpop.f32.mrb[0].mxu0
        %v3621 = vadd.f32 %v2644, %v3620
        %v3622 = vpop.f32.mrb[0].mxu0
        %v3623 = vpop.f32.mrb[0].mxu0
        %v3624 = vadd.f32 %v2647, %v3623
        %v3625 = vpop.f32.mrb[0].mxu0
        %3626 = vmatprep.mubr.bf16.mxu0 0
        %3627 = vmatmul.mubr.bf16.gmra.mrb[0].mxu0 %v3026
        %v3628 = vpop.f32.mrb[0].mxu0
        %v3629 = vadd.f32 %v2652, %v3628
        %v3630 = vpop.f32.mrb[0].mxu0
        %v3631 = vpop.f32.mrb[0].mxu0
        %v3632 = vadd.f32 %v2655, %v3631
        %v3633 = vpop.f32.mrb[0].mxu0
        %3634 = vmatprep.mubr.bf16.mxu0 0
        %3635 = vmatmul.mubr.bf16.gmra.mrb[0].mxu0 %v3027
        %v3636 = vpop.f32.mrb[0].mxu0
        %v3637 = vadd.f32 %v2660, %v3636
        %v3638 = vpop.f32.mrb[0].mxu0
        %v3639 = vpop.f32.mrb[0].mxu0
        %v3640 = vadd.f32 %v2663, %v3639
        %v3641 = vpop.f32.mrb[0].mxu0
        %3642 = vmatprep.mubr.bf16.mxu0 0
        %3643 = vmatmul.mubr.bf16.gmra.mrb[0].mxu0 %v3028
        %v3644 = vpop.f32.mrb[0].mxu0
        %v3645 = vadd.f32 %v2668, %v3644
        %v3646 = vpop.f32.mrb[0].mxu0
        %v3647 = vpop.f32.mrb[0].mxu0
        %v3648 = vadd.f32 %v2671, %v3647
        %v3649 = vpop.f32.mrb[0].mxu0
        %3650 = vmatprep.mubr.bf16.mxu0 0
        %3651 = vmatmul.mubr.bf16.gmra.mrb[0].mxu0 %v3029
        %v3652 = vpop.f32.mrb[0].mxu0
        %v3653 = vadd.f32 %v2676, %v3652
        %v3654 = vpop.f32.mrb[0].mxu0
        %v3655 = vpop.f32.mrb[0].mxu0
        %v3656 = vadd.f32 %v2679, %v3655
        %v3657 = vpop.f32.mrb[0].mxu0
        %3658 = vmatprep.mubr.bf16.mxu0 0
        %3659 = vmatmul.mubr.bf16.gmra.mrb[0].mxu0 %v3030
        %v3660 = vpop.f32.mrb[0].mxu0
        %v3661 = vadd.f32 %v2684, %v3660
        %v3662 = vpop.f32.mrb[0].mxu0
        %v3663 = vpop.f32.mrb[0].mxu0
        %v3664 = vadd.f32 %v2687, %v3663
        %v3665 = vpop.f32.mrb[0].mxu0
        %3666 = vmatprep.mubr.bf16.mxu0 0
        %3667 = vmatmul.mubr.bf16.gmra.mrb[0].mxu0 %v3031
        %v3668 = vpop.f32.mrb[0].mxu0
        %v3669 = vadd.f32 %v2692, %v3668
        %v3670 = vpop.f32.mrb[0].mxu0
        %v3671 = vpop.f32.mrb[0].mxu0
        %v3672 = vadd.f32 %v2695, %v3671
        %v3673 = vpop.f32.mrb[0].mxu0
        %3674 = vmatprep.mubr.bf16.mxu0 0
        %3675 = vmatmul.mubr.bf16.gmra.mrb[0].mxu0 %v3032
        %v3676 = vpop.f32.mrb[0].mxu0
        %v3677 = vadd.f32 %v2700, %v3676
        %v3678 = vpop.f32.mrb[0].mxu0
        %v3679 = vpop.f32.mrb[0].mxu0
        %v3680 = vadd.f32 %v2703, %v3679
        %v3681 = vpop.f32.mrb[0].mxu0
        %3682 = vmatprep.mubr.bf16.mxu0 0
        %3683 = vmatmul.mubr.bf16.gmra.mrb[0].mxu0 %v3033
        %v3684 = vpop.f32.mrb[0].mxu0
        %v3685 = vadd.f32 %v2708, %v3684
        %v3686 = vpop.f32.mrb[0].mxu0
        %v3687 = vpop.f32.mrb[0].mxu0
        %v3688 = vadd.f32 %v2711, %v3687
        %v3689 = vpop.f32.mrb[0].mxu0
        %3690 = vdwg.mxu0
        %vm3723 = vcmask 1042432
        %vm3724 = vcmask 1046532
        %vm3725 = vmor %vm3723, %vm3724
        %v3726 = vrot.slane %v251, 5
        %v3727 = vrot.slane %v3726, 4
        %v3728 = vrot.slane %v252, 5
        %v3729 = vsel %vm3725, %v3727, %v3728
        %v3730 = vrot.slane %v3728, 4
        %v3731 = vrot.slane %v253, 5
        %v3732 = vsel %vm3725, %v3730, %v3731
        %v3733 = vrot.slane %v3731, 4
        %v3734 = vrot.slane %v254, 5
        %v3735 = vsel %vm3725, %v3733, %v3734
        %v3736 = vrot.slane %v3734, 4
        %v3737 = vrot.slane %v255, 5
        %v3738 = vsel %vm3725, %v3736, %v3737
        %v3739 = vrot.slane %v256, 5
        %v3740 = vrot.slane %v3739, 4
        %v3741 = vrot.slane %v257, 5
        %v3742 = vsel %vm3725, %v3740, %v3741
        %v3743 = vrot.slane %v3741, 4
        %v3744 = vrot.slane %v258, 5
        %v3745 = vsel %vm3725, %v3743, %v3744
        %v3746 = vrot.slane %v3744, 4
        %v3747 = vrot.slane %v259, 5
        %v3748 = vsel %vm3725, %v3746, %v3747
        %v3749 = vrot.slane %v3747, 4
        %v3750 = vrot.slane %v260, 5
        %v3751 = vsel %vm3725, %v3749, %v3750
        %v3752 = vrot.slane %v261, 5
        %v3753 = vrot.slane %v3752, 4
        %v3754 = vrot.slane %v262, 5
        %v3755 = vsel %vm3725, %v3753, %v3754
        %v3756 = vrot.slane %v3754, 4
        %v3757 = vrot.slane %v263, 5
        %v3758 = vsel %vm3725, %v3756, %v3757
        %v3759 = vrot.slane %v3757, 4
        %v3760 = vrot.slane %v264, 5
        %v3761 = vsel %vm3725, %v3759, %v3760
        %v3762 = vrot.slane %v3760, 4
        %v3763 = vrot.slane %v265, 5
        %v3764 = vsel %vm3725, %v3762, %v3763
        %v3765 = vrot.slane %v266, 5
        %v3766 = vrot.slane %v3765, 4
        %v3767 = vrot.slane %v267, 5
        %v3768 = vsel %vm3725, %v3766, %v3767
        %v3769 = vrot.slane %v3767, 4
        %v3770 = vrot.slane %v268, 5
        %v3771 = vsel %vm3725, %v3769, %v3770
        %v3772 = vrot.slane %v3770, 4
        %v3773 = vrot.slane %v269, 5
        %v3774 = vsel %vm3725, %v3772, %v3773
        %v3775 = vrot.slane %v3773, 4
        %v3776 = vrot.slane %v270, 5
        %v3777 = vsel %vm3725, %v3775, %v3776
        %v3778 = vrot.slane %v271, 5
        %v3779 = vrot.slane %v3778, 4
        %v3780 = vrot.slane %v272, 5
        %v3781 = vsel %vm3725, %v3779, %v3780
        %v3782 = vrot.slane %v3780, 4
        %v3783 = vrot.slane %v273, 5
        %v3784 = vsel %vm3725, %v3782, %v3783
        %v3785 = vrot.slane %v3783, 4
        %v3786 = vrot.slane %v274, 5
        %v3787 = vsel %vm3725, %v3785, %v3786
        %v3788 = vrot.slane %v3786, 4
        %v3789 = vrot.slane %v275, 5
        %v3790 = vsel %vm3725, %v3788, %v3789
        %v3791 = vrot.slane %v276, 5
        %v3792 = vrot.slane %v3791, 4
        %v3793 = vrot.slane %v277, 5
        %v3794 = vsel %vm3725, %v3792, %v3793
        %v3795 = vrot.slane %v3793, 4
        %v3796 = vrot.slane %v278, 5
        %v3797 = vsel %vm3725, %v3795, %v3796
        %v3798 = vrot.slane %v3796, 4
        %v3799 = vrot.slane %v279, 5
        %v3800 = vsel %vm3725, %v3798, %v3799
        %v3801 = vrot.slane %v3799, 4
        %v3802 = vrot.slane %v280, 5
        %v3803 = vsel %vm3725, %v3801, %v3802
        %v3804 = vrot.slane %v281, 5
        %v3805 = vrot.slane %v3804, 4
        %v3806 = vrot.slane %v282, 5
        %v3807 = vsel %vm3725, %v3805, %v3806
        %v3808 = vrot.slane %v3806, 4
        %v3809 = vrot.slane %v283, 5
        %v3810 = vsel %vm3725, %v3808, %v3809
        %v3811 = vrot.slane %v3809, 4
        %v3812 = vrot.slane %v284, 5
        %v3813 = vsel %vm3725, %v3811, %v3812
        %v3814 = vrot.slane %v3812, 4
        %v3815 = vrot.slane %v285, 5
        %v3816 = vsel %vm3725, %v3814, %v3815
        %v3817 = vrot.slane %v286, 5
        %v3818 = vrot.slane %v3817, 4
        %v3819 = vrot.slane %v287, 5
        %v3820 = vsel %vm3725, %v3818, %v3819
        %v3821 = vrot.slane %v3819, 4
        %v3822 = vrot.slane %v288, 5
        %v3823 = vsel %vm3725, %v3821, %v3822
        %v3824 = vrot.slane %v3822, 4
        %v3825 = vrot.slane %v289, 5
        %v3826 = vsel %vm3725, %v3824, %v3825
        %v3827 = vrot.slane %v3825, 4
        %v3828 = vrot.slane %v290, 5
        %v3829 = vsel %vm3725, %v3827, %v3828
        %v3830 = vrot.slane %v291, 5
        %v3831 = vrot.slane %v3830, 4
        %v3832 = vrot.slane %v292, 5
        %v3833 = vsel %vm3725, %v3831, %v3832
        %v3834 = vrot.slane %v3832, 4
        %v3835 = vrot.slane %v293, 5
        %v3836 = vsel %vm3725, %v3834, %v3835
        %v3837 = vrot.slane %v3835, 4
        %v3838 = vrot.slane %v294, 5
        %v3839 = vsel %vm3725, %v3837, %v3838
        %v3840 = vrot.slane %v3838, 4
        %v3841 = vrot.slane %v295, 5
        %v3842 = vsel %vm3725, %v3840, %v3841
        %v3843 = vrot.slane %v296, 5
        %v3844 = vrot.slane %v3843, 4
        %v3845 = vrot.slane %v297, 5
        %v3846 = vsel %vm3725, %v3844, %v3845
        %v3847 = vrot.slane %v3845, 4
        %v3848 = vrot.slane %v298, 5
        %v3849 = vsel %vm3725, %v3847, %v3848
        %v3850 = vrot.slane %v3848, 4
        %v3851 = vrot.slane %v299, 5
        %v3852 = vsel %vm3725, %v3850, %v3851
        %v3853 = vrot.slane %v3851, 4
        %v3854 = vrot.slane %v300, 5
        %v3855 = vsel %vm3725, %v3853, %v3854
        %v3856 = vrot.slane %v301, 5
        %v3857 = vrot.slane %v3856, 4
        %v3858 = vrot.slane %v302, 5
        %v3859 = vsel %vm3725, %v3857, %v3858
        %v3860 = vrot.slane %v3858, 4
        %v3861 = vrot.slane %v303, 5
        %v3862 = vsel %vm3725, %v3860, %v3861
        %v3863 = vrot.slane %v3861, 4
        %v3864 = vrot.slane %v304, 5
        %v3865 = vsel %vm3725, %v3863, %v3864
        %v3866 = vrot.slane %v3864, 4
        %v3867 = vrot.slane %v305, 5
        %v3868 = vsel %vm3725, %v3866, %v3867
        %v3869 = vrot.slane %v306, 5
        %v3870 = vrot.slane %v3869, 4
        %v3871 = vrot.slane %v307, 5
        %v3872 = vsel %vm3725, %v3870, %v3871
        %v3873 = vrot.slane %v3871, 4
        %v3874 = vrot.slane %v308, 5
        %v3875 = vsel %vm3725, %v3873, %v3874
        %v3876 = vrot.slane %v3874, 4
        %v3877 = vrot.slane %v309, 5
        %v3878 = vsel %vm3725, %v3876, %v3877
        %v3879 = vrot.slane %v3877, 4
        %v3880 = vrot.slane %v310, 5
        %v3881 = vsel %vm3725, %v3879, %v3880
        %v3882 = vrot.slane %v311, 5
        %v3883 = vrot.slane %v3882, 4
        %v3884 = vrot.slane %v312, 5
        %v3885 = vsel %vm3725, %v3883, %v3884
        %v3886 = vrot.slane %v3884, 4
        %v3887 = vrot.slane %v313, 5
        %v3888 = vsel %vm3725, %v3886, %v3887
        %v3889 = vrot.slane %v3887, 4
        %v3890 = vrot.slane %v314, 5
        %v3891 = vsel %vm3725, %v3889, %v3890
        %v3892 = vrot.slane %v3890, 4
        %v3893 = vrot.slane %v315, 5
        %v3894 = vsel %vm3725, %v3892, %v3893
        %v3895 = vrot.slane %v316, 5
        %v3896 = vrot.slane %v3895, 4
        %v3897 = vrot.slane %v317, 5
        %v3898 = vsel %vm3725, %v3896, %v3897
        %v3899 = vrot.slane %v3897, 4
        %v3900 = vrot.slane %v318, 5
        %v3901 = vsel %vm3725, %v3899, %v3900
        %v3902 = vrot.slane %v3900, 4
        %v3903 = vrot.slane %v319, 5
        %v3904 = vsel %vm3725, %v3902, %v3903
        %v3905 = vrot.slane %v3903, 4
        %v3906 = vrot.slane %v320, 5
        %v3907 = vsel %vm3725, %v3905, %v3906
        %v3908 = vrot.slane %v321, 5
        %v3909 = vrot.slane %v3908, 4
        %v3910 = vrot.slane %v322, 5
        %v3911 = vsel %vm3725, %v3909, %v3910
        %v3912 = vrot.slane %v3910, 4
        %v3913 = vrot.slane %v323, 5
        %v3914 = vsel %vm3725, %v3912, %v3913
        %v3915 = vrot.slane %v3913, 4
        %v3916 = vrot.slane %v324, 5
        %v3917 = vsel %vm3725, %v3915, %v3916
        %v3918 = vrot.slane %v3916, 4
        %v3919 = vrot.slane %v325, 5
        %v3920 = vsel %vm3725, %v3918, %v3919
        %v3921 = vrot.slane %v326, 5
        %v3922 = vrot.slane %v3921, 4
        %v3923 = vrot.slane %v327, 5
        %v3924 = vsel %vm3725, %v3922, %v3923
        %v3925 = vrot.slane %v3923, 4
        %v3926 = vrot.slane %v328, 5
        %v3927 = vsel %vm3725, %v3925, %v3926
        %v3928 = vrot.slane %v3926, 4
        %v3929 = vrot.slane %v329, 5
        %v3930 = vsel %vm3725, %v3928, %v3929
        %v3931 = vrot.slane %v3929, 4
        %v3932 = vrot.slane %v330, 5
        %v3933 = vsel %vm3725, %v3931, %v3932
        %v3934 = vrot.slane %v331, 5
        %v3935 = vrot.slane %v3934, 4
        %v3936 = vrot.slane %v332, 5
        %v3937 = vsel %vm3725, %v3935, %v3936
        %v3938 = vrot.slane %v3936, 4
        %v3939 = vrot.slane %v333, 5
        %v3940 = vsel %vm3725, %v3938, %v3939
        %v3941 = vrot.slane %v3939, 4
        %v3942 = vrot.slane %v334, 5
        %v3943 = vsel %vm3725, %v3941, %v3942
        %v3944 = vrot.slane %v3942, 4
        %v3945 = vrot.slane %v335, 5
        %v3946 = vsel %vm3725, %v3944, %v3945
        %v3947 = vrot.slane %v336, 5
        %v3948 = vrot.slane %v3947, 4
        %v3949 = vrot.slane %v337, 5
        %v3950 = vsel %vm3725, %v3948, %v3949
        %v3951 = vrot.slane %v3949, 4
        %v3952 = vrot.slane %v338, 5
        %v3953 = vsel %vm3725, %v3951, %v3952
        %v3954 = vrot.slane %v3952, 4
        %v3955 = vrot.slane %v339, 5
        %v3956 = vsel %vm3725, %v3954, %v3955
        %v3957 = vrot.slane %v3955, 4
        %v3958 = vrot.slane %v340, 5
        %v3959 = vsel %vm3725, %v3957, %v3958
        %v3960 = vrot.slane %v341, 5
        %v3961 = vrot.slane %v3960, 4
        %v3962 = vrot.slane %v342, 5
        %v3963 = vsel %vm3725, %v3961, %v3962
        %v3964 = vrot.slane %v3962, 4
        %v3965 = vrot.slane %v343, 5
        %v3966 = vsel %vm3725, %v3964, %v3965
        %v3967 = vrot.slane %v3965, 4
        %v3968 = vrot.slane %v344, 5
        %v3969 = vsel %vm3725, %v3967, %v3968
        %v3970 = vrot.slane %v3968, 4
        %v3971 = vrot.slane %v345, 5
        %v3972 = vsel %vm3725, %v3970, %v3971
        %v3973 = vrot.slane %v346, 5
        %v3974 = vrot.slane %v3973, 4
        %v3975 = vrot.slane %v347, 5
        %v3976 = vsel %vm3725, %v3974, %v3975
        %v3977 = vrot.slane %v3975, 4
        %v3978 = vrot.slane %v348, 5
        %v3979 = vsel %vm3725, %v3977, %v3978
        %v3980 = vrot.slane %v3978, 4
        %v3981 = vrot.slane %v349, 5
        %v3982 = vsel %vm3725, %v3980, %v3981
        %v3983 = vrot.slane %v3981, 4
        %v3984 = vrot.slane %v350, 5
        %v3985 = vsel %vm3725, %v3983, %v3984
        %v3986 = vrot.slane %v351, 5
        %v3987 = vrot.slane %v3986, 4
        %v3988 = vrot.slane %v352, 5
        %v3989 = vsel %vm3725, %v3987, %v3988
        %v3990 = vrot.slane %v3988, 4
        %v3991 = vrot.slane %v353, 5
        %v3992 = vsel %vm3725, %v3990, %v3991
        %v3993 = vrot.slane %v3991, 4
        %v3994 = vrot.slane %v354, 5
        %v3995 = vsel %vm3725, %v3993, %v3994
        %v3996 = vrot.slane %v3994, 4
        %v3997 = vrot.slane %v355, 5
        %v3998 = vsel %vm3725, %v3996, %v3997
        %v3999 = vrot.slane %v356, 5
        %v4000 = vrot.slane %v3999, 4
        %v4001 = vrot.slane %v357, 5
        %v4002 = vsel %vm3725, %v4000, %v4001
        %v4003 = vrot.slane %v4001, 4
        %v4004 = vrot.slane %v358, 5
        %v4005 = vsel %vm3725, %v4003, %v4004
        %v4006 = vrot.slane %v4004, 4
        %v4007 = vrot.slane %v359, 5
        %v4008 = vsel %vm3725, %v4006, %v4007
        %v4009 = vrot.slane %v4007, 4
        %v4010 = vrot.slane %v360, 5
        %v4011 = vsel %vm3725, %v4009, %v4010
        %v4012 = vrot.slane %v361, 5
        %v4013 = vrot.slane %v4012, 4
        %v4014 = vrot.slane %v362, 5
        %v4015 = vsel %vm3725, %v4013, %v4014
        %v4016 = vrot.slane %v4014, 4
        %v4017 = vrot.slane %v363, 5
        %v4018 = vsel %vm3725, %v4016, %v4017
        %v4019 = vrot.slane %v4017, 4
        %v4020 = vrot.slane %v364, 5
        %v4021 = vsel %vm3725, %v4019, %v4020
        %v4022 = vrot.slane %v4020, 4
        %v4023 = vrot.slane %v365, 5
        %v4024 = vsel %vm3725, %v4022, %v4023
        %v4025 = vrot.slane %v366, 5
        %v4026 = vrot.slane %v4025, 4
        %v4027 = vrot.slane %v367, 5
        %v4028 = vsel %vm3725, %v4026, %v4027
        %v4029 = vrot.slane %v4027, 4
        %v4030 = vrot.slane %v368, 5
        %v4031 = vsel %vm3725, %v4029, %v4030
        %v4032 = vrot.slane %v4030, 4
        %v4033 = vrot.slane %v369, 5
        %v4034 = vsel %vm3725, %v4032, %v4033
        %v4035 = vrot.slane %v4033, 4
        %v4036 = vrot.slane %v370, 5
        %v4037 = vsel %vm3725, %v4035, %v4036
        %v4038 = vrot.slane %v371, 5
        %v4039 = vrot.slane %v4038, 4
        %v4040 = vrot.slane %v372, 5
        %v4041 = vsel %vm3725, %v4039, %v4040
        %v4042 = vrot.slane %v4040, 4
        %v4043 = vrot.slane %v373, 5
        %v4044 = vsel %vm3725, %v4042, %v4043
        %v4045 = vrot.slane %v4043, 4
        %v4046 = vrot.slane %v374, 5
        %v4047 = vsel %vm3725, %v4045, %v4046
        %v4048 = vrot.slane %v4046, 4
        %v4049 = vrot.slane %v375, 5
        %v4050 = vsel %vm3725, %v4048, %v4049
        %v4051 = vrot.slane %v376, 5
        %v4052 = vrot.slane %v4051, 4
        %v4053 = vrot.slane %v377, 5
        %v4054 = vsel %vm3725, %v4052, %v4053
        %v4055 = vrot.slane %v4053, 4
        %v4056 = vrot.slane %v378, 5
        %v4057 = vsel %vm3725, %v4055, %v4056
        %v4058 = vrot.slane %v4056, 4
        %v4059 = vrot.slane %v379, 5
        %v4060 = vsel %vm3725, %v4058, %v4059
        %v4061 = vrot.slane %v4059, 4
        %v4062 = vrot.slane %v380, 5
        %v4063 = vsel %vm3725, %v4061, %v4062
        %v4064 = vrot.slane %v381, 5
        %v4065 = vrot.slane %v4064, 4
        %v4066 = vrot.slane %v382, 5
        %v4067 = vsel %vm3725, %v4065, %v4066
        %v4068 = vrot.slane %v4066, 4
        %v4069 = vrot.slane %v383, 5
        %v4070 = vsel %vm3725, %v4068, %v4069
        %v4071 = vrot.slane %v4069, 4
        %v4072 = vrot.slane %v384, 5
        %v4073 = vsel %vm3725, %v4071, %v4072
        %v4074 = vrot.slane %v4072, 4
        %v4075 = vrot.slane %v385, 5
        %v4076 = vsel %vm3725, %v4074, %v4075
        %v4077 = vrot.slane %v386, 5
        %v4078 = vrot.slane %v4077, 4
        %v4079 = vrot.slane %v387, 5
        %v4080 = vsel %vm3725, %v4078, %v4079
        %v4081 = vrot.slane %v4079, 4
        %v4082 = vrot.slane %v388, 5
        %v4083 = vsel %vm3725, %v4081, %v4082
        %v4084 = vrot.slane %v4082, 4
        %v4085 = vrot.slane %v389, 5
        %v4086 = vsel %vm3725, %v4084, %v4085
        %v4087 = vrot.slane %v4085, 4
        %v4088 = vrot.slane %v390, 5
        %v4089 = vsel %vm3725, %v4087, %v4088
        %v4090 = vrot.slane %v391, 5
        %v4091 = vrot.slane %v4090, 4
        %v4092 = vrot.slane %v392, 5
        %v4093 = vsel %vm3725, %v4091, %v4092
        %v4094 = vrot.slane %v4092, 4
        %v4095 = vrot.slane %v393, 5
        %v4096 = vsel %vm3725, %v4094, %v4095
        %v4097 = vrot.slane %v4095, 4
        %v4098 = vrot.slane %v394, 5
        %v4099 = vsel %vm3725, %v4097, %v4098
        %v4100 = vrot.slane %v4098, 4
        %v4101 = vrot.slane %v395, 5
        %v4102 = vsel %vm3725, %v4100, %v4101
        %v4103 = vrot.slane %v396, 5
        %v4104 = vrot.slane %v4103, 4
        %v4105 = vrot.slane %v397, 5
        %v4106 = vsel %vm3725, %v4104, %v4105
        %v4107 = vrot.slane %v4105, 4
        %v4108 = vrot.slane %v398, 5
        %v4109 = vsel %vm3725, %v4107, %v4108
        %v4110 = vrot.slane %v4108, 4
        %v4111 = vrot.slane %v399, 5
        %v4112 = vsel %vm3725, %v4110, %v4111
        %v4113 = vrot.slane %v4111, 4
        %v4114 = vrot.slane %v400, 5
        %v4115 = vsel %vm3725, %v4113, %v4114
        %v4116 = vrot.slane %v401, 5
        %v4117 = vrot.slane %v4116, 4
        %v4118 = vrot.slane %v402, 5
        %v4119 = vsel %vm3725, %v4117, %v4118
        %v4120 = vrot.slane %v4118, 4
        %v4121 = vrot.slane %v403, 5
        %v4122 = vsel %vm3725, %v4120, %v4121
        %v4123 = vrot.slane %v4121, 4
        %v4124 = vrot.slane %v404, 5
        %v4125 = vsel %vm3725, %v4123, %v4124
        %v4126 = vrot.slane %v4124, 4
        %v4127 = vrot.slane %v405, 5
        %v4128 = vsel %vm3725, %v4126, %v4127
        %v4129 = vrot.slane %v406, 5
        %v4130 = vrot.slane %v4129, 4
        %v4131 = vrot.slane %v407, 5
        %v4132 = vsel %vm3725, %v4130, %v4131
        %v4133 = vrot.slane %v4131, 4
        %v4134 = vrot.slane %v408, 5
        %v4135 = vsel %vm3725, %v4133, %v4134
        %v4136 = vrot.slane %v4134, 4
        %v4137 = vrot.slane %v409, 5
        %v4138 = vsel %vm3725, %v4136, %v4137
        %v4139 = vrot.slane %v4137, 4
        %v4140 = vrot.slane %v410, 5
        %v4141 = vsel %vm3725, %v4139, %v4140
        %s4142 = scalar_lea.vmem %s1, 128
        %v4143 = vld [vmem:[%s4142] sm:$0xf]
        %v4144 = vld [vmem:[%s4142 + $0x4] sm:$0xf]
        %v4145 = vld [vmem:[%s4142 + $0x8] sm:$0xf]
        %v4146 = vld [vmem:[%s4142 + $0xc] sm:$0xf]
        %v4147 = vld [vmem:[%s4142 + $0x10] sm:$0xf]
        %v4148 = vld [vmem:[%s4142 + $0x14] sm:$0xf]
        %v4149 = vld [vmem:[%s4142 + $0x18] sm:$0xf]
        %v4150 = vld [vmem:[%s4142 + $0x1c] sm:$0xf]
        %v4151 = vld [vmem:[%s4142 + $0x20] sm:$0xf]
        %v4152 = vld [vmem:[%s4142 + $0x24] sm:$0xf]
        %v4153 = vld [vmem:[%s4142 + $0x28] sm:$0xf]
        %v4154 = vld [vmem:[%s4142 + $0x2c] sm:$0xf]
        %v4155 = vld [vmem:[%s4142 + $0x30] sm:$0xf]
        %v4156 = vld [vmem:[%s4142 + $0x34] sm:$0xf]
        %v4157 = vld [vmem:[%s4142 + $0x38] sm:$0xf]
        %v4158 = vld [vmem:[%s4142 + $0x3c] sm:$0xf]
        %v4159 = vunpack.c.l.b16 %v3729
        %v4160 = vunpack.c.l.b16 %v3732
        %v4161 = vunpack.c.l.b16 %v3735
        %v4162 = vunpack.c.l.b16 %v3738
        %v4163 = vunpack.c.l.b16 %v3742
        %v4164 = vunpack.c.l.b16 %v3745
        %v4165 = vunpack.c.l.b16 %v3748
        %v4166 = vunpack.c.l.b16 %v3751
        %v4167 = vunpack.c.l.b16 %v3755
        %v4168 = vunpack.c.l.b16 %v3758
        %v4169 = vunpack.c.l.b16 %v3761
        %v4170 = vunpack.c.l.b16 %v3764
        %v4171 = vunpack.c.l.b16 %v3768
        %v4172 = vunpack.c.l.b16 %v3771
        %v4173 = vunpack.c.l.b16 %v3774
        %v4174 = vunpack.c.l.b16 %v3777
        %v4175 = vunpack.c.l.b16 %v3781
        %v4176 = vunpack.c.l.b16 %v3784
        %v4177 = vunpack.c.l.b16 %v3787
        %v4178 = vunpack.c.l.b16 %v3790
        %v4179 = vunpack.c.l.b16 %v3794
        %v4180 = vunpack.c.l.b16 %v3797
        %v4181 = vunpack.c.l.b16 %v3800
        %v4182 = vunpack.c.l.b16 %v3803
        %v4183 = vunpack.c.l.b16 %v3807
        %v4184 = vunpack.c.l.b16 %v3810
        %v4185 = vunpack.c.l.b16 %v3813
        %v4186 = vunpack.c.l.b16 %v3816
        %v4187 = vunpack.c.l.b16 %v3820
        %v4188 = vunpack.c.l.b16 %v3823
        %v4189 = vunpack.c.l.b16 %v3826
        %v4190 = vunpack.c.l.b16 %v3829
        %v4191 = vunpack.c.l.b16 %v3833
        %v4192 = vunpack.c.l.b16 %v3836
        %v4193 = vunpack.c.l.b16 %v3839
        %v4194 = vunpack.c.l.b16 %v3842
        %v4195 = vunpack.c.l.b16 %v3846
        %v4196 = vunpack.c.l.b16 %v3849
        %v4197 = vunpack.c.l.b16 %v3852
        %v4198 = vunpack.c.l.b16 %v3855
        %v4199 = vunpack.c.l.b16 %v3859
        %v4200 = vunpack.c.l.b16 %v3862
        %v4201 = vunpack.c.l.b16 %v3865
        %v4202 = vunpack.c.l.b16 %v3868
        %v4203 = vunpack.c.l.b16 %v3872
        %v4204 = vunpack.c.l.b16 %v3875
        %v4205 = vunpack.c.l.b16 %v3878
        %v4206 = vunpack.c.l.b16 %v3881
        %v4207 = vunpack.c.l.b16 %v3885
        %v4208 = vunpack.c.l.b16 %v3888
        %v4209 = vunpack.c.l.b16 %v3891
        %v4210 = vunpack.c.l.b16 %v3894
        %v4211 = vunpack.c.l.b16 %v3898
        %v4212 = vunpack.c.l.b16 %v3901
        %v4213 = vunpack.c.l.b16 %v3904
        %v4214 = vunpack.c.l.b16 %v3907
        %v4215 = vunpack.c.l.b16 %v3911
        %v4216 = vunpack.c.l.b16 %v3914
        %v4217 = vunpack.c.l.b16 %v3917
        %v4218 = vunpack.c.l.b16 %v3920
        %v4219 = vunpack.c.l.b16 %v3924
        %v4220 = vunpack.c.l.b16 %v3927
        %v4221 = vunpack.c.l.b16 %v3930
        %v4222 = vunpack.c.l.b16 %v3933
        %v4223 = vunpack.c.l.b16 %v3937
        %v4224 = vunpack.c.l.b16 %v3940
        %v4225 = vunpack.c.l.b16 %v3943
        %v4226 = vunpack.c.l.b16 %v3946
        %v4227 = vunpack.c.l.b16 %v3950
        %v4228 = vunpack.c.l.b16 %v3953
        %v4229 = vunpack.c.l.b16 %v3956
        %v4230 = vunpack.c.l.b16 %v3959
        %v4231 = vunpack.c.l.b16 %v3963
        %v4232 = vunpack.c.l.b16 %v3966
        %v4233 = vunpack.c.l.b16 %v3969
        %v4234 = vunpack.c.l.b16 %v3972
        %v4235 = vunpack.c.l.b16 %v3976
        %v4236 = vunpack.c.l.b16 %v3979
        %v4237 = vunpack.c.l.b16 %v3982
        %v4238 = vunpack.c.l.b16 %v3985
        %v4239 = vunpack.c.l.b16 %v3989
        %v4240 = vunpack.c.l.b16 %v3992
        %v4241 = vunpack.c.l.b16 %v3995
        %v4242 = vunpack.c.l.b16 %v3998
        %v4243 = vunpack.c.l.b16 %v4002
        %v4244 = vunpack.c.l.b16 %v4005
        %v4245 = vunpack.c.l.b16 %v4008
        %v4246 = vunpack.c.l.b16 %v4011
        %v4247 = vunpack.c.l.b16 %v4015
        %v4248 = vunpack.c.l.b16 %v4018
        %v4249 = vunpack.c.l.b16 %v4021
        %v4250 = vunpack.c.l.b16 %v4024
        %v4251 = vunpack.c.l.b16 %v4028
        %v4252 = vunpack.c.l.b16 %v4031
        %v4253 = vunpack.c.l.b16 %v4034
        %v4254 = vunpack.c.l.b16 %v4037
        %v4255 = vunpack.c.l.b16 %v4041
        %v4256 = vunpack.c.l.b16 %v4044
        %v4257 = vunpack.c.l.b16 %v4047
        %v4258 = vunpack.c.l.b16 %v4050
        %v4259 = vunpack.c.l.b16 %v4054
        %v4260 = vunpack.c.l.b16 %v4057
        %v4261 = vunpack.c.l.b16 %v4060
        %v4262 = vunpack.c.l.b16 %v4063
        %v4263 = vunpack.c.l.b16 %v4067
        %v4264 = vunpack.c.l.b16 %v4070
        %v4265 = vunpack.c.l.b16 %v4073
        %v4266 = vunpack.c.l.b16 %v4076
        %v4267 = vunpack.c.l.b16 %v4080
        %v4268 = vunpack.c.l.b16 %v4083
        %v4269 = vunpack.c.l.b16 %v4086
        %v4270 = vunpack.c.l.b16 %v4089
        %v4271 = vunpack.c.l.b16 %v4093
        %v4272 = vunpack.c.l.b16 %v4096
        %v4273 = vunpack.c.l.b16 %v4099
        %v4274 = vunpack.c.l.b16 %v4102
        %v4275 = vunpack.c.l.b16 %v4106
        %v4276 = vunpack.c.l.b16 %v4109
        %v4277 = vunpack.c.l.b16 %v4112
        %v4278 = vunpack.c.l.b16 %v4115
        %v4279 = vunpack.c.l.b16 %v4119
        %v4280 = vunpack.c.l.b16 %v4122
        %v4281 = vunpack.c.l.b16 %v4125
        %v4282 = vunpack.c.l.b16 %v4128
        %v4283 = vunpack.c.l.b16 %v4132
        %v4284 = vunpack.c.l.b16 %v4135
        %v4285 = vunpack.c.l.b16 %v4138
        %v4286 = vunpack.c.l.b16 %v4141
        %v4287 = vpack.c.b16 %v4160, %v4159
        %v4288 = vpack.c.b16 %v4162, %v4161
        %v4289 = vpack.c.b16 %v4164, %v4163
        %v4290 = vpack.c.b16 %v4166, %v4165
        %v4291 = vpack.c.b16 %v4168, %v4167
        %v4292 = vpack.c.b16 %v4170, %v4169
        %v4293 = vpack.c.b16 %v4172, %v4171
        %v4294 = vpack.c.b16 %v4174, %v4173
        %v4295 = vpack.c.b16 %v4176, %v4175
        %v4296 = vpack.c.b16 %v4178, %v4177
        %v4297 = vpack.c.b16 %v4180, %v4179
        %v4298 = vpack.c.b16 %v4182, %v4181
        %v4299 = vpack.c.b16 %v4184, %v4183
        %v4300 = vpack.c.b16 %v4186, %v4185
        %v4301 = vpack.c.b16 %v4188, %v4187
        %v4302 = vpack.c.b16 %v4190, %v4189
        %v4303 = vpack.c.b16 %v4192, %v4191
        %v4304 = vpack.c.b16 %v4194, %v4193
        %v4305 = vpack.c.b16 %v4196, %v4195
        %v4306 = vpack.c.b16 %v4198, %v4197
        %v4307 = vpack.c.b16 %v4200, %v4199
        %v4308 = vpack.c.b16 %v4202, %v4201
        %v4309 = vpack.c.b16 %v4204, %v4203
        %v4310 = vpack.c.b16 %v4206, %v4205
        %v4311 = vpack.c.b16 %v4208, %v4207
        %v4312 = vpack.c.b16 %v4210, %v4209
        %v4313 = vpack.c.b16 %v4212, %v4211
        %v4314 = vpack.c.b16 %v4214, %v4213
        %v4315 = vpack.c.b16 %v4216, %v4215
        %v4316 = vpack.c.b16 %v4218, %v4217
        %v4317 = vpack.c.b16 %v4220, %v4219
        %v4318 = vpack.c.b16 %v4222, %v4221
        %v4319 = vpack.c.b16 %v4224, %v4223
        %v4320 = vpack.c.b16 %v4226, %v4225
        %v4321 = vpack.c.b16 %v4228, %v4227
        %v4322 = vpack.c.b16 %v4230, %v4229
        %v4323 = vpack.c.b16 %v4232, %v4231
        %v4324 = vpack.c.b16 %v4234, %v4233
        %v4325 = vpack.c.b16 %v4236, %v4235
        %v4326 = vpack.c.b16 %v4238, %v4237
        %v4327 = vpack.c.b16 %v4240, %v4239
        %v4328 = vpack.c.b16 %v4242, %v4241
        %v4329 = vpack.c.b16 %v4244, %v4243
        %v4330 = vpack.c.b16 %v4246, %v4245
        %v4331 = vpack.c.b16 %v4248, %v4247
        %v4332 = vpack.c.b16 %v4250, %v4249
        %v4333 = vpack.c.b16 %v4252, %v4251
        %v4334 = vpack.c.b16 %v4254, %v4253
        %v4335 = vpack.c.b16 %v4256, %v4255
        %v4336 = vpack.c.b16 %v4258, %v4257
        %v4337 = vpack.c.b16 %v4260, %v4259
        %v4338 = vpack.c.b16 %v4262, %v4261
        %v4339 = vpack.c.b16 %v4264, %v4263
        %v4340 = vpack.c.b16 %v4266, %v4265
        %v4341 = vpack.c.b16 %v4268, %v4267
        %v4342 = vpack.c.b16 %v4270, %v4269
        %v4343 = vpack.c.b16 %v4272, %v4271
        %v4344 = vpack.c.b16 %v4274, %v4273
        %v4345 = vpack.c.b16 %v4276, %v4275
        %v4346 = vpack.c.b16 %v4278, %v4277
        %v4347 = vpack.c.b16 %v4280, %v4279
        %v4348 = vpack.c.b16 %v4282, %v4281
        %v4349 = vpack.c.b16 %v4284, %v4283
        %v4350 = vpack.c.b16 %v4286, %v4285
        %v4431 = vunpack.c.l.b16 %v4143
        %v4432 = vunpack.c.l.b16 %v4144
        %v4433 = vunpack.c.l.b16 %v4145
        %v4434 = vunpack.c.l.b16 %v4146
        %v4435 = vunpack.c.l.b16 %v4147
        %v4436 = vunpack.c.l.b16 %v4148
        %v4437 = vunpack.c.l.b16 %v4149
        %v4438 = vunpack.c.l.b16 %v4150
        %v4439 = vunpack.c.l.b16 %v4151
        %v4440 = vunpack.c.l.b16 %v4152
        %v4441 = vunpack.c.l.b16 %v4153
        %v4442 = vunpack.c.l.b16 %v4154
        %v4443 = vunpack.c.l.b16 %v4155
        %v4444 = vunpack.c.l.b16 %v4156
        %v4445 = vunpack.c.l.b16 %v4157
        %v4446 = vunpack.c.l.b16 %v4158
        %v4447 = vpack.c.b16 %v4432, %v4431
        %v4448 = vpack.c.b16 %v4434, %v4433
        %v4449 = vpack.c.b16 %v4436, %v4435
        %v4450 = vpack.c.b16 %v4438, %v4437
        %v4451 = vpack.c.b16 %v4440, %v4439
        %v4452 = vpack.c.b16 %v4442, %v4441
        %v4453 = vpack.c.b16 %v4444, %v4443
        %v4454 = vpack.c.b16 %v4446, %v4445
        %4463 = vmatprep.subr.bf16.mxu0 0
        %4464 = vmatpush1.bf16.msra.mxu0 %v4447
        %4465 = vmatprep.subr.bf16.mxu0 0
        %4466 = vmatpush1.bf16.msra.mxu0 %v4448
        %4467 = vmatprep.subr.bf16.mxu0 0
        %4468 = vmatpush1.bf16.msra.mxu0 %v4449
        %4469 = vmatprep.subr.bf16.mxu0 0
        %4470 = vmatpush1.bf16.msra.mxu0 %v4450
        %4471 = vmatprep.subr.bf16.mxu0 0
        %4472 = vmatpush1.bf16.msra.mxu0 %v4451
        %4473 = vmatprep.subr.bf16.mxu0 0
        %4474 = vmatpush1.bf16.msra.mxu0 %v4452
        %4475 = vmatprep.subr.bf16.mxu0 0
        %4476 = vmatpush1.bf16.msra.mxu0 %v4453
        %4477 = vmatprep.subr.bf16.mxu0 0
        %4478 = vmatpush1.bf16.msra.mxu0 %v4454
        %4479 = vmatprep.subr.bf16.mxu0 0
        %4480 = vmatpush1.bf16.msra.mxu0 0
        %4481 = vmatprep.subr.bf16.mxu0 0
        %4482 = vmatpush1.bf16.msra.mxu0 0
        %4483 = vmatprep.subr.bf16.mxu0 0
        %4484 = vmatpush1.bf16.msra.mxu0 0
        %4485 = vmatprep.subr.bf16.mxu0 0
        %4486 = vmatpush1.bf16.msra.mxu0 0
        %4487 = vmatprep.subr.bf16.mxu0 0
        %4488 = vmatpush1.bf16.msra.mxu0 0
        %4489 = vmatprep.subr.bf16.mxu0 0
        %4490 = vmatpush1.bf16.msra.mxu0 0
        %4491 = vmatprep.subr.bf16.mxu0 0
        %4492 = vmatpush1.bf16.msra.mxu0 0
        %4493 = vmatprep.subr.bf16.mxu0 0
        %4494 = vmatpush1.bf16.msra.mxu0 0
        %4495 = vmatprep.mubr.bf16.mxu0 0
        %4496 = vmatmul.mubr.bf16.gmra.mrb[0].mxu0 %v4287
        %v4497 = vpop.f32.mrb[0].mxu0
        %v4498 = vadd.f32 0.0, %v4497
        %v4499 = vpop.f32.mrb[0].mxu0
        %v4500 = vpop.f32.mrb[0].mxu0
        %v4501 = vadd.f32 0.0, %v4500
        %v4502 = vpop.f32.mrb[0].mxu0
        %4503 = vmatprep.mubr.bf16.mxu0 0
        %4504 = vmatmul.mubr.bf16.gmra.mrb[0].mxu0 %v4288
        %v4505 = vpop.f32.mrb[0].mxu0
        %v4506 = vadd.f32 0.0, %v4505
        %v4507 = vpop.f32.mrb[0].mxu0
        %v4508 = vpop.f32.mrb[0].mxu0
        %v4509 = vadd.f32 0.0, %v4508
        %v4510 = vpop.f32.mrb[0].mxu0
        %4511 = vmatprep.mubr.bf16.mxu0 0
        %4512 = vmatmul.mubr.bf16.gmra.mrb[0].mxu0 %v4289
        %v4513 = vpop.f32.mrb[0].mxu0
        %v4514 = vadd.f32 0.0, %v4513
        %v4515 = vpop.f32.mrb[0].mxu0
        %v4516 = vpop.f32.mrb[0].mxu0
        %v4517 = vadd.f32 0.0, %v4516
        %v4518 = vpop.f32.mrb[0].mxu0
        %4519 = vmatprep.mubr.bf16.mxu0 0
        %4520 = vmatmul.mubr.bf16.gmra.mrb[0].mxu0 %v4290
        %v4521 = vpop.f32.mrb[0].mxu0
        %v4522 = vadd.f32 0.0, %v4521
        %v4523 = vpop.f32.mrb[0].mxu0
        %v4524 = vpop.f32.mrb[0].mxu0
        %v4525 = vadd.f32 0.0, %v4524
        %v4526 = vpop.f32.mrb[0].mxu0
        %4527 = vmatprep.mubr.bf16.mxu0 0
        %4528 = vmatmul.mubr.bf16.gmra.mrb[0].mxu0 %v4291
        %v4529 = vpop.f32.mrb[0].mxu0
        %v4530 = vadd.f32 0.0, %v4529
        %v4531 = vpop.f32.mrb[0].mxu0
        %v4532 = vpop.f32.mrb[0].mxu0
        %v4533 = vadd.f32 0.0, %v4532
        %v4534 = vpop.f32.mrb[0].mxu0
        %4535 = vmatprep.mubr.bf16.mxu0 0
        %4536 = vmatmul.mubr.bf16.gmra.mrb[0].mxu0 %v4292
        %v4537 = vpop.f32.mrb[0].mxu0
        %v4538 = vadd.f32 0.0, %v4537
        %v4539 = vpop.f32.mrb[0].mxu0
        %v4540 = vpop.f32.mrb[0].mxu0
        %v4541 = vadd.f32 0.0, %v4540
        %v4542 = vpop.f32.mrb[0].mxu0
        %4543 = vmatprep.mubr.bf16.mxu0 0
        %4544 = vmatmul.mubr.bf16.gmra.mrb[0].mxu0 %v4293
        %v4545 = vpop.f32.mrb[0].mxu0
        %v4546 = vadd.f32 0.0, %v4545
        %v4547 = vpop.f32.mrb[0].mxu0
        %v4548 = vpop.f32.mrb[0].mxu0
        %v4549 = vadd.f32 0.0, %v4548
        %v4550 = vpop.f32.mrb[0].mxu0
        %4551 = vmatprep.mubr.bf16.mxu0 0
        %4552 = vmatmul.mubr.bf16.gmra.mrb[0].mxu0 %v4294
        %v4553 = vpop.f32.mrb[0].mxu0
        %v4554 = vadd.f32 0.0, %v4553
        %v4555 = vpop.f32.mrb[0].mxu0
        %v4556 = vpop.f32.mrb[0].mxu0
        %v4557 = vadd.f32 0.0, %v4556
        %v4558 = vpop.f32.mrb[0].mxu0
        %4559 = vmatprep.mubr.bf16.mxu0 0
        %4560 = vmatmul.mubr.bf16.gmra.mrb[0].mxu0 %v4295
        %v4561 = vpop.f32.mrb[0].mxu0
        %v4562 = vadd.f32 0.0, %v4561
        %v4563 = vpop.f32.mrb[0].mxu0
        %v4564 = vpop.f32.mrb[0].mxu0
        %v4565 = vadd.f32 0.0, %v4564
        %v4566 = vpop.f32.mrb[0].mxu0
        %4567 = vmatprep.mubr.bf16.mxu0 0
        %4568 = vmatmul.mubr.bf16.gmra.mrb[0].mxu0 %v4296
        %v4569 = vpop.f32.mrb[0].mxu0
        %v4570 = vadd.f32 0.0, %v4569
        %v4571 = vpop.f32.mrb[0].mxu0
        %v4572 = vpop.f32.mrb[0].mxu0
        %v4573 = vadd.f32 0.0, %v4572
        %v4574 = vpop.f32.mrb[0].mxu0
        %4575 = vmatprep.mubr.bf16.mxu0 0
        %4576 = vmatmul.mubr.bf16.gmra.mrb[0].mxu0 %v4297
        %v4577 = vpop.f32.mrb[0].mxu0
        %v4578 = vadd.f32 0.0, %v4577
        %v4579 = vpop.f32.mrb[0].mxu0
        %v4580 = vpop.f32.mrb[0].mxu0
        %v4581 = vadd.f32 0.0, %v4580
        %v4582 = vpop.f32.mrb[0].mxu0
        %4583 = vmatprep.mubr.bf16.mxu0 0
        %4584 = vmatmul.mubr.bf16.gmra.mrb[0].mxu0 %v4298
        %v4585 = vpop.f32.mrb[0].mxu0
        %v4586 = vadd.f32 0.0, %v4585
        %v4587 = vpop.f32.mrb[0].mxu0
        %v4588 = vpop.f32.mrb[0].mxu0
        %v4589 = vadd.f32 0.0, %v4588
        %v4590 = vpop.f32.mrb[0].mxu0
        %4591 = vmatprep.mubr.bf16.mxu0 0
        %4592 = vmatmul.mubr.bf16.gmra.mrb[0].mxu0 %v4299
        %v4593 = vpop.f32.mrb[0].mxu0
        %v4594 = vadd.f32 0.0, %v4593
        %v4595 = vpop.f32.mrb[0].mxu0
        %v4596 = vpop.f32.mrb[0].mxu0
        %v4597 = vadd.f32 0.0, %v4596
        %v4598 = vpop.f32.mrb[0].mxu0
        %4599 = vmatprep.mubr.bf16.mxu0 0
        %4600 = vmatmul.mubr.bf16.gmra.mrb[0].mxu0 %v4300
        %v4601 = vpop.f32.mrb[0].mxu0
        %v4602 = vadd.f32 0.0, %v4601
        %v4603 = vpop.f32.mrb[0].mxu0
        %v4604 = vpop.f32.mrb[0].mxu0
        %v4605 = vadd.f32 0.0, %v4604
        %v4606 = vpop.f32.mrb[0].mxu0
        %4607 = vmatprep.mubr.bf16.mxu0 0
        %4608 = vmatmul.mubr.bf16.gmra.mrb[0].mxu0 %v4301
        %v4609 = vpop.f32.mrb[0].mxu0
        %v4610 = vadd.f32 0.0, %v4609
        %v4611 = vpop.f32.mrb[0].mxu0
        %v4612 = vpop.f32.mrb[0].mxu0
        %v4613 = vadd.f32 0.0, %v4612
        %v4614 = vpop.f32.mrb[0].mxu0
        %4615 = vmatprep.mubr.bf16.mxu0 0
        %4616 = vmatmul.mubr.bf16.gmra.mrb[0].mxu0 %v4302
        %v4617 = vpop.f32.mrb[0].mxu0
        %v4618 = vadd.f32 0.0, %v4617
        %v4619 = vpop.f32.mrb[0].mxu0
        %v4620 = vpop.f32.mrb[0].mxu0
        %v4621 = vadd.f32 0.0, %v4620
        %v4622 = vpop.f32.mrb[0].mxu0
        %4623 = vmatprep.mubr.bf16.mxu0 0
        %4624 = vmatmul.mubr.bf16.gmra.mrb[0].mxu0 %v4303
        %v4625 = vpop.f32.mrb[0].mxu0
        %v4626 = vadd.f32 0.0, %v4625
        %v4627 = vpop.f32.mrb[0].mxu0
        %v4628 = vpop.f32.mrb[0].mxu0
        %v4629 = vadd.f32 0.0, %v4628
        %v4630 = vpop.f32.mrb[0].mxu0
        %4631 = vmatprep.mubr.bf16.mxu0 0
        %4632 = vmatmul.mubr.bf16.gmra.mrb[0].mxu0 %v4304
        %v4633 = vpop.f32.mrb[0].mxu0
        %v4634 = vadd.f32 0.0, %v4633
        %v4635 = vpop.f32.mrb[0].mxu0
        %v4636 = vpop.f32.mrb[0].mxu0
        %v4637 = vadd.f32 0.0, %v4636
        %v4638 = vpop.f32.mrb[0].mxu0
        %4639 = vmatprep.mubr.bf16.mxu0 0
        %4640 = vmatmul.mubr.bf16.gmra.mrb[0].mxu0 %v4305
        %v4641 = vpop.f32.mrb[0].mxu0
        %v4642 = vadd.f32 0.0, %v4641
        %v4643 = vpop.f32.mrb[0].mxu0
        %v4644 = vpop.f32.mrb[0].mxu0
        %v4645 = vadd.f32 0.0, %v4644
        %v4646 = vpop.f32.mrb[0].mxu0
        %4647 = vmatprep.mubr.bf16.mxu0 0
        %4648 = vmatmul.mubr.bf16.gmra.mrb[0].mxu0 %v4306
        %v4649 = vpop.f32.mrb[0].mxu0
        %v4650 = vadd.f32 0.0, %v4649
        %v4651 = vpop.f32.mrb[0].mxu0
        %v4652 = vpop.f32.mrb[0].mxu0
        %v4653 = vadd.f32 0.0, %v4652
        %v4654 = vpop.f32.mrb[0].mxu0
        %4655 = vmatprep.mubr.bf16.mxu0 0
        %4656 = vmatmul.mubr.bf16.gmra.mrb[0].mxu0 %v4307
        %v4657 = vpop.f32.mrb[0].mxu0
        %v4658 = vadd.f32 0.0, %v4657
        %v4659 = vpop.f32.mrb[0].mxu0
        %v4660 = vpop.f32.mrb[0].mxu0
        %v4661 = vadd.f32 0.0, %v4660
        %v4662 = vpop.f32.mrb[0].mxu0
        %4663 = vmatprep.mubr.bf16.mxu0 0
        %4664 = vmatmul.mubr.bf16.gmra.mrb[0].mxu0 %v4308
        %v4665 = vpop.f32.mrb[0].mxu0
        %v4666 = vadd.f32 0.0, %v4665
        %v4667 = vpop.f32.mrb[0].mxu0
        %v4668 = vpop.f32.mrb[0].mxu0
        %v4669 = vadd.f32 0.0, %v4668
        %v4670 = vpop.f32.mrb[0].mxu0
        %4671 = vmatprep.mubr.bf16.mxu0 0
        %4672 = vmatmul.mubr.bf16.gmra.mrb[0].mxu0 %v4309
        %v4673 = vpop.f32.mrb[0].mxu0
        %v4674 = vadd.f32 0.0, %v4673
        %v4675 = vpop.f32.mrb[0].mxu0
        %v4676 = vpop.f32.mrb[0].mxu0
        %v4677 = vadd.f32 0.0, %v4676
        %v4678 = vpop.f32.mrb[0].mxu0
        %4679 = vmatprep.mubr.bf16.mxu0 0
        %4680 = vmatmul.mubr.bf16.gmra.mrb[0].mxu0 %v4310
        %v4681 = vpop.f32.mrb[0].mxu0
        %v4682 = vadd.f32 0.0, %v4681
        %v4683 = vpop.f32.mrb[0].mxu0
        %v4684 = vpop.f32.mrb[0].mxu0
        %v4685 = vadd.f32 0.0, %v4684
        %v4686 = vpop.f32.mrb[0].mxu0
        %4687 = vmatprep.mubr.bf16.mxu0 0
        %4688 = vmatmul.mubr.bf16.gmra.mrb[0].mxu0 %v4311
        %v4689 = vpop.f32.mrb[0].mxu0
        %v4690 = vadd.f32 0.0, %v4689
        %v4691 = vpop.f32.mrb[0].mxu0
        %v4692 = vpop.f32.mrb[0].mxu0
        %v4693 = vadd.f32 0.0, %v4692
        %v4694 = vpop.f32.mrb[0].mxu0
        %4695 = vmatprep.mubr.bf16.mxu0 0
        %4696 = vmatmul.mubr.bf16.gmra.mrb[0].mxu0 %v4312
        %v4697 = vpop.f32.mrb[0].mxu0
        %v4698 = vadd.f32 0.0, %v4697
        %v4699 = vpop.f32.mrb[0].mxu0
        %v4700 = vpop.f32.mrb[0].mxu0
        %v4701 = vadd.f32 0.0, %v4700
        %v4702 = vpop.f32.mrb[0].mxu0
        %4703 = vmatprep.mubr.bf16.mxu0 0
        %4704 = vmatmul.mubr.bf16.gmra.mrb[0].mxu0 %v4313
        %v4705 = vpop.f32.mrb[0].mxu0
        %v4706 = vadd.f32 0.0, %v4705
        %v4707 = vpop.f32.mrb[0].mxu0
        %v4708 = vpop.f32.mrb[0].mxu0
        %v4709 = vadd.f32 0.0, %v4708
        %v4710 = vpop.f32.mrb[0].mxu0
        %4711 = vmatprep.mubr.bf16.mxu0 0
        %4712 = vmatmul.mubr.bf16.gmra.mrb[0].mxu0 %v4314
        %v4713 = vpop.f32.mrb[0].mxu0
        %v4714 = vadd.f32 0.0, %v4713
        %v4715 = vpop.f32.mrb[0].mxu0
        %v4716 = vpop.f32.mrb[0].mxu0
        %v4717 = vadd.f32 0.0, %v4716
        %v4718 = vpop.f32.mrb[0].mxu0
        %4719 = vmatprep.mubr.bf16.mxu0 0
        %4720 = vmatmul.mubr.bf16.gmra.mrb[0].mxu0 %v4315
        %v4721 = vpop.f32.mrb[0].mxu0
        %v4722 = vadd.f32 0.0, %v4721
        %v4723 = vpop.f32.mrb[0].mxu0
        %v4724 = vpop.f32.mrb[0].mxu0
        %v4725 = vadd.f32 0.0, %v4724
        %v4726 = vpop.f32.mrb[0].mxu0
        %4727 = vmatprep.mubr.bf16.mxu0 0
        %4728 = vmatmul.mubr.bf16.gmra.mrb[0].mxu0 %v4316
        %v4729 = vpop.f32.mrb[0].mxu0
        %v4730 = vadd.f32 0.0, %v4729
        %v4731 = vpop.f32.mrb[0].mxu0
        %v4732 = vpop.f32.mrb[0].mxu0
        %v4733 = vadd.f32 0.0, %v4732
        %v4734 = vpop.f32.mrb[0].mxu0
        %4735 = vmatprep.mubr.bf16.mxu0 0
        %4736 = vmatmul.mubr.bf16.gmra.mrb[0].mxu0 %v4317
        %v4737 = vpop.f32.mrb[0].mxu0
        %v4738 = vadd.f32 0.0, %v4737
        %v4739 = vpop.f32.mrb[0].mxu0
        %v4740 = vpop.f32.mrb[0].mxu0
        %v4741 = vadd.f32 0.0, %v4740
        %v4742 = vpop.f32.mrb[0].mxu0
        %4743 = vmatprep.mubr.bf16.mxu0 0
        %4744 = vmatmul.mubr.bf16.gmra.mrb[0].mxu0 %v4318
        %v4745 = vpop.f32.mrb[0].mxu0
        %v4746 = vadd.f32 0.0, %v4745
        %v4747 = vpop.f32.mrb[0].mxu0
        %v4748 = vpop.f32.mrb[0].mxu0
        %v4749 = vadd.f32 0.0, %v4748
        %v4750 = vpop.f32.mrb[0].mxu0
        %4751 = vmatprep.mubr.bf16.mxu0 0
        %4752 = vmatmul.mubr.bf16.gmra.mrb[0].mxu0 %v4319
        %v4753 = vpop.f32.mrb[0].mxu0
        %v4754 = vadd.f32 0.0, %v4753
        %v4755 = vpop.f32.mrb[0].mxu0
        %v4756 = vpop.f32.mrb[0].mxu0
        %v4757 = vadd.f32 0.0, %v4756
        %v4758 = vpop.f32.mrb[0].mxu0
        %4759 = vmatprep.mubr.bf16.mxu0 0
        %4760 = vmatmul.mubr.bf16.gmra.mrb[0].mxu0 %v4320
        %v4761 = vpop.f32.mrb[0].mxu0
        %v4762 = vadd.f32 0.0, %v4761
        %v4763 = vpop.f32.mrb[0].mxu0
        %v4764 = vpop.f32.mrb[0].mxu0
        %v4765 = vadd.f32 0.0, %v4764
        %v4766 = vpop.f32.mrb[0].mxu0
        %4767 = vmatprep.mubr.bf16.mxu0 0
        %4768 = vmatmul.mubr.bf16.gmra.mrb[0].mxu0 %v4321
        %v4769 = vpop.f32.mrb[0].mxu0
        %v4770 = vadd.f32 0.0, %v4769
        %v4771 = vpop.f32.mrb[0].mxu0
        %v4772 = vpop.f32.mrb[0].mxu0
        %v4773 = vadd.f32 0.0, %v4772
        %v4774 = vpop.f32.mrb[0].mxu0
        %4775 = vmatprep.mubr.bf16.mxu0 0
        %4776 = vmatmul.mubr.bf16.gmra.mrb[0].mxu0 %v4322
        %v4777 = vpop.f32.mrb[0].mxu0
        %v4778 = vadd.f32 0.0, %v4777
        %v4779 = vpop.f32.mrb[0].mxu0
        %v4780 = vpop.f32.mrb[0].mxu0
        %v4781 = vadd.f32 0.0, %v4780
        %v4782 = vpop.f32.mrb[0].mxu0
        %4783 = vmatprep.mubr.bf16.mxu0 0
        %4784 = vmatmul.mubr.bf16.gmra.mrb[0].mxu0 %v4323
        %v4785 = vpop.f32.mrb[0].mxu0
        %v4786 = vadd.f32 0.0, %v4785
        %v4787 = vpop.f32.mrb[0].mxu0
        %v4788 = vpop.f32.mrb[0].mxu0
        %v4789 = vadd.f32 0.0, %v4788
        %v4790 = vpop.f32.mrb[0].mxu0
        %4791 = vmatprep.mubr.bf16.mxu0 0
        %4792 = vmatmul.mubr.bf16.gmra.mrb[0].mxu0 %v4324
        %v4793 = vpop.f32.mrb[0].mxu0
        %v4794 = vadd.f32 0.0, %v4793
        %v4795 = vpop.f32.mrb[0].mxu0
        %v4796 = vpop.f32.mrb[0].mxu0
        %v4797 = vadd.f32 0.0, %v4796
        %v4798 = vpop.f32.mrb[0].mxu0
        %4799 = vmatprep.mubr.bf16.mxu0 0
        %4800 = vmatmul.mubr.bf16.gmra.mrb[0].mxu0 %v4325
        %v4801 = vpop.f32.mrb[0].mxu0
        %v4802 = vadd.f32 0.0, %v4801
        %v4803 = vpop.f32.mrb[0].mxu0
        %v4804 = vpop.f32.mrb[0].mxu0
        %v4805 = vadd.f32 0.0, %v4804
        %v4806 = vpop.f32.mrb[0].mxu0
        %4807 = vmatprep.mubr.bf16.mxu0 0
        %4808 = vmatmul.mubr.bf16.gmra.mrb[0].mxu0 %v4326
        %v4809 = vpop.f32.mrb[0].mxu0
        %v4810 = vadd.f32 0.0, %v4809
        %v4811 = vpop.f32.mrb[0].mxu0
        %v4812 = vpop.f32.mrb[0].mxu0
        %v4813 = vadd.f32 0.0, %v4812
        %v4814 = vpop.f32.mrb[0].mxu0
        %4815 = vmatprep.mubr.bf16.mxu0 0
        %4816 = vmatmul.mubr.bf16.gmra.mrb[0].mxu0 %v4327
        %v4817 = vpop.f32.mrb[0].mxu0
        %v4818 = vadd.f32 0.0, %v4817
        %v4819 = vpop.f32.mrb[0].mxu0
        %v4820 = vpop.f32.mrb[0].mxu0
        %v4821 = vadd.f32 0.0, %v4820
        %v4822 = vpop.f32.mrb[0].mxu0
        %4823 = vmatprep.mubr.bf16.mxu0 0
        %4824 = vmatmul.mubr.bf16.gmra.mrb[0].mxu0 %v4328
        %v4825 = vpop.f32.mrb[0].mxu0
        %v4826 = vadd.f32 0.0, %v4825
        %v4827 = vpop.f32.mrb[0].mxu0
        %v4828 = vpop.f32.mrb[0].mxu0
        %v4829 = vadd.f32 0.0, %v4828
        %v4830 = vpop.f32.mrb[0].mxu0
        %4831 = vmatprep.mubr.bf16.mxu0 0
        %4832 = vmatmul.mubr.bf16.gmra.mrb[0].mxu0 %v4329
        %v4833 = vpop.f32.mrb[0].mxu0
        %v4834 = vadd.f32 0.0, %v4833
        %v4835 = vpop.f32.mrb[0].mxu0
        %v4836 = vpop.f32.mrb[0].mxu0
        %v4837 = vadd.f32 0.0, %v4836
        %v4838 = vpop.f32.mrb[0].mxu0
        %4839 = vmatprep.mubr.bf16.mxu0 0
        %4840 = vmatmul.mubr.bf16.gmra.mrb[0].mxu0 %v4330
        %v4841 = vpop.f32.mrb[0].mxu0
        %v4842 = vadd.f32 0.0, %v4841
        %v4843 = vpop.f32.mrb[0].mxu0
        %v4844 = vpop.f32.mrb[0].mxu0
        %v4845 = vadd.f32 0.0, %v4844
        %v4846 = vpop.f32.mrb[0].mxu0
        %4847 = vmatprep.mubr.bf16.mxu0 0
        %4848 = vmatmul.mubr.bf16.gmra.mrb[0].mxu0 %v4331
        %v4849 = vpop.f32.mrb[0].mxu0
        %v4850 = vadd.f32 0.0, %v4849
        %v4851 = vpop.f32.mrb[0].mxu0
        %v4852 = vpop.f32.mrb[0].mxu0
        %v4853 = vadd.f32 0.0, %v4852
        %v4854 = vpop.f32.mrb[0].mxu0
        %4855 = vmatprep.mubr.bf16.mxu0 0
        %4856 = vmatmul.mubr.bf16.gmra.mrb[0].mxu0 %v4332
        %v4857 = vpop.f32.mrb[0].mxu0
        %v4858 = vadd.f32 0.0, %v4857
        %v4859 = vpop.f32.mrb[0].mxu0
        %v4860 = vpop.f32.mrb[0].mxu0
        %v4861 = vadd.f32 0.0, %v4860
        %v4862 = vpop.f32.mrb[0].mxu0
        %4863 = vmatprep.mubr.bf16.mxu0 0
        %4864 = vmatmul.mubr.bf16.gmra.mrb[0].mxu0 %v4333
        %v4865 = vpop.f32.mrb[0].mxu0
        %v4866 = vadd.f32 0.0, %v4865
        %v4867 = vpop.f32.mrb[0].mxu0
        %v4868 = vpop.f32.mrb[0].mxu0
        %v4869 = vadd.f32 0.0, %v4868
        %v4870 = vpop.f32.mrb[0].mxu0
        %4871 = vmatprep.mubr.bf16.mxu0 0
        %4872 = vmatmul.mubr.bf16.gmra.mrb[0].mxu0 %v4334
        %v4873 = vpop.f32.mrb[0].mxu0
        %v4874 = vadd.f32 0.0, %v4873
        %v4875 = vpop.f32.mrb[0].mxu0
        %v4876 = vpop.f32.mrb[0].mxu0
        %v4877 = vadd.f32 0.0, %v4876
        %v4878 = vpop.f32.mrb[0].mxu0
        %4879 = vmatprep.mubr.bf16.mxu0 0
        %4880 = vmatmul.mubr.bf16.gmra.mrb[0].mxu0 %v4335
        %v4881 = vpop.f32.mrb[0].mxu0
        %v4882 = vadd.f32 0.0, %v4881
        %v4883 = vpop.f32.mrb[0].mxu0
        %v4884 = vpop.f32.mrb[0].mxu0
        %v4885 = vadd.f32 0.0, %v4884
        %v4886 = vpop.f32.mrb[0].mxu0
        %4887 = vmatprep.mubr.bf16.mxu0 0
        %4888 = vmatmul.mubr.bf16.gmra.mrb[0].mxu0 %v4336
        %v4889 = vpop.f32.mrb[0].mxu0
        %v4890 = vadd.f32 0.0, %v4889
        %v4891 = vpop.f32.mrb[0].mxu0
        %v4892 = vpop.f32.mrb[0].mxu0
        %v4893 = vadd.f32 0.0, %v4892
        %v4894 = vpop.f32.mrb[0].mxu0
        %4895 = vmatprep.mubr.bf16.mxu0 0
        %4896 = vmatmul.mubr.bf16.gmra.mrb[0].mxu0 %v4337
        %v4897 = vpop.f32.mrb[0].mxu0
        %v4898 = vadd.f32 0.0, %v4897
        %v4899 = vpop.f32.mrb[0].mxu0
        %v4900 = vpop.f32.mrb[0].mxu0
        %v4901 = vadd.f32 0.0, %v4900
        %v4902 = vpop.f32.mrb[0].mxu0
        %4903 = vmatprep.mubr.bf16.mxu0 0
        %4904 = vmatmul.mubr.bf16.gmra.mrb[0].mxu0 %v4338
        %v4905 = vpop.f32.mrb[0].mxu0
        %v4906 = vadd.f32 0.0, %v4905
        %v4907 = vpop.f32.mrb[0].mxu0
        %v4908 = vpop.f32.mrb[0].mxu0
        %v4909 = vadd.f32 0.0, %v4908
        %v4910 = vpop.f32.mrb[0].mxu0
        %4911 = vmatprep.mubr.bf16.mxu0 0
        %4912 = vmatmul.mubr.bf16.gmra.mrb[0].mxu0 %v4339
        %v4913 = vpop.f32.mrb[0].mxu0
        %v4914 = vadd.f32 0.0, %v4913
        %v4915 = vpop.f32.mrb[0].mxu0
        %v4916 = vpop.f32.mrb[0].mxu0
        %v4917 = vadd.f32 0.0, %v4916
        %v4918 = vpop.f32.mrb[0].mxu0
        %4919 = vmatprep.mubr.bf16.mxu0 0
        %4920 = vmatmul.mubr.bf16.gmra.mrb[0].mxu0 %v4340
        %v4921 = vpop.f32.mrb[0].mxu0
        %v4922 = vadd.f32 0.0, %v4921
        %v4923 = vpop.f32.mrb[0].mxu0
        %v4924 = vpop.f32.mrb[0].mxu0
        %v4925 = vadd.f32 0.0, %v4924
        %v4926 = vpop.f32.mrb[0].mxu0
        %4927 = vmatprep.mubr.bf16.mxu0 0
        %4928 = vmatmul.mubr.bf16.gmra.mrb[0].mxu0 %v4341
        %v4929 = vpop.f32.mrb[0].mxu0
        %v4930 = vadd.f32 0.0, %v4929
        %v4931 = vpop.f32.mrb[0].mxu0
        %v4932 = vpop.f32.mrb[0].mxu0
        %v4933 = vadd.f32 0.0, %v4932
        %v4934 = vpop.f32.mrb[0].mxu0
        %4935 = vmatprep.mubr.bf16.mxu0 0
        %4936 = vmatmul.mubr.bf16.gmra.mrb[0].mxu0 %v4342
        %v4937 = vpop.f32.mrb[0].mxu0
        %v4938 = vadd.f32 0.0, %v4937
        %v4939 = vpop.f32.mrb[0].mxu0
        %v4940 = vpop.f32.mrb[0].mxu0
        %v4941 = vadd.f32 0.0, %v4940
        %v4942 = vpop.f32.mrb[0].mxu0
        %4943 = vmatprep.mubr.bf16.mxu0 0
        %4944 = vmatmul.mubr.bf16.gmra.mrb[0].mxu0 %v4343
        %v4945 = vpop.f32.mrb[0].mxu0
        %v4946 = vadd.f32 0.0, %v4945
        %v4947 = vpop.f32.mrb[0].mxu0
        %v4948 = vpop.f32.mrb[0].mxu0
        %v4949 = vadd.f32 0.0, %v4948
        %v4950 = vpop.f32.mrb[0].mxu0
        %4951 = vmatprep.mubr.bf16.mxu0 0
        %4952 = vmatmul.mubr.bf16.gmra.mrb[0].mxu0 %v4344
        %v4953 = vpop.f32.mrb[0].mxu0
        %v4954 = vadd.f32 0.0, %v4953
        %v4955 = vpop.f32.mrb[0].mxu0
        %v4956 = vpop.f32.mrb[0].mxu0
        %v4957 = vadd.f32 0.0, %v4956
        %v4958 = vpop.f32.mrb[0].mxu0
        %4959 = vmatprep.mubr.bf16.mxu0 0
        %4960 = vmatmul.mubr.bf16.gmra.mrb[0].mxu0 %v4345
        %v4961 = vpop.f32.mrb[0].mxu0
        %v4962 = vadd.f32 0.0, %v4961
        %v4963 = vpop.f32.mrb[0].mxu0
        %v4964 = vpop.f32.mrb[0].mxu0
        %v4965 = vadd.f32 0.0, %v4964
        %v4966 = vpop.f32.mrb[0].mxu0
        %4967 = vmatprep.mubr.bf16.mxu0 0
        %4968 = vmatmul.mubr.bf16.gmra.mrb[0].mxu0 %v4346
        %v4969 = vpop.f32.mrb[0].mxu0
        %v4970 = vadd.f32 0.0, %v4969
        %v4971 = vpop.f32.mrb[0].mxu0
        %v4972 = vpop.f32.mrb[0].mxu0
        %v4973 = vadd.f32 0.0, %v4972
        %v4974 = vpop.f32.mrb[0].mxu0
        %4975 = vmatprep.mubr.bf16.mxu0 0
        %4976 = vmatmul.mubr.bf16.gmra.mrb[0].mxu0 %v4347
        %v4977 = vpop.f32.mrb[0].mxu0
        %v4978 = vadd.f32 0.0, %v4977
        %v4979 = vpop.f32.mrb[0].mxu0
        %v4980 = vpop.f32.mrb[0].mxu0
        %v4981 = vadd.f32 0.0, %v4980
        %v4982 = vpop.f32.mrb[0].mxu0
        %4983 = vmatprep.mubr.bf16.mxu0 0
        %4984 = vmatmul.mubr.bf16.gmra.mrb[0].mxu0 %v4348
        %v4985 = vpop.f32.mrb[0].mxu0
        %v4986 = vadd.f32 0.0, %v4985
        %v4987 = vpop.f32.mrb[0].mxu0
        %v4988 = vpop.f32.mrb[0].mxu0
        %v4989 = vadd.f32 0.0, %v4988
        %v4990 = vpop.f32.mrb[0].mxu0
        %4991 = vmatprep.mubr.bf16.mxu0 0
        %4992 = vmatmul.mubr.bf16.gmra.mrb[0].mxu0 %v4349
        %v4993 = vpop.f32.mrb[0].mxu0
        %v4994 = vadd.f32 0.0, %v4993
        %v4995 = vpop.f32.mrb[0].mxu0
        %v4996 = vpop.f32.mrb[0].mxu0
        %v4997 = vadd.f32 0.0, %v4996
        %v4998 = vpop.f32.mrb[0].mxu0
        %4999 = vmatprep.mubr.bf16.mxu0 0
        %5000 = vmatmul.mubr.bf16.gmra.mrb[0].mxu0 %v4350
        %v5001 = vpop.f32.mrb[0].mxu0
        %v5002 = vadd.f32 0.0, %v5001
        %v5003 = vpop.f32.mrb[0].mxu0
        %v5004 = vpop.f32.mrb[0].mxu0
        %v5005 = vadd.f32 0.0, %v5004
        %v5006 = vpop.f32.mrb[0].mxu0
        %5007 = vdwg.mxu0
        %v5008 = vadd.f32 %v3181, %v4498
        %v5009 = vadd.f32 %v3184, %v4501
        %v5010 = vadd.f32 %v3189, %v4506
        %v5011 = vadd.f32 %v3192, %v4509
        %v5012 = vadd.f32 %v3197, %v4514
        %v5013 = vadd.f32 %v3200, %v4517
        %v5014 = vadd.f32 %v3205, %v4522
        %v5015 = vadd.f32 %v3208, %v4525
        %v5016 = vadd.f32 %v3213, %v4530
        %v5017 = vadd.f32 %v3216, %v4533
        %v5018 = vadd.f32 %v3221, %v4538
        %v5019 = vadd.f32 %v3224, %v4541
        %v5020 = vadd.f32 %v3229, %v4546
        %v5021 = vadd.f32 %v3232, %v4549
        %v5022 = vadd.f32 %v3237, %v4554
        %v5023 = vadd.f32 %v3240, %v4557
        %v5024 = vadd.f32 %v3245, %v4562
        %v5025 = vadd.f32 %v3248, %v4565
        %v5026 = vadd.f32 %v3253, %v4570
        %v5027 = vadd.f32 %v3256, %v4573
        %v5028 = vadd.f32 %v3261, %v4578
        %v5029 = vadd.f32 %v3264, %v4581
        %v5030 = vadd.f32 %v3269, %v4586
        %v5031 = vadd.f32 %v3272, %v4589
        %v5032 = vadd.f32 %v3277, %v4594
        %v5033 = vadd.f32 %v3280, %v4597
        %v5034 = vadd.f32 %v3285, %v4602
        %v5035 = vadd.f32 %v3288, %v4605
        %v5036 = vadd.f32 %v3293, %v4610
        %v5037 = vadd.f32 %v3296, %v4613
        %v5038 = vadd.f32 %v3301, %v4618
        %v5039 = vadd.f32 %v3304, %v4621
        %v5040 = vadd.f32 %v3309, %v4626
        %v5041 = vadd.f32 %v3312, %v4629
        %v5042 = vadd.f32 %v3317, %v4634
        %v5043 = vadd.f32 %v3320, %v4637
        %v5044 = vadd.f32 %v3325, %v4642
        %v5045 = vadd.f32 %v3328, %v4645
        %v5046 = vadd.f32 %v3333, %v4650
        %v5047 = vadd.f32 %v3336, %v4653
        %v5048 = vadd.f32 %v3341, %v4658
        %v5049 = vadd.f32 %v3344, %v4661
        %v5050 = vadd.f32 %v3349, %v4666
        %v5051 = vadd.f32 %v3352, %v4669
        %v5052 = vadd.f32 %v3357, %v4674
        %v5053 = vadd.f32 %v3360, %v4677
        %v5054 = vadd.f32 %v3365, %v4682
        %v5055 = vadd.f32 %v3368, %v4685
        %v5056 = vadd.f32 %v3373, %v4690
        %v5057 = vadd.f32 %v3376, %v4693
        %v5058 = vadd.f32 %v3381, %v4698
        %v5059 = vadd.f32 %v3384, %v4701
        %v5060 = vadd.f32 %v3389, %v4706
        %v5061 = vadd.f32 %v3392, %v4709
        %v5062 = vadd.f32 %v3397, %v4714
        %v5063 = vadd.f32 %v3400, %v4717
        %v5064 = vadd.f32 %v3405, %v4722
        %v5065 = vadd.f32 %v3408, %v4725
        %v5066 = vadd.f32 %v3413, %v4730
        %v5067 = vadd.f32 %v3416, %v4733
        %v5068 = vadd.f32 %v3421, %v4738
        %v5069 = vadd.f32 %v3424, %v4741
        %v5070 = vadd.f32 %v3429, %v4746
        %v5071 = vadd.f32 %v3432, %v4749
        %v5072 = vadd.f32 %v3437, %v4754
        %v5073 = vadd.f32 %v3440, %v4757
        %v5074 = vadd.f32 %v3445, %v4762
        %v5075 = vadd.f32 %v3448, %v4765
        %v5076 = vadd.f32 %v3453, %v4770
        %v5077 = vadd.f32 %v3456, %v4773
        %v5078 = vadd.f32 %v3461, %v4778
        %v5079 = vadd.f32 %v3464, %v4781
        %v5080 = vadd.f32 %v3469, %v4786
        %v5081 = vadd.f32 %v3472, %v4789
        %v5082 = vadd.f32 %v3477, %v4794
        %v5083 = vadd.f32 %v3480, %v4797
        %v5084 = vadd.f32 %v3485, %v4802
        %v5085 = vadd.f32 %v3488, %v4805
        %v5086 = vadd.f32 %v3493, %v4810
        %v5087 = vadd.f32 %v3496, %v4813
        %v5088 = vadd.f32 %v3501, %v4818
        %v5089 = vadd.f32 %v3504, %v4821
        %v5090 = vadd.f32 %v3509, %v4826
        %v5091 = vadd.f32 %v3512, %v4829
        %v5092 = vadd.f32 %v3517, %v4834
        %v5093 = vadd.f32 %v3520, %v4837
        %v5094 = vadd.f32 %v3525, %v4842
        %v5095 = vadd.f32 %v3528, %v4845
        %v5096 = vadd.f32 %v3533, %v4850
        %v5097 = vadd.f32 %v3536, %v4853
        %v5098 = vadd.f32 %v3541, %v4858
        %v5099 = vadd.f32 %v3544, %v4861
        %v5100 = vadd.f32 %v3549, %v4866
        %v5101 = vadd.f32 %v3552, %v4869
        %v5102 = vadd.f32 %v3557, %v4874
        %v5103 = vadd.f32 %v3560, %v4877
        %v5104 = vadd.f32 %v3565, %v4882
        %v5105 = vadd.f32 %v3568, %v4885
        %v5106 = vadd.f32 %v3573, %v4890
        %v5107 = vadd.f32 %v3576, %v4893
        %v5108 = vadd.f32 %v3581, %v4898
        %v5109 = vadd.f32 %v3584, %v4901
        %v5110 = vadd.f32 %v3589, %v4906
        %v5111 = vadd.f32 %v3592, %v4909
        %v5112 = vadd.f32 %v3597, %v4914
        %v5113 = vadd.f32 %v3600, %v4917
        %v5114 = vadd.f32 %v3605, %v4922
        %v5115 = vadd.f32 %v3608, %v4925
        %v5116 = vadd.f32 %v3613, %v4930
        %v5117 = vadd.f32 %v3616, %v4933
        %v5118 = vadd.f32 %v3621, %v4938
        %v5119 = vadd.f32 %v3624, %v4941
        %v5120 = vadd.f32 %v3629, %v4946
        %v5121 = vadd.f32 %v3632, %v4949
        %v5122 = vadd.f32 %v3637, %v4954
        %v5123 = vadd.f32 %v3640, %v4957
        %v5124 = vadd.f32 %v3645, %v4962
        %v5125 = vadd.f32 %v3648, %v4965
        %v5126 = vadd.f32 %v3653, %v4970
        %v5127 = vadd.f32 %v3656, %v4973
        %v5128 = vadd.f32 %v3661, %v4978
        %v5129 = vadd.f32 %v3664, %v4981
        %v5130 = vadd.f32 %v3669, %v4986
        %v5131 = vadd.f32 %v3672, %v4989
        %v5132 = vadd.f32 %v3677, %v4994
        %v5133 = vadd.f32 %v3680, %v4997
        %v5134 = vadd.f32 %v3685, %v5002
        %v5135 = vadd.f32 %v3688, %v5005
        %s5136 = scalar_lea.vmem %s1, 192
        %v5137 = vld [vmem:[%s5136] sm:$0xf]
        %v5138 = vld [vmem:[%s5136 + $0x4] sm:$0xf]
        %v5139 = vld [vmem:[%s5136 + $0x8] sm:$0xf]
        %v5140 = vld [vmem:[%s5136 + $0xc] sm:$0xf]
        %v5141 = vld [vmem:[%s5136 + $0x10] sm:$0xf]
        %v5142 = vld [vmem:[%s5136 + $0x14] sm:$0xf]
        %v5143 = vld [vmem:[%s5136 + $0x18] sm:$0xf]
        %v5144 = vld [vmem:[%s5136 + $0x1c] sm:$0xf]
        %v5145 = vld [vmem:[%s5136 + $0x20] sm:$0xf]
        %v5146 = vld [vmem:[%s5136 + $0x24] sm:$0xf]
        %v5147 = vld [vmem:[%s5136 + $0x28] sm:$0xf]
        %v5148 = vld [vmem:[%s5136 + $0x2c] sm:$0xf]
        %v5149 = vld [vmem:[%s5136 + $0x30] sm:$0xf]
        %v5150 = vld [vmem:[%s5136 + $0x34] sm:$0xf]
        %v5151 = vld [vmem:[%s5136 + $0x38] sm:$0xf]
        %v5152 = vld [vmem:[%s5136 + $0x3c] sm:$0xf]
        %v5157 = vunpack.c.l.b16 %v411
        %v5158 = vunpack.c.l.b16 %v412
        %v5159 = vunpack.c.l.b16 %v413
        %v5160 = vunpack.c.l.b16 %v414
        %v5161 = vpack.c.b16 %v5158, %v5157
        %v5162 = vpack.c.b16 %v5160, %v5159
        %v5181 = vunpack.c.l.b16 %v5137
        %v5182 = vunpack.c.l.b16 %v5138
        %v5183 = vunpack.c.l.b16 %v5139
        %v5184 = vunpack.c.l.b16 %v5140
        %v5185 = vunpack.c.l.b16 %v5141
        %v5186 = vunpack.c.l.b16 %v5142
        %v5187 = vunpack.c.l.b16 %v5143
        %v5188 = vunpack.c.l.b16 %v5144
        %v5189 = vunpack.c.l.b16 %v5145
        %v5190 = vunpack.c.l.b16 %v5146
        %v5191 = vunpack.c.l.b16 %v5147
        %v5192 = vunpack.c.l.b16 %v5148
        %v5193 = vunpack.c.l.b16 %v5149
        %v5194 = vunpack.c.l.b16 %v5150
        %v5195 = vunpack.c.l.b16 %v5151
        %v5196 = vunpack.c.l.b16 %v5152
        %v5197 = vpack.c.b16 %v5182, %v5181
        %v5198 = vpack.c.b16 %v5184, %v5183
        %v5199 = vpack.c.b16 %v5186, %v5185
        %v5200 = vpack.c.b16 %v5188, %v5187
        %v5201 = vpack.c.b16 %v5190, %v5189
        %v5202 = vpack.c.b16 %v5192, %v5191
        %v5203 = vpack.c.b16 %v5194, %v5193
        %v5204 = vpack.c.b16 %v5196, %v5195
        %5213 = vmatprep.subr.bf16.mxu0 0
        %5214 = vmatpush1.bf16.msra.mxu0 %v5197
        %5215 = vmatprep.subr.bf16.mxu0 0
        %5216 = vmatpush1.bf16.msra.mxu0 %v5198
        %5217 = vmatprep.subr.bf16.mxu0 0
        %5218 = vmatpush1.bf16.msra.mxu0 %v5199
        %5219 = vmatprep.subr.bf16.mxu0 0
        %5220 = vmatpush1.bf16.msra.mxu0 %v5200
        %5221 = vmatprep.subr.bf16.mxu0 0
        %5222 = vmatpush1.bf16.msra.mxu0 %v5201
        %5223 = vmatprep.subr.bf16.mxu0 0
        %5224 = vmatpush1.bf16.msra.mxu0 %v5202
        %5225 = vmatprep.subr.bf16.mxu0 0
        %5226 = vmatpush1.bf16.msra.mxu0 %v5203
        %5227 = vmatprep.subr.bf16.mxu0 0
        %5228 = vmatpush1.bf16.msra.mxu0 %v5204
        %5229 = vmatprep.subr.bf16.mxu0 0
        %5230 = vmatpush1.bf16.msra.mxu0 0
        %5231 = vmatprep.subr.bf16.mxu0 0
        %5232 = vmatpush1.bf16.msra.mxu0 0
        %5233 = vmatprep.subr.bf16.mxu0 0
        %5234 = vmatpush1.bf16.msra.mxu0 0
        %5235 = vmatprep.subr.bf16.mxu0 0
        %5236 = vmatpush1.bf16.msra.mxu0 0
        %5237 = vmatprep.subr.bf16.mxu0 0
        %5238 = vmatpush1.bf16.msra.mxu0 0
        %5239 = vmatprep.subr.bf16.mxu0 0
        %5240 = vmatpush1.bf16.msra.mxu0 0
        %5241 = vmatprep.subr.bf16.mxu0 0
        %5242 = vmatpush1.bf16.msra.mxu0 0
        %5243 = vmatprep.subr.bf16.mxu0 0
        %5244 = vmatpush1.bf16.msra.mxu0 0
        %5245 = vmatprep.mubr.bf16.mxu0 0
        %5246 = vmatmul.mubr.bf16.gmra.mrb[0].mxu0 %v2972
        %v5247 = vpop.f32.mrb[0].mxu0
        %v5248 = vadd.f32 0.0, %v5247
        %v5249 = vpop.f32.mrb[0].mxu0
        %v5250 = vpop.f32.mrb[0].mxu0
        %v5251 = vadd.f32 0.0, %v5250
        %v5252 = vpop.f32.mrb[0].mxu0
        %5253 = vmatprep.mubr.bf16.mxu0 0
        %5254 = vmatmul.mubr.bf16.gmra.mrb[0].mxu0 %v2973
        %v5255 = vpop.f32.mrb[0].mxu0
        %v5256 = vadd.f32 0.0, %v5255
        %v5257 = vpop.f32.mrb[0].mxu0
        %v5258 = vpop.f32.mrb[0].mxu0
        %v5259 = vadd.f32 0.0, %v5258
        %v5260 = vpop.f32.mrb[0].mxu0
        %5261 = vmatprep.mubr.bf16.mxu0 0
        %5262 = vmatmul.mubr.bf16.gmra.mrb[0].mxu0 %v2974
        %v5263 = vpop.f32.mrb[0].mxu0
        %v5264 = vadd.f32 0.0, %v5263
        %v5265 = vpop.f32.mrb[0].mxu0
        %v5266 = vpop.f32.mrb[0].mxu0
        %v5267 = vadd.f32 0.0, %v5266
        %v5268 = vpop.f32.mrb[0].mxu0
        %5269 = vmatprep.mubr.bf16.mxu0 0
        %5270 = vmatmul.mubr.bf16.gmra.mrb[0].mxu0 %v2975
        %v5271 = vpop.f32.mrb[0].mxu0
        %v5272 = vadd.f32 0.0, %v5271
        %v5273 = vpop.f32.mrb[0].mxu0
        %v5274 = vpop.f32.mrb[0].mxu0
        %v5275 = vadd.f32 0.0, %v5274
        %v5276 = vpop.f32.mrb[0].mxu0
        %5277 = vmatprep.mubr.bf16.mxu0 0
        %5278 = vmatmul.mubr.bf16.gmra.mrb[0].mxu0 %v2976
        %v5279 = vpop.f32.mrb[0].mxu0
        %v5280 = vadd.f32 0.0, %v5279
        %v5281 = vpop.f32.mrb[0].mxu0
        %v5282 = vpop.f32.mrb[0].mxu0
        %v5283 = vadd.f32 0.0, %v5282
        %v5284 = vpop.f32.mrb[0].mxu0
        %5285 = vmatprep.mubr.bf16.mxu0 0
        %5286 = vmatmul.mubr.bf16.gmra.mrb[0].mxu0 %v2977
        %v5287 = vpop.f32.mrb[0].mxu0
        %v5288 = vadd.f32 0.0, %v5287
        %v5289 = vpop.f32.mrb[0].mxu0
        %v5290 = vpop.f32.mrb[0].mxu0
        %v5291 = vadd.f32 0.0, %v5290
        %v5292 = vpop.f32.mrb[0].mxu0
        %5293 = vmatprep.mubr.bf16.mxu0 0
        %5294 = vmatmul.mubr.bf16.gmra.mrb[0].mxu0 %v2978
        %v5295 = vpop.f32.mrb[0].mxu0
        %v5296 = vadd.f32 0.0, %v5295
        %v5297 = vpop.f32.mrb[0].mxu0
        %v5298 = vpop.f32.mrb[0].mxu0
        %v5299 = vadd.f32 0.0, %v5298
        %v5300 = vpop.f32.mrb[0].mxu0
        %5301 = vmatprep.mubr.bf16.mxu0 0
        %5302 = vmatmul.mubr.bf16.gmra.mrb[0].mxu0 %v2979
        %v5303 = vpop.f32.mrb[0].mxu0
        %v5304 = vadd.f32 0.0, %v5303
        %v5305 = vpop.f32.mrb[0].mxu0
        %v5306 = vpop.f32.mrb[0].mxu0
        %v5307 = vadd.f32 0.0, %v5306
        %v5308 = vpop.f32.mrb[0].mxu0
        %5309 = vmatprep.mubr.bf16.mxu0 0
        %5310 = vmatmul.mubr.bf16.gmra.mrb[0].mxu0 %v2980
        %v5311 = vpop.f32.mrb[0].mxu0
        %v5312 = vadd.f32 0.0, %v5311
        %v5313 = vpop.f32.mrb[0].mxu0
        %v5314 = vpop.f32.mrb[0].mxu0
        %v5315 = vadd.f32 0.0, %v5314
        %v5316 = vpop.f32.mrb[0].mxu0
        %5317 = vmatprep.mubr.bf16.mxu0 0
        %5318 = vmatmul.mubr.bf16.gmra.mrb[0].mxu0 %v2981
        %v5319 = vpop.f32.mrb[0].mxu0
        %v5320 = vadd.f32 0.0, %v5319
        %v5321 = vpop.f32.mrb[0].mxu0
        %v5322 = vpop.f32.mrb[0].mxu0
        %v5323 = vadd.f32 0.0, %v5322
        %v5324 = vpop.f32.mrb[0].mxu0
        %5325 = vmatprep.mubr.bf16.mxu0 0
        %5326 = vmatmul.mubr.bf16.gmra.mrb[0].mxu0 %v2982
        %v5327 = vpop.f32.mrb[0].mxu0
        %v5328 = vadd.f32 0.0, %v5327
        %v5329 = vpop.f32.mrb[0].mxu0
        %v5330 = vpop.f32.mrb[0].mxu0
        %v5331 = vadd.f32 0.0, %v5330
        %v5332 = vpop.f32.mrb[0].mxu0
        %5333 = vmatprep.mubr.bf16.mxu0 0
        %5334 = vmatmul.mubr.bf16.gmra.mrb[0].mxu0 %v2983
        %v5335 = vpop.f32.mrb[0].mxu0
        %v5336 = vadd.f32 0.0, %v5335
        %v5337 = vpop.f32.mrb[0].mxu0
        %v5338 = vpop.f32.mrb[0].mxu0
        %v5339 = vadd.f32 0.0, %v5338
        %v5340 = vpop.f32.mrb[0].mxu0
        %5341 = vmatprep.mubr.bf16.mxu0 0
        %5342 = vmatmul.mubr.bf16.gmra.mrb[0].mxu0 %v2984
        %v5343 = vpop.f32.mrb[0].mxu0
        %v5344 = vadd.f32 0.0, %v5343
        %v5345 = vpop.f32.mrb[0].mxu0
        %v5346 = vpop.f32.mrb[0].mxu0
        %v5347 = vadd.f32 0.0, %v5346
        %v5348 = vpop.f32.mrb[0].mxu0
        %5349 = vmatprep.mubr.bf16.mxu0 0
        %5350 = vmatmul.mubr.bf16.gmra.mrb[0].mxu0 %v2985
        %v5351 = vpop.f32.mrb[0].mxu0
        %v5352 = vadd.f32 0.0, %v5351
        %v5353 = vpop.f32.mrb[0].mxu0
        %v5354 = vpop.f32.mrb[0].mxu0
        %v5355 = vadd.f32 0.0, %v5354
        %v5356 = vpop.f32.mrb[0].mxu0
        %5357 = vmatprep.mubr.bf16.mxu0 0
        %5358 = vmatmul.mubr.bf16.gmra.mrb[0].mxu0 %v2986
        %v5359 = vpop.f32.mrb[0].mxu0
        %v5360 = vadd.f32 0.0, %v5359
        %v5361 = vpop.f32.mrb[0].mxu0
        %v5362 = vpop.f32.mrb[0].mxu0
        %v5363 = vadd.f32 0.0, %v5362
        %v5364 = vpop.f32.mrb[0].mxu0
        %5365 = vmatprep.mubr.bf16.mxu0 0
        %5366 = vmatmul.mubr.bf16.gmra.mrb[0].mxu0 %v2987
        %v5367 = vpop.f32.mrb[0].mxu0
        %v5368 = vadd.f32 0.0, %v5367
        %v5369 = vpop.f32.mrb[0].mxu0
        %v5370 = vpop.f32.mrb[0].mxu0
        %v5371 = vadd.f32 0.0, %v5370
        %v5372 = vpop.f32.mrb[0].mxu0
        %5373 = vmatprep.mubr.bf16.mxu0 0
        %5374 = vmatmul.mubr.bf16.gmra.mrb[0].mxu0 %v2988
        %v5375 = vpop.f32.mrb[0].mxu0
        %v5376 = vadd.f32 0.0, %v5375
        %v5377 = vpop.f32.mrb[0].mxu0
        %v5378 = vpop.f32.mrb[0].mxu0
        %v5379 = vadd.f32 0.0, %v5378
        %v5380 = vpop.f32.mrb[0].mxu0
        %5381 = vmatprep.mubr.bf16.mxu0 0
        %5382 = vmatmul.mubr.bf16.gmra.mrb[0].mxu0 %v2989
        %v5383 = vpop.f32.mrb[0].mxu0
        %v5384 = vadd.f32 0.0, %v5383
        %v5385 = vpop.f32.mrb[0].mxu0
        %v5386 = vpop.f32.mrb[0].mxu0
        %v5387 = vadd.f32 0.0, %v5386
        %v5388 = vpop.f32.mrb[0].mxu0
        %5389 = vmatprep.mubr.bf16.mxu0 0
        %5390 = vmatmul.mubr.bf16.gmra.mrb[0].mxu0 %v2990
        %v5391 = vpop.f32.mrb[0].mxu0
        %v5392 = vadd.f32 0.0, %v5391
        %v5393 = vpop.f32.mrb[0].mxu0
        %v5394 = vpop.f32.mrb[0].mxu0
        %v5395 = vadd.f32 0.0, %v5394
        %v5396 = vpop.f32.mrb[0].mxu0
        %5397 = vmatprep.mubr.bf16.mxu0 0
        %5398 = vmatmul.mubr.bf16.gmra.mrb[0].mxu0 %v2991
        %v5399 = vpop.f32.mrb[0].mxu0
        %v5400 = vadd.f32 0.0, %v5399
        %v5401 = vpop.f32.mrb[0].mxu0
        %v5402 = vpop.f32.mrb[0].mxu0
        %v5403 = vadd.f32 0.0, %v5402
        %v5404 = vpop.f32.mrb[0].mxu0
        %5405 = vmatprep.mubr.bf16.mxu0 0
        %5406 = vmatmul.mubr.bf16.gmra.mrb[0].mxu0 %v2992
        %v5407 = vpop.f32.mrb[0].mxu0
        %v5408 = vadd.f32 0.0, %v5407
        %v5409 = vpop.f32.mrb[0].mxu0
        %v5410 = vpop.f32.mrb[0].mxu0
        %v5411 = vadd.f32 0.0, %v5410
        %v5412 = vpop.f32.mrb[0].mxu0
        %5413 = vmatprep.mubr.bf16.mxu0 0
        %5414 = vmatmul.mubr.bf16.gmra.mrb[0].mxu0 %v2993
        %v5415 = vpop.f32.mrb[0].mxu0
        %v5416 = vadd.f32 0.0, %v5415
        %v5417 = vpop.f32.mrb[0].mxu0
        %v5418 = vpop.f32.mrb[0].mxu0
        %v5419 = vadd.f32 0.0, %v5418
        %v5420 = vpop.f32.mrb[0].mxu0
        %5421 = vmatprep.mubr.bf16.mxu0 0
        %5422 = vmatmul.mubr.bf16.gmra.mrb[0].mxu0 %v2994
        %v5423 = vpop.f32.mrb[0].mxu0
        %v5424 = vadd.f32 0.0, %v5423
        %v5425 = vpop.f32.mrb[0].mxu0
        %v5426 = vpop.f32.mrb[0].mxu0
        %v5427 = vadd.f32 0.0, %v5426
        %v5428 = vpop.f32.mrb[0].mxu0
        %5429 = vmatprep.mubr.bf16.mxu0 0
        %5430 = vmatmul.mubr.bf16.gmra.mrb[0].mxu0 %v2995
        %v5431 = vpop.f32.mrb[0].mxu0
        %v5432 = vadd.f32 0.0, %v5431
        %v5433 = vpop.f32.mrb[0].mxu0
        %v5434 = vpop.f32.mrb[0].mxu0
        %v5435 = vadd.f32 0.0, %v5434
        %v5436 = vpop.f32.mrb[0].mxu0
        %5437 = vmatprep.mubr.bf16.mxu0 0
        %5438 = vmatmul.mubr.bf16.gmra.mrb[0].mxu0 %v2996
        %v5439 = vpop.f32.mrb[0].mxu0
        %v5440 = vadd.f32 0.0, %v5439
        %v5441 = vpop.f32.mrb[0].mxu0
        %v5442 = vpop.f32.mrb[0].mxu0
        %v5443 = vadd.f32 0.0, %v5442
        %v5444 = vpop.f32.mrb[0].mxu0
        %5445 = vmatprep.mubr.bf16.mxu0 0
        %5446 = vmatmul.mubr.bf16.gmra.mrb[0].mxu0 %v2997
        %v5447 = vpop.f32.mrb[0].mxu0
        %v5448 = vadd.f32 0.0, %v5447
        %v5449 = vpop.f32.mrb[0].mxu0
        %v5450 = vpop.f32.mrb[0].mxu0
        %v5451 = vadd.f32 0.0, %v5450
        %v5452 = vpop.f32.mrb[0].mxu0
        %5453 = vmatprep.mubr.bf16.mxu0 0
        %5454 = vmatmul.mubr.bf16.gmra.mrb[0].mxu0 %v2998
        %v5455 = vpop.f32.mrb[0].mxu0
        %v5456 = vadd.f32 0.0, %v5455
        %v5457 = vpop.f32.mrb[0].mxu0
        %v5458 = vpop.f32.mrb[0].mxu0
        %v5459 = vadd.f32 0.0, %v5458
        %v5460 = vpop.f32.mrb[0].mxu0
        %5461 = vmatprep.mubr.bf16.mxu0 0
        %5462 = vmatmul.mubr.bf16.gmra.mrb[0].mxu0 %v2999
        %v5463 = vpop.f32.mrb[0].mxu0
        %v5464 = vadd.f32 0.0, %v5463
        %v5465 = vpop.f32.mrb[0].mxu0
        %v5466 = vpop.f32.mrb[0].mxu0
        %v5467 = vadd.f32 0.0, %v5466
        %v5468 = vpop.f32.mrb[0].mxu0
        %5469 = vmatprep.mubr.bf16.mxu0 0
        %5470 = vmatmul.mubr.bf16.gmra.mrb[0].mxu0 %v3000
        %v5471 = vpop.f32.mrb[0].mxu0
        %v5472 = vadd.f32 0.0, %v5471
        %v5473 = vpop.f32.mrb[0].mxu0
        %v5474 = vpop.f32.mrb[0].mxu0
        %v5475 = vadd.f32 0.0, %v5474
        %v5476 = vpop.f32.mrb[0].mxu0
        %5477 = vmatprep.mubr.bf16.mxu0 0
        %5478 = vmatmul.mubr.bf16.gmra.mrb[0].mxu0 %v3001
        %v5479 = vpop.f32.mrb[0].mxu0
        %v5480 = vadd.f32 0.0, %v5479
        %v5481 = vpop.f32.mrb[0].mxu0
        %v5482 = vpop.f32.mrb[0].mxu0
        %v5483 = vadd.f32 0.0, %v5482
        %v5484 = vpop.f32.mrb[0].mxu0
        %5485 = vmatprep.mubr.bf16.mxu0 0
        %5486 = vmatmul.mubr.bf16.gmra.mrb[0].mxu0 %v3002
        %v5487 = vpop.f32.mrb[0].mxu0
        %v5488 = vadd.f32 0.0, %v5487
        %v5489 = vpop.f32.mrb[0].mxu0
        %v5490 = vpop.f32.mrb[0].mxu0
        %v5491 = vadd.f32 0.0, %v5490
        %v5492 = vpop.f32.mrb[0].mxu0
        %5493 = vmatprep.mubr.bf16.mxu0 0
        %5494 = vmatmul.mubr.bf16.gmra.mrb[0].mxu0 %v3003
        %v5495 = vpop.f32.mrb[0].mxu0
        %v5496 = vadd.f32 0.0, %v5495
        %v5497 = vpop.f32.mrb[0].mxu0
        %v5498 = vpop.f32.mrb[0].mxu0
        %v5499 = vadd.f32 0.0, %v5498
        %v5500 = vpop.f32.mrb[0].mxu0
        %5501 = vmatprep.mubr.bf16.mxu0 0
        %5502 = vmatmul.mubr.bf16.gmra.mrb[0].mxu0 %v3004
        %v5503 = vpop.f32.mrb[0].mxu0
        %v5504 = vadd.f32 0.0, %v5503
        %v5505 = vpop.f32.mrb[0].mxu0
        %v5506 = vpop.f32.mrb[0].mxu0
        %v5507 = vadd.f32 0.0, %v5506
        %v5508 = vpop.f32.mrb[0].mxu0
        %5509 = vmatprep.mubr.bf16.mxu0 0
        %5510 = vmatmul.mubr.bf16.gmra.mrb[0].mxu0 %v3005
        %v5511 = vpop.f32.mrb[0].mxu0
        %v5512 = vadd.f32 0.0, %v5511
        %v5513 = vpop.f32.mrb[0].mxu0
        %v5514 = vpop.f32.mrb[0].mxu0
        %v5515 = vadd.f32 0.0, %v5514
        %v5516 = vpop.f32.mrb[0].mxu0
        %5517 = vmatprep.mubr.bf16.mxu0 0
        %5518 = vmatmul.mubr.bf16.gmra.mrb[0].mxu0 %v3006
        %v5519 = vpop.f32.mrb[0].mxu0
        %v5520 = vadd.f32 0.0, %v5519
        %v5521 = vpop.f32.mrb[0].mxu0
        %v5522 = vpop.f32.mrb[0].mxu0
        %v5523 = vadd.f32 0.0, %v5522
        %v5524 = vpop.f32.mrb[0].mxu0
        %5525 = vmatprep.mubr.bf16.mxu0 0
        %5526 = vmatmul.mubr.bf16.gmra.mrb[0].mxu0 %v3007
        %v5527 = vpop.f32.mrb[0].mxu0
        %v5528 = vadd.f32 0.0, %v5527
        %v5529 = vpop.f32.mrb[0].mxu0
        %v5530 = vpop.f32.mrb[0].mxu0
        %v5531 = vadd.f32 0.0, %v5530
        %v5532 = vpop.f32.mrb[0].mxu0
        %5533 = vmatprep.mubr.bf16.mxu0 0
        %5534 = vmatmul.mubr.bf16.gmra.mrb[0].mxu0 %v3008
        %v5535 = vpop.f32.mrb[0].mxu0
        %v5536 = vadd.f32 0.0, %v5535
        %v5537 = vpop.f32.mrb[0].mxu0
        %v5538 = vpop.f32.mrb[0].mxu0
        %v5539 = vadd.f32 0.0, %v5538
        %v5540 = vpop.f32.mrb[0].mxu0
        %5541 = vmatprep.mubr.bf16.mxu0 0
        %5542 = vmatmul.mubr.bf16.gmra.mrb[0].mxu0 %v3009
        %v5543 = vpop.f32.mrb[0].mxu0
        %v5544 = vadd.f32 0.0, %v5543
        %v5545 = vpop.f32.mrb[0].mxu0
        %v5546 = vpop.f32.mrb[0].mxu0
        %v5547 = vadd.f32 0.0, %v5546
        %v5548 = vpop.f32.mrb[0].mxu0
        %5549 = vmatprep.mubr.bf16.mxu0 0
        %5550 = vmatmul.mubr.bf16.gmra.mrb[0].mxu0 %v3010
        %v5551 = vpop.f32.mrb[0].mxu0
        %v5552 = vadd.f32 0.0, %v5551
        %v5553 = vpop.f32.mrb[0].mxu0
        %v5554 = vpop.f32.mrb[0].mxu0
        %v5555 = vadd.f32 0.0, %v5554
        %v5556 = vpop.f32.mrb[0].mxu0
        %5557 = vmatprep.mubr.bf16.mxu0 0
        %5558 = vmatmul.mubr.bf16.gmra.mrb[0].mxu0 %v3011
        %v5559 = vpop.f32.mrb[0].mxu0
        %v5560 = vadd.f32 0.0, %v5559
        %v5561 = vpop.f32.mrb[0].mxu0
        %v5562 = vpop.f32.mrb[0].mxu0
        %v5563 = vadd.f32 0.0, %v5562
        %v5564 = vpop.f32.mrb[0].mxu0
        %5565 = vmatprep.mubr.bf16.mxu0 0
        %5566 = vmatmul.mubr.bf16.gmra.mrb[0].mxu0 %v3012
        %v5567 = vpop.f32.mrb[0].mxu0
        %v5568 = vadd.f32 0.0, %v5567
        %v5569 = vpop.f32.mrb[0].mxu0
        %v5570 = vpop.f32.mrb[0].mxu0
        %v5571 = vadd.f32 0.0, %v5570
        %v5572 = vpop.f32.mrb[0].mxu0
        %5573 = vmatprep.mubr.bf16.mxu0 0
        %5574 = vmatmul.mubr.bf16.gmra.mrb[0].mxu0 %v3013
        %v5575 = vpop.f32.mrb[0].mxu0
        %v5576 = vadd.f32 0.0, %v5575
        %v5577 = vpop.f32.mrb[0].mxu0
        %v5578 = vpop.f32.mrb[0].mxu0
        %v5579 = vadd.f32 0.0, %v5578
        %v5580 = vpop.f32.mrb[0].mxu0
        %5581 = vmatprep.mubr.bf16.mxu0 0
        %5582 = vmatmul.mubr.bf16.gmra.mrb[0].mxu0 %v3014
        %v5583 = vpop.f32.mrb[0].mxu0
        %v5584 = vadd.f32 0.0, %v5583
        %v5585 = vpop.f32.mrb[0].mxu0
        %v5586 = vpop.f32.mrb[0].mxu0
        %v5587 = vadd.f32 0.0, %v5586
        %v5588 = vpop.f32.mrb[0].mxu0
        %5589 = vmatprep.mubr.bf16.mxu0 0
        %5590 = vmatmul.mubr.bf16.gmra.mrb[0].mxu0 %v3015
        %v5591 = vpop.f32.mrb[0].mxu0
        %v5592 = vadd.f32 0.0, %v5591
        %v5593 = vpop.f32.mrb[0].mxu0
        %v5594 = vpop.f32.mrb[0].mxu0
        %v5595 = vadd.f32 0.0, %v5594
        %v5596 = vpop.f32.mrb[0].mxu0
        %5597 = vmatprep.mubr.bf16.mxu0 0
        %5598 = vmatmul.mubr.bf16.gmra.mrb[0].mxu0 %v3016
        %v5599 = vpop.f32.mrb[0].mxu0
        %v5600 = vadd.f32 0.0, %v5599
        %v5601 = vpop.f32.mrb[0].mxu0
        %v5602 = vpop.f32.mrb[0].mxu0
        %v5603 = vadd.f32 0.0, %v5602
        %v5604 = vpop.f32.mrb[0].mxu0
        %5605 = vmatprep.mubr.bf16.mxu0 0
        %5606 = vmatmul.mubr.bf16.gmra.mrb[0].mxu0 %v3017
        %v5607 = vpop.f32.mrb[0].mxu0
        %v5608 = vadd.f32 0.0, %v5607
        %v5609 = vpop.f32.mrb[0].mxu0
        %v5610 = vpop.f32.mrb[0].mxu0
        %v5611 = vadd.f32 0.0, %v5610
        %v5612 = vpop.f32.mrb[0].mxu0
        %5613 = vmatprep.mubr.bf16.mxu0 0
        %5614 = vmatmul.mubr.bf16.gmra.mrb[0].mxu0 %v3018
        %v5615 = vpop.f32.mrb[0].mxu0
        %v5616 = vadd.f32 0.0, %v5615
        %v5617 = vpop.f32.mrb[0].mxu0
        %v5618 = vpop.f32.mrb[0].mxu0
        %v5619 = vadd.f32 0.0, %v5618
        %v5620 = vpop.f32.mrb[0].mxu0
        %5621 = vmatprep.mubr.bf16.mxu0 0
        %5622 = vmatmul.mubr.bf16.gmra.mrb[0].mxu0 %v3019
        %v5623 = vpop.f32.mrb[0].mxu0
        %v5624 = vadd.f32 0.0, %v5623
        %v5625 = vpop.f32.mrb[0].mxu0
        %v5626 = vpop.f32.mrb[0].mxu0
        %v5627 = vadd.f32 0.0, %v5626
        %v5628 = vpop.f32.mrb[0].mxu0
        %5629 = vmatprep.mubr.bf16.mxu0 0
        %5630 = vmatmul.mubr.bf16.gmra.mrb[0].mxu0 %v3020
        %v5631 = vpop.f32.mrb[0].mxu0
        %v5632 = vadd.f32 0.0, %v5631
        %v5633 = vpop.f32.mrb[0].mxu0
        %v5634 = vpop.f32.mrb[0].mxu0
        %v5635 = vadd.f32 0.0, %v5634
        %v5636 = vpop.f32.mrb[0].mxu0
        %5637 = vmatprep.mubr.bf16.mxu0 0
        %5638 = vmatmul.mubr.bf16.gmra.mrb[0].mxu0 %v3021
        %v5639 = vpop.f32.mrb[0].mxu0
        %v5640 = vadd.f32 0.0, %v5639
        %v5641 = vpop.f32.mrb[0].mxu0
        %v5642 = vpop.f32.mrb[0].mxu0
        %v5643 = vadd.f32 0.0, %v5642
        %v5644 = vpop.f32.mrb[0].mxu0
        %5645 = vmatprep.mubr.bf16.mxu0 0
        %5646 = vmatmul.mubr.bf16.gmra.mrb[0].mxu0 %v3022
        %v5647 = vpop.f32.mrb[0].mxu0
        %v5648 = vadd.f32 0.0, %v5647
        %v5649 = vpop.f32.mrb[0].mxu0
        %v5650 = vpop.f32.mrb[0].mxu0
        %v5651 = vadd.f32 0.0, %v5650
        %v5652 = vpop.f32.mrb[0].mxu0
        %5653 = vmatprep.mubr.bf16.mxu0 0
        %5654 = vmatmul.mubr.bf16.gmra.mrb[0].mxu0 %v3023
        %v5655 = vpop.f32.mrb[0].mxu0
        %v5656 = vadd.f32 0.0, %v5655
        %v5657 = vpop.f32.mrb[0].mxu0
        %v5658 = vpop.f32.mrb[0].mxu0
        %v5659 = vadd.f32 0.0, %v5658
        %v5660 = vpop.f32.mrb[0].mxu0
        %5661 = vmatprep.mubr.bf16.mxu0 0
        %5662 = vmatmul.mubr.bf16.gmra.mrb[0].mxu0 %v3024
        %v5663 = vpop.f32.mrb[0].mxu0
        %v5664 = vadd.f32 0.0, %v5663
        %v5665 = vpop.f32.mrb[0].mxu0
        %v5666 = vpop.f32.mrb[0].mxu0
        %v5667 = vadd.f32 0.0, %v5666
        %v5668 = vpop.f32.mrb[0].mxu0
        %5669 = vmatprep.mubr.bf16.mxu0 0
        %5670 = vmatmul.mubr.bf16.gmra.mrb[0].mxu0 %v3025
        %v5671 = vpop.f32.mrb[0].mxu0
        %v5672 = vadd.f32 0.0, %v5671
        %v5673 = vpop.f32.mrb[0].mxu0
        %v5674 = vpop.f32.mrb[0].mxu0
        %v5675 = vadd.f32 0.0, %v5674
        %v5676 = vpop.f32.mrb[0].mxu0
        %5677 = vmatprep.mubr.bf16.mxu0 0
        %5678 = vmatmul.mubr.bf16.gmra.mrb[0].mxu0 %v3026
        %v5679 = vpop.f32.mrb[0].mxu0
        %v5680 = vadd.f32 0.0, %v5679
        %v5681 = vpop.f32.mrb[0].mxu0
        %v5682 = vpop.f32.mrb[0].mxu0
        %v5683 = vadd.f32 0.0, %v5682
        %v5684 = vpop.f32.mrb[0].mxu0
        %5685 = vmatprep.mubr.bf16.mxu0 0
        %5686 = vmatmul.mubr.bf16.gmra.mrb[0].mxu0 %v3027
        %v5687 = vpop.f32.mrb[0].mxu0
        %v5688 = vadd.f32 0.0, %v5687
        %v5689 = vpop.f32.mrb[0].mxu0
        %v5690 = vpop.f32.mrb[0].mxu0
        %v5691 = vadd.f32 0.0, %v5690
        %v5692 = vpop.f32.mrb[0].mxu0
        %5693 = vmatprep.mubr.bf16.mxu0 0
        %5694 = vmatmul.mubr.bf16.gmra.mrb[0].mxu0 %v3028
        %v5695 = vpop.f32.mrb[0].mxu0
        %v5696 = vadd.f32 0.0, %v5695
        %v5697 = vpop.f32.mrb[0].mxu0
        %v5698 = vpop.f32.mrb[0].mxu0
        %v5699 = vadd.f32 0.0, %v5698
        %v5700 = vpop.f32.mrb[0].mxu0
        %5701 = vmatprep.mubr.bf16.mxu0 0
        %5702 = vmatmul.mubr.bf16.gmra.mrb[0].mxu0 %v3029
        %v5703 = vpop.f32.mrb[0].mxu0
        %v5704 = vadd.f32 0.0, %v5703
        %v5705 = vpop.f32.mrb[0].mxu0
        %v5706 = vpop.f32.mrb[0].mxu0
        %v5707 = vadd.f32 0.0, %v5706
        %v5708 = vpop.f32.mrb[0].mxu0
        %5709 = vmatprep.mubr.bf16.mxu0 0
        %5710 = vmatmul.mubr.bf16.gmra.mrb[0].mxu0 %v3030
        %v5711 = vpop.f32.mrb[0].mxu0
        %v5712 = vadd.f32 0.0, %v5711
        %v5713 = vpop.f32.mrb[0].mxu0
        %v5714 = vpop.f32.mrb[0].mxu0
        %v5715 = vadd.f32 0.0, %v5714
        %v5716 = vpop.f32.mrb[0].mxu0
        %5717 = vmatprep.mubr.bf16.mxu0 0
        %5718 = vmatmul.mubr.bf16.gmra.mrb[0].mxu0 %v3031
        %v5719 = vpop.f32.mrb[0].mxu0
        %v5720 = vadd.f32 0.0, %v5719
        %v5721 = vpop.f32.mrb[0].mxu0
        %v5722 = vpop.f32.mrb[0].mxu0
        %v5723 = vadd.f32 0.0, %v5722
        %v5724 = vpop.f32.mrb[0].mxu0
        %5725 = vmatprep.mubr.bf16.mxu0 0
        %5726 = vmatmul.mubr.bf16.gmra.mrb[0].mxu0 %v3032
        %v5727 = vpop.f32.mrb[0].mxu0
        %v5728 = vadd.f32 0.0, %v5727
        %v5729 = vpop.f32.mrb[0].mxu0
        %v5730 = vpop.f32.mrb[0].mxu0
        %v5731 = vadd.f32 0.0, %v5730
        %v5732 = vpop.f32.mrb[0].mxu0
        %5733 = vmatprep.mubr.bf16.mxu0 0
        %5734 = vmatmul.mubr.bf16.gmra.mrb[0].mxu0 %v3033
        %v5735 = vpop.f32.mrb[0].mxu0
        %v5736 = vadd.f32 0.0, %v5735
        %v5737 = vpop.f32.mrb[0].mxu0
        %v5738 = vpop.f32.mrb[0].mxu0
        %v5739 = vadd.f32 0.0, %v5738
        %v5740 = vpop.f32.mrb[0].mxu0
        %5741 = vmatprep.mubr.bf16.mxu0 0
        %5742 = vmatmul.mubr.bf16.gmra.mrb[0].mxu0 %v5161
        %v5743 = vpop.f32.mrb[0].mxu0
        %v5744 = vadd.f32 0.0, %v5743
        %v5745 = vpop.f32.mrb[0].mxu0
        %v5746 = vpop.f32.mrb[0].mxu0
        %v5747 = vadd.f32 0.0, %v5746
        %v5748 = vpop.f32.mrb[0].mxu0
        %5749 = vmatprep.mubr.bf16.mxu0 0
        %5750 = vmatmul.mubr.bf16.gmra.mrb[0].mxu0 %v5162
        %v5751 = vpop.f32.mrb[0].mxu0
        %v5752 = vadd.f32 0.0, %v5751
        %v5753 = vpop.f32.mrb[0].mxu0
        %v5754 = vpop.f32.mrb[0].mxu0
        %v5755 = vadd.f32 0.0, %v5754
        %v5756 = vpop.f32.mrb[0].mxu0
        %5757 = vdwg.mxu0
        %v5758 = vadd.f32 %v5008, %v5248
        %v5759 = vadd.f32 %v5009, %v5251
        %v5760 = vadd.f32 %v5010, %v5256
        %v5761 = vadd.f32 %v5011, %v5259
        %v5762 = vadd.f32 %v5012, %v5264
        %v5763 = vadd.f32 %v5013, %v5267
        %v5764 = vadd.f32 %v5014, %v5272
        %v5765 = vadd.f32 %v5015, %v5275
        %v5766 = vadd.f32 %v5016, %v5280
        %v5767 = vadd.f32 %v5017, %v5283
        %v5768 = vadd.f32 %v5018, %v5288
        %v5769 = vadd.f32 %v5019, %v5291
        %v5770 = vadd.f32 %v5020, %v5296
        %v5771 = vadd.f32 %v5021, %v5299
        %v5772 = vadd.f32 %v5022, %v5304
        %v5773 = vadd.f32 %v5023, %v5307
        %v5774 = vadd.f32 %v5024, %v5312
        %v5775 = vadd.f32 %v5025, %v5315
        %v5776 = vadd.f32 %v5026, %v5320
        %v5777 = vadd.f32 %v5027, %v5323
        %v5778 = vadd.f32 %v5028, %v5328
        %v5779 = vadd.f32 %v5029, %v5331
        %v5780 = vadd.f32 %v5030, %v5336
        %v5781 = vadd.f32 %v5031, %v5339
        %v5782 = vadd.f32 %v5032, %v5344
        %v5783 = vadd.f32 %v5033, %v5347
        %v5784 = vadd.f32 %v5034, %v5352
        %v5785 = vadd.f32 %v5035, %v5355
        %v5786 = vadd.f32 %v5036, %v5360
        %v5787 = vadd.f32 %v5037, %v5363
        %v5788 = vadd.f32 %v5038, %v5368
        %v5789 = vadd.f32 %v5039, %v5371
        %v5790 = vadd.f32 %v5040, %v5376
        %v5791 = vadd.f32 %v5041, %v5379
        %v5792 = vadd.f32 %v5042, %v5384
        %v5793 = vadd.f32 %v5043, %v5387
        %v5794 = vadd.f32 %v5044, %v5392
        %v5795 = vadd.f32 %v5045, %v5395
        %v5796 = vadd.f32 %v5046, %v5400
        %v5797 = vadd.f32 %v5047, %v5403
        %v5798 = vadd.f32 %v5048, %v5408
        %v5799 = vadd.f32 %v5049, %v5411
        %v5800 = vadd.f32 %v5050, %v5416
        %v5801 = vadd.f32 %v5051, %v5419
        %v5802 = vadd.f32 %v5052, %v5424
        %v5803 = vadd.f32 %v5053, %v5427
        %v5804 = vadd.f32 %v5054, %v5432
        %v5805 = vadd.f32 %v5055, %v5435
        %v5806 = vadd.f32 %v5056, %v5440
        %v5807 = vadd.f32 %v5057, %v5443
        %v5808 = vadd.f32 %v5058, %v5448
        %v5809 = vadd.f32 %v5059, %v5451
        %v5810 = vadd.f32 %v5060, %v5456
        %v5811 = vadd.f32 %v5061, %v5459
        %v5812 = vadd.f32 %v5062, %v5464
        %v5813 = vadd.f32 %v5063, %v5467
        %v5814 = vadd.f32 %v5064, %v5472
        %v5815 = vadd.f32 %v5065, %v5475
        %v5816 = vadd.f32 %v5066, %v5480
        %v5817 = vadd.f32 %v5067, %v5483
        %v5818 = vadd.f32 %v5068, %v5488
        %v5819 = vadd.f32 %v5069, %v5491
        %v5820 = vadd.f32 %v5070, %v5496
        %v5821 = vadd.f32 %v5071, %v5499
        %v5822 = vadd.f32 %v5072, %v5504
        %v5823 = vadd.f32 %v5073, %v5507
        %v5824 = vadd.f32 %v5074, %v5512
        %v5825 = vadd.f32 %v5075, %v5515
        %v5826 = vadd.f32 %v5076, %v5520
        %v5827 = vadd.f32 %v5077, %v5523
        %v5828 = vadd.f32 %v5078, %v5528
        %v5829 = vadd.f32 %v5079, %v5531
        %v5830 = vadd.f32 %v5080, %v5536
        %v5831 = vadd.f32 %v5081, %v5539
        %v5832 = vadd.f32 %v5082, %v5544
        %v5833 = vadd.f32 %v5083, %v5547
        %v5834 = vadd.f32 %v5084, %v5552
        %v5835 = vadd.f32 %v5085, %v5555
        %v5836 = vadd.f32 %v5086, %v5560
        %v5837 = vadd.f32 %v5087, %v5563
        %v5838 = vadd.f32 %v5088, %v5568
        %v5839 = vadd.f32 %v5089, %v5571
        %v5840 = vadd.f32 %v5090, %v5576
        %v5841 = vadd.f32 %v5091, %v5579
        %v5842 = vadd.f32 %v5092, %v5584
        %v5843 = vadd.f32 %v5093, %v5587
        %v5844 = vadd.f32 %v5094, %v5592
        %v5845 = vadd.f32 %v5095, %v5595
        %v5846 = vadd.f32 %v5096, %v5600
        %v5847 = vadd.f32 %v5097, %v5603
        %v5848 = vadd.f32 %v5098, %v5608
        %v5849 = vadd.f32 %v5099, %v5611
        %v5850 = vadd.f32 %v5100, %v5616
        %v5851 = vadd.f32 %v5101, %v5619
        %v5852 = vadd.f32 %v5102, %v5624
        %v5853 = vadd.f32 %v5103, %v5627
        %v5854 = vadd.f32 %v5104, %v5632
        %v5855 = vadd.f32 %v5105, %v5635
        %v5856 = vadd.f32 %v5106, %v5640
        %v5857 = vadd.f32 %v5107, %v5643
        %v5858 = vadd.f32 %v5108, %v5648
        %v5859 = vadd.f32 %v5109, %v5651
        %v5860 = vadd.f32 %v5110, %v5656
        %v5861 = vadd.f32 %v5111, %v5659
        %v5862 = vadd.f32 %v5112, %v5664
        %v5863 = vadd.f32 %v5113, %v5667
        %v5864 = vadd.f32 %v5114, %v5672
        %v5865 = vadd.f32 %v5115, %v5675
        %v5866 = vadd.f32 %v5116, %v5680
        %v5867 = vadd.f32 %v5117, %v5683
        %v5868 = vadd.f32 %v5118, %v5688
        %v5869 = vadd.f32 %v5119, %v5691
        %v5870 = vadd.f32 %v5120, %v5696
        %v5871 = vadd.f32 %v5121, %v5699
        %v5872 = vadd.f32 %v5122, %v5704
        %v5873 = vadd.f32 %v5123, %v5707
        %v5874 = vadd.f32 %v5124, %v5712
        %v5875 = vadd.f32 %v5125, %v5715
        %v5876 = vadd.f32 %v5126, %v5720
        %v5877 = vadd.f32 %v5127, %v5723
        %v5878 = vadd.f32 %v5128, %v5728
        %v5879 = vadd.f32 %v5129, %v5731
        %v5880 = vadd.f32 %v5130, %v5736
        %v5881 = vadd.f32 %v5131, %v5739
        %v5882 = vadd.f32 %v5132, %v5744
        %v5883 = vadd.f32 %v5133, %v5747
        %v5884 = vadd.f32 %v5134, %v5752
        %v5885 = vadd.f32 %v5135, %v5755
        %v5887 = vshrl.u32 %v411, 16
        %v5889 = vrot.slane %v5887, 4
        %v5890 = vshll.u32 %v411, 16
        %v5892 = vrot.slane %v5890, 5
        %v5893 = vor.u32 %v5889, %v5892
        %v5894 = vrot.slane %v5893, 4
        %v5896 = vshll.u32 %v412, 16
        %v5898 = vrot.slane %v5896, 5
        %v5899 = vsel %vm439, %v5894, %v5898
        %v5900 = vshrl.u32 %v412, 16
        %v5902 = vrot.slane %v5900, 4
        %v5903 = vor.u32 %v5902, %v5898
        %v5904 = vrot.slane %v5903, 4
        %v5906 = vshll.u32 %v413, 16
        %v5908 = vrot.slane %v5906, 5
        %v5909 = vsel %vm439, %v5904, %v5908
        %v5910 = vshrl.u32 %v413, 16
        %v5912 = vrot.slane %v5910, 4
        %v5913 = vor.u32 %v5912, %v5908
        %v5914 = vrot.slane %v5913, 4
        %v5916 = vshll.u32 %v414, 16
        %v5918 = vrot.slane %v5916, 5
        %v5919 = vsel %vm439, %v5914, %v5918
        %v5920 = vshrl.u32 %v414, 16
        %v5922 = vrot.slane %v5920, 4
        %v5923 = vor.u32 %v5922, %v5918
        %v5924 = vrot.slane %v5923, 4
        %v5926 = vshll.u32 %v415, 16
        %v5928 = vrot.slane %v5926, 5
        %v5929 = vsel %vm439, %v5924, %v5928
        %s5930 = scalar_lea.vmem %s1, 256
        %v5931 = vld [vmem:[%s5930] sm:$0xf]
        %v5932 = vld [vmem:[%s5930 + $0x4] sm:$0xf]
        %v5933 = vld [vmem:[%s5930 + $0x8] sm:$0xf]
        %v5934 = vld [vmem:[%s5930 + $0xc] sm:$0xf]
        %v5935 = vld [vmem:[%s5930 + $0x10] sm:$0xf]
        %v5936 = vld [vmem:[%s5930 + $0x14] sm:$0xf]
        %v5937 = vld [vmem:[%s5930 + $0x18] sm:$0xf]
        %v5938 = vld [vmem:[%s5930 + $0x1c] sm:$0xf]
        %v5939 = vld [vmem:[%s5930 + $0x20] sm:$0xf]
        %v5940 = vld [vmem:[%s5930 + $0x24] sm:$0xf]
        %v5941 = vld [vmem:[%s5930 + $0x28] sm:$0xf]
        %v5942 = vld [vmem:[%s5930 + $0x2c] sm:$0xf]
        %v5943 = vld [vmem:[%s5930 + $0x30] sm:$0xf]
        %v5944 = vld [vmem:[%s5930 + $0x34] sm:$0xf]
        %v5945 = vld [vmem:[%s5930 + $0x38] sm:$0xf]
        %v5946 = vld [vmem:[%s5930 + $0x3c] sm:$0xf]
        %v5947 = vunpack.c.l.b16 %v5899
        %v5948 = vunpack.c.l.b16 %v5909
        %v5949 = vunpack.c.l.b16 %v5919
        %v5950 = vunpack.c.l.b16 %v5929
        %v5951 = vpack.c.b16 %v5948, %v5947
        %v5952 = vpack.c.b16 %v5950, %v5949
        %v5971 = vunpack.c.l.b16 %v5931
        %v5972 = vunpack.c.l.b16 %v5932
        %v5973 = vunpack.c.l.b16 %v5933
        %v5974 = vunpack.c.l.b16 %v5934
        %v5975 = vunpack.c.l.b16 %v5935
        %v5976 = vunpack.c.l.b16 %v5936
        %v5977 = vunpack.c.l.b16 %v5937
        %v5978 = vunpack.c.l.b16 %v5938
        %v5979 = vunpack.c.l.b16 %v5939
        %v5980 = vunpack.c.l.b16 %v5940
        %v5981 = vunpack.c.l.b16 %v5941
        %v5982 = vunpack.c.l.b16 %v5942
        %v5983 = vunpack.c.l.b16 %v5943
        %v5984 = vunpack.c.l.b16 %v5944
        %v5985 = vunpack.c.l.b16 %v5945
        %v5986 = vunpack.c.l.b16 %v5946
        %v5987 = vpack.c.b16 %v5972, %v5971
        %v5988 = vpack.c.b16 %v5974, %v5973
        %v5989 = vpack.c.b16 %v5976, %v5975
        %v5990 = vpack.c.b16 %v5978, %v5977
        %v5991 = vpack.c.b16 %v5980, %v5979
        %v5992 = vpack.c.b16 %v5982, %v5981
        %v5993 = vpack.c.b16 %v5984, %v5983
        %v5994 = vpack.c.b16 %v5986, %v5985
        %6003 = vmatprep.subr.bf16.mxu0 0
        %6004 = vmatpush1.bf16.msra.mxu0 %v5987
        %6005 = vmatprep.subr.bf16.mxu0 0
        %6006 = vmatpush1.bf16.msra.mxu0 %v5988
        %6007 = vmatprep.subr.bf16.mxu0 0
        %6008 = vmatpush1.bf16.msra.mxu0 %v5989
        %6009 = vmatprep.subr.bf16.mxu0 0
        %6010 = vmatpush1.bf16.msra.mxu0 %v5990
        %6011 = vmatprep.subr.bf16.mxu0 0
        %6012 = vmatpush1.bf16.msra.mxu0 %v5991
        %6013 = vmatprep.subr.bf16.mxu0 0
        %6014 = vmatpush1.bf16.msra.mxu0 %v5992
        %6015 = vmatprep.subr.bf16.mxu0 0
        %6016 = vmatpush1.bf16.msra.mxu0 %v5993
        %6017 = vmatprep.subr.bf16.mxu0 0
        %6018 = vmatpush1.bf16.msra.mxu0 %v5994
        %6019 = vmatprep.subr.bf16.mxu0 0
        %6020 = vmatpush1.bf16.msra.mxu0 0
        %6021 = vmatprep.subr.bf16.mxu0 0
        %6022 = vmatpush1.bf16.msra.mxu0 0
        %6023 = vmatprep.subr.bf16.mxu0 0
        %6024 = vmatpush1.bf16.msra.mxu0 0
        %6025 = vmatprep.subr.bf16.mxu0 0
        %6026 = vmatpush1.bf16.msra.mxu0 0
        %6027 = vmatprep.subr.bf16.mxu0 0
        %6028 = vmatpush1.bf16.msra.mxu0 0
        %6029 = vmatprep.subr.bf16.mxu0 0
        %6030 = vmatpush1.bf16.msra.mxu0 0
        %6031 = vmatprep.subr.bf16.mxu0 0
        %6032 = vmatpush1.bf16.msra.mxu0 0
        %6033 = vmatprep.subr.bf16.mxu0 0
        %6034 = vmatpush1.bf16.msra.mxu0 0
        %6035 = vmatprep.mubr.bf16.mxu0 0
        %6036 = vmatmul.mubr.bf16.gmra.mrb[0].mxu0 %v1995
        %v6037 = vpop.f32.mrb[0].mxu0
        %v6038 = vadd.f32 0.0, %v6037
        %v6039 = vpop.f32.mrb[0].mxu0
        %v6040 = vpop.f32.mrb[0].mxu0
        %v6041 = vadd.f32 0.0, %v6040
        %v6042 = vpop.f32.mrb[0].mxu0
        %6043 = vmatprep.mubr.bf16.mxu0 0
        %6044 = vmatmul.mubr.bf16.gmra.mrb[0].mxu0 %v1996
        %v6045 = vpop.f32.mrb[0].mxu0
        %v6046 = vadd.f32 0.0, %v6045
        %v6047 = vpop.f32.mrb[0].mxu0
        %v6048 = vpop.f32.mrb[0].mxu0
        %v6049 = vadd.f32 0.0, %v6048
        %v6050 = vpop.f32.mrb[0].mxu0
        %6051 = vmatprep.mubr.bf16.mxu0 0
        %6052 = vmatmul.mubr.bf16.gmra.mrb[0].mxu0 %v1997
        %v6053 = vpop.f32.mrb[0].mxu0
        %v6054 = vadd.f32 0.0, %v6053
        %v6055 = vpop.f32.mrb[0].mxu0
        %v6056 = vpop.f32.mrb[0].mxu0
        %v6057 = vadd.f32 0.0, %v6056
        %v6058 = vpop.f32.mrb[0].mxu0
        %6059 = vmatprep.mubr.bf16.mxu0 0
        %6060 = vmatmul.mubr.bf16.gmra.mrb[0].mxu0 %v1998
        %v6061 = vpop.f32.mrb[0].mxu0
        %v6062 = vadd.f32 0.0, %v6061
        %v6063 = vpop.f32.mrb[0].mxu0
        %v6064 = vpop.f32.mrb[0].mxu0
        %v6065 = vadd.f32 0.0, %v6064
        %v6066 = vpop.f32.mrb[0].mxu0
        %6067 = vmatprep.mubr.bf16.mxu0 0
        %6068 = vmatmul.mubr.bf16.gmra.mrb[0].mxu0 %v1999
        %v6069 = vpop.f32.mrb[0].mxu0
        %v6070 = vadd.f32 0.0, %v6069
        %v6071 = vpop.f32.mrb[0].mxu0
        %v6072 = vpop.f32.mrb[0].mxu0
        %v6073 = vadd.f32 0.0, %v6072
        %v6074 = vpop.f32.mrb[0].mxu0
        %6075 = vmatprep.mubr.bf16.mxu0 0
        %6076 = vmatmul.mubr.bf16.gmra.mrb[0].mxu0 %v2000
        %v6077 = vpop.f32.mrb[0].mxu0
        %v6078 = vadd.f32 0.0, %v6077
        %v6079 = vpop.f32.mrb[0].mxu0
        %v6080 = vpop.f32.mrb[0].mxu0
        %v6081 = vadd.f32 0.0, %v6080
        %v6082 = vpop.f32.mrb[0].mxu0
        %6083 = vmatprep.mubr.bf16.mxu0 0
        %6084 = vmatmul.mubr.bf16.gmra.mrb[0].mxu0 %v2001
        %v6085 = vpop.f32.mrb[0].mxu0
        %v6086 = vadd.f32 0.0, %v6085
        %v6087 = vpop.f32.mrb[0].mxu0
        %v6088 = vpop.f32.mrb[0].mxu0
        %v6089 = vadd.f32 0.0, %v6088
        %v6090 = vpop.f32.mrb[0].mxu0
        %6091 = vmatprep.mubr.bf16.mxu0 0
        %6092 = vmatmul.mubr.bf16.gmra.mrb[0].mxu0 %v2002
        %v6093 = vpop.f32.mrb[0].mxu0
        %v6094 = vadd.f32 0.0, %v6093
        %v6095 = vpop.f32.mrb[0].mxu0
        %v6096 = vpop.f32.mrb[0].mxu0
        %v6097 = vadd.f32 0.0, %v6096
        %v6098 = vpop.f32.mrb[0].mxu0
        %6099 = vmatprep.mubr.bf16.mxu0 0
        %6100 = vmatmul.mubr.bf16.gmra.mrb[0].mxu0 %v2003
        %v6101 = vpop.f32.mrb[0].mxu0
        %v6102 = vadd.f32 0.0, %v6101
        %v6103 = vpop.f32.mrb[0].mxu0
        %v6104 = vpop.f32.mrb[0].mxu0
        %v6105 = vadd.f32 0.0, %v6104
        %v6106 = vpop.f32.mrb[0].mxu0
        %6107 = vmatprep.mubr.bf16.mxu0 0
        %6108 = vmatmul.mubr.bf16.gmra.mrb[0].mxu0 %v2004
        %v6109 = vpop.f32.mrb[0].mxu0
        %v6110 = vadd.f32 0.0, %v6109
        %v6111 = vpop.f32.mrb[0].mxu0
        %v6112 = vpop.f32.mrb[0].mxu0
        %v6113 = vadd.f32 0.0, %v6112
        %v6114 = vpop.f32.mrb[0].mxu0
        %6115 = vmatprep.mubr.bf16.mxu0 0
        %6116 = vmatmul.mubr.bf16.gmra.mrb[0].mxu0 %v2005
        %v6117 = vpop.f32.mrb[0].mxu0
        %v6118 = vadd.f32 0.0, %v6117
        %v6119 = vpop.f32.mrb[0].mxu0
        %v6120 = vpop.f32.mrb[0].mxu0
        %v6121 = vadd.f32 0.0, %v6120
        %v6122 = vpop.f32.mrb[0].mxu0
        %6123 = vmatprep.mubr.bf16.mxu0 0
        %6124 = vmatmul.mubr.bf16.gmra.mrb[0].mxu0 %v2006
        %v6125 = vpop.f32.mrb[0].mxu0
        %v6126 = vadd.f32 0.0, %v6125
        %v6127 = vpop.f32.mrb[0].mxu0
        %v6128 = vpop.f32.mrb[0].mxu0
        %v6129 = vadd.f32 0.0, %v6128
        %v6130 = vpop.f32.mrb[0].mxu0
        %6131 = vmatprep.mubr.bf16.mxu0 0
        %6132 = vmatmul.mubr.bf16.gmra.mrb[0].mxu0 %v2007
        %v6133 = vpop.f32.mrb[0].mxu0
        %v6134 = vadd.f32 0.0, %v6133
        %v6135 = vpop.f32.mrb[0].mxu0
        %v6136 = vpop.f32.mrb[0].mxu0
        %v6137 = vadd.f32 0.0, %v6136
        %v6138 = vpop.f32.mrb[0].mxu0
        %6139 = vmatprep.mubr.bf16.mxu0 0
        %6140 = vmatmul.mubr.bf16.gmra.mrb[0].mxu0 %v2008
        %v6141 = vpop.f32.mrb[0].mxu0
        %v6142 = vadd.f32 0.0, %v6141
        %v6143 = vpop.f32.mrb[0].mxu0
        %v6144 = vpop.f32.mrb[0].mxu0
        %v6145 = vadd.f32 0.0, %v6144
        %v6146 = vpop.f32.mrb[0].mxu0
        %6147 = vmatprep.mubr.bf16.mxu0 0
        %6148 = vmatmul.mubr.bf16.gmra.mrb[0].mxu0 %v2009
        %v6149 = vpop.f32.mrb[0].mxu0
        %v6150 = vadd.f32 0.0, %v6149
        %v6151 = vpop.f32.mrb[0].mxu0
        %v6152 = vpop.f32.mrb[0].mxu0
        %v6153 = vadd.f32 0.0, %v6152
        %v6154 = vpop.f32.mrb[0].mxu0
        %6155 = vmatprep.mubr.bf16.mxu0 0
        %6156 = vmatmul.mubr.bf16.gmra.mrb[0].mxu0 %v2010
        %v6157 = vpop.f32.mrb[0].mxu0
        %v6158 = vadd.f32 0.0, %v6157
        %v6159 = vpop.f32.mrb[0].mxu0
        %v6160 = vpop.f32.mrb[0].mxu0
        %v6161 = vadd.f32 0.0, %v6160
        %v6162 = vpop.f32.mrb[0].mxu0
        %6163 = vmatprep.mubr.bf16.mxu0 0
        %6164 = vmatmul.mubr.bf16.gmra.mrb[0].mxu0 %v2011
        %v6165 = vpop.f32.mrb[0].mxu0
        %v6166 = vadd.f32 0.0, %v6165
        %v6167 = vpop.f32.mrb[0].mxu0
        %v6168 = vpop.f32.mrb[0].mxu0
        %v6169 = vadd.f32 0.0, %v6168
        %v6170 = vpop.f32.mrb[0].mxu0
        %6171 = vmatprep.mubr.bf16.mxu0 0
        %6172 = vmatmul.mubr.bf16.gmra.mrb[0].mxu0 %v2012
        %v6173 = vpop.f32.mrb[0].mxu0
        %v6174 = vadd.f32 0.0, %v6173
        %v6175 = vpop.f32.mrb[0].mxu0
        %v6176 = vpop.f32.mrb[0].mxu0
        %v6177 = vadd.f32 0.0, %v6176
        %v6178 = vpop.f32.mrb[0].mxu0
        %6179 = vmatprep.mubr.bf16.mxu0 0
        %6180 = vmatmul.mubr.bf16.gmra.mrb[0].mxu0 %v2013
        %v6181 = vpop.f32.mrb[0].mxu0
        %v6182 = vadd.f32 0.0, %v6181
        %v6183 = vpop.f32.mrb[0].mxu0
        %v6184 = vpop.f32.mrb[0].mxu0
        %v6185 = vadd.f32 0.0, %v6184
        %v6186 = vpop.f32.mrb[0].mxu0
        %6187 = vmatprep.mubr.bf16.mxu0 0
        %6188 = vmatmul.mubr.bf16.gmra.mrb[0].mxu0 %v2014
        %v6189 = vpop.f32.mrb[0].mxu0
        %v6190 = vadd.f32 0.0, %v6189
        %v6191 = vpop.f32.mrb[0].mxu0
        %v6192 = vpop.f32.mrb[0].mxu0
        %v6193 = vadd.f32 0.0, %v6192
        %v6194 = vpop.f32.mrb[0].mxu0
        %6195 = vmatprep.mubr.bf16.mxu0 0
        %6196 = vmatmul.mubr.bf16.gmra.mrb[0].mxu0 %v2015
        %v6197 = vpop.f32.mrb[0].mxu0
        %v6198 = vadd.f32 0.0, %v6197
        %v6199 = vpop.f32.mrb[0].mxu0
        %v6200 = vpop.f32.mrb[0].mxu0
        %v6201 = vadd.f32 0.0, %v6200
        %v6202 = vpop.f32.mrb[0].mxu0
        %6203 = vmatprep.mubr.bf16.mxu0 0
        %6204 = vmatmul.mubr.bf16.gmra.mrb[0].mxu0 %v2016
        %v6205 = vpop.f32.mrb[0].mxu0
        %v6206 = vadd.f32 0.0, %v6205
        %v6207 = vpop.f32.mrb[0].mxu0
        %v6208 = vpop.f32.mrb[0].mxu0
        %v6209 = vadd.f32 0.0, %v6208
        %v6210 = vpop.f32.mrb[0].mxu0
        %6211 = vmatprep.mubr.bf16.mxu0 0
        %6212 = vmatmul.mubr.bf16.gmra.mrb[0].mxu0 %v2017
        %v6213 = vpop.f32.mrb[0].mxu0
        %v6214 = vadd.f32 0.0, %v6213
        %v6215 = vpop.f32.mrb[0].mxu0
        %v6216 = vpop.f32.mrb[0].mxu0
        %v6217 = vadd.f32 0.0, %v6216
        %v6218 = vpop.f32.mrb[0].mxu0
        %6219 = vmatprep.mubr.bf16.mxu0 0
        %6220 = vmatmul.mubr.bf16.gmra.mrb[0].mxu0 %v2018
        %v6221 = vpop.f32.mrb[0].mxu0
        %v6222 = vadd.f32 0.0, %v6221
        %v6223 = vpop.f32.mrb[0].mxu0
        %v6224 = vpop.f32.mrb[0].mxu0
        %v6225 = vadd.f32 0.0, %v6224
        %v6226 = vpop.f32.mrb[0].mxu0
        %6227 = vmatprep.mubr.bf16.mxu0 0
        %6228 = vmatmul.mubr.bf16.gmra.mrb[0].mxu0 %v2019
        %v6229 = vpop.f32.mrb[0].mxu0
        %v6230 = vadd.f32 0.0, %v6229
        %v6231 = vpop.f32.mrb[0].mxu0
        %v6232 = vpop.f32.mrb[0].mxu0
        %v6233 = vadd.f32 0.0, %v6232
        %v6234 = vpop.f32.mrb[0].mxu0
        %6235 = vmatprep.mubr.bf16.mxu0 0
        %6236 = vmatmul.mubr.bf16.gmra.mrb[0].mxu0 %v2020
        %v6237 = vpop.f32.mrb[0].mxu0
        %v6238 = vadd.f32 0.0, %v6237
        %v6239 = vpop.f32.mrb[0].mxu0
        %v6240 = vpop.f32.mrb[0].mxu0
        %v6241 = vadd.f32 0.0, %v6240
        %v6242 = vpop.f32.mrb[0].mxu0
        %6243 = vmatprep.mubr.bf16.mxu0 0
        %6244 = vmatmul.mubr.bf16.gmra.mrb[0].mxu0 %v2021
        %v6245 = vpop.f32.mrb[0].mxu0
        %v6246 = vadd.f32 0.0, %v6245
        %v6247 = vpop.f32.mrb[0].mxu0
        %v6248 = vpop.f32.mrb[0].mxu0
        %v6249 = vadd.f32 0.0, %v6248
        %v6250 = vpop.f32.mrb[0].mxu0
        %6251 = vmatprep.mubr.bf16.mxu0 0
        %6252 = vmatmul.mubr.bf16.gmra.mrb[0].mxu0 %v2022
        %v6253 = vpop.f32.mrb[0].mxu0
        %v6254 = vadd.f32 0.0, %v6253
        %v6255 = vpop.f32.mrb[0].mxu0
        %v6256 = vpop.f32.mrb[0].mxu0
        %v6257 = vadd.f32 0.0, %v6256
        %v6258 = vpop.f32.mrb[0].mxu0
        %6259 = vmatprep.mubr.bf16.mxu0 0
        %6260 = vmatmul.mubr.bf16.gmra.mrb[0].mxu0 %v2023
        %v6261 = vpop.f32.mrb[0].mxu0
        %v6262 = vadd.f32 0.0, %v6261
        %v6263 = vpop.f32.mrb[0].mxu0
        %v6264 = vpop.f32.mrb[0].mxu0
        %v6265 = vadd.f32 0.0, %v6264
        %v6266 = vpop.f32.mrb[0].mxu0
        %6267 = vmatprep.mubr.bf16.mxu0 0
        %6268 = vmatmul.mubr.bf16.gmra.mrb[0].mxu0 %v2024
        %v6269 = vpop.f32.mrb[0].mxu0
        %v6270 = vadd.f32 0.0, %v6269
        %v6271 = vpop.f32.mrb[0].mxu0
        %v6272 = vpop.f32.mrb[0].mxu0
        %v6273 = vadd.f32 0.0, %v6272
        %v6274 = vpop.f32.mrb[0].mxu0
        %6275 = vmatprep.mubr.bf16.mxu0 0
        %6276 = vmatmul.mubr.bf16.gmra.mrb[0].mxu0 %v2025
        %v6277 = vpop.f32.mrb[0].mxu0
        %v6278 = vadd.f32 0.0, %v6277
        %v6279 = vpop.f32.mrb[0].mxu0
        %v6280 = vpop.f32.mrb[0].mxu0
        %v6281 = vadd.f32 0.0, %v6280
        %v6282 = vpop.f32.mrb[0].mxu0
        %6283 = vmatprep.mubr.bf16.mxu0 0
        %6284 = vmatmul.mubr.bf16.gmra.mrb[0].mxu0 %v2026
        %v6285 = vpop.f32.mrb[0].mxu0
        %v6286 = vadd.f32 0.0, %v6285
        %v6287 = vpop.f32.mrb[0].mxu0
        %v6288 = vpop.f32.mrb[0].mxu0
        %v6289 = vadd.f32 0.0, %v6288
        %v6290 = vpop.f32.mrb[0].mxu0
        %6291 = vmatprep.mubr.bf16.mxu0 0
        %6292 = vmatmul.mubr.bf16.gmra.mrb[0].mxu0 %v2027
        %v6293 = vpop.f32.mrb[0].mxu0
        %v6294 = vadd.f32 0.0, %v6293
        %v6295 = vpop.f32.mrb[0].mxu0
        %v6296 = vpop.f32.mrb[0].mxu0
        %v6297 = vadd.f32 0.0, %v6296
        %v6298 = vpop.f32.mrb[0].mxu0
        %6299 = vmatprep.mubr.bf16.mxu0 0
        %6300 = vmatmul.mubr.bf16.gmra.mrb[0].mxu0 %v2028
        %v6301 = vpop.f32.mrb[0].mxu0
        %v6302 = vadd.f32 0.0, %v6301
        %v6303 = vpop.f32.mrb[0].mxu0
        %v6304 = vpop.f32.mrb[0].mxu0
        %v6305 = vadd.f32 0.0, %v6304
        %v6306 = vpop.f32.mrb[0].mxu0
        %6307 = vmatprep.mubr.bf16.mxu0 0
        %6308 = vmatmul.mubr.bf16.gmra.mrb[0].mxu0 %v2029
        %v6309 = vpop.f32.mrb[0].mxu0
        %v6310 = vadd.f32 0.0, %v6309
        %v6311 = vpop.f32.mrb[0].mxu0
        %v6312 = vpop.f32.mrb[0].mxu0
        %v6313 = vadd.f32 0.0, %v6312
        %v6314 = vpop.f32.mrb[0].mxu0
        %6315 = vmatprep.mubr.bf16.mxu0 0
        %6316 = vmatmul.mubr.bf16.gmra.mrb[0].mxu0 %v2030
        %v6317 = vpop.f32.mrb[0].mxu0
        %v6318 = vadd.f32 0.0, %v6317
        %v6319 = vpop.f32.mrb[0].mxu0
        %v6320 = vpop.f32.mrb[0].mxu0
        %v6321 = vadd.f32 0.0, %v6320
        %v6322 = vpop.f32.mrb[0].mxu0
        %6323 = vmatprep.mubr.bf16.mxu0 0
        %6324 = vmatmul.mubr.bf16.gmra.mrb[0].mxu0 %v2031
        %v6325 = vpop.f32.mrb[0].mxu0
        %v6326 = vadd.f32 0.0, %v6325
        %v6327 = vpop.f32.mrb[0].mxu0
        %v6328 = vpop.f32.mrb[0].mxu0
        %v6329 = vadd.f32 0.0, %v6328
        %v6330 = vpop.f32.mrb[0].mxu0
        %6331 = vmatprep.mubr.bf16.mxu0 0
        %6332 = vmatmul.mubr.bf16.gmra.mrb[0].mxu0 %v2032
        %v6333 = vpop.f32.mrb[0].mxu0
        %v6334 = vadd.f32 0.0, %v6333
        %v6335 = vpop.f32.mrb[0].mxu0
        %v6336 = vpop.f32.mrb[0].mxu0
        %v6337 = vadd.f32 0.0, %v6336
        %v6338 = vpop.f32.mrb[0].mxu0
        %6339 = vmatprep.mubr.bf16.mxu0 0
        %6340 = vmatmul.mubr.bf16.gmra.mrb[0].mxu0 %v2033
        %v6341 = vpop.f32.mrb[0].mxu0
        %v6342 = vadd.f32 0.0, %v6341
        %v6343 = vpop.f32.mrb[0].mxu0
        %v6344 = vpop.f32.mrb[0].mxu0
        %v6345 = vadd.f32 0.0, %v6344
        %v6346 = vpop.f32.mrb[0].mxu0
        %6347 = vmatprep.mubr.bf16.mxu0 0
        %6348 = vmatmul.mubr.bf16.gmra.mrb[0].mxu0 %v2034
        %v6349 = vpop.f32.mrb[0].mxu0
        %v6350 = vadd.f32 0.0, %v6349
        %v6351 = vpop.f32.mrb[0].mxu0
        %v6352 = vpop.f32.mrb[0].mxu0
        %v6353 = vadd.f32 0.0, %v6352
        %v6354 = vpop.f32.mrb[0].mxu0
        %6355 = vmatprep.mubr.bf16.mxu0 0
        %6356 = vmatmul.mubr.bf16.gmra.mrb[0].mxu0 %v2035
        %v6357 = vpop.f32.mrb[0].mxu0
        %v6358 = vadd.f32 0.0, %v6357
        %v6359 = vpop.f32.mrb[0].mxu0
        %v6360 = vpop.f32.mrb[0].mxu0
        %v6361 = vadd.f32 0.0, %v6360
        %v6362 = vpop.f32.mrb[0].mxu0
        %6363 = vmatprep.mubr.bf16.mxu0 0
        %6364 = vmatmul.mubr.bf16.gmra.mrb[0].mxu0 %v2036
        %v6365 = vpop.f32.mrb[0].mxu0
        %v6366 = vadd.f32 0.0, %v6365
        %v6367 = vpop.f32.mrb[0].mxu0
        %v6368 = vpop.f32.mrb[0].mxu0
        %v6369 = vadd.f32 0.0, %v6368
        %v6370 = vpop.f32.mrb[0].mxu0
        %6371 = vmatprep.mubr.bf16.mxu0 0
        %6372 = vmatmul.mubr.bf16.gmra.mrb[0].mxu0 %v2037
        %v6373 = vpop.f32.mrb[0].mxu0
        %v6374 = vadd.f32 0.0, %v6373
        %v6375 = vpop.f32.mrb[0].mxu0
        %v6376 = vpop.f32.mrb[0].mxu0
        %v6377 = vadd.f32 0.0, %v6376
        %v6378 = vpop.f32.mrb[0].mxu0
        %6379 = vmatprep.mubr.bf16.mxu0 0
        %6380 = vmatmul.mubr.bf16.gmra.mrb[0].mxu0 %v2038
        %v6381 = vpop.f32.mrb[0].mxu0
        %v6382 = vadd.f32 0.0, %v6381
        %v6383 = vpop.f32.mrb[0].mxu0
        %v6384 = vpop.f32.mrb[0].mxu0
        %v6385 = vadd.f32 0.0, %v6384
        %v6386 = vpop.f32.mrb[0].mxu0
        %6387 = vmatprep.mubr.bf16.mxu0 0
        %6388 = vmatmul.mubr.bf16.gmra.mrb[0].mxu0 %v2039
        %v6389 = vpop.f32.mrb[0].mxu0
        %v6390 = vadd.f32 0.0, %v6389
        %v6391 = vpop.f32.mrb[0].mxu0
        %v6392 = vpop.f32.mrb[0].mxu0
        %v6393 = vadd.f32 0.0, %v6392
        %v6394 = vpop.f32.mrb[0].mxu0
        %6395 = vmatprep.mubr.bf16.mxu0 0
        %6396 = vmatmul.mubr.bf16.gmra.mrb[0].mxu0 %v2040
        %v6397 = vpop.f32.mrb[0].mxu0
        %v6398 = vadd.f32 0.0, %v6397
        %v6399 = vpop.f32.mrb[0].mxu0
        %v6400 = vpop.f32.mrb[0].mxu0
        %v6401 = vadd.f32 0.0, %v6400
        %v6402 = vpop.f32.mrb[0].mxu0
        %6403 = vmatprep.mubr.bf16.mxu0 0
        %6404 = vmatmul.mubr.bf16.gmra.mrb[0].mxu0 %v2041
        %v6405 = vpop.f32.mrb[0].mxu0
        %v6406 = vadd.f32 0.0, %v6405
        %v6407 = vpop.f32.mrb[0].mxu0
        %v6408 = vpop.f32.mrb[0].mxu0
        %v6409 = vadd.f32 0.0, %v6408
        %v6410 = vpop.f32.mrb[0].mxu0
        %6411 = vmatprep.mubr.bf16.mxu0 0
        %6412 = vmatmul.mubr.bf16.gmra.mrb[0].mxu0 %v2042
        %v6413 = vpop.f32.mrb[0].mxu0
        %v6414 = vadd.f32 0.0, %v6413
        %v6415 = vpop.f32.mrb[0].mxu0
        %v6416 = vpop.f32.mrb[0].mxu0
        %v6417 = vadd.f32 0.0, %v6416
        %v6418 = vpop.f32.mrb[0].mxu0
        %6419 = vmatprep.mubr.bf16.mxu0 0
        %6420 = vmatmul.mubr.bf16.gmra.mrb[0].mxu0 %v2043
        %v6421 = vpop.f32.mrb[0].mxu0
        %v6422 = vadd.f32 0.0, %v6421
        %v6423 = vpop.f32.mrb[0].mxu0
        %v6424 = vpop.f32.mrb[0].mxu0
        %v6425 = vadd.f32 0.0, %v6424
        %v6426 = vpop.f32.mrb[0].mxu0
        %6427 = vmatprep.mubr.bf16.mxu0 0
        %6428 = vmatmul.mubr.bf16.gmra.mrb[0].mxu0 %v2044
        %v6429 = vpop.f32.mrb[0].mxu0
        %v6430 = vadd.f32 0.0, %v6429
        %v6431 = vpop.f32.mrb[0].mxu0
        %v6432 = vpop.f32.mrb[0].mxu0
        %v6433 = vadd.f32 0.0, %v6432
        %v6434 = vpop.f32.mrb[0].mxu0
        %6435 = vmatprep.mubr.bf16.mxu0 0
        %6436 = vmatmul.mubr.bf16.gmra.mrb[0].mxu0 %v2045
        %v6437 = vpop.f32.mrb[0].mxu0
        %v6438 = vadd.f32 0.0, %v6437
        %v6439 = vpop.f32.mrb[0].mxu0
        %v6440 = vpop.f32.mrb[0].mxu0
        %v6441 = vadd.f32 0.0, %v6440
        %v6442 = vpop.f32.mrb[0].mxu0
        %6443 = vmatprep.mubr.bf16.mxu0 0
        %6444 = vmatmul.mubr.bf16.gmra.mrb[0].mxu0 %v2046
        %v6445 = vpop.f32.mrb[0].mxu0
        %v6446 = vadd.f32 0.0, %v6445
        %v6447 = vpop.f32.mrb[0].mxu0
        %v6448 = vpop.f32.mrb[0].mxu0
        %v6449 = vadd.f32 0.0, %v6448
        %v6450 = vpop.f32.mrb[0].mxu0
        %6451 = vmatprep.mubr.bf16.mxu0 0
        %6452 = vmatmul.mubr.bf16.gmra.mrb[0].mxu0 %v2047
        %v6453 = vpop.f32.mrb[0].mxu0
        %v6454 = vadd.f32 0.0, %v6453
        %v6455 = vpop.f32.mrb[0].mxu0
        %v6456 = vpop.f32.mrb[0].mxu0
        %v6457 = vadd.f32 0.0, %v6456
        %v6458 = vpop.f32.mrb[0].mxu0
        %6459 = vmatprep.mubr.bf16.mxu0 0
        %6460 = vmatmul.mubr.bf16.gmra.mrb[0].mxu0 %v2048
        %v6461 = vpop.f32.mrb[0].mxu0
        %v6462 = vadd.f32 0.0, %v6461
        %v6463 = vpop.f32.mrb[0].mxu0
        %v6464 = vpop.f32.mrb[0].mxu0
        %v6465 = vadd.f32 0.0, %v6464
        %v6466 = vpop.f32.mrb[0].mxu0
        %6467 = vmatprep.mubr.bf16.mxu0 0
        %6468 = vmatmul.mubr.bf16.gmra.mrb[0].mxu0 %v2049
        %v6469 = vpop.f32.mrb[0].mxu0
        %v6470 = vadd.f32 0.0, %v6469
        %v6471 = vpop.f32.mrb[0].mxu0
        %v6472 = vpop.f32.mrb[0].mxu0
        %v6473 = vadd.f32 0.0, %v6472
        %v6474 = vpop.f32.mrb[0].mxu0
        %6475 = vmatprep.mubr.bf16.mxu0 0
        %6476 = vmatmul.mubr.bf16.gmra.mrb[0].mxu0 %v2050
        %v6477 = vpop.f32.mrb[0].mxu0
        %v6478 = vadd.f32 0.0, %v6477
        %v6479 = vpop.f32.mrb[0].mxu0
        %v6480 = vpop.f32.mrb[0].mxu0
        %v6481 = vadd.f32 0.0, %v6480
        %v6482 = vpop.f32.mrb[0].mxu0
        %6483 = vmatprep.mubr.bf16.mxu0 0
        %6484 = vmatmul.mubr.bf16.gmra.mrb[0].mxu0 %v2051
        %v6485 = vpop.f32.mrb[0].mxu0
        %v6486 = vadd.f32 0.0, %v6485
        %v6487 = vpop.f32.mrb[0].mxu0
        %v6488 = vpop.f32.mrb[0].mxu0
        %v6489 = vadd.f32 0.0, %v6488
        %v6490 = vpop.f32.mrb[0].mxu0
        %6491 = vmatprep.mubr.bf16.mxu0 0
        %6492 = vmatmul.mubr.bf16.gmra.mrb[0].mxu0 %v2052
        %v6493 = vpop.f32.mrb[0].mxu0
        %v6494 = vadd.f32 0.0, %v6493
        %v6495 = vpop.f32.mrb[0].mxu0
        %v6496 = vpop.f32.mrb[0].mxu0
        %v6497 = vadd.f32 0.0, %v6496
        %v6498 = vpop.f32.mrb[0].mxu0
        %6499 = vmatprep.mubr.bf16.mxu0 0
        %6500 = vmatmul.mubr.bf16.gmra.mrb[0].mxu0 %v2053
        %v6501 = vpop.f32.mrb[0].mxu0
        %v6502 = vadd.f32 0.0, %v6501
        %v6503 = vpop.f32.mrb[0].mxu0
        %v6504 = vpop.f32.mrb[0].mxu0
        %v6505 = vadd.f32 0.0, %v6504
        %v6506 = vpop.f32.mrb[0].mxu0
        %6507 = vmatprep.mubr.bf16.mxu0 0
        %6508 = vmatmul.mubr.bf16.gmra.mrb[0].mxu0 %v2054
        %v6509 = vpop.f32.mrb[0].mxu0
        %v6510 = vadd.f32 0.0, %v6509
        %v6511 = vpop.f32.mrb[0].mxu0
        %v6512 = vpop.f32.mrb[0].mxu0
        %v6513 = vadd.f32 0.0, %v6512
        %v6514 = vpop.f32.mrb[0].mxu0
        %6515 = vmatprep.mubr.bf16.mxu0 0
        %6516 = vmatmul.mubr.bf16.gmra.mrb[0].mxu0 %v2055
        %v6517 = vpop.f32.mrb[0].mxu0
        %v6518 = vadd.f32 0.0, %v6517
        %v6519 = vpop.f32.mrb[0].mxu0
        %v6520 = vpop.f32.mrb[0].mxu0
        %v6521 = vadd.f32 0.0, %v6520
        %v6522 = vpop.f32.mrb[0].mxu0
        %6523 = vmatprep.mubr.bf16.mxu0 0
        %6524 = vmatmul.mubr.bf16.gmra.mrb[0].mxu0 %v2056
        %v6525 = vpop.f32.mrb[0].mxu0
        %v6526 = vadd.f32 0.0, %v6525
        %v6527 = vpop.f32.mrb[0].mxu0
        %v6528 = vpop.f32.mrb[0].mxu0
        %v6529 = vadd.f32 0.0, %v6528
        %v6530 = vpop.f32.mrb[0].mxu0
        %6531 = vmatprep.mubr.bf16.mxu0 0
        %6532 = vmatmul.mubr.bf16.gmra.mrb[0].mxu0 %v5951
        %v6533 = vpop.f32.mrb[0].mxu0
        %v6534 = vadd.f32 0.0, %v6533
        %v6535 = vpop.f32.mrb[0].mxu0
        %v6536 = vpop.f32.mrb[0].mxu0
        %v6537 = vadd.f32 0.0, %v6536
        %v6538 = vpop.f32.mrb[0].mxu0
        %6539 = vmatprep.mubr.bf16.mxu0 0
        %6540 = vmatmul.mubr.bf16.gmra.mrb[0].mxu0 %v5952
        %v6541 = vpop.f32.mrb[0].mxu0
        %v6542 = vadd.f32 0.0, %v6541
        %v6543 = vpop.f32.mrb[0].mxu0
        %v6544 = vpop.f32.mrb[0].mxu0
        %v6545 = vadd.f32 0.0, %v6544
        %v6546 = vpop.f32.mrb[0].mxu0
        %6547 = vdwg.mxu0
        %v6548 = vadd.f32 %v5758, %v6038
        %v6549 = vadd.f32 %v5759, %v6041
        %v6550 = vadd.f32 %v5760, %v6046
        %v6551 = vadd.f32 %v5761, %v6049
        %v6552 = vadd.f32 %v5762, %v6054
        %v6553 = vadd.f32 %v5763, %v6057
        %v6554 = vadd.f32 %v5764, %v6062
        %v6555 = vadd.f32 %v5765, %v6065
        %v6556 = vadd.f32 %v5766, %v6070
        %v6557 = vadd.f32 %v5767, %v6073
        %v6558 = vadd.f32 %v5768, %v6078
        %v6559 = vadd.f32 %v5769, %v6081
        %v6560 = vadd.f32 %v5770, %v6086
        %v6561 = vadd.f32 %v5771, %v6089
        %v6562 = vadd.f32 %v5772, %v6094
        %v6563 = vadd.f32 %v5773, %v6097
        %v6564 = vadd.f32 %v5774, %v6102
        %v6565 = vadd.f32 %v5775, %v6105
        %v6566 = vadd.f32 %v5776, %v6110
        %v6567 = vadd.f32 %v5777, %v6113
        %v6568 = vadd.f32 %v5778, %v6118
        %v6569 = vadd.f32 %v5779, %v6121
        %v6570 = vadd.f32 %v5780, %v6126
        %v6571 = vadd.f32 %v5781, %v6129
        %v6572 = vadd.f32 %v5782, %v6134
        %v6573 = vadd.f32 %v5783, %v6137
        %v6574 = vadd.f32 %v5784, %v6142
        %v6575 = vadd.f32 %v5785, %v6145
        %v6576 = vadd.f32 %v5786, %v6150
        %v6577 = vadd.f32 %v5787, %v6153
        %v6578 = vadd.f32 %v5788, %v6158
        %v6579 = vadd.f32 %v5789, %v6161
        %v6580 = vadd.f32 %v5790, %v6166
        %v6581 = vadd.f32 %v5791, %v6169
        %v6582 = vadd.f32 %v5792, %v6174
        %v6583 = vadd.f32 %v5793, %v6177
        %v6584 = vadd.f32 %v5794, %v6182
        %v6585 = vadd.f32 %v5795, %v6185
        %v6586 = vadd.f32 %v5796, %v6190
        %v6587 = vadd.f32 %v5797, %v6193
        %v6588 = vadd.f32 %v5798, %v6198
        %v6589 = vadd.f32 %v5799, %v6201
        %v6590 = vadd.f32 %v5800, %v6206
        %v6591 = vadd.f32 %v5801, %v6209
        %v6592 = vadd.f32 %v5802, %v6214
        %v6593 = vadd.f32 %v5803, %v6217
        %v6594 = vadd.f32 %v5804, %v6222
        %v6595 = vadd.f32 %v5805, %v6225
        %v6596 = vadd.f32 %v5806, %v6230
        %v6597 = vadd.f32 %v5807, %v6233
        %v6598 = vadd.f32 %v5808, %v6238
        %v6599 = vadd.f32 %v5809, %v6241
        %v6600 = vadd.f32 %v5810, %v6246
        %v6601 = vadd.f32 %v5811, %v6249
        %v6602 = vadd.f32 %v5812, %v6254
        %v6603 = vadd.f32 %v5813, %v6257
        %v6604 = vadd.f32 %v5814, %v6262
        %v6605 = vadd.f32 %v5815, %v6265
        %v6606 = vadd.f32 %v5816, %v6270
        %v6607 = vadd.f32 %v5817, %v6273
        %v6608 = vadd.f32 %v5818, %v6278
        %v6609 = vadd.f32 %v5819, %v6281
        %v6610 = vadd.f32 %v5820, %v6286
        %v6611 = vadd.f32 %v5821, %v6289
        %v6612 = vadd.f32 %v5822, %v6294
        %v6613 = vadd.f32 %v5823, %v6297
        %v6614 = vadd.f32 %v5824, %v6302
        %v6615 = vadd.f32 %v5825, %v6305
        %v6616 = vadd.f32 %v5826, %v6310
        %v6617 = vadd.f32 %v5827, %v6313
        %v6618 = vadd.f32 %v5828, %v6318
        %v6619 = vadd.f32 %v5829, %v6321
        %v6620 = vadd.f32 %v5830, %v6326
        %v6621 = vadd.f32 %v5831, %v6329
        %v6622 = vadd.f32 %v5832, %v6334
        %v6623 = vadd.f32 %v5833, %v6337
        %v6624 = vadd.f32 %v5834, %v6342
        %v6625 = vadd.f32 %v5835, %v6345
        %v6626 = vadd.f32 %v5836, %v6350
        %v6627 = vadd.f32 %v5837, %v6353
        %v6628 = vadd.f32 %v5838, %v6358
        %v6629 = vadd.f32 %v5839, %v6361
        %v6630 = vadd.f32 %v5840, %v6366
        %v6631 = vadd.f32 %v5841, %v6369
        %v6632 = vadd.f32 %v5842, %v6374
        %v6633 = vadd.f32 %v5843, %v6377
        %v6634 = vadd.f32 %v5844, %v6382
        %v6635 = vadd.f32 %v5845, %v6385
        %v6636 = vadd.f32 %v5846, %v6390
        %v6637 = vadd.f32 %v5847, %v6393
        %v6638 = vadd.f32 %v5848, %v6398
        %v6639 = vadd.f32 %v5849, %v6401
        %v6640 = vadd.f32 %v5850, %v6406
        %v6641 = vadd.f32 %v5851, %v6409
        %v6642 = vadd.f32 %v5852, %v6414
        %v6643 = vadd.f32 %v5853, %v6417
        %v6644 = vadd.f32 %v5854, %v6422
        %v6645 = vadd.f32 %v5855, %v6425
        %v6646 = vadd.f32 %v5856, %v6430
        %v6647 = vadd.f32 %v5857, %v6433
        %v6648 = vadd.f32 %v5858, %v6438
        %v6649 = vadd.f32 %v5859, %v6441
        %v6650 = vadd.f32 %v5860, %v6446
        %v6651 = vadd.f32 %v5861, %v6449
        %v6652 = vadd.f32 %v5862, %v6454
        %v6653 = vadd.f32 %v5863, %v6457
        %v6654 = vadd.f32 %v5864, %v6462
        %v6655 = vadd.f32 %v5865, %v6465
        %v6656 = vadd.f32 %v5866, %v6470
        %v6657 = vadd.f32 %v5867, %v6473
        %v6658 = vadd.f32 %v5868, %v6478
        %v6659 = vadd.f32 %v5869, %v6481
        %v6660 = vadd.f32 %v5870, %v6486
        %v6661 = vadd.f32 %v5871, %v6489
        %v6662 = vadd.f32 %v5872, %v6494
        %v6663 = vadd.f32 %v5873, %v6497
        %v6664 = vadd.f32 %v5874, %v6502
        %v6665 = vadd.f32 %v5875, %v6505
        %v6666 = vadd.f32 %v5876, %v6510
        %v6667 = vadd.f32 %v5877, %v6513
        %v6668 = vadd.f32 %v5878, %v6518
        %v6669 = vadd.f32 %v5879, %v6521
        %v6670 = vadd.f32 %v5880, %v6526
        %v6671 = vadd.f32 %v5881, %v6529
        %v6672 = vadd.f32 %v5882, %v6534
        %v6673 = vadd.f32 %v5883, %v6537
        %v6674 = vadd.f32 %v5884, %v6542
        %v6675 = vadd.f32 %v5885, %v6545
        %v6677 = vrot.slane %v411, 5
        %v6678 = vrot.slane %v6677, 4
        %v6679 = vrot.slane %v412, 5
        %v6680 = vsel %vm3725, %v6678, %v6679
        %v6681 = vrot.slane %v6679, 4
        %v6682 = vrot.slane %v413, 5
        %v6683 = vsel %vm3725, %v6681, %v6682
        %v6684 = vrot.slane %v6682, 4
        %v6685 = vrot.slane %v414, 5
        %v6686 = vsel %vm3725, %v6684, %v6685
        %v6687 = vrot.slane %v6685, 4
        %v6688 = vrot.slane %v415, 5
        %v6689 = vsel %vm3725, %v6687, %v6688
        %s6690 = scalar_lea.vmem %s1, 320
        %v6691 = vld [vmem:[%s6690] sm:$0xf]
        %v6692 = vld [vmem:[%s6690 + $0x4] sm:$0xf]
        %v6693 = vld [vmem:[%s6690 + $0x8] sm:$0xf]
        %v6694 = vld [vmem:[%s6690 + $0xc] sm:$0xf]
        %v6695 = vld [vmem:[%s6690 + $0x10] sm:$0xf]
        %v6696 = vld [vmem:[%s6690 + $0x14] sm:$0xf]
        %v6697 = vld [vmem:[%s6690 + $0x18] sm:$0xf]
        %v6698 = vld [vmem:[%s6690 + $0x1c] sm:$0xf]
        %v6699 = vld [vmem:[%s6690 + $0x20] sm:$0xf]
        %v6700 = vld [vmem:[%s6690 + $0x24] sm:$0xf]
        %v6701 = vld [vmem:[%s6690 + $0x28] sm:$0xf]
        %v6702 = vld [vmem:[%s6690 + $0x2c] sm:$0xf]
        %v6703 = vld [vmem:[%s6690 + $0x30] sm:$0xf]
        %v6704 = vld [vmem:[%s6690 + $0x34] sm:$0xf]
        %v6705 = vld [vmem:[%s6690 + $0x38] sm:$0xf]
        %v6706 = vld [vmem:[%s6690 + $0x3c] sm:$0xf]
        %v6707 = vunpack.c.l.b16 %v6680
        %v6708 = vunpack.c.l.b16 %v6683
        %v6709 = vunpack.c.l.b16 %v6686
        %v6710 = vunpack.c.l.b16 %v6689
        %v6711 = vpack.c.b16 %v6708, %v6707
        %v6712 = vpack.c.b16 %v6710, %v6709
        %v6731 = vunpack.c.l.b16 %v6691
        %v6732 = vunpack.c.l.b16 %v6692
        %v6733 = vunpack.c.l.b16 %v6693
        %v6734 = vunpack.c.l.b16 %v6694
        %v6735 = vunpack.c.l.b16 %v6695
        %v6736 = vunpack.c.l.b16 %v6696
        %v6737 = vunpack.c.l.b16 %v6697
        %v6738 = vunpack.c.l.b16 %v6698
        %v6739 = vunpack.c.l.b16 %v6699
        %v6740 = vunpack.c.l.b16 %v6700
        %v6741 = vunpack.c.l.b16 %v6701
        %v6742 = vunpack.c.l.b16 %v6702
        %v6743 = vunpack.c.l.b16 %v6703
        %v6744 = vunpack.c.l.b16 %v6704
        %v6745 = vunpack.c.l.b16 %v6705
        %v6746 = vunpack.c.l.b16 %v6706
        %v6747 = vpack.c.b16 %v6732, %v6731
        %v6748 = vpack.c.b16 %v6734, %v6733
        %v6749 = vpack.c.b16 %v6736, %v6735
        %v6750 = vpack.c.b16 %v6738, %v6737
        %v6751 = vpack.c.b16 %v6740, %v6739
        %v6752 = vpack.c.b16 %v6742, %v6741
        %v6753 = vpack.c.b16 %v6744, %v6743
        %v6754 = vpack.c.b16 %v6746, %v6745
        %6763 = vmatprep.subr.bf16.mxu0 0
        %6764 = vmatpush1.bf16.msra.mxu0 %v6747
        %6765 = vmatprep.subr.bf16.mxu0 0
        %6766 = vmatpush1.bf16.msra.mxu0 %v6748
        %6767 = vmatprep.subr.bf16.mxu0 0
        %6768 = vmatpush1.bf16.msra.mxu0 %v6749
        %6769 = vmatprep.subr.bf16.mxu0 0
        %6770 = vmatpush1.bf16.msra.mxu0 %v6750
        %6771 = vmatprep.subr.bf16.mxu0 0
        %6772 = vmatpush1.bf16.msra.mxu0 %v6751
        %6773 = vmatprep.subr.bf16.mxu0 0
        %6774 = vmatpush1.bf16.msra.mxu0 %v6752
        %6775 = vmatprep.subr.bf16.mxu0 0
        %6776 = vmatpush1.bf16.msra.mxu0 %v6753
        %6777 = vmatprep.subr.bf16.mxu0 0
        %6778 = vmatpush1.bf16.msra.mxu0 %v6754
        %6779 = vmatprep.subr.bf16.mxu0 0
        %6780 = vmatpush1.bf16.msra.mxu0 0
        %6781 = vmatprep.subr.bf16.mxu0 0
        %6782 = vmatpush1.bf16.msra.mxu0 0
        %6783 = vmatprep.subr.bf16.mxu0 0
        %6784 = vmatpush1.bf16.msra.mxu0 0
        %6785 = vmatprep.subr.bf16.mxu0 0
        %6786 = vmatpush1.bf16.msra.mxu0 0
        %6787 = vmatprep.subr.bf16.mxu0 0
        %6788 = vmatpush1.bf16.msra.mxu0 0
        %6789 = vmatprep.subr.bf16.mxu0 0
        %6790 = vmatpush1.bf16.msra.mxu0 0
        %6791 = vmatprep.subr.bf16.mxu0 0
        %6792 = vmatpush1.bf16.msra.mxu0 0
        %6793 = vmatprep.subr.bf16.mxu0 0
        %6794 = vmatpush1.bf16.msra.mxu0 0
        %6795 = vmatprep.mubr.bf16.mxu0 0
        %6796 = vmatmul.mubr.bf16.gmra.mrb[0].mxu0 %v4289
        %v6797 = vpop.f32.mrb[0].mxu0
        %v6798 = vadd.f32 0.0, %v6797
        %v6799 = vpop.f32.mrb[0].mxu0
        %v6800 = vpop.f32.mrb[0].mxu0
        %v6801 = vadd.f32 0.0, %v6800
        %v6802 = vpop.f32.mrb[0].mxu0
        %6803 = vmatprep.mubr.bf16.mxu0 0
        %6804 = vmatmul.mubr.bf16.gmra.mrb[0].mxu0 %v4290
        %v6805 = vpop.f32.mrb[0].mxu0
        %v6806 = vadd.f32 0.0, %v6805
        %v6807 = vpop.f32.mrb[0].mxu0
        %v6808 = vpop.f32.mrb[0].mxu0
        %v6809 = vadd.f32 0.0, %v6808
        %v6810 = vpop.f32.mrb[0].mxu0
        %6811 = vmatprep.mubr.bf16.mxu0 0
        %6812 = vmatmul.mubr.bf16.gmra.mrb[0].mxu0 %v4291
        %v6813 = vpop.f32.mrb[0].mxu0
        %v6814 = vadd.f32 0.0, %v6813
        %v6815 = vpop.f32.mrb[0].mxu0
        %v6816 = vpop.f32.mrb[0].mxu0
        %v6817 = vadd.f32 0.0, %v6816
        %v6818 = vpop.f32.mrb[0].mxu0
        %6819 = vmatprep.mubr.bf16.mxu0 0
        %6820 = vmatmul.mubr.bf16.gmra.mrb[0].mxu0 %v4292
        %v6821 = vpop.f32.mrb[0].mxu0
        %v6822 = vadd.f32 0.0, %v6821
        %v6823 = vpop.f32.mrb[0].mxu0
        %v6824 = vpop.f32.mrb[0].mxu0
        %v6825 = vadd.f32 0.0, %v6824
        %v6826 = vpop.f32.mrb[0].mxu0
        %6827 = vmatprep.mubr.bf16.mxu0 0
        %6828 = vmatmul.mubr.bf16.gmra.mrb[0].mxu0 %v4293
        %v6829 = vpop.f32.mrb[0].mxu0
        %v6830 = vadd.f32 0.0, %v6829
        %v6831 = vpop.f32.mrb[0].mxu0
        %v6832 = vpop.f32.mrb[0].mxu0
        %v6833 = vadd.f32 0.0, %v6832
        %v6834 = vpop.f32.mrb[0].mxu0
        %6835 = vmatprep.mubr.bf16.mxu0 0
        %6836 = vmatmul.mubr.bf16.gmra.mrb[0].mxu0 %v4294
        %v6837 = vpop.f32.mrb[0].mxu0
        %v6838 = vadd.f32 0.0, %v6837
        %v6839 = vpop.f32.mrb[0].mxu0
        %v6840 = vpop.f32.mrb[0].mxu0
        %v6841 = vadd.f32 0.0, %v6840
        %v6842 = vpop.f32.mrb[0].mxu0
        %6843 = vmatprep.mubr.bf16.mxu0 0
        %6844 = vmatmul.mubr.bf16.gmra.mrb[0].mxu0 %v4295
        %v6845 = vpop.f32.mrb[0].mxu0
        %v6846 = vadd.f32 0.0, %v6845
        %v6847 = vpop.f32.mrb[0].mxu0
        %v6848 = vpop.f32.mrb[0].mxu0
        %v6849 = vadd.f32 0.0, %v6848
        %v6850 = vpop.f32.mrb[0].mxu0
        %6851 = vmatprep.mubr.bf16.mxu0 0
        %6852 = vmatmul.mubr.bf16.gmra.mrb[0].mxu0 %v4296
        %v6853 = vpop.f32.mrb[0].mxu0
        %v6854 = vadd.f32 0.0, %v6853
        %v6855 = vpop.f32.mrb[0].mxu0
        %v6856 = vpop.f32.mrb[0].mxu0
        %v6857 = vadd.f32 0.0, %v6856
        %v6858 = vpop.f32.mrb[0].mxu0
        %6859 = vmatprep.mubr.bf16.mxu0 0
        %6860 = vmatmul.mubr.bf16.gmra.mrb[0].mxu0 %v4297
        %v6861 = vpop.f32.mrb[0].mxu0
        %v6862 = vadd.f32 0.0, %v6861
        %v6863 = vpop.f32.mrb[0].mxu0
        %v6864 = vpop.f32.mrb[0].mxu0
        %v6865 = vadd.f32 0.0, %v6864
        %v6866 = vpop.f32.mrb[0].mxu0
        %6867 = vmatprep.mubr.bf16.mxu0 0
        %6868 = vmatmul.mubr.bf16.gmra.mrb[0].mxu0 %v4298
        %v6869 = vpop.f32.mrb[0].mxu0
        %v6870 = vadd.f32 0.0, %v6869
        %v6871 = vpop.f32.mrb[0].mxu0
        %v6872 = vpop.f32.mrb[0].mxu0
        %v6873 = vadd.f32 0.0, %v6872
        %v6874 = vpop.f32.mrb[0].mxu0
        %6875 = vmatprep.mubr.bf16.mxu0 0
        %6876 = vmatmul.mubr.bf16.gmra.mrb[0].mxu0 %v4299
        %v6877 = vpop.f32.mrb[0].mxu0
        %v6878 = vadd.f32 0.0, %v6877
        %v6879 = vpop.f32.mrb[0].mxu0
        %v6880 = vpop.f32.mrb[0].mxu0
        %v6881 = vadd.f32 0.0, %v6880
        %v6882 = vpop.f32.mrb[0].mxu0
        %6883 = vmatprep.mubr.bf16.mxu0 0
        %6884 = vmatmul.mubr.bf16.gmra.mrb[0].mxu0 %v4300
        %v6885 = vpop.f32.mrb[0].mxu0
        %v6886 = vadd.f32 0.0, %v6885
        %v6887 = vpop.f32.mrb[0].mxu0
        %v6888 = vpop.f32.mrb[0].mxu0
        %v6889 = vadd.f32 0.0, %v6888
        %v6890 = vpop.f32.mrb[0].mxu0
        %6891 = vmatprep.mubr.bf16.mxu0 0
        %6892 = vmatmul.mubr.bf16.gmra.mrb[0].mxu0 %v4301
        %v6893 = vpop.f32.mrb[0].mxu0
        %v6894 = vadd.f32 0.0, %v6893
        %v6895 = vpop.f32.mrb[0].mxu0
        %v6896 = vpop.f32.mrb[0].mxu0
        %v6897 = vadd.f32 0.0, %v6896
        %v6898 = vpop.f32.mrb[0].mxu0
        %6899 = vmatprep.mubr.bf16.mxu0 0
        %6900 = vmatmul.mubr.bf16.gmra.mrb[0].mxu0 %v4302
        %v6901 = vpop.f32.mrb[0].mxu0
        %v6902 = vadd.f32 0.0, %v6901
        %v6903 = vpop.f32.mrb[0].mxu0
        %v6904 = vpop.f32.mrb[0].mxu0
        %v6905 = vadd.f32 0.0, %v6904
        %v6906 = vpop.f32.mrb[0].mxu0
        %6907 = vmatprep.mubr.bf16.mxu0 0
        %6908 = vmatmul.mubr.bf16.gmra.mrb[0].mxu0 %v4303
        %v6909 = vpop.f32.mrb[0].mxu0
        %v6910 = vadd.f32 0.0, %v6909
        %v6911 = vpop.f32.mrb[0].mxu0
        %v6912 = vpop.f32.mrb[0].mxu0
        %v6913 = vadd.f32 0.0, %v6912
        %v6914 = vpop.f32.mrb[0].mxu0
        %6915 = vmatprep.mubr.bf16.mxu0 0
        %6916 = vmatmul.mubr.bf16.gmra.mrb[0].mxu0 %v4304
        %v6917 = vpop.f32.mrb[0].mxu0
        %v6918 = vadd.f32 0.0, %v6917
        %v6919 = vpop.f32.mrb[0].mxu0
        %v6920 = vpop.f32.mrb[0].mxu0
        %v6921 = vadd.f32 0.0, %v6920
        %v6922 = vpop.f32.mrb[0].mxu0
        %6923 = vmatprep.mubr.bf16.mxu0 0
        %6924 = vmatmul.mubr.bf16.gmra.mrb[0].mxu0 %v4305
        %v6925 = vpop.f32.mrb[0].mxu0
        %v6926 = vadd.f32 0.0, %v6925
        %v6927 = vpop.f32.mrb[0].mxu0
        %v6928 = vpop.f32.mrb[0].mxu0
        %v6929 = vadd.f32 0.0, %v6928
        %v6930 = vpop.f32.mrb[0].mxu0
        %6931 = vmatprep.mubr.bf16.mxu0 0
        %6932 = vmatmul.mubr.bf16.gmra.mrb[0].mxu0 %v4306
        %v6933 = vpop.f32.mrb[0].mxu0
        %v6934 = vadd.f32 0.0, %v6933
        %v6935 = vpop.f32.mrb[0].mxu0
        %v6936 = vpop.f32.mrb[0].mxu0
        %v6937 = vadd.f32 0.0, %v6936
        %v6938 = vpop.f32.mrb[0].mxu0
        %6939 = vmatprep.mubr.bf16.mxu0 0
        %6940 = vmatmul.mubr.bf16.gmra.mrb[0].mxu0 %v4307
        %v6941 = vpop.f32.mrb[0].mxu0
        %v6942 = vadd.f32 0.0, %v6941
        %v6943 = vpop.f32.mrb[0].mxu0
        %v6944 = vpop.f32.mrb[0].mxu0
        %v6945 = vadd.f32 0.0, %v6944
        %v6946 = vpop.f32.mrb[0].mxu0
        %6947 = vmatprep.mubr.bf16.mxu0 0
        %6948 = vmatmul.mubr.bf16.gmra.mrb[0].mxu0 %v4308
        %v6949 = vpop.f32.mrb[0].mxu0
        %v6950 = vadd.f32 0.0, %v6949
        %v6951 = vpop.f32.mrb[0].mxu0
        %v6952 = vpop.f32.mrb[0].mxu0
        %v6953 = vadd.f32 0.0, %v6952
        %v6954 = vpop.f32.mrb[0].mxu0
        %6955 = vmatprep.mubr.bf16.mxu0 0
        %6956 = vmatmul.mubr.bf16.gmra.mrb[0].mxu0 %v4309
        %v6957 = vpop.f32.mrb[0].mxu0
        %v6958 = vadd.f32 0.0, %v6957
        %v6959 = vpop.f32.mrb[0].mxu0
        %v6960 = vpop.f32.mrb[0].mxu0
        %v6961 = vadd.f32 0.0, %v6960
        %v6962 = vpop.f32.mrb[0].mxu0
        %6963 = vmatprep.mubr.bf16.mxu0 0
        %6964 = vmatmul.mubr.bf16.gmra.mrb[0].mxu0 %v4310
        %v6965 = vpop.f32.mrb[0].mxu0
        %v6966 = vadd.f32 0.0, %v6965
        %v6967 = vpop.f32.mrb[0].mxu0
        %v6968 = vpop.f32.mrb[0].mxu0
        %v6969 = vadd.f32 0.0, %v6968
        %v6970 = vpop.f32.mrb[0].mxu0
        %6971 = vmatprep.mubr.bf16.mxu0 0
        %6972 = vmatmul.mubr.bf16.gmra.mrb[0].mxu0 %v4311
        %v6973 = vpop.f32.mrb[0].mxu0
        %v6974 = vadd.f32 0.0, %v6973
        %v6975 = vpop.f32.mrb[0].mxu0
        %v6976 = vpop.f32.mrb[0].mxu0
        %v6977 = vadd.f32 0.0, %v6976
        %v6978 = vpop.f32.mrb[0].mxu0
        %6979 = vmatprep.mubr.bf16.mxu0 0
        %6980 = vmatmul.mubr.bf16.gmra.mrb[0].mxu0 %v4312
        %v6981 = vpop.f32.mrb[0].mxu0
        %v6982 = vadd.f32 0.0, %v6981
        %v6983 = vpop.f32.mrb[0].mxu0
        %v6984 = vpop.f32.mrb[0].mxu0
        %v6985 = vadd.f32 0.0, %v6984
        %v6986 = vpop.f32.mrb[0].mxu0
        %6987 = vmatprep.mubr.bf16.mxu0 0
        %6988 = vmatmul.mubr.bf16.gmra.mrb[0].mxu0 %v4313
        %v6989 = vpop.f32.mrb[0].mxu0
        %v6990 = vadd.f32 0.0, %v6989
        %v6991 = vpop.f32.mrb[0].mxu0
        %v6992 = vpop.f32.mrb[0].mxu0
        %v6993 = vadd.f32 0.0, %v6992
        %v6994 = vpop.f32.mrb[0].mxu0
        %6995 = vmatprep.mubr.bf16.mxu0 0
        %6996 = vmatmul.mubr.bf16.gmra.mrb[0].mxu0 %v4314
        %v6997 = vpop.f32.mrb[0].mxu0
        %v6998 = vadd.f32 0.0, %v6997
        %v6999 = vpop.f32.mrb[0].mxu0
        %v7000 = vpop.f32.mrb[0].mxu0
        %v7001 = vadd.f32 0.0, %v7000
        %v7002 = vpop.f32.mrb[0].mxu0
        %7003 = vmatprep.mubr.bf16.mxu0 0
        %7004 = vmatmul.mubr.bf16.gmra.mrb[0].mxu0 %v4315
        %v7005 = vpop.f32.mrb[0].mxu0
        %v7006 = vadd.f32 0.0, %v7005
        %v7007 = vpop.f32.mrb[0].mxu0
        %v7008 = vpop.f32.mrb[0].mxu0
        %v7009 = vadd.f32 0.0, %v7008
        %v7010 = vpop.f32.mrb[0].mxu0
        %7011 = vmatprep.mubr.bf16.mxu0 0
        %7012 = vmatmul.mubr.bf16.gmra.mrb[0].mxu0 %v4316
        %v7013 = vpop.f32.mrb[0].mxu0
        %v7014 = vadd.f32 0.0, %v7013
        %v7015 = vpop.f32.mrb[0].mxu0
        %v7016 = vpop.f32.mrb[0].mxu0
        %v7017 = vadd.f32 0.0, %v7016
        %v7018 = vpop.f32.mrb[0].mxu0
        %7019 = vmatprep.mubr.bf16.mxu0 0
        %7020 = vmatmul.mubr.bf16.gmra.mrb[0].mxu0 %v4317
        %v7021 = vpop.f32.mrb[0].mxu0
        %v7022 = vadd.f32 0.0, %v7021
        %v7023 = vpop.f32.mrb[0].mxu0
        %v7024 = vpop.f32.mrb[0].mxu0
        %v7025 = vadd.f32 0.0, %v7024
        %v7026 = vpop.f32.mrb[0].mxu0
        %7027 = vmatprep.mubr.bf16.mxu0 0
        %7028 = vmatmul.mubr.bf16.gmra.mrb[0].mxu0 %v4318
        %v7029 = vpop.f32.mrb[0].mxu0
        %v7030 = vadd.f32 0.0, %v7029
        %v7031 = vpop.f32.mrb[0].mxu0
        %v7032 = vpop.f32.mrb[0].mxu0
        %v7033 = vadd.f32 0.0, %v7032
        %v7034 = vpop.f32.mrb[0].mxu0
        %7035 = vmatprep.mubr.bf16.mxu0 0
        %7036 = vmatmul.mubr.bf16.gmra.mrb[0].mxu0 %v4319
        %v7037 = vpop.f32.mrb[0].mxu0
        %v7038 = vadd.f32 0.0, %v7037
        %v7039 = vpop.f32.mrb[0].mxu0
        %v7040 = vpop.f32.mrb[0].mxu0
        %v7041 = vadd.f32 0.0, %v7040
        %v7042 = vpop.f32.mrb[0].mxu0
        %7043 = vmatprep.mubr.bf16.mxu0 0
        %7044 = vmatmul.mubr.bf16.gmra.mrb[0].mxu0 %v4320
        %v7045 = vpop.f32.mrb[0].mxu0
        %v7046 = vadd.f32 0.0, %v7045
        %v7047 = vpop.f32.mrb[0].mxu0
        %v7048 = vpop.f32.mrb[0].mxu0
        %v7049 = vadd.f32 0.0, %v7048
        %v7050 = vpop.f32.mrb[0].mxu0
        %7051 = vmatprep.mubr.bf16.mxu0 0
        %7052 = vmatmul.mubr.bf16.gmra.mrb[0].mxu0 %v4321
        %v7053 = vpop.f32.mrb[0].mxu0
        %v7054 = vadd.f32 0.0, %v7053
        %v7055 = vpop.f32.mrb[0].mxu0
        %v7056 = vpop.f32.mrb[0].mxu0
        %v7057 = vadd.f32 0.0, %v7056
        %v7058 = vpop.f32.mrb[0].mxu0
        %7059 = vmatprep.mubr.bf16.mxu0 0
        %7060 = vmatmul.mubr.bf16.gmra.mrb[0].mxu0 %v4322
        %v7061 = vpop.f32.mrb[0].mxu0
        %v7062 = vadd.f32 0.0, %v7061
        %v7063 = vpop.f32.mrb[0].mxu0
        %v7064 = vpop.f32.mrb[0].mxu0
        %v7065 = vadd.f32 0.0, %v7064
        %v7066 = vpop.f32.mrb[0].mxu0
        %7067 = vmatprep.mubr.bf16.mxu0 0
        %7068 = vmatmul.mubr.bf16.gmra.mrb[0].mxu0 %v4323
        %v7069 = vpop.f32.mrb[0].mxu0
        %v7070 = vadd.f32 0.0, %v7069
        %v7071 = vpop.f32.mrb[0].mxu0
        %v7072 = vpop.f32.mrb[0].mxu0
        %v7073 = vadd.f32 0.0, %v7072
        %v7074 = vpop.f32.mrb[0].mxu0
        %7075 = vmatprep.mubr.bf16.mxu0 0
        %7076 = vmatmul.mubr.bf16.gmra.mrb[0].mxu0 %v4324
        %v7077 = vpop.f32.mrb[0].mxu0
        %v7078 = vadd.f32 0.0, %v7077
        %v7079 = vpop.f32.mrb[0].mxu0
        %v7080 = vpop.f32.mrb[0].mxu0
        %v7081 = vadd.f32 0.0, %v7080
        %v7082 = vpop.f32.mrb[0].mxu0
        %7083 = vmatprep.mubr.bf16.mxu0 0
        %7084 = vmatmul.mubr.bf16.gmra.mrb[0].mxu0 %v4325
        %v7085 = vpop.f32.mrb[0].mxu0
        %v7086 = vadd.f32 0.0, %v7085
        %v7087 = vpop.f32.mrb[0].mxu0
        %v7088 = vpop.f32.mrb[0].mxu0
        %v7089 = vadd.f32 0.0, %v7088
        %v7090 = vpop.f32.mrb[0].mxu0
        %7091 = vmatprep.mubr.bf16.mxu0 0
        %7092 = vmatmul.mubr.bf16.gmra.mrb[0].mxu0 %v4326
        %v7093 = vpop.f32.mrb[0].mxu0
        %v7094 = vadd.f32 0.0, %v7093
        %v7095 = vpop.f32.mrb[0].mxu0
        %v7096 = vpop.f32.mrb[0].mxu0
        %v7097 = vadd.f32 0.0, %v7096
        %v7098 = vpop.f32.mrb[0].mxu0
        %7099 = vmatprep.mubr.bf16.mxu0 0
        %7100 = vmatmul.mubr.bf16.gmra.mrb[0].mxu0 %v4327
        %v7101 = vpop.f32.mrb[0].mxu0
        %v7102 = vadd.f32 0.0, %v7101
        %v7103 = vpop.f32.mrb[0].mxu0
        %v7104 = vpop.f32.mrb[0].mxu0
        %v7105 = vadd.f32 0.0, %v7104
        %v7106 = vpop.f32.mrb[0].mxu0
        %7107 = vmatprep.mubr.bf16.mxu0 0
        %7108 = vmatmul.mubr.bf16.gmra.mrb[0].mxu0 %v4328
        %v7109 = vpop.f32.mrb[0].mxu0
        %v7110 = vadd.f32 0.0, %v7109
        %v7111 = vpop.f32.mrb[0].mxu0
        %v7112 = vpop.f32.mrb[0].mxu0
        %v7113 = vadd.f32 0.0, %v7112
        %v7114 = vpop.f32.mrb[0].mxu0
        %7115 = vmatprep.mubr.bf16.mxu0 0
        %7116 = vmatmul.mubr.bf16.gmra.mrb[0].mxu0 %v4329
        %v7117 = vpop.f32.mrb[0].mxu0
        %v7118 = vadd.f32 0.0, %v7117
        %v7119 = vpop.f32.mrb[0].mxu0
        %v7120 = vpop.f32.mrb[0].mxu0
        %v7121 = vadd.f32 0.0, %v7120
        %v7122 = vpop.f32.mrb[0].mxu0
        %7123 = vmatprep.mubr.bf16.mxu0 0
        %7124 = vmatmul.mubr.bf16.gmra.mrb[0].mxu0 %v4330
        %v7125 = vpop.f32.mrb[0].mxu0
        %v7126 = vadd.f32 0.0, %v7125
        %v7127 = vpop.f32.mrb[0].mxu0
        %v7128 = vpop.f32.mrb[0].mxu0
        %v7129 = vadd.f32 0.0, %v7128
        %v7130 = vpop.f32.mrb[0].mxu0
        %7131 = vmatprep.mubr.bf16.mxu0 0
        %7132 = vmatmul.mubr.bf16.gmra.mrb[0].mxu0 %v4331
        %v7133 = vpop.f32.mrb[0].mxu0
        %v7134 = vadd.f32 0.0, %v7133
        %v7135 = vpop.f32.mrb[0].mxu0
        %v7136 = vpop.f32.mrb[0].mxu0
        %v7137 = vadd.f32 0.0, %v7136
        %v7138 = vpop.f32.mrb[0].mxu0
        %7139 = vmatprep.mubr.bf16.mxu0 0
        %7140 = vmatmul.mubr.bf16.gmra.mrb[0].mxu0 %v4332
        %v7141 = vpop.f32.mrb[0].mxu0
        %v7142 = vadd.f32 0.0, %v7141
        %v7143 = vpop.f32.mrb[0].mxu0
        %v7144 = vpop.f32.mrb[0].mxu0
        %v7145 = vadd.f32 0.0, %v7144
        %v7146 = vpop.f32.mrb[0].mxu0
        %7147 = vmatprep.mubr.bf16.mxu0 0
        %7148 = vmatmul.mubr.bf16.gmra.mrb[0].mxu0 %v4333
        %v7149 = vpop.f32.mrb[0].mxu0
        %v7150 = vadd.f32 0.0, %v7149
        %v7151 = vpop.f32.mrb[0].mxu0
        %v7152 = vpop.f32.mrb[0].mxu0
        %v7153 = vadd.f32 0.0, %v7152
        %v7154 = vpop.f32.mrb[0].mxu0
        %7155 = vmatprep.mubr.bf16.mxu0 0
        %7156 = vmatmul.mubr.bf16.gmra.mrb[0].mxu0 %v4334
        %v7157 = vpop.f32.mrb[0].mxu0
        %v7158 = vadd.f32 0.0, %v7157
        %v7159 = vpop.f32.mrb[0].mxu0
        %v7160 = vpop.f32.mrb[0].mxu0
        %v7161 = vadd.f32 0.0, %v7160
        %v7162 = vpop.f32.mrb[0].mxu0
        %7163 = vmatprep.mubr.bf16.mxu0 0
        %7164 = vmatmul.mubr.bf16.gmra.mrb[0].mxu0 %v4335
        %v7165 = vpop.f32.mrb[0].mxu0
        %v7166 = vadd.f32 0.0, %v7165
        %v7167 = vpop.f32.mrb[0].mxu0
        %v7168 = vpop.f32.mrb[0].mxu0
        %v7169 = vadd.f32 0.0, %v7168
        %v7170 = vpop.f32.mrb[0].mxu0
        %7171 = vmatprep.mubr.bf16.mxu0 0
        %7172 = vmatmul.mubr.bf16.gmra.mrb[0].mxu0 %v4336
        %v7173 = vpop.f32.mrb[0].mxu0
        %v7174 = vadd.f32 0.0, %v7173
        %v7175 = vpop.f32.mrb[0].mxu0
        %v7176 = vpop.f32.mrb[0].mxu0
        %v7177 = vadd.f32 0.0, %v7176
        %v7178 = vpop.f32.mrb[0].mxu0
        %7179 = vmatprep.mubr.bf16.mxu0 0
        %7180 = vmatmul.mubr.bf16.gmra.mrb[0].mxu0 %v4337
        %v7181 = vpop.f32.mrb[0].mxu0
        %v7182 = vadd.f32 0.0, %v7181
        %v7183 = vpop.f32.mrb[0].mxu0
        %v7184 = vpop.f32.mrb[0].mxu0
        %v7185 = vadd.f32 0.0, %v7184
        %v7186 = vpop.f32.mrb[0].mxu0
        %7187 = vmatprep.mubr.bf16.mxu0 0
        %7188 = vmatmul.mubr.bf16.gmra.mrb[0].mxu0 %v4338
        %v7189 = vpop.f32.mrb[0].mxu0
        %v7190 = vadd.f32 0.0, %v7189
        %v7191 = vpop.f32.mrb[0].mxu0
        %v7192 = vpop.f32.mrb[0].mxu0
        %v7193 = vadd.f32 0.0, %v7192
        %v7194 = vpop.f32.mrb[0].mxu0
        %7195 = vmatprep.mubr.bf16.mxu0 0
        %7196 = vmatmul.mubr.bf16.gmra.mrb[0].mxu0 %v4339
        %v7197 = vpop.f32.mrb[0].mxu0
        %v7198 = vadd.f32 0.0, %v7197
        %v7199 = vpop.f32.mrb[0].mxu0
        %v7200 = vpop.f32.mrb[0].mxu0
        %v7201 = vadd.f32 0.0, %v7200
        %v7202 = vpop.f32.mrb[0].mxu0
        %7203 = vmatprep.mubr.bf16.mxu0 0
        %7204 = vmatmul.mubr.bf16.gmra.mrb[0].mxu0 %v4340
        %v7205 = vpop.f32.mrb[0].mxu0
        %v7206 = vadd.f32 0.0, %v7205
        %v7207 = vpop.f32.mrb[0].mxu0
        %v7208 = vpop.f32.mrb[0].mxu0
        %v7209 = vadd.f32 0.0, %v7208
        %v7210 = vpop.f32.mrb[0].mxu0
        %7211 = vmatprep.mubr.bf16.mxu0 0
        %7212 = vmatmul.mubr.bf16.gmra.mrb[0].mxu0 %v4341
        %v7213 = vpop.f32.mrb[0].mxu0
        %v7214 = vadd.f32 0.0, %v7213
        %v7215 = vpop.f32.mrb[0].mxu0
        %v7216 = vpop.f32.mrb[0].mxu0
        %v7217 = vadd.f32 0.0, %v7216
        %v7218 = vpop.f32.mrb[0].mxu0
        %7219 = vmatprep.mubr.bf16.mxu0 0
        %7220 = vmatmul.mubr.bf16.gmra.mrb[0].mxu0 %v4342
        %v7221 = vpop.f32.mrb[0].mxu0
        %v7222 = vadd.f32 0.0, %v7221
        %v7223 = vpop.f32.mrb[0].mxu0
        %v7224 = vpop.f32.mrb[0].mxu0
        %v7225 = vadd.f32 0.0, %v7224
        %v7226 = vpop.f32.mrb[0].mxu0
        %7227 = vmatprep.mubr.bf16.mxu0 0
        %7228 = vmatmul.mubr.bf16.gmra.mrb[0].mxu0 %v4343
        %v7229 = vpop.f32.mrb[0].mxu0
        %v7230 = vadd.f32 0.0, %v7229
        %v7231 = vpop.f32.mrb[0].mxu0
        %v7232 = vpop.f32.mrb[0].mxu0
        %v7233 = vadd.f32 0.0, %v7232
        %v7234 = vpop.f32.mrb[0].mxu0
        %7235 = vmatprep.mubr.bf16.mxu0 0
        %7236 = vmatmul.mubr.bf16.gmra.mrb[0].mxu0 %v4344
        %v7237 = vpop.f32.mrb[0].mxu0
        %v7238 = vadd.f32 0.0, %v7237
        %v7239 = vpop.f32.mrb[0].mxu0
        %v7240 = vpop.f32.mrb[0].mxu0
        %v7241 = vadd.f32 0.0, %v7240
        %v7242 = vpop.f32.mrb[0].mxu0
        %7243 = vmatprep.mubr.bf16.mxu0 0
        %7244 = vmatmul.mubr.bf16.gmra.mrb[0].mxu0 %v4345
        %v7245 = vpop.f32.mrb[0].mxu0
        %v7246 = vadd.f32 0.0, %v7245
        %v7247 = vpop.f32.mrb[0].mxu0
        %v7248 = vpop.f32.mrb[0].mxu0
        %v7249 = vadd.f32 0.0, %v7248
        %v7250 = vpop.f32.mrb[0].mxu0
        %7251 = vmatprep.mubr.bf16.mxu0 0
        %7252 = vmatmul.mubr.bf16.gmra.mrb[0].mxu0 %v4346
        %v7253 = vpop.f32.mrb[0].mxu0
        %v7254 = vadd.f32 0.0, %v7253
        %v7255 = vpop.f32.mrb[0].mxu0
        %v7256 = vpop.f32.mrb[0].mxu0
        %v7257 = vadd.f32 0.0, %v7256
        %v7258 = vpop.f32.mrb[0].mxu0
        %7259 = vmatprep.mubr.bf16.mxu0 0
        %7260 = vmatmul.mubr.bf16.gmra.mrb[0].mxu0 %v4347
        %v7261 = vpop.f32.mrb[0].mxu0
        %v7262 = vadd.f32 0.0, %v7261
        %v7263 = vpop.f32.mrb[0].mxu0
        %v7264 = vpop.f32.mrb[0].mxu0
        %v7265 = vadd.f32 0.0, %v7264
        %v7266 = vpop.f32.mrb[0].mxu0
        %7267 = vmatprep.mubr.bf16.mxu0 0
        %7268 = vmatmul.mubr.bf16.gmra.mrb[0].mxu0 %v4348
        %v7269 = vpop.f32.mrb[0].mxu0
        %v7270 = vadd.f32 0.0, %v7269
        %v7271 = vpop.f32.mrb[0].mxu0
        %v7272 = vpop.f32.mrb[0].mxu0
        %v7273 = vadd.f32 0.0, %v7272
        %v7274 = vpop.f32.mrb[0].mxu0
        %7275 = vmatprep.mubr.bf16.mxu0 0
        %7276 = vmatmul.mubr.bf16.gmra.mrb[0].mxu0 %v4349
        %v7277 = vpop.f32.mrb[0].mxu0
        %v7278 = vadd.f32 0.0, %v7277
        %v7279 = vpop.f32.mrb[0].mxu0
        %v7280 = vpop.f32.mrb[0].mxu0
        %v7281 = vadd.f32 0.0, %v7280
        %v7282 = vpop.f32.mrb[0].mxu0
        %7283 = vmatprep.mubr.bf16.mxu0 0
        %7284 = vmatmul.mubr.bf16.gmra.mrb[0].mxu0 %v4350
        %v7285 = vpop.f32.mrb[0].mxu0
        %v7286 = vadd.f32 0.0, %v7285
        %v7287 = vpop.f32.mrb[0].mxu0
        %v7288 = vpop.f32.mrb[0].mxu0
        %v7289 = vadd.f32 0.0, %v7288
        %v7290 = vpop.f32.mrb[0].mxu0
        %7291 = vmatprep.mubr.bf16.mxu0 0
        %7292 = vmatmul.mubr.bf16.gmra.mrb[0].mxu0 %v6711
        %v7293 = vpop.f32.mrb[0].mxu0
        %v7294 = vadd.f32 0.0, %v7293
        %v7295 = vpop.f32.mrb[0].mxu0
        %v7296 = vpop.f32.mrb[0].mxu0
        %v7297 = vadd.f32 0.0, %v7296
        %v7298 = vpop.f32.mrb[0].mxu0
        %7299 = vmatprep.mubr.bf16.mxu0 0
        %7300 = vmatmul.mubr.bf16.gmra.mrb[0].mxu0 %v6712
        %v7301 = vpop.f32.mrb[0].mxu0
        %v7302 = vadd.f32 0.0, %v7301
        %v7303 = vpop.f32.mrb[0].mxu0
        %v7304 = vpop.f32.mrb[0].mxu0
        %v7305 = vadd.f32 0.0, %v7304
        %v7306 = vpop.f32.mrb[0].mxu0
        %7307 = vdwg.mxu0
        %v7308 = vadd.f32 %v6548, %v6798
        %v7309 = vadd.f32 %v6549, %v6801
        %v7310 = vadd.f32 %v6550, %v6806
        %v7311 = vadd.f32 %v6551, %v6809
        %v7312 = vadd.f32 %v6552, %v6814
        %v7313 = vadd.f32 %v6553, %v6817
        %v7314 = vadd.f32 %v6554, %v6822
        %v7315 = vadd.f32 %v6555, %v6825
        %v7316 = vadd.f32 %v6556, %v6830
        %v7317 = vadd.f32 %v6557, %v6833
        %v7318 = vadd.f32 %v6558, %v6838
        %v7319 = vadd.f32 %v6559, %v6841
        %v7320 = vadd.f32 %v6560, %v6846
        %v7321 = vadd.f32 %v6561, %v6849
        %v7322 = vadd.f32 %v6562, %v6854
        %v7323 = vadd.f32 %v6563, %v6857
        %v7324 = vadd.f32 %v6564, %v6862
        %v7325 = vadd.f32 %v6565, %v6865
        %v7326 = vadd.f32 %v6566, %v6870
        %v7327 = vadd.f32 %v6567, %v6873
        %v7328 = vadd.f32 %v6568, %v6878
        %v7329 = vadd.f32 %v6569, %v6881
        %v7330 = vadd.f32 %v6570, %v6886
        %v7331 = vadd.f32 %v6571, %v6889
        %v7332 = vadd.f32 %v6572, %v6894
        %v7333 = vadd.f32 %v6573, %v6897
        %v7334 = vadd.f32 %v6574, %v6902
        %v7335 = vadd.f32 %v6575, %v6905
        %v7336 = vadd.f32 %v6576, %v6910
        %v7337 = vadd.f32 %v6577, %v6913
        %v7338 = vadd.f32 %v6578, %v6918
        %v7339 = vadd.f32 %v6579, %v6921
        %v7340 = vadd.f32 %v6580, %v6926
        %v7341 = vadd.f32 %v6581, %v6929
        %v7342 = vadd.f32 %v6582, %v6934
        %v7343 = vadd.f32 %v6583, %v6937
        %v7344 = vadd.f32 %v6584, %v6942
        %v7345 = vadd.f32 %v6585, %v6945
        %v7346 = vadd.f32 %v6586, %v6950
        %v7347 = vadd.f32 %v6587, %v6953
        %v7348 = vadd.f32 %v6588, %v6958
        %v7349 = vadd.f32 %v6589, %v6961
        %v7350 = vadd.f32 %v6590, %v6966
        %v7351 = vadd.f32 %v6591, %v6969
        %v7352 = vadd.f32 %v6592, %v6974
        %v7353 = vadd.f32 %v6593, %v6977
        %v7354 = vadd.f32 %v6594, %v6982
        %v7355 = vadd.f32 %v6595, %v6985
        %v7356 = vadd.f32 %v6596, %v6990
        %v7357 = vadd.f32 %v6597, %v6993
        %v7358 = vadd.f32 %v6598, %v6998
        %v7359 = vadd.f32 %v6599, %v7001
        %v7360 = vadd.f32 %v6600, %v7006
        %v7361 = vadd.f32 %v6601, %v7009
        %v7362 = vadd.f32 %v6602, %v7014
        %v7363 = vadd.f32 %v6603, %v7017
        %v7364 = vadd.f32 %v6604, %v7022
        %v7365 = vadd.f32 %v6605, %v7025
        %v7366 = vadd.f32 %v6606, %v7030
        %v7367 = vadd.f32 %v6607, %v7033
        %v7368 = vadd.f32 %v6608, %v7038
        %v7369 = vadd.f32 %v6609, %v7041
        %v7370 = vadd.f32 %v6610, %v7046
        %v7371 = vadd.f32 %v6611, %v7049
        %v7372 = vadd.f32 %v6612, %v7054
        %v7373 = vadd.f32 %v6613, %v7057
        %v7374 = vadd.f32 %v6614, %v7062
        %v7375 = vadd.f32 %v6615, %v7065
        %v7376 = vadd.f32 %v6616, %v7070
        %v7377 = vadd.f32 %v6617, %v7073
        %v7378 = vadd.f32 %v6618, %v7078
        %v7379 = vadd.f32 %v6619, %v7081
        %v7380 = vadd.f32 %v6620, %v7086
        %v7381 = vadd.f32 %v6621, %v7089
        %v7382 = vadd.f32 %v6622, %v7094
        %v7383 = vadd.f32 %v6623, %v7097
        %v7384 = vadd.f32 %v6624, %v7102
        %v7385 = vadd.f32 %v6625, %v7105
        %v7386 = vadd.f32 %v6626, %v7110
        %v7387 = vadd.f32 %v6627, %v7113
        %v7388 = vadd.f32 %v6628, %v7118
        %v7389 = vadd.f32 %v6629, %v7121
        %v7390 = vadd.f32 %v6630, %v7126
        %v7391 = vadd.f32 %v6631, %v7129
        %v7392 = vadd.f32 %v6632, %v7134
        %v7393 = vadd.f32 %v6633, %v7137
        %v7394 = vadd.f32 %v6634, %v7142
        %v7395 = vadd.f32 %v6635, %v7145
        %v7396 = vadd.f32 %v6636, %v7150
        %v7397 = vadd.f32 %v6637, %v7153
        %v7398 = vadd.f32 %v6638, %v7158
        %v7399 = vadd.f32 %v6639, %v7161
        %v7400 = vadd.f32 %v6640, %v7166
        %v7401 = vadd.f32 %v6641, %v7169
        %v7402 = vadd.f32 %v6642, %v7174
        %v7403 = vadd.f32 %v6643, %v7177
        %v7404 = vadd.f32 %v6644, %v7182
        %v7405 = vadd.f32 %v6645, %v7185
        %v7406 = vadd.f32 %v6646, %v7190
        %v7407 = vadd.f32 %v6647, %v7193
        %v7408 = vadd.f32 %v6648, %v7198
        %v7409 = vadd.f32 %v6649, %v7201
        %v7410 = vadd.f32 %v6650, %v7206
        %v7411 = vadd.f32 %v6651, %v7209
        %v7412 = vadd.f32 %v6652, %v7214
        %v7413 = vadd.f32 %v6653, %v7217
        %v7414 = vadd.f32 %v6654, %v7222
        %v7415 = vadd.f32 %v6655, %v7225
        %v7416 = vadd.f32 %v6656, %v7230
        %v7417 = vadd.f32 %v6657, %v7233
        %v7418 = vadd.f32 %v6658, %v7238
        %v7419 = vadd.f32 %v6659, %v7241
        %v7420 = vadd.f32 %v6660, %v7246
        %v7421 = vadd.f32 %v6661, %v7249
        %v7422 = vadd.f32 %v6662, %v7254
        %v7423 = vadd.f32 %v6663, %v7257
        %v7424 = vadd.f32 %v6664, %v7262
        %v7425 = vadd.f32 %v6665, %v7265
        %v7426 = vadd.f32 %v6666, %v7270
        %v7427 = vadd.f32 %v6667, %v7273
        %v7428 = vadd.f32 %v6668, %v7278
        %v7429 = vadd.f32 %v6669, %v7281
        %v7430 = vadd.f32 %v6670, %v7286
        %v7431 = vadd.f32 %v6671, %v7289
        %v7432 = vadd.f32 %v6672, %v7294
        %v7433 = vadd.f32 %v6673, %v7297
        %v7434 = vadd.f32 %v6674, %v7302
        %v7435 = vadd.f32 %v6675, %v7305
        %s7436 = scalar_lea.vmem %s1, 384
        %v7437 = vld [vmem:[%s7436] sm:$0xf]
        %v7438 = vld [vmem:[%s7436 + $0x4] sm:$0xf]
        %v7439 = vld [vmem:[%s7436 + $0x8] sm:$0xf]
        %v7440 = vld [vmem:[%s7436 + $0xc] sm:$0xf]
        %v7441 = vld [vmem:[%s7436 + $0x10] sm:$0xf]
        %v7442 = vld [vmem:[%s7436 + $0x14] sm:$0xf]
        %v7443 = vld [vmem:[%s7436 + $0x18] sm:$0xf]
        %v7444 = vld [vmem:[%s7436 + $0x1c] sm:$0xf]
        %v7445 = vld [vmem:[%s7436 + $0x20] sm:$0xf]
        %v7446 = vld [vmem:[%s7436 + $0x24] sm:$0xf]
        %v7447 = vld [vmem:[%s7436 + $0x28] sm:$0xf]
        %v7448 = vld [vmem:[%s7436 + $0x2c] sm:$0xf]
        %v7449 = vld [vmem:[%s7436 + $0x30] sm:$0xf]
        %v7450 = vld [vmem:[%s7436 + $0x34] sm:$0xf]
        %v7451 = vld [vmem:[%s7436 + $0x38] sm:$0xf]
        %v7452 = vld [vmem:[%s7436 + $0x3c] sm:$0xf]
        %v7457 = vunpack.c.l.b16 %v416
        %v7458 = vunpack.c.l.b16 %v417
        %v7459 = vunpack.c.l.b16 %v418
        %v7460 = vunpack.c.l.b16 %v419
        %v7461 = vpack.c.b16 %v7458, %v7457
        %v7462 = vpack.c.b16 %v7460, %v7459
        %v7481 = vunpack.c.l.b16 %v7437
        %v7482 = vunpack.c.l.b16 %v7438
        %v7483 = vunpack.c.l.b16 %v7439
        %v7484 = vunpack.c.l.b16 %v7440
        %v7485 = vunpack.c.l.b16 %v7441
        %v7486 = vunpack.c.l.b16 %v7442
        %v7487 = vunpack.c.l.b16 %v7443
        %v7488 = vunpack.c.l.b16 %v7444
        %v7489 = vunpack.c.l.b16 %v7445
        %v7490 = vunpack.c.l.b16 %v7446
        %v7491 = vunpack.c.l.b16 %v7447
        %v7492 = vunpack.c.l.b16 %v7448
        %v7493 = vunpack.c.l.b16 %v7449
        %v7494 = vunpack.c.l.b16 %v7450
        %v7495 = vunpack.c.l.b16 %v7451
        %v7496 = vunpack.c.l.b16 %v7452
        %v7497 = vpack.c.b16 %v7482, %v7481
        %v7498 = vpack.c.b16 %v7484, %v7483
        %v7499 = vpack.c.b16 %v7486, %v7485
        %v7500 = vpack.c.b16 %v7488, %v7487
        %v7501 = vpack.c.b16 %v7490, %v7489
        %v7502 = vpack.c.b16 %v7492, %v7491
        %v7503 = vpack.c.b16 %v7494, %v7493
        %v7504 = vpack.c.b16 %v7496, %v7495
        %7513 = vmatprep.subr.bf16.mxu0 0
        %7514 = vmatpush1.bf16.msra.mxu0 %v7497
        %7515 = vmatprep.subr.bf16.mxu0 0
        %7516 = vmatpush1.bf16.msra.mxu0 %v7498
        %7517 = vmatprep.subr.bf16.mxu0 0
        %7518 = vmatpush1.bf16.msra.mxu0 %v7499
        %7519 = vmatprep.subr.bf16.mxu0 0
        %7520 = vmatpush1.bf16.msra.mxu0 %v7500
        %7521 = vmatprep.subr.bf16.mxu0 0
        %7522 = vmatpush1.bf16.msra.mxu0 %v7501
        %7523 = vmatprep.subr.bf16.mxu0 0
        %7524 = vmatpush1.bf16.msra.mxu0 %v7502
        %7525 = vmatprep.subr.bf16.mxu0 0
        %7526 = vmatpush1.bf16.msra.mxu0 %v7503
        %7527 = vmatprep.subr.bf16.mxu0 0
        %7528 = vmatpush1.bf16.msra.mxu0 %v7504
        %7529 = vmatprep.subr.bf16.mxu0 0
        %7530 = vmatpush1.bf16.msra.mxu0 0
        %7531 = vmatprep.subr.bf16.mxu0 0
        %7532 = vmatpush1.bf16.msra.mxu0 0
        %7533 = vmatprep.subr.bf16.mxu0 0
        %7534 = vmatpush1.bf16.msra.mxu0 0
        %7535 = vmatprep.subr.bf16.mxu0 0
        %7536 = vmatpush1.bf16.msra.mxu0 0
        %7537 = vmatprep.subr.bf16.mxu0 0
        %7538 = vmatpush1.bf16.msra.mxu0 0
        %7539 = vmatprep.subr.bf16.mxu0 0
        %7540 = vmatpush1.bf16.msra.mxu0 0
        %7541 = vmatprep.subr.bf16.mxu0 0
        %7542 = vmatpush1.bf16.msra.mxu0 0
        %7543 = vmatprep.subr.bf16.mxu0 0
        %7544 = vmatpush1.bf16.msra.mxu0 0
        %7545 = vmatprep.mubr.bf16.mxu0 0
        %7546 = vmatmul.mubr.bf16.gmra.mrb[0].mxu0 %v2974
        %v7547 = vpop.f32.mrb[0].mxu0
        %v7548 = vadd.f32 0.0, %v7547
        %v7549 = vpop.f32.mrb[0].mxu0
        %v7550 = vpop.f32.mrb[0].mxu0
        %v7551 = vadd.f32 0.0, %v7550
        %v7552 = vpop.f32.mrb[0].mxu0
        %7553 = vmatprep.mubr.bf16.mxu0 0
        %7554 = vmatmul.mubr.bf16.gmra.mrb[0].mxu0 %v2975
        %v7555 = vpop.f32.mrb[0].mxu0
        %v7556 = vadd.f32 0.0, %v7555
        %v7557 = vpop.f32.mrb[0].mxu0
        %v7558 = vpop.f32.mrb[0].mxu0
        %v7559 = vadd.f32 0.0, %v7558
        %v7560 = vpop.f32.mrb[0].mxu0
        %7561 = vmatprep.mubr.bf16.mxu0 0
        %7562 = vmatmul.mubr.bf16.gmra.mrb[0].mxu0 %v2976
        %v7563 = vpop.f32.mrb[0].mxu0
        %v7564 = vadd.f32 0.0, %v7563
        %v7565 = vpop.f32.mrb[0].mxu0
        %v7566 = vpop.f32.mrb[0].mxu0
        %v7567 = vadd.f32 0.0, %v7566
        %v7568 = vpop.f32.mrb[0].mxu0
        %7569 = vmatprep.mubr.bf16.mxu0 0
        %7570 = vmatmul.mubr.bf16.gmra.mrb[0].mxu0 %v2977
        %v7571 = vpop.f32.mrb[0].mxu0
        %v7572 = vadd.f32 0.0, %v7571
        %v7573 = vpop.f32.mrb[0].mxu0
        %v7574 = vpop.f32.mrb[0].mxu0
        %v7575 = vadd.f32 0.0, %v7574
        %v7576 = vpop.f32.mrb[0].mxu0
        %7577 = vmatprep.mubr.bf16.mxu0 0
        %7578 = vmatmul.mubr.bf16.gmra.mrb[0].mxu0 %v2978
        %v7579 = vpop.f32.mrb[0].mxu0
        %v7580 = vadd.f32 0.0, %v7579
        %v7581 = vpop.f32.mrb[0].mxu0
        %v7582 = vpop.f32.mrb[0].mxu0
        %v7583 = vadd.f32 0.0, %v7582
        %v7584 = vpop.f32.mrb[0].mxu0
        %7585 = vmatprep.mubr.bf16.mxu0 0
        %7586 = vmatmul.mubr.bf16.gmra.mrb[0].mxu0 %v2979
        %v7587 = vpop.f32.mrb[0].mxu0
        %v7588 = vadd.f32 0.0, %v7587
        %v7589 = vpop.f32.mrb[0].mxu0
        %v7590 = vpop.f32.mrb[0].mxu0
        %v7591 = vadd.f32 0.0, %v7590
        %v7592 = vpop.f32.mrb[0].mxu0
        %7593 = vmatprep.mubr.bf16.mxu0 0
        %7594 = vmatmul.mubr.bf16.gmra.mrb[0].mxu0 %v2980
        %v7595 = vpop.f32.mrb[0].mxu0
        %v7596 = vadd.f32 0.0, %v7595
        %v7597 = vpop.f32.mrb[0].mxu0
        %v7598 = vpop.f32.mrb[0].mxu0
        %v7599 = vadd.f32 0.0, %v7598
        %v7600 = vpop.f32.mrb[0].mxu0
        %7601 = vmatprep.mubr.bf16.mxu0 0
        %7602 = vmatmul.mubr.bf16.gmra.mrb[0].mxu0 %v2981
        %v7603 = vpop.f32.mrb[0].mxu0
        %v7604 = vadd.f32 0.0, %v7603
        %v7605 = vpop.f32.mrb[0].mxu0
        %v7606 = vpop.f32.mrb[0].mxu0
        %v7607 = vadd.f32 0.0, %v7606
        %v7608 = vpop.f32.mrb[0].mxu0
        %7609 = vmatprep.mubr.bf16.mxu0 0
        %7610 = vmatmul.mubr.bf16.gmra.mrb[0].mxu0 %v2982
        %v7611 = vpop.f32.mrb[0].mxu0
        %v7612 = vadd.f32 0.0, %v7611
        %v7613 = vpop.f32.mrb[0].mxu0
        %v7614 = vpop.f32.mrb[0].mxu0
        %v7615 = vadd.f32 0.0, %v7614
        %v7616 = vpop.f32.mrb[0].mxu0
        %7617 = vmatprep.mubr.bf16.mxu0 0
        %7618 = vmatmul.mubr.bf16.gmra.mrb[0].mxu0 %v2983
        %v7619 = vpop.f32.mrb[0].mxu0
        %v7620 = vadd.f32 0.0, %v7619
        %v7621 = vpop.f32.mrb[0].mxu0
        %v7622 = vpop.f32.mrb[0].mxu0
        %v7623 = vadd.f32 0.0, %v7622
        %v7624 = vpop.f32.mrb[0].mxu0
        %7625 = vmatprep.mubr.bf16.mxu0 0
        %7626 = vmatmul.mubr.bf16.gmra.mrb[0].mxu0 %v2984
        %v7627 = vpop.f32.mrb[0].mxu0
        %v7628 = vadd.f32 0.0, %v7627
        %v7629 = vpop.f32.mrb[0].mxu0
        %v7630 = vpop.f32.mrb[0].mxu0
        %v7631 = vadd.f32 0.0, %v7630
        %v7632 = vpop.f32.mrb[0].mxu0
        %7633 = vmatprep.mubr.bf16.mxu0 0
        %7634 = vmatmul.mubr.bf16.gmra.mrb[0].mxu0 %v2985
        %v7635 = vpop.f32.mrb[0].mxu0
        %v7636 = vadd.f32 0.0, %v7635
        %v7637 = vpop.f32.mrb[0].mxu0
        %v7638 = vpop.f32.mrb[0].mxu0
        %v7639 = vadd.f32 0.0, %v7638
        %v7640 = vpop.f32.mrb[0].mxu0
        %7641 = vmatprep.mubr.bf16.mxu0 0
        %7642 = vmatmul.mubr.bf16.gmra.mrb[0].mxu0 %v2986
        %v7643 = vpop.f32.mrb[0].mxu0
        %v7644 = vadd.f32 0.0, %v7643
        %v7645 = vpop.f32.mrb[0].mxu0
        %v7646 = vpop.f32.mrb[0].mxu0
        %v7647 = vadd.f32 0.0, %v7646
        %v7648 = vpop.f32.mrb[0].mxu0
        %7649 = vmatprep.mubr.bf16.mxu0 0
        %7650 = vmatmul.mubr.bf16.gmra.mrb[0].mxu0 %v2987
        %v7651 = vpop.f32.mrb[0].mxu0
        %v7652 = vadd.f32 0.0, %v7651
        %v7653 = vpop.f32.mrb[0].mxu0
        %v7654 = vpop.f32.mrb[0].mxu0
        %v7655 = vadd.f32 0.0, %v7654
        %v7656 = vpop.f32.mrb[0].mxu0
        %7657 = vmatprep.mubr.bf16.mxu0 0
        %7658 = vmatmul.mubr.bf16.gmra.mrb[0].mxu0 %v2988
        %v7659 = vpop.f32.mrb[0].mxu0
        %v7660 = vadd.f32 0.0, %v7659
        %v7661 = vpop.f32.mrb[0].mxu0
        %v7662 = vpop.f32.mrb[0].mxu0
        %v7663 = vadd.f32 0.0, %v7662
        %v7664 = vpop.f32.mrb[0].mxu0
        %7665 = vmatprep.mubr.bf16.mxu0 0
        %7666 = vmatmul.mubr.bf16.gmra.mrb[0].mxu0 %v2989
        %v7667 = vpop.f32.mrb[0].mxu0
        %v7668 = vadd.f32 0.0, %v7667
        %v7669 = vpop.f32.mrb[0].mxu0
        %v7670 = vpop.f32.mrb[0].mxu0
        %v7671 = vadd.f32 0.0, %v7670
        %v7672 = vpop.f32.mrb[0].mxu0
        %7673 = vmatprep.mubr.bf16.mxu0 0
        %7674 = vmatmul.mubr.bf16.gmra.mrb[0].mxu0 %v2990
        %v7675 = vpop.f32.mrb[0].mxu0
        %v7676 = vadd.f32 0.0, %v7675
        %v7677 = vpop.f32.mrb[0].mxu0
        %v7678 = vpop.f32.mrb[0].mxu0
        %v7679 = vadd.f32 0.0, %v7678
        %v7680 = vpop.f32.mrb[0].mxu0
        %7681 = vmatprep.mubr.bf16.mxu0 0
        %7682 = vmatmul.mubr.bf16.gmra.mrb[0].mxu0 %v2991
        %v7683 = vpop.f32.mrb[0].mxu0
        %v7684 = vadd.f32 0.0, %v7683
        %v7685 = vpop.f32.mrb[0].mxu0
        %v7686 = vpop.f32.mrb[0].mxu0
        %v7687 = vadd.f32 0.0, %v7686
        %v7688 = vpop.f32.mrb[0].mxu0
        %7689 = vmatprep.mubr.bf16.mxu0 0
        %7690 = vmatmul.mubr.bf16.gmra.mrb[0].mxu0 %v2992
        %v7691 = vpop.f32.mrb[0].mxu0
        %v7692 = vadd.f32 0.0, %v7691
        %v7693 = vpop.f32.mrb[0].mxu0
        %v7694 = vpop.f32.mrb[0].mxu0
        %v7695 = vadd.f32 0.0, %v7694
        %v7696 = vpop.f32.mrb[0].mxu0
        %7697 = vmatprep.mubr.bf16.mxu0 0
        %7698 = vmatmul.mubr.bf16.gmra.mrb[0].mxu0 %v2993
        %v7699 = vpop.f32.mrb[0].mxu0
        %v7700 = vadd.f32 0.0, %v7699
        %v7701 = vpop.f32.mrb[0].mxu0
        %v7702 = vpop.f32.mrb[0].mxu0
        %v7703 = vadd.f32 0.0, %v7702
        %v7704 = vpop.f32.mrb[0].mxu0
        %7705 = vmatprep.mubr.bf16.mxu0 0
        %7706 = vmatmul.mubr.bf16.gmra.mrb[0].mxu0 %v2994
        %v7707 = vpop.f32.mrb[0].mxu0
        %v7708 = vadd.f32 0.0, %v7707
        %v7709 = vpop.f32.mrb[0].mxu0
        %v7710 = vpop.f32.mrb[0].mxu0
        %v7711 = vadd.f32 0.0, %v7710
        %v7712 = vpop.f32.mrb[0].mxu0
        %7713 = vmatprep.mubr.bf16.mxu0 0
        %7714 = vmatmul.mubr.bf16.gmra.mrb[0].mxu0 %v2995
        %v7715 = vpop.f32.mrb[0].mxu0
        %v7716 = vadd.f32 0.0, %v7715
        %v7717 = vpop.f32.mrb[0].mxu0
        %v7718 = vpop.f32.mrb[0].mxu0
        %v7719 = vadd.f32 0.0, %v7718
        %v7720 = vpop.f32.mrb[0].mxu0
        %7721 = vmatprep.mubr.bf16.mxu0 0
        %7722 = vmatmul.mubr.bf16.gmra.mrb[0].mxu0 %v2996
        %v7723 = vpop.f32.mrb[0].mxu0
        %v7724 = vadd.f32 0.0, %v7723
        %v7725 = vpop.f32.mrb[0].mxu0
        %v7726 = vpop.f32.mrb[0].mxu0
        %v7727 = vadd.f32 0.0, %v7726
        %v7728 = vpop.f32.mrb[0].mxu0
        %7729 = vmatprep.mubr.bf16.mxu0 0
        %7730 = vmatmul.mubr.bf16.gmra.mrb[0].mxu0 %v2997
        %v7731 = vpop.f32.mrb[0].mxu0
        %v7732 = vadd.f32 0.0, %v7731
        %v7733 = vpop.f32.mrb[0].mxu0
        %v7734 = vpop.f32.mrb[0].mxu0
        %v7735 = vadd.f32 0.0, %v7734
        %v7736 = vpop.f32.mrb[0].mxu0
        %7737 = vmatprep.mubr.bf16.mxu0 0
        %7738 = vmatmul.mubr.bf16.gmra.mrb[0].mxu0 %v2998
        %v7739 = vpop.f32.mrb[0].mxu0
        %v7740 = vadd.f32 0.0, %v7739
        %v7741 = vpop.f32.mrb[0].mxu0
        %v7742 = vpop.f32.mrb[0].mxu0
        %v7743 = vadd.f32 0.0, %v7742
        %v7744 = vpop.f32.mrb[0].mxu0
        %7745 = vmatprep.mubr.bf16.mxu0 0
        %7746 = vmatmul.mubr.bf16.gmra.mrb[0].mxu0 %v2999
        %v7747 = vpop.f32.mrb[0].mxu0
        %v7748 = vadd.f32 0.0, %v7747
        %v7749 = vpop.f32.mrb[0].mxu0
        %v7750 = vpop.f32.mrb[0].mxu0
        %v7751 = vadd.f32 0.0, %v7750
        %v7752 = vpop.f32.mrb[0].mxu0
        %7753 = vmatprep.mubr.bf16.mxu0 0
        %7754 = vmatmul.mubr.bf16.gmra.mrb[0].mxu0 %v3000
        %v7755 = vpop.f32.mrb[0].mxu0
        %v7756 = vadd.f32 0.0, %v7755
        %v7757 = vpop.f32.mrb[0].mxu0
        %v7758 = vpop.f32.mrb[0].mxu0
        %v7759 = vadd.f32 0.0, %v7758
        %v7760 = vpop.f32.mrb[0].mxu0
        %7761 = vmatprep.mubr.bf16.mxu0 0
        %7762 = vmatmul.mubr.bf16.gmra.mrb[0].mxu0 %v3001
        %v7763 = vpop.f32.mrb[0].mxu0
        %v7764 = vadd.f32 0.0, %v7763
        %v7765 = vpop.f32.mrb[0].mxu0
        %v7766 = vpop.f32.mrb[0].mxu0
        %v7767 = vadd.f32 0.0, %v7766
        %v7768 = vpop.f32.mrb[0].mxu0
        %7769 = vmatprep.mubr.bf16.mxu0 0
        %7770 = vmatmul.mubr.bf16.gmra.mrb[0].mxu0 %v3002
        %v7771 = vpop.f32.mrb[0].mxu0
        %v7772 = vadd.f32 0.0, %v7771
        %v7773 = vpop.f32.mrb[0].mxu0
        %v7774 = vpop.f32.mrb[0].mxu0
        %v7775 = vadd.f32 0.0, %v7774
        %v7776 = vpop.f32.mrb[0].mxu0
        %7777 = vmatprep.mubr.bf16.mxu0 0
        %7778 = vmatmul.mubr.bf16.gmra.mrb[0].mxu0 %v3003
        %v7779 = vpop.f32.mrb[0].mxu0
        %v7780 = vadd.f32 0.0, %v7779
        %v7781 = vpop.f32.mrb[0].mxu0
        %v7782 = vpop.f32.mrb[0].mxu0
        %v7783 = vadd.f32 0.0, %v7782
        %v7784 = vpop.f32.mrb[0].mxu0
        %7785 = vmatprep.mubr.bf16.mxu0 0
        %7786 = vmatmul.mubr.bf16.gmra.mrb[0].mxu0 %v3004
        %v7787 = vpop.f32.mrb[0].mxu0
        %v7788 = vadd.f32 0.0, %v7787
        %v7789 = vpop.f32.mrb[0].mxu0
        %v7790 = vpop.f32.mrb[0].mxu0
        %v7791 = vadd.f32 0.0, %v7790
        %v7792 = vpop.f32.mrb[0].mxu0
        %7793 = vmatprep.mubr.bf16.mxu0 0
        %7794 = vmatmul.mubr.bf16.gmra.mrb[0].mxu0 %v3005
        %v7795 = vpop.f32.mrb[0].mxu0
        %v7796 = vadd.f32 0.0, %v7795
        %v7797 = vpop.f32.mrb[0].mxu0
        %v7798 = vpop.f32.mrb[0].mxu0
        %v7799 = vadd.f32 0.0, %v7798
        %v7800 = vpop.f32.mrb[0].mxu0
        %7801 = vmatprep.mubr.bf16.mxu0 0
        %7802 = vmatmul.mubr.bf16.gmra.mrb[0].mxu0 %v3006
        %v7803 = vpop.f32.mrb[0].mxu0
        %v7804 = vadd.f32 0.0, %v7803
        %v7805 = vpop.f32.mrb[0].mxu0
        %v7806 = vpop.f32.mrb[0].mxu0
        %v7807 = vadd.f32 0.0, %v7806
        %v7808 = vpop.f32.mrb[0].mxu0
        %7809 = vmatprep.mubr.bf16.mxu0 0
        %7810 = vmatmul.mubr.bf16.gmra.mrb[0].mxu0 %v3007
        %v7811 = vpop.f32.mrb[0].mxu0
        %v7812 = vadd.f32 0.0, %v7811
        %v7813 = vpop.f32.mrb[0].mxu0
        %v7814 = vpop.f32.mrb[0].mxu0
        %v7815 = vadd.f32 0.0, %v7814
        %v7816 = vpop.f32.mrb[0].mxu0
        %7817 = vmatprep.mubr.bf16.mxu0 0
        %7818 = vmatmul.mubr.bf16.gmra.mrb[0].mxu0 %v3008
        %v7819 = vpop.f32.mrb[0].mxu0
        %v7820 = vadd.f32 0.0, %v7819
        %v7821 = vpop.f32.mrb[0].mxu0
        %v7822 = vpop.f32.mrb[0].mxu0
        %v7823 = vadd.f32 0.0, %v7822
        %v7824 = vpop.f32.mrb[0].mxu0
        %7825 = vmatprep.mubr.bf16.mxu0 0
        %7826 = vmatmul.mubr.bf16.gmra.mrb[0].mxu0 %v3009
        %v7827 = vpop.f32.mrb[0].mxu0
        %v7828 = vadd.f32 0.0, %v7827
        %v7829 = vpop.f32.mrb[0].mxu0
        %v7830 = vpop.f32.mrb[0].mxu0
        %v7831 = vadd.f32 0.0, %v7830
        %v7832 = vpop.f32.mrb[0].mxu0
        %7833 = vmatprep.mubr.bf16.mxu0 0
        %7834 = vmatmul.mubr.bf16.gmra.mrb[0].mxu0 %v3010
        %v7835 = vpop.f32.mrb[0].mxu0
        %v7836 = vadd.f32 0.0, %v7835
        %v7837 = vpop.f32.mrb[0].mxu0
        %v7838 = vpop.f32.mrb[0].mxu0
        %v7839 = vadd.f32 0.0, %v7838
        %v7840 = vpop.f32.mrb[0].mxu0
        %7841 = vmatprep.mubr.bf16.mxu0 0
        %7842 = vmatmul.mubr.bf16.gmra.mrb[0].mxu0 %v3011
        %v7843 = vpop.f32.mrb[0].mxu0
        %v7844 = vadd.f32 0.0, %v7843
        %v7845 = vpop.f32.mrb[0].mxu0
        %v7846 = vpop.f32.mrb[0].mxu0
        %v7847 = vadd.f32 0.0, %v7846
        %v7848 = vpop.f32.mrb[0].mxu0
        %7849 = vmatprep.mubr.bf16.mxu0 0
        %7850 = vmatmul.mubr.bf16.gmra.mrb[0].mxu0 %v3012
        %v7851 = vpop.f32.mrb[0].mxu0
        %v7852 = vadd.f32 0.0, %v7851
        %v7853 = vpop.f32.mrb[0].mxu0
        %v7854 = vpop.f32.mrb[0].mxu0
        %v7855 = vadd.f32 0.0, %v7854
        %v7856 = vpop.f32.mrb[0].mxu0
        %7857 = vmatprep.mubr.bf16.mxu0 0
        %7858 = vmatmul.mubr.bf16.gmra.mrb[0].mxu0 %v3013
        %v7859 = vpop.f32.mrb[0].mxu0
        %v7860 = vadd.f32 0.0, %v7859
        %v7861 = vpop.f32.mrb[0].mxu0
        %v7862 = vpop.f32.mrb[0].mxu0
        %v7863 = vadd.f32 0.0, %v7862
        %v7864 = vpop.f32.mrb[0].mxu0
        %7865 = vmatprep.mubr.bf16.mxu0 0
        %7866 = vmatmul.mubr.bf16.gmra.mrb[0].mxu0 %v3014
        %v7867 = vpop.f32.mrb[0].mxu0
        %v7868 = vadd.f32 0.0, %v7867
        %v7869 = vpop.f32.mrb[0].mxu0
        %v7870 = vpop.f32.mrb[0].mxu0
        %v7871 = vadd.f32 0.0, %v7870
        %v7872 = vpop.f32.mrb[0].mxu0
        %7873 = vmatprep.mubr.bf16.mxu0 0
        %7874 = vmatmul.mubr.bf16.gmra.mrb[0].mxu0 %v3015
        %v7875 = vpop.f32.mrb[0].mxu0
        %v7876 = vadd.f32 0.0, %v7875
        %v7877 = vpop.f32.mrb[0].mxu0
        %v7878 = vpop.f32.mrb[0].mxu0
        %v7879 = vadd.f32 0.0, %v7878
        %v7880 = vpop.f32.mrb[0].mxu0
        %7881 = vmatprep.mubr.bf16.mxu0 0
        %7882 = vmatmul.mubr.bf16.gmra.mrb[0].mxu0 %v3016
        %v7883 = vpop.f32.mrb[0].mxu0
        %v7884 = vadd.f32 0.0, %v7883
        %v7885 = vpop.f32.mrb[0].mxu0
        %v7886 = vpop.f32.mrb[0].mxu0
        %v7887 = vadd.f32 0.0, %v7886
        %v7888 = vpop.f32.mrb[0].mxu0
        %7889 = vmatprep.mubr.bf16.mxu0 0
        %7890 = vmatmul.mubr.bf16.gmra.mrb[0].mxu0 %v3017
        %v7891 = vpop.f32.mrb[0].mxu0
        %v7892 = vadd.f32 0.0, %v7891
        %v7893 = vpop.f32.mrb[0].mxu0
        %v7894 = vpop.f32.mrb[0].mxu0
        %v7895 = vadd.f32 0.0, %v7894
        %v7896 = vpop.f32.mrb[0].mxu0
        %7897 = vmatprep.mubr.bf16.mxu0 0
        %7898 = vmatmul.mubr.bf16.gmra.mrb[0].mxu0 %v3018
        %v7899 = vpop.f32.mrb[0].mxu0
        %v7900 = vadd.f32 0.0, %v7899
        %v7901 = vpop.f32.mrb[0].mxu0
        %v7902 = vpop.f32.mrb[0].mxu0
        %v7903 = vadd.f32 0.0, %v7902
        %v7904 = vpop.f32.mrb[0].mxu0
        %7905 = vmatprep.mubr.bf16.mxu0 0
        %7906 = vmatmul.mubr.bf16.gmra.mrb[0].mxu0 %v3019
        %v7907 = vpop.f32.mrb[0].mxu0
        %v7908 = vadd.f32 0.0, %v7907
        %v7909 = vpop.f32.mrb[0].mxu0
        %v7910 = vpop.f32.mrb[0].mxu0
        %v7911 = vadd.f32 0.0, %v7910
        %v7912 = vpop.f32.mrb[0].mxu0
        %7913 = vmatprep.mubr.bf16.mxu0 0
        %7914 = vmatmul.mubr.bf16.gmra.mrb[0].mxu0 %v3020
        %v7915 = vpop.f32.mrb[0].mxu0
        %v7916 = vadd.f32 0.0, %v7915
        %v7917 = vpop.f32.mrb[0].mxu0
        %v7918 = vpop.f32.mrb[0].mxu0
        %v7919 = vadd.f32 0.0, %v7918
        %v7920 = vpop.f32.mrb[0].mxu0
        %7921 = vmatprep.mubr.bf16.mxu0 0
        %7922 = vmatmul.mubr.bf16.gmra.mrb[0].mxu0 %v3021
        %v7923 = vpop.f32.mrb[0].mxu0
        %v7924 = vadd.f32 0.0, %v7923
        %v7925 = vpop.f32.mrb[0].mxu0
        %v7926 = vpop.f32.mrb[0].mxu0
        %v7927 = vadd.f32 0.0, %v7926
        %v7928 = vpop.f32.mrb[0].mxu0
        %7929 = vmatprep.mubr.bf16.mxu0 0
        %7930 = vmatmul.mubr.bf16.gmra.mrb[0].mxu0 %v3022
        %v7931 = vpop.f32.mrb[0].mxu0
        %v7932 = vadd.f32 0.0, %v7931
        %v7933 = vpop.f32.mrb[0].mxu0
        %v7934 = vpop.f32.mrb[0].mxu0
        %v7935 = vadd.f32 0.0, %v7934
        %v7936 = vpop.f32.mrb[0].mxu0
        %7937 = vmatprep.mubr.bf16.mxu0 0
        %7938 = vmatmul.mubr.bf16.gmra.mrb[0].mxu0 %v3023
        %v7939 = vpop.f32.mrb[0].mxu0
        %v7940 = vadd.f32 0.0, %v7939
        %v7941 = vpop.f32.mrb[0].mxu0
        %v7942 = vpop.f32.mrb[0].mxu0
        %v7943 = vadd.f32 0.0, %v7942
        %v7944 = vpop.f32.mrb[0].mxu0
        %7945 = vmatprep.mubr.bf16.mxu0 0
        %7946 = vmatmul.mubr.bf16.gmra.mrb[0].mxu0 %v3024
        %v7947 = vpop.f32.mrb[0].mxu0
        %v7948 = vadd.f32 0.0, %v7947
        %v7949 = vpop.f32.mrb[0].mxu0
        %v7950 = vpop.f32.mrb[0].mxu0
        %v7951 = vadd.f32 0.0, %v7950
        %v7952 = vpop.f32.mrb[0].mxu0
        %7953 = vmatprep.mubr.bf16.mxu0 0
        %7954 = vmatmul.mubr.bf16.gmra.mrb[0].mxu0 %v3025
        %v7955 = vpop.f32.mrb[0].mxu0
        %v7956 = vadd.f32 0.0, %v7955
        %v7957 = vpop.f32.mrb[0].mxu0
        %v7958 = vpop.f32.mrb[0].mxu0
        %v7959 = vadd.f32 0.0, %v7958
        %v7960 = vpop.f32.mrb[0].mxu0
        %7961 = vmatprep.mubr.bf16.mxu0 0
        %7962 = vmatmul.mubr.bf16.gmra.mrb[0].mxu0 %v3026
        %v7963 = vpop.f32.mrb[0].mxu0
        %v7964 = vadd.f32 0.0, %v7963
        %v7965 = vpop.f32.mrb[0].mxu0
        %v7966 = vpop.f32.mrb[0].mxu0
        %v7967 = vadd.f32 0.0, %v7966
        %v7968 = vpop.f32.mrb[0].mxu0
        %7969 = vmatprep.mubr.bf16.mxu0 0
        %7970 = vmatmul.mubr.bf16.gmra.mrb[0].mxu0 %v3027
        %v7971 = vpop.f32.mrb[0].mxu0
        %v7972 = vadd.f32 0.0, %v7971
        %v7973 = vpop.f32.mrb[0].mxu0
        %v7974 = vpop.f32.mrb[0].mxu0
        %v7975 = vadd.f32 0.0, %v7974
        %v7976 = vpop.f32.mrb[0].mxu0
        %7977 = vmatprep.mubr.bf16.mxu0 0
        %7978 = vmatmul.mubr.bf16.gmra.mrb[0].mxu0 %v3028
        %v7979 = vpop.f32.mrb[0].mxu0
        %v7980 = vadd.f32 0.0, %v7979
        %v7981 = vpop.f32.mrb[0].mxu0
        %v7982 = vpop.f32.mrb[0].mxu0
        %v7983 = vadd.f32 0.0, %v7982
        %v7984 = vpop.f32.mrb[0].mxu0
        %7985 = vmatprep.mubr.bf16.mxu0 0
        %7986 = vmatmul.mubr.bf16.gmra.mrb[0].mxu0 %v3029
        %v7987 = vpop.f32.mrb[0].mxu0
        %v7988 = vadd.f32 0.0, %v7987
        %v7989 = vpop.f32.mrb[0].mxu0
        %v7990 = vpop.f32.mrb[0].mxu0
        %v7991 = vadd.f32 0.0, %v7990
        %v7992 = vpop.f32.mrb[0].mxu0
        %7993 = vmatprep.mubr.bf16.mxu0 0
        %7994 = vmatmul.mubr.bf16.gmra.mrb[0].mxu0 %v3030
        %v7995 = vpop.f32.mrb[0].mxu0
        %v7996 = vadd.f32 0.0, %v7995
        %v7997 = vpop.f32.mrb[0].mxu0
        %v7998 = vpop.f32.mrb[0].mxu0
        %v7999 = vadd.f32 0.0, %v7998
        %v8000 = vpop.f32.mrb[0].mxu0
        %8001 = vmatprep.mubr.bf16.mxu0 0
        %8002 = vmatmul.mubr.bf16.gmra.mrb[0].mxu0 %v3031
        %v8003 = vpop.f32.mrb[0].mxu0
        %v8004 = vadd.f32 0.0, %v8003
        %v8005 = vpop.f32.mrb[0].mxu0
        %v8006 = vpop.f32.mrb[0].mxu0
        %v8007 = vadd.f32 0.0, %v8006
        %v8008 = vpop.f32.mrb[0].mxu0
        %8009 = vmatprep.mubr.bf16.mxu0 0
        %8010 = vmatmul.mubr.bf16.gmra.mrb[0].mxu0 %v3032
        %v8011 = vpop.f32.mrb[0].mxu0
        %v8012 = vadd.f32 0.0, %v8011
        %v8013 = vpop.f32.mrb[0].mxu0
        %v8014 = vpop.f32.mrb[0].mxu0
        %v8015 = vadd.f32 0.0, %v8014
        %v8016 = vpop.f32.mrb[0].mxu0
        %8017 = vmatprep.mubr.bf16.mxu0 0
        %8018 = vmatmul.mubr.bf16.gmra.mrb[0].mxu0 %v3033
        %v8019 = vpop.f32.mrb[0].mxu0
        %v8020 = vadd.f32 0.0, %v8019
        %v8021 = vpop.f32.mrb[0].mxu0
        %v8022 = vpop.f32.mrb[0].mxu0
        %v8023 = vadd.f32 0.0, %v8022
        %v8024 = vpop.f32.mrb[0].mxu0
        %8025 = vmatprep.mubr.bf16.mxu0 0
        %8026 = vmatmul.mubr.bf16.gmra.mrb[0].mxu0 %v5161
        %v8027 = vpop.f32.mrb[0].mxu0
        %v8028 = vadd.f32 0.0, %v8027
        %v8029 = vpop.f32.mrb[0].mxu0
        %v8030 = vpop.f32.mrb[0].mxu0
        %v8031 = vadd.f32 0.0, %v8030
        %v8032 = vpop.f32.mrb[0].mxu0
        %8033 = vmatprep.mubr.bf16.mxu0 0
        %8034 = vmatmul.mubr.bf16.gmra.mrb[0].mxu0 %v5162
        %v8035 = vpop.f32.mrb[0].mxu0
        %v8036 = vadd.f32 0.0, %v8035
        %v8037 = vpop.f32.mrb[0].mxu0
        %v8038 = vpop.f32.mrb[0].mxu0
        %v8039 = vadd.f32 0.0, %v8038
        %v8040 = vpop.f32.mrb[0].mxu0
        %8041 = vmatprep.mubr.bf16.mxu0 0
        %8042 = vmatmul.mubr.bf16.gmra.mrb[0].mxu0 %v7461
        %v8043 = vpop.f32.mrb[0].mxu0
        %v8044 = vadd.f32 0.0, %v8043
        %v8045 = vpop.f32.mrb[0].mxu0
        %v8046 = vpop.f32.mrb[0].mxu0
        %v8047 = vadd.f32 0.0, %v8046
        %v8048 = vpop.f32.mrb[0].mxu0
        %8049 = vmatprep.mubr.bf16.mxu0 0
        %8050 = vmatmul.mubr.bf16.gmra.mrb[0].mxu0 %v7462
        %v8051 = vpop.f32.mrb[0].mxu0
        %v8052 = vadd.f32 0.0, %v8051
        %v8053 = vpop.f32.mrb[0].mxu0
        %v8054 = vpop.f32.mrb[0].mxu0
        %v8055 = vadd.f32 0.0, %v8054
        %v8056 = vpop.f32.mrb[0].mxu0
        %8057 = vdwg.mxu0
        %v8058 = vadd.f32 %v7308, %v7548
        %v8059 = vadd.f32 %v7309, %v7551
        %v8060 = vadd.f32 %v7310, %v7556
        %v8061 = vadd.f32 %v7311, %v7559
        %v8062 = vadd.f32 %v7312, %v7564
        %v8063 = vadd.f32 %v7313, %v7567
        %v8064 = vadd.f32 %v7314, %v7572
        %v8065 = vadd.f32 %v7315, %v7575
        %v8066 = vadd.f32 %v7316, %v7580
        %v8067 = vadd.f32 %v7317, %v7583
        %v8068 = vadd.f32 %v7318, %v7588
        %v8069 = vadd.f32 %v7319, %v7591
        %v8070 = vadd.f32 %v7320, %v7596
        %v8071 = vadd.f32 %v7321, %v7599
        %v8072 = vadd.f32 %v7322, %v7604
        %v8073 = vadd.f32 %v7323, %v7607
        %v8074 = vadd.f32 %v7324, %v7612
        %v8075 = vadd.f32 %v7325, %v7615
        %v8076 = vadd.f32 %v7326, %v7620
        %v8077 = vadd.f32 %v7327, %v7623
        %v8078 = vadd.f32 %v7328, %v7628
        %v8079 = vadd.f32 %v7329, %v7631
        %v8080 = vadd.f32 %v7330, %v7636
        %v8081 = vadd.f32 %v7331, %v7639
        %v8082 = vadd.f32 %v7332, %v7644
        %v8083 = vadd.f32 %v7333, %v7647
        %v8084 = vadd.f32 %v7334, %v7652
        %v8085 = vadd.f32 %v7335, %v7655
        %v8086 = vadd.f32 %v7336, %v7660
        %v8087 = vadd.f32 %v7337, %v7663
        %v8088 = vadd.f32 %v7338, %v7668
        %v8089 = vadd.f32 %v7339, %v7671
        %v8090 = vadd.f32 %v7340, %v7676
        %v8091 = vadd.f32 %v7341, %v7679
        %v8092 = vadd.f32 %v7342, %v7684
        %v8093 = vadd.f32 %v7343, %v7687
        %v8094 = vadd.f32 %v7344, %v7692
        %v8095 = vadd.f32 %v7345, %v7695
        %v8096 = vadd.f32 %v7346, %v7700
        %v8097 = vadd.f32 %v7347, %v7703
        %v8098 = vadd.f32 %v7348, %v7708
        %v8099 = vadd.f32 %v7349, %v7711
        %v8100 = vadd.f32 %v7350, %v7716
        %v8101 = vadd.f32 %v7351, %v7719
        %v8102 = vadd.f32 %v7352, %v7724
        %v8103 = vadd.f32 %v7353, %v7727
        %v8104 = vadd.f32 %v7354, %v7732
        %v8105 = vadd.f32 %v7355, %v7735
        %v8106 = vadd.f32 %v7356, %v7740
        %v8107 = vadd.f32 %v7357, %v7743
        %v8108 = vadd.f32 %v7358, %v7748
        %v8109 = vadd.f32 %v7359, %v7751
        %v8110 = vadd.f32 %v7360, %v7756
        %v8111 = vadd.f32 %v7361, %v7759
        %v8112 = vadd.f32 %v7362, %v7764
        %v8113 = vadd.f32 %v7363, %v7767
        %v8114 = vadd.f32 %v7364, %v7772
        %v8115 = vadd.f32 %v7365, %v7775
        %v8116 = vadd.f32 %v7366, %v7780
        %v8117 = vadd.f32 %v7367, %v7783
        %v8118 = vadd.f32 %v7368, %v7788
        %v8119 = vadd.f32 %v7369, %v7791
        %v8120 = vadd.f32 %v7370, %v7796
        %v8121 = vadd.f32 %v7371, %v7799
        %v8122 = vadd.f32 %v7372, %v7804
        %v8123 = vadd.f32 %v7373, %v7807
        %v8124 = vadd.f32 %v7374, %v7812
        %v8125 = vadd.f32 %v7375, %v7815
        %v8126 = vadd.f32 %v7376, %v7820
        %v8127 = vadd.f32 %v7377, %v7823
        %v8128 = vadd.f32 %v7378, %v7828
        %v8129 = vadd.f32 %v7379, %v7831
        %v8130 = vadd.f32 %v7380, %v7836
        %v8131 = vadd.f32 %v7381, %v7839
        %v8132 = vadd.f32 %v7382, %v7844
        %v8133 = vadd.f32 %v7383, %v7847
        %v8134 = vadd.f32 %v7384, %v7852
        %v8135 = vadd.f32 %v7385, %v7855
        %v8136 = vadd.f32 %v7386, %v7860
        %v8137 = vadd.f32 %v7387, %v7863
        %v8138 = vadd.f32 %v7388, %v7868
        %v8139 = vadd.f32 %v7389, %v7871
        %v8140 = vadd.f32 %v7390, %v7876
        %v8141 = vadd.f32 %v7391, %v7879
        %v8142 = vadd.f32 %v7392, %v7884
        %v8143 = vadd.f32 %v7393, %v7887
        %v8144 = vadd.f32 %v7394, %v7892
        %v8145 = vadd.f32 %v7395, %v7895
        %v8146 = vadd.f32 %v7396, %v7900
        %v8147 = vadd.f32 %v7397, %v7903
        %v8148 = vadd.f32 %v7398, %v7908
        %v8149 = vadd.f32 %v7399, %v7911
        %v8150 = vadd.f32 %v7400, %v7916
        %v8151 = vadd.f32 %v7401, %v7919
        %v8152 = vadd.f32 %v7402, %v7924
        %v8153 = vadd.f32 %v7403, %v7927
        %v8154 = vadd.f32 %v7404, %v7932
        %v8155 = vadd.f32 %v7405, %v7935
        %v8156 = vadd.f32 %v7406, %v7940
        %v8157 = vadd.f32 %v7407, %v7943
        %v8158 = vadd.f32 %v7408, %v7948
        %v8159 = vadd.f32 %v7409, %v7951
        %v8160 = vadd.f32 %v7410, %v7956
        %v8161 = vadd.f32 %v7411, %v7959
        %v8162 = vadd.f32 %v7412, %v7964
        %v8163 = vadd.f32 %v7413, %v7967
        %v8164 = vadd.f32 %v7414, %v7972
        %v8165 = vadd.f32 %v7415, %v7975
        %v8166 = vadd.f32 %v7416, %v7980
        %v8167 = vadd.f32 %v7417, %v7983
        %v8168 = vadd.f32 %v7418, %v7988
        %v8169 = vadd.f32 %v7419, %v7991
        %v8170 = vadd.f32 %v7420, %v7996
        %v8171 = vadd.f32 %v7421, %v7999
        %v8172 = vadd.f32 %v7422, %v8004
        %v8173 = vadd.f32 %v7423, %v8007
        %v8174 = vadd.f32 %v7424, %v8012
        %v8175 = vadd.f32 %v7425, %v8015
        %v8176 = vadd.f32 %v7426, %v8020
        %v8177 = vadd.f32 %v7427, %v8023
        %v8178 = vadd.f32 %v7428, %v8028
        %v8179 = vadd.f32 %v7429, %v8031
        %v8180 = vadd.f32 %v7430, %v8036
        %v8181 = vadd.f32 %v7431, %v8039
        %v8182 = vadd.f32 %v7432, %v8044
        %v8183 = vadd.f32 %v7433, %v8047
        %v8184 = vadd.f32 %v7434, %v8052
        %v8185 = vadd.f32 %v7435, %v8055
        %v8187 = vshrl.u32 %v416, 16
        %v8189 = vrot.slane %v8187, 4
        %v8190 = vshll.u32 %v416, 16
        %v8192 = vrot.slane %v8190, 5
        %v8193 = vor.u32 %v8189, %v8192
        %v8194 = vrot.slane %v8193, 4
        %v8196 = vshll.u32 %v417, 16
        %v8198 = vrot.slane %v8196, 5
        %v8199 = vsel %vm439, %v8194, %v8198
        %v8200 = vshrl.u32 %v417, 16
        %v8202 = vrot.slane %v8200, 4
        %v8203 = vor.u32 %v8202, %v8198
        %v8204 = vrot.slane %v8203, 4
        %v8206 = vshll.u32 %v418, 16
        %v8208 = vrot.slane %v8206, 5
        %v8209 = vsel %vm439, %v8204, %v8208
        %v8210 = vshrl.u32 %v418, 16
        %v8212 = vrot.slane %v8210, 4
        %v8213 = vor.u32 %v8212, %v8208
        %v8214 = vrot.slane %v8213, 4
        %v8216 = vshll.u32 %v419, 16
        %v8218 = vrot.slane %v8216, 5
        %v8219 = vsel %vm439, %v8214, %v8218
        %v8220 = vshrl.u32 %v419, 16
        %v8222 = vrot.slane %v8220, 4
        %v8223 = vor.u32 %v8222, %v8218
        %v8224 = vrot.slane %v8223, 4
        %v8226 = vshll.u32 %v420, 16
        %v8228 = vrot.slane %v8226, 5
        %v8229 = vsel %vm439, %v8224, %v8228
        %s8230 = scalar_lea.vmem %s1, 448
        %v8231 = vld [vmem:[%s8230] sm:$0xf]
        %v8232 = vld [vmem:[%s8230 + $0x4] sm:$0xf]
        %v8233 = vld [vmem:[%s8230 + $0x8] sm:$0xf]
        %v8234 = vld [vmem:[%s8230 + $0xc] sm:$0xf]
        %v8235 = vld [vmem:[%s8230 + $0x10] sm:$0xf]
        %v8236 = vld [vmem:[%s8230 + $0x14] sm:$0xf]
        %v8237 = vld [vmem:[%s8230 + $0x18] sm:$0xf]
        %v8238 = vld [vmem:[%s8230 + $0x1c] sm:$0xf]
        %v8239 = vld [vmem:[%s8230 + $0x20] sm:$0xf]
        %v8240 = vld [vmem:[%s8230 + $0x24] sm:$0xf]
        %v8241 = vld [vmem:[%s8230 + $0x28] sm:$0xf]
        %v8242 = vld [vmem:[%s8230 + $0x2c] sm:$0xf]
        %v8243 = vld [vmem:[%s8230 + $0x30] sm:$0xf]
        %v8244 = vld [vmem:[%s8230 + $0x34] sm:$0xf]
        %v8245 = vld [vmem:[%s8230 + $0x38] sm:$0xf]
        %v8246 = vld [vmem:[%s8230 + $0x3c] sm:$0xf]
        %v8247 = vunpack.c.l.b16 %v8199
        %v8248 = vunpack.c.l.b16 %v8209
        %v8249 = vunpack.c.l.b16 %v8219
        %v8250 = vunpack.c.l.b16 %v8229
        %v8251 = vpack.c.b16 %v8248, %v8247
        %v8252 = vpack.c.b16 %v8250, %v8249
        %v8271 = vunpack.c.l.b16 %v8231
        %v8272 = vunpack.c.l.b16 %v8232
        %v8273 = vunpack.c.l.b16 %v8233
        %v8274 = vunpack.c.l.b16 %v8234
        %v8275 = vunpack.c.l.b16 %v8235
        %v8276 = vunpack.c.l.b16 %v8236
        %v8277 = vunpack.c.l.b16 %v8237
        %v8278 = vunpack.c.l.b16 %v8238
        %v8279 = vunpack.c.l.b16 %v8239
        %v8280 = vunpack.c.l.b16 %v8240
        %v8281 = vunpack.c.l.b16 %v8241
        %v8282 = vunpack.c.l.b16 %v8242
        %v8283 = vunpack.c.l.b16 %v8243
        %v8284 = vunpack.c.l.b16 %v8244
        %v8285 = vunpack.c.l.b16 %v8245
        %v8286 = vunpack.c.l.b16 %v8246
        %v8287 = vpack.c.b16 %v8272, %v8271
        %v8288 = vpack.c.b16 %v8274, %v8273
        %v8289 = vpack.c.b16 %v8276, %v8275
        %v8290 = vpack.c.b16 %v8278, %v8277
        %v8291 = vpack.c.b16 %v8280, %v8279
        %v8292 = vpack.c.b16 %v8282, %v8281
        %v8293 = vpack.c.b16 %v8284, %v8283
        %v8294 = vpack.c.b16 %v8286, %v8285
        %8303 = vmatprep.subr.bf16.mxu0 0
        %8304 = vmatpush1.bf16.msra.mxu0 %v8287
        %8305 = vmatprep.subr.bf16.mxu0 0
        %8306 = vmatpush1.bf16.msra.mxu0 %v8288
        %8307 = vmatprep.subr.bf16.mxu0 0
        %8308 = vmatpush1.bf16.msra.mxu0 %v8289
        %8309 = vmatprep.subr.bf16.mxu0 0
        %8310 = vmatpush1.bf16.msra.mxu0 %v8290
        %8311 = vmatprep.subr.bf16.mxu0 0
        %8312 = vmatpush1.bf16.msra.mxu0 %v8291
        %8313 = vmatprep.subr.bf16.mxu0 0
        %8314 = vmatpush1.bf16.msra.mxu0 %v8292
        %8315 = vmatprep.subr.bf16.mxu0 0
        %8316 = vmatpush1.bf16.msra.mxu0 %v8293
        %8317 = vmatprep.subr.bf16.mxu0 0
        %8318 = vmatpush1.bf16.msra.mxu0 %v8294
        %8319 = vmatprep.subr.bf16.mxu0 0
        %8320 = vmatpush1.bf16.msra.mxu0 0
        %8321 = vmatprep.subr.bf16.mxu0 0
        %8322 = vmatpush1.bf16.msra.mxu0 0
        %8323 = vmatprep.subr.bf16.mxu0 0
        %8324 = vmatpush1.bf16.msra.mxu0 0
        %8325 = vmatprep.subr.bf16.mxu0 0
        %8326 = vmatpush1.bf16.msra.mxu0 0
        %8327 = vmatprep.subr.bf16.mxu0 0
        %8328 = vmatpush1.bf16.msra.mxu0 0
        %8329 = vmatprep.subr.bf16.mxu0 0
        %8330 = vmatpush1.bf16.msra.mxu0 0
        %8331 = vmatprep.subr.bf16.mxu0 0
        %8332 = vmatpush1.bf16.msra.mxu0 0
        %8333 = vmatprep.subr.bf16.mxu0 0
        %8334 = vmatpush1.bf16.msra.mxu0 0
        %8335 = vmatprep.mubr.bf16.mxu0 0
        %8336 = vmatmul.mubr.bf16.gmra.mrb[0].mxu0 %v1997
        %v8337 = vpop.f32.mrb[0].mxu0
        %v8338 = vadd.f32 0.0, %v8337
        %v8339 = vpop.f32.mrb[0].mxu0
        %v8340 = vpop.f32.mrb[0].mxu0
        %v8341 = vadd.f32 0.0, %v8340
        %v8342 = vpop.f32.mrb[0].mxu0
        %8343 = vmatprep.mubr.bf16.mxu0 0
        %8344 = vmatmul.mubr.bf16.gmra.mrb[0].mxu0 %v1998
        %v8345 = vpop.f32.mrb[0].mxu0
        %v8346 = vadd.f32 0.0, %v8345
        %v8347 = vpop.f32.mrb[0].mxu0
        %v8348 = vpop.f32.mrb[0].mxu0
        %v8349 = vadd.f32 0.0, %v8348
        %v8350 = vpop.f32.mrb[0].mxu0
        %8351 = vmatprep.mubr.bf16.mxu0 0
        %8352 = vmatmul.mubr.bf16.gmra.mrb[0].mxu0 %v1999
        %v8353 = vpop.f32.mrb[0].mxu0
        %v8354 = vadd.f32 0.0, %v8353
        %v8355 = vpop.f32.mrb[0].mxu0
        %v8356 = vpop.f32.mrb[0].mxu0
        %v8357 = vadd.f32 0.0, %v8356
        %v8358 = vpop.f32.mrb[0].mxu0
        %8359 = vmatprep.mubr.bf16.mxu0 0
        %8360 = vmatmul.mubr.bf16.gmra.mrb[0].mxu0 %v2000
        %v8361 = vpop.f32.mrb[0].mxu0
        %v8362 = vadd.f32 0.0, %v8361
        %v8363 = vpop.f32.mrb[0].mxu0
        %v8364 = vpop.f32.mrb[0].mxu0
        %v8365 = vadd.f32 0.0, %v8364
        %v8366 = vpop.f32.mrb[0].mxu0
        %8367 = vmatprep.mubr.bf16.mxu0 0
        %8368 = vmatmul.mubr.bf16.gmra.mrb[0].mxu0 %v2001
        %v8369 = vpop.f32.mrb[0].mxu0
        %v8370 = vadd.f32 0.0, %v8369
        %v8371 = vpop.f32.mrb[0].mxu0
        %v8372 = vpop.f32.mrb[0].mxu0
        %v8373 = vadd.f32 0.0, %v8372
        %v8374 = vpop.f32.mrb[0].mxu0
        %8375 = vmatprep.mubr.bf16.mxu0 0
        %8376 = vmatmul.mubr.bf16.gmra.mrb[0].mxu0 %v2002
        %v8377 = vpop.f32.mrb[0].mxu0
        %v8378 = vadd.f32 0.0, %v8377
        %v8379 = vpop.f32.mrb[0].mxu0
        %v8380 = vpop.f32.mrb[0].mxu0
        %v8381 = vadd.f32 0.0, %v8380
        %v8382 = vpop.f32.mrb[0].mxu0
        %8383 = vmatprep.mubr.bf16.mxu0 0
        %8384 = vmatmul.mubr.bf16.gmra.mrb[0].mxu0 %v2003
        %v8385 = vpop.f32.mrb[0].mxu0
        %v8386 = vadd.f32 0.0, %v8385
        %v8387 = vpop.f32.mrb[0].mxu0
        %v8388 = vpop.f32.mrb[0].mxu0
        %v8389 = vadd.f32 0.0, %v8388
        %v8390 = vpop.f32.mrb[0].mxu0
        %8391 = vmatprep.mubr.bf16.mxu0 0
        %8392 = vmatmul.mubr.bf16.gmra.mrb[0].mxu0 %v2004
        %v8393 = vpop.f32.mrb[0].mxu0
        %v8394 = vadd.f32 0.0, %v8393
        %v8395 = vpop.f32.mrb[0].mxu0
        %v8396 = vpop.f32.mrb[0].mxu0
        %v8397 = vadd.f32 0.0, %v8396
        %v8398 = vpop.f32.mrb[0].mxu0
        %8399 = vmatprep.mubr.bf16.mxu0 0
        %8400 = vmatmul.mubr.bf16.gmra.mrb[0].mxu0 %v2005
        %v8401 = vpop.f32.mrb[0].mxu0
        %v8402 = vadd.f32 0.0, %v8401
        %v8403 = vpop.f32.mrb[0].mxu0
        %v8404 = vpop.f32.mrb[0].mxu0
        %v8405 = vadd.f32 0.0, %v8404
        %v8406 = vpop.f32.mrb[0].mxu0
        %8407 = vmatprep.mubr.bf16.mxu0 0
        %8408 = vmatmul.mubr.bf16.gmra.mrb[0].mxu0 %v2006
        %v8409 = vpop.f32.mrb[0].mxu0
        %v8410 = vadd.f32 0.0, %v8409
        %v8411 = vpop.f32.mrb[0].mxu0
        %v8412 = vpop.f32.mrb[0].mxu0
        %v8413 = vadd.f32 0.0, %v8412
        %v8414 = vpop.f32.mrb[0].mxu0
        %8415 = vmatprep.mubr.bf16.mxu0 0
        %8416 = vmatmul.mubr.bf16.gmra.mrb[0].mxu0 %v2007
        %v8417 = vpop.f32.mrb[0].mxu0
        %v8418 = vadd.f32 0.0, %v8417
        %v8419 = vpop.f32.mrb[0].mxu0
        %v8420 = vpop.f32.mrb[0].mxu0
        %v8421 = vadd.f32 0.0, %v8420
        %v8422 = vpop.f32.mrb[0].mxu0
        %8423 = vmatprep.mubr.bf16.mxu0 0
        %8424 = vmatmul.mubr.bf16.gmra.mrb[0].mxu0 %v2008
        %v8425 = vpop.f32.mrb[0].mxu0
        %v8426 = vadd.f32 0.0, %v8425
        %v8427 = vpop.f32.mrb[0].mxu0
        %v8428 = vpop.f32.mrb[0].mxu0
        %v8429 = vadd.f32 0.0, %v8428
        %v8430 = vpop.f32.mrb[0].mxu0
        %8431 = vmatprep.mubr.bf16.mxu0 0
        %8432 = vmatmul.mubr.bf16.gmra.mrb[0].mxu0 %v2009
        %v8433 = vpop.f32.mrb[0].mxu0
        %v8434 = vadd.f32 0.0, %v8433
        %v8435 = vpop.f32.mrb[0].mxu0
        %v8436 = vpop.f32.mrb[0].mxu0
        %v8437 = vadd.f32 0.0, %v8436
        %v8438 = vpop.f32.mrb[0].mxu0
        %8439 = vmatprep.mubr.bf16.mxu0 0
        %8440 = vmatmul.mubr.bf16.gmra.mrb[0].mxu0 %v2010
        %v8441 = vpop.f32.mrb[0].mxu0
        %v8442 = vadd.f32 0.0, %v8441
        %v8443 = vpop.f32.mrb[0].mxu0
        %v8444 = vpop.f32.mrb[0].mxu0
        %v8445 = vadd.f32 0.0, %v8444
        %v8446 = vpop.f32.mrb[0].mxu0
        %8447 = vmatprep.mubr.bf16.mxu0 0
        %8448 = vmatmul.mubr.bf16.gmra.mrb[0].mxu0 %v2011
        %v8449 = vpop.f32.mrb[0].mxu0
        %v8450 = vadd.f32 0.0, %v8449
        %v8451 = vpop.f32.mrb[0].mxu0
        %v8452 = vpop.f32.mrb[0].mxu0
        %v8453 = vadd.f32 0.0, %v8452
        %v8454 = vpop.f32.mrb[0].mxu0
        %8455 = vmatprep.mubr.bf16.mxu0 0
        %8456 = vmatmul.mubr.bf16.gmra.mrb[0].mxu0 %v2012
        %v8457 = vpop.f32.mrb[0].mxu0
        %v8458 = vadd.f32 0.0, %v8457
        %v8459 = vpop.f32.mrb[0].mxu0
        %v8460 = vpop.f32.mrb[0].mxu0
        %v8461 = vadd.f32 0.0, %v8460
        %v8462 = vpop.f32.mrb[0].mxu0
        %8463 = vmatprep.mubr.bf16.mxu0 0
        %8464 = vmatmul.mubr.bf16.gmra.mrb[0].mxu0 %v2013
        %v8465 = vpop.f32.mrb[0].mxu0
        %v8466 = vadd.f32 0.0, %v8465
        %v8467 = vpop.f32.mrb[0].mxu0
        %v8468 = vpop.f32.mrb[0].mxu0
        %v8469 = vadd.f32 0.0, %v8468
        %v8470 = vpop.f32.mrb[0].mxu0
        %8471 = vmatprep.mubr.bf16.mxu0 0
        %8472 = vmatmul.mubr.bf16.gmra.mrb[0].mxu0 %v2014
        %v8473 = vpop.f32.mrb[0].mxu0
        %v8474 = vadd.f32 0.0, %v8473
        %v8475 = vpop.f32.mrb[0].mxu0
        %v8476 = vpop.f32.mrb[0].mxu0
        %v8477 = vadd.f32 0.0, %v8476
        %v8478 = vpop.f32.mrb[0].mxu0
        %8479 = vmatprep.mubr.bf16.mxu0 0
        %8480 = vmatmul.mubr.bf16.gmra.mrb[0].mxu0 %v2015
        %v8481 = vpop.f32.mrb[0].mxu0
        %v8482 = vadd.f32 0.0, %v8481
        %v8483 = vpop.f32.mrb[0].mxu0
        %v8484 = vpop.f32.mrb[0].mxu0
        %v8485 = vadd.f32 0.0, %v8484
        %v8486 = vpop.f32.mrb[0].mxu0
        %8487 = vmatprep.mubr.bf16.mxu0 0
        %8488 = vmatmul.mubr.bf16.gmra.mrb[0].mxu0 %v2016
        %v8489 = vpop.f32.mrb[0].mxu0
        %v8490 = vadd.f32 0.0, %v8489
        %v8491 = vpop.f32.mrb[0].mxu0
        %v8492 = vpop.f32.mrb[0].mxu0
        %v8493 = vadd.f32 0.0, %v8492
        %v8494 = vpop.f32.mrb[0].mxu0
        %8495 = vmatprep.mubr.bf16.mxu0 0
        %8496 = vmatmul.mubr.bf16.gmra.mrb[0].mxu0 %v2017
        %v8497 = vpop.f32.mrb[0].mxu0
        %v8498 = vadd.f32 0.0, %v8497
        %v8499 = vpop.f32.mrb[0].mxu0
        %v8500 = vpop.f32.mrb[0].mxu0
        %v8501 = vadd.f32 0.0, %v8500
        %v8502 = vpop.f32.mrb[0].mxu0
        %8503 = vmatprep.mubr.bf16.mxu0 0
        %8504 = vmatmul.mubr.bf16.gmra.mrb[0].mxu0 %v2018
        %v8505 = vpop.f32.mrb[0].mxu0
        %v8506 = vadd.f32 0.0, %v8505
        %v8507 = vpop.f32.mrb[0].mxu0
        %v8508 = vpop.f32.mrb[0].mxu0
        %v8509 = vadd.f32 0.0, %v8508
        %v8510 = vpop.f32.mrb[0].mxu0
        %8511 = vmatprep.mubr.bf16.mxu0 0
        %8512 = vmatmul.mubr.bf16.gmra.mrb[0].mxu0 %v2019
        %v8513 = vpop.f32.mrb[0].mxu0
        %v8514 = vadd.f32 0.0, %v8513
        %v8515 = vpop.f32.mrb[0].mxu0
        %v8516 = vpop.f32.mrb[0].mxu0
        %v8517 = vadd.f32 0.0, %v8516
        %v8518 = vpop.f32.mrb[0].mxu0
        %8519 = vmatprep.mubr.bf16.mxu0 0
        %8520 = vmatmul.mubr.bf16.gmra.mrb[0].mxu0 %v2020
        %v8521 = vpop.f32.mrb[0].mxu0
        %v8522 = vadd.f32 0.0, %v8521
        %v8523 = vpop.f32.mrb[0].mxu0
        %v8524 = vpop.f32.mrb[0].mxu0
        %v8525 = vadd.f32 0.0, %v8524
        %v8526 = vpop.f32.mrb[0].mxu0
        %8527 = vmatprep.mubr.bf16.mxu0 0
        %8528 = vmatmul.mubr.bf16.gmra.mrb[0].mxu0 %v2021
        %v8529 = vpop.f32.mrb[0].mxu0
        %v8530 = vadd.f32 0.0, %v8529
        %v8531 = vpop.f32.mrb[0].mxu0
        %v8532 = vpop.f32.mrb[0].mxu0
        %v8533 = vadd.f32 0.0, %v8532
        %v8534 = vpop.f32.mrb[0].mxu0
        %8535 = vmatprep.mubr.bf16.mxu0 0
        %8536 = vmatmul.mubr.bf16.gmra.mrb[0].mxu0 %v2022
        %v8537 = vpop.f32.mrb[0].mxu0
        %v8538 = vadd.f32 0.0, %v8537
        %v8539 = vpop.f32.mrb[0].mxu0
        %v8540 = vpop.f32.mrb[0].mxu0
        %v8541 = vadd.f32 0.0, %v8540
        %v8542 = vpop.f32.mrb[0].mxu0
        %8543 = vmatprep.mubr.bf16.mxu0 0
        %8544 = vmatmul.mubr.bf16.gmra.mrb[0].mxu0 %v2023
        %v8545 = vpop.f32.mrb[0].mxu0
        %v8546 = vadd.f32 0.0, %v8545
        %v8547 = vpop.f32.mrb[0].mxu0
        %v8548 = vpop.f32.mrb[0].mxu0
        %v8549 = vadd.f32 0.0, %v8548
        %v8550 = vpop.f32.mrb[0].mxu0
        %8551 = vmatprep.mubr.bf16.mxu0 0
        %8552 = vmatmul.mubr.bf16.gmra.mrb[0].mxu0 %v2024
        %v8553 = vpop.f32.mrb[0].mxu0
        %v8554 = vadd.f32 0.0, %v8553
        %v8555 = vpop.f32.mrb[0].mxu0
        %v8556 = vpop.f32.mrb[0].mxu0
        %v8557 = vadd.f32 0.0, %v8556
        %v8558 = vpop.f32.mrb[0].mxu0
        %8559 = vmatprep.mubr.bf16.mxu0 0
        %8560 = vmatmul.mubr.bf16.gmra.mrb[0].mxu0 %v2025
        %v8561 = vpop.f32.mrb[0].mxu0
        %v8562 = vadd.f32 0.0, %v8561
        %v8563 = vpop.f32.mrb[0].mxu0
        %v8564 = vpop.f32.mrb[0].mxu0
        %v8565 = vadd.f32 0.0, %v8564
        %v8566 = vpop.f32.mrb[0].mxu0
        %8567 = vmatprep.mubr.bf16.mxu0 0
        %8568 = vmatmul.mubr.bf16.gmra.mrb[0].mxu0 %v2026
        %v8569 = vpop.f32.mrb[0].mxu0
        %v8570 = vadd.f32 0.0, %v8569
        %v8571 = vpop.f32.mrb[0].mxu0
        %v8572 = vpop.f32.mrb[0].mxu0
        %v8573 = vadd.f32 0.0, %v8572
        %v8574 = vpop.f32.mrb[0].mxu0
        %8575 = vmatprep.mubr.bf16.mxu0 0
        %8576 = vmatmul.mubr.bf16.gmra.mrb[0].mxu0 %v2027
        %v8577 = vpop.f32.mrb[0].mxu0
        %v8578 = vadd.f32 0.0, %v8577
        %v8579 = vpop.f32.mrb[0].mxu0
        %v8580 = vpop.f32.mrb[0].mxu0
        %v8581 = vadd.f32 0.0, %v8580
        %v8582 = vpop.f32.mrb[0].mxu0
        %8583 = vmatprep.mubr.bf16.mxu0 0
        %8584 = vmatmul.mubr.bf16.gmra.mrb[0].mxu0 %v2028
        %v8585 = vpop.f32.mrb[0].mxu0
        %v8586 = vadd.f32 0.0, %v8585
        %v8587 = vpop.f32.mrb[0].mxu0
        %v8588 = vpop.f32.mrb[0].mxu0
        %v8589 = vadd.f32 0.0, %v8588
        %v8590 = vpop.f32.mrb[0].mxu0
        %8591 = vmatprep.mubr.bf16.mxu0 0
        %8592 = vmatmul.mubr.bf16.gmra.mrb[0].mxu0 %v2029
        %v8593 = vpop.f32.mrb[0].mxu0
        %v8594 = vadd.f32 0.0, %v8593
        %v8595 = vpop.f32.mrb[0].mxu0
        %v8596 = vpop.f32.mrb[0].mxu0
        %v8597 = vadd.f32 0.0, %v8596
        %v8598 = vpop.f32.mrb[0].mxu0
        %8599 = vmatprep.mubr.bf16.mxu0 0
        %8600 = vmatmul.mubr.bf16.gmra.mrb[0].mxu0 %v2030
        %v8601 = vpop.f32.mrb[0].mxu0
        %v8602 = vadd.f32 0.0, %v8601
        %v8603 = vpop.f32.mrb[0].mxu0
        %v8604 = vpop.f32.mrb[0].mxu0
        %v8605 = vadd.f32 0.0, %v8604
        %v8606 = vpop.f32.mrb[0].mxu0
        %8607 = vmatprep.mubr.bf16.mxu0 0
        %8608 = vmatmul.mubr.bf16.gmra.mrb[0].mxu0 %v2031
        %v8609 = vpop.f32.mrb[0].mxu0
        %v8610 = vadd.f32 0.0, %v8609
        %v8611 = vpop.f32.mrb[0].mxu0
        %v8612 = vpop.f32.mrb[0].mxu0
        %v8613 = vadd.f32 0.0, %v8612
        %v8614 = vpop.f32.mrb[0].mxu0
        %8615 = vmatprep.mubr.bf16.mxu0 0
        %8616 = vmatmul.mubr.bf16.gmra.mrb[0].mxu0 %v2032
        %v8617 = vpop.f32.mrb[0].mxu0
        %v8618 = vadd.f32 0.0, %v8617
        %v8619 = vpop.f32.mrb[0].mxu0
        %v8620 = vpop.f32.mrb[0].mxu0
        %v8621 = vadd.f32 0.0, %v8620
        %v8622 = vpop.f32.mrb[0].mxu0
        %8623 = vmatprep.mubr.bf16.mxu0 0
        %8624 = vmatmul.mubr.bf16.gmra.mrb[0].mxu0 %v2033
        %v8625 = vpop.f32.mrb[0].mxu0
        %v8626 = vadd.f32 0.0, %v8625
        %v8627 = vpop.f32.mrb[0].mxu0
        %v8628 = vpop.f32.mrb[0].mxu0
        %v8629 = vadd.f32 0.0, %v8628
        %v8630 = vpop.f32.mrb[0].mxu0
        %8631 = vmatprep.mubr.bf16.mxu0 0
        %8632 = vmatmul.mubr.bf16.gmra.mrb[0].mxu0 %v2034
        %v8633 = vpop.f32.mrb[0].mxu0
        %v8634 = vadd.f32 0.0, %v8633
        %v8635 = vpop.f32.mrb[0].mxu0
        %v8636 = vpop.f32.mrb[0].mxu0
        %v8637 = vadd.f32 0.0, %v8636
        %v8638 = vpop.f32.mrb[0].mxu0
        %8639 = vmatprep.mubr.bf16.mxu0 0
        %8640 = vmatmul.mubr.bf16.gmra.mrb[0].mxu0 %v2035
        %v8641 = vpop.f32.mrb[0].mxu0
        %v8642 = vadd.f32 0.0, %v8641
        %v8643 = vpop.f32.mrb[0].mxu0
        %v8644 = vpop.f32.mrb[0].mxu0
        %v8645 = vadd.f32 0.0, %v8644
        %v8646 = vpop.f32.mrb[0].mxu0
        %8647 = vmatprep.mubr.bf16.mxu0 0
        %8648 = vmatmul.mubr.bf16.gmra.mrb[0].mxu0 %v2036
        %v8649 = vpop.f32.mrb[0].mxu0
        %v8650 = vadd.f32 0.0, %v8649
        %v8651 = vpop.f32.mrb[0].mxu0
        %v8652 = vpop.f32.mrb[0].mxu0
        %v8653 = vadd.f32 0.0, %v8652
        %v8654 = vpop.f32.mrb[0].mxu0
        %8655 = vmatprep.mubr.bf16.mxu0 0
        %8656 = vmatmul.mubr.bf16.gmra.mrb[0].mxu0 %v2037
        %v8657 = vpop.f32.mrb[0].mxu0
        %v8658 = vadd.f32 0.0, %v8657
        %v8659 = vpop.f32.mrb[0].mxu0
        %v8660 = vpop.f32.mrb[0].mxu0
        %v8661 = vadd.f32 0.0, %v8660
        %v8662 = vpop.f32.mrb[0].mxu0
        %8663 = vmatprep.mubr.bf16.mxu0 0
        %8664 = vmatmul.mubr.bf16.gmra.mrb[0].mxu0 %v2038
        %v8665 = vpop.f32.mrb[0].mxu0
        %v8666 = vadd.f32 0.0, %v8665
        %v8667 = vpop.f32.mrb[0].mxu0
        %v8668 = vpop.f32.mrb[0].mxu0
        %v8669 = vadd.f32 0.0, %v8668
        %v8670 = vpop.f32.mrb[0].mxu0
        %8671 = vmatprep.mubr.bf16.mxu0 0
        %8672 = vmatmul.mubr.bf16.gmra.mrb[0].mxu0 %v2039
        %v8673 = vpop.f32.mrb[0].mxu0
        %v8674 = vadd.f32 0.0, %v8673
        %v8675 = vpop.f32.mrb[0].mxu0
        %v8676 = vpop.f32.mrb[0].mxu0
        %v8677 = vadd.f32 0.0, %v8676
        %v8678 = vpop.f32.mrb[0].mxu0
        %8679 = vmatprep.mubr.bf16.mxu0 0
        %8680 = vmatmul.mubr.bf16.gmra.mrb[0].mxu0 %v2040
        %v8681 = vpop.f32.mrb[0].mxu0
        %v8682 = vadd.f32 0.0, %v8681
        %v8683 = vpop.f32.mrb[0].mxu0
        %v8684 = vpop.f32.mrb[0].mxu0
        %v8685 = vadd.f32 0.0, %v8684
        %v8686 = vpop.f32.mrb[0].mxu0
        %8687 = vmatprep.mubr.bf16.mxu0 0
        %8688 = vmatmul.mubr.bf16.gmra.mrb[0].mxu0 %v2041
        %v8689 = vpop.f32.mrb[0].mxu0
        %v8690 = vadd.f32 0.0, %v8689
        %v8691 = vpop.f32.mrb[0].mxu0
        %v8692 = vpop.f32.mrb[0].mxu0
        %v8693 = vadd.f32 0.0, %v8692
        %v8694 = vpop.f32.mrb[0].mxu0
        %8695 = vmatprep.mubr.bf16.mxu0 0
        %8696 = vmatmul.mubr.bf16.gmra.mrb[0].mxu0 %v2042
        %v8697 = vpop.f32.mrb[0].mxu0
        %v8698 = vadd.f32 0.0, %v8697
        %v8699 = vpop.f32.mrb[0].mxu0
        %v8700 = vpop.f32.mrb[0].mxu0
        %v8701 = vadd.f32 0.0, %v8700
        %v8702 = vpop.f32.mrb[0].mxu0
        %8703 = vmatprep.mubr.bf16.mxu0 0
        %8704 = vmatmul.mubr.bf16.gmra.mrb[0].mxu0 %v2043
        %v8705 = vpop.f32.mrb[0].mxu0
        %v8706 = vadd.f32 0.0, %v8705
        %v8707 = vpop.f32.mrb[0].mxu0
        %v8708 = vpop.f32.mrb[0].mxu0
        %v8709 = vadd.f32 0.0, %v8708
        %v8710 = vpop.f32.mrb[0].mxu0
        %8711 = vmatprep.mubr.bf16.mxu0 0
        %8712 = vmatmul.mubr.bf16.gmra.mrb[0].mxu0 %v2044
        %v8713 = vpop.f32.mrb[0].mxu0
        %v8714 = vadd.f32 0.0, %v8713
        %v8715 = vpop.f32.mrb[0].mxu0
        %v8716 = vpop.f32.mrb[0].mxu0
        %v8717 = vadd.f32 0.0, %v8716
        %v8718 = vpop.f32.mrb[0].mxu0
        %8719 = vmatprep.mubr.bf16.mxu0 0
        %8720 = vmatmul.mubr.bf16.gmra.mrb[0].mxu0 %v2045
        %v8721 = vpop.f32.mrb[0].mxu0
        %v8722 = vadd.f32 0.0, %v8721
        %v8723 = vpop.f32.mrb[0].mxu0
        %v8724 = vpop.f32.mrb[0].mxu0
        %v8725 = vadd.f32 0.0, %v8724
        %v8726 = vpop.f32.mrb[0].mxu0
        %8727 = vmatprep.mubr.bf16.mxu0 0
        %8728 = vmatmul.mubr.bf16.gmra.mrb[0].mxu0 %v2046
        %v8729 = vpop.f32.mrb[0].mxu0
        %v8730 = vadd.f32 0.0, %v8729
        %v8731 = vpop.f32.mrb[0].mxu0
        %v8732 = vpop.f32.mrb[0].mxu0
        %v8733 = vadd.f32 0.0, %v8732
        %v8734 = vpop.f32.mrb[0].mxu0
        %8735 = vmatprep.mubr.bf16.mxu0 0
        %8736 = vmatmul.mubr.bf16.gmra.mrb[0].mxu0 %v2047
        %v8737 = vpop.f32.mrb[0].mxu0
        %v8738 = vadd.f32 0.0, %v8737
        %v8739 = vpop.f32.mrb[0].mxu0
        %v8740 = vpop.f32.mrb[0].mxu0
        %v8741 = vadd.f32 0.0, %v8740
        %v8742 = vpop.f32.mrb[0].mxu0
        %8743 = vmatprep.mubr.bf16.mxu0 0
        %8744 = vmatmul.mubr.bf16.gmra.mrb[0].mxu0 %v2048
        %v8745 = vpop.f32.mrb[0].mxu0
        %v8746 = vadd.f32 0.0, %v8745
        %v8747 = vpop.f32.mrb[0].mxu0
        %v8748 = vpop.f32.mrb[0].mxu0
        %v8749 = vadd.f32 0.0, %v8748
        %v8750 = vpop.f32.mrb[0].mxu0
        %8751 = vmatprep.mubr.bf16.mxu0 0
        %8752 = vmatmul.mubr.bf16.gmra.mrb[0].mxu0 %v2049
        %v8753 = vpop.f32.mrb[0].mxu0
        %v8754 = vadd.f32 0.0, %v8753
        %v8755 = vpop.f32.mrb[0].mxu0
        %v8756 = vpop.f32.mrb[0].mxu0
        %v8757 = vadd.f32 0.0, %v8756
        %v8758 = vpop.f32.mrb[0].mxu0
        %8759 = vmatprep.mubr.bf16.mxu0 0
        %8760 = vmatmul.mubr.bf16.gmra.mrb[0].mxu0 %v2050
        %v8761 = vpop.f32.mrb[0].mxu0
        %v8762 = vadd.f32 0.0, %v8761
        %v8763 = vpop.f32.mrb[0].mxu0
        %v8764 = vpop.f32.mrb[0].mxu0
        %v8765 = vadd.f32 0.0, %v8764
        %v8766 = vpop.f32.mrb[0].mxu0
        %8767 = vmatprep.mubr.bf16.mxu0 0
        %8768 = vmatmul.mubr.bf16.gmra.mrb[0].mxu0 %v2051
        %v8769 = vpop.f32.mrb[0].mxu0
        %v8770 = vadd.f32 0.0, %v8769
        %v8771 = vpop.f32.mrb[0].mxu0
        %v8772 = vpop.f32.mrb[0].mxu0
        %v8773 = vadd.f32 0.0, %v8772
        %v8774 = vpop.f32.mrb[0].mxu0
        %8775 = vmatprep.mubr.bf16.mxu0 0
        %8776 = vmatmul.mubr.bf16.gmra.mrb[0].mxu0 %v2052
        %v8777 = vpop.f32.mrb[0].mxu0
        %v8778 = vadd.f32 0.0, %v8777
        %v8779 = vpop.f32.mrb[0].mxu0
        %v8780 = vpop.f32.mrb[0].mxu0
        %v8781 = vadd.f32 0.0, %v8780
        %v8782 = vpop.f32.mrb[0].mxu0
        %8783 = vmatprep.mubr.bf16.mxu0 0
        %8784 = vmatmul.mubr.bf16.gmra.mrb[0].mxu0 %v2053
        %v8785 = vpop.f32.mrb[0].mxu0
        %v8786 = vadd.f32 0.0, %v8785
        %v8787 = vpop.f32.mrb[0].mxu0
        %v8788 = vpop.f32.mrb[0].mxu0
        %v8789 = vadd.f32 0.0, %v8788
        %v8790 = vpop.f32.mrb[0].mxu0
        %8791 = vmatprep.mubr.bf16.mxu0 0
        %8792 = vmatmul.mubr.bf16.gmra.mrb[0].mxu0 %v2054
        %v8793 = vpop.f32.mrb[0].mxu0
        %v8794 = vadd.f32 0.0, %v8793
        %v8795 = vpop.f32.mrb[0].mxu0
        %v8796 = vpop.f32.mrb[0].mxu0
        %v8797 = vadd.f32 0.0, %v8796
        %v8798 = vpop.f32.mrb[0].mxu0
        %8799 = vmatprep.mubr.bf16.mxu0 0
        %8800 = vmatmul.mubr.bf16.gmra.mrb[0].mxu0 %v2055
        %v8801 = vpop.f32.mrb[0].mxu0
        %v8802 = vadd.f32 0.0, %v8801
        %v8803 = vpop.f32.mrb[0].mxu0
        %v8804 = vpop.f32.mrb[0].mxu0
        %v8805 = vadd.f32 0.0, %v8804
        %v8806 = vpop.f32.mrb[0].mxu0
        %8807 = vmatprep.mubr.bf16.mxu0 0
        %8808 = vmatmul.mubr.bf16.gmra.mrb[0].mxu0 %v2056
        %v8809 = vpop.f32.mrb[0].mxu0
        %v8810 = vadd.f32 0.0, %v8809
        %v8811 = vpop.f32.mrb[0].mxu0
        %v8812 = vpop.f32.mrb[0].mxu0
        %v8813 = vadd.f32 0.0, %v8812
        %v8814 = vpop.f32.mrb[0].mxu0
        %8815 = vmatprep.mubr.bf16.mxu0 0
        %8816 = vmatmul.mubr.bf16.gmra.mrb[0].mxu0 %v5951
        %v8817 = vpop.f32.mrb[0].mxu0
        %v8818 = vadd.f32 0.0, %v8817
        %v8819 = vpop.f32.mrb[0].mxu0
        %v8820 = vpop.f32.mrb[0].mxu0
        %v8821 = vadd.f32 0.0, %v8820
        %v8822 = vpop.f32.mrb[0].mxu0
        %8823 = vmatprep.mubr.bf16.mxu0 0
        %8824 = vmatmul.mubr.bf16.gmra.mrb[0].mxu0 %v5952
        %v8825 = vpop.f32.mrb[0].mxu0
        %v8826 = vadd.f32 0.0, %v8825
        %v8827 = vpop.f32.mrb[0].mxu0
        %v8828 = vpop.f32.mrb[0].mxu0
        %v8829 = vadd.f32 0.0, %v8828
        %v8830 = vpop.f32.mrb[0].mxu0
        %8831 = vmatprep.mubr.bf16.mxu0 0
        %8832 = vmatmul.mubr.bf16.gmra.mrb[0].mxu0 %v8251
        %v8833 = vpop.f32.mrb[0].mxu0
        %v8834 = vadd.f32 0.0, %v8833
        %v8835 = vpop.f32.mrb[0].mxu0
        %v8836 = vpop.f32.mrb[0].mxu0
        %v8837 = vadd.f32 0.0, %v8836
        %v8838 = vpop.f32.mrb[0].mxu0
        %8839 = vmatprep.mubr.bf16.mxu0 0
        %8840 = vmatmul.mubr.bf16.gmra.mrb[0].mxu0 %v8252
        %v8841 = vpop.f32.mrb[0].mxu0
        %v8842 = vadd.f32 0.0, %v8841
        %v8843 = vpop.f32.mrb[0].mxu0
        %v8844 = vpop.f32.mrb[0].mxu0
        %v8845 = vadd.f32 0.0, %v8844
        %v8846 = vpop.f32.mrb[0].mxu0
        %8847 = vdwg.mxu0
        %v8848 = vadd.f32 %v8058, %v8338
        %v8849 = vadd.f32 %v8059, %v8341
        %v8850 = vadd.f32 %v8060, %v8346
        %v8851 = vadd.f32 %v8061, %v8349
        %v8852 = vadd.f32 %v8062, %v8354
        %v8853 = vadd.f32 %v8063, %v8357
        %v8854 = vadd.f32 %v8064, %v8362
        %v8855 = vadd.f32 %v8065, %v8365
        %v8856 = vadd.f32 %v8066, %v8370
        %v8857 = vadd.f32 %v8067, %v8373
        %v8858 = vadd.f32 %v8068, %v8378
        %v8859 = vadd.f32 %v8069, %v8381
        %v8860 = vadd.f32 %v8070, %v8386
        %v8861 = vadd.f32 %v8071, %v8389
        %v8862 = vadd.f32 %v8072, %v8394
        %v8863 = vadd.f32 %v8073, %v8397
        %v8864 = vadd.f32 %v8074, %v8402
        %v8865 = vadd.f32 %v8075, %v8405
        %v8866 = vadd.f32 %v8076, %v8410
        %v8867 = vadd.f32 %v8077, %v8413
        %v8868 = vadd.f32 %v8078, %v8418
        %v8869 = vadd.f32 %v8079, %v8421
        %v8870 = vadd.f32 %v8080, %v8426
        %v8871 = vadd.f32 %v8081, %v8429
        %v8872 = vadd.f32 %v8082, %v8434
        %v8873 = vadd.f32 %v8083, %v8437
        %v8874 = vadd.f32 %v8084, %v8442
        %v8875 = vadd.f32 %v8085, %v8445
        %v8876 = vadd.f32 %v8086, %v8450
        %v8877 = vadd.f32 %v8087, %v8453
        %v8878 = vadd.f32 %v8088, %v8458
        %v8879 = vadd.f32 %v8089, %v8461
        %v8880 = vadd.f32 %v8090, %v8466
        %v8881 = vadd.f32 %v8091, %v8469
        %v8882 = vadd.f32 %v8092, %v8474
        %v8883 = vadd.f32 %v8093, %v8477
        %v8884 = vadd.f32 %v8094, %v8482
        %v8885 = vadd.f32 %v8095, %v8485
        %v8886 = vadd.f32 %v8096, %v8490
        %v8887 = vadd.f32 %v8097, %v8493
        %v8888 = vadd.f32 %v8098, %v8498
        %v8889 = vadd.f32 %v8099, %v8501
        %v8890 = vadd.f32 %v8100, %v8506
        %v8891 = vadd.f32 %v8101, %v8509
        %v8892 = vadd.f32 %v8102, %v8514
        %v8893 = vadd.f32 %v8103, %v8517
        %v8894 = vadd.f32 %v8104, %v8522
        %v8895 = vadd.f32 %v8105, %v8525
        %v8896 = vadd.f32 %v8106, %v8530
        %v8897 = vadd.f32 %v8107, %v8533
        %v8898 = vadd.f32 %v8108, %v8538
        %v8899 = vadd.f32 %v8109, %v8541
        %v8900 = vadd.f32 %v8110, %v8546
        %v8901 = vadd.f32 %v8111, %v8549
        %v8902 = vadd.f32 %v8112, %v8554
        %v8903 = vadd.f32 %v8113, %v8557
        %v8904 = vadd.f32 %v8114, %v8562
        %v8905 = vadd.f32 %v8115, %v8565
        %v8906 = vadd.f32 %v8116, %v8570
        %v8907 = vadd.f32 %v8117, %v8573
        %v8908 = vadd.f32 %v8118, %v8578
        %v8909 = vadd.f32 %v8119, %v8581
        %v8910 = vadd.f32 %v8120, %v8586
        %v8911 = vadd.f32 %v8121, %v8589
        %v8912 = vadd.f32 %v8122, %v8594
        %v8913 = vadd.f32 %v8123, %v8597
        %v8914 = vadd.f32 %v8124, %v8602
        %v8915 = vadd.f32 %v8125, %v8605
        %v8916 = vadd.f32 %v8126, %v8610
        %v8917 = vadd.f32 %v8127, %v8613
        %v8918 = vadd.f32 %v8128, %v8618
        %v8919 = vadd.f32 %v8129, %v8621
        %v8920 = vadd.f32 %v8130, %v8626
        %v8921 = vadd.f32 %v8131, %v8629
        %v8922 = vadd.f32 %v8132, %v8634
        %v8923 = vadd.f32 %v8133, %v8637
        %v8924 = vadd.f32 %v8134, %v8642
        %v8925 = vadd.f32 %v8135, %v8645
        %v8926 = vadd.f32 %v8136, %v8650
        %v8927 = vadd.f32 %v8137, %v8653
        %v8928 = vadd.f32 %v8138, %v8658
        %v8929 = vadd.f32 %v8139, %v8661
        %v8930 = vadd.f32 %v8140, %v8666
        %v8931 = vadd.f32 %v8141, %v8669
        %v8932 = vadd.f32 %v8142, %v8674
        %v8933 = vadd.f32 %v8143, %v8677
        %v8934 = vadd.f32 %v8144, %v8682
        %v8935 = vadd.f32 %v8145, %v8685
        %v8936 = vadd.f32 %v8146, %v8690
        %v8937 = vadd.f32 %v8147, %v8693
        %v8938 = vadd.f32 %v8148, %v8698
        %v8939 = vadd.f32 %v8149, %v8701
        %v8940 = vadd.f32 %v8150, %v8706
        %v8941 = vadd.f32 %v8151, %v8709
        %v8942 = vadd.f32 %v8152, %v8714
        %v8943 = vadd.f32 %v8153, %v8717
        %v8944 = vadd.f32 %v8154, %v8722
        %v8945 = vadd.f32 %v8155, %v8725
        %v8946 = vadd.f32 %v8156, %v8730
        %v8947 = vadd.f32 %v8157, %v8733
        %v8948 = vadd.f32 %v8158, %v8738
        %v8949 = vadd.f32 %v8159, %v8741
        %v8950 = vadd.f32 %v8160, %v8746
        %v8951 = vadd.f32 %v8161, %v8749
        %v8952 = vadd.f32 %v8162, %v8754
        %v8953 = vadd.f32 %v8163, %v8757
        %v8954 = vadd.f32 %v8164, %v8762
        %v8955 = vadd.f32 %v8165, %v8765
        %v8956 = vadd.f32 %v8166, %v8770
        %v8957 = vadd.f32 %v8167, %v8773
        %v8958 = vadd.f32 %v8168, %v8778
        %v8959 = vadd.f32 %v8169, %v8781
        %v8960 = vadd.f32 %v8170, %v8786
        %v8961 = vadd.f32 %v8171, %v8789
        %v8962 = vadd.f32 %v8172, %v8794
        %v8963 = vadd.f32 %v8173, %v8797
        %v8964 = vadd.f32 %v8174, %v8802
        %v8965 = vadd.f32 %v8175, %v8805
        %v8966 = vadd.f32 %v8176, %v8810
        %v8967 = vadd.f32 %v8177, %v8813
        %v8968 = vadd.f32 %v8178, %v8818
        %v8969 = vadd.f32 %v8179, %v8821
        %v8970 = vadd.f32 %v8180, %v8826
        %v8971 = vadd.f32 %v8181, %v8829
        %v8972 = vadd.f32 %v8182, %v8834
        %v8973 = vadd.f32 %v8183, %v8837
        %v8974 = vadd.f32 %v8184, %v8842
        %v8975 = vadd.f32 %v8185, %v8845
        %v8977 = vrot.slane %v416, 5
        %v8978 = vrot.slane %v8977, 4
        %v8979 = vrot.slane %v417, 5
        %v8980 = vsel %vm3725, %v8978, %v8979
        %v8981 = vrot.slane %v8979, 4
        %v8982 = vrot.slane %v418, 5
        %v8983 = vsel %vm3725, %v8981, %v8982
        %v8984 = vrot.slane %v8982, 4
        %v8985 = vrot.slane %v419, 5
        %v8986 = vsel %vm3725, %v8984, %v8985
        %v8987 = vrot.slane %v8985, 4
        %v8988 = vrot.slane %v420, 5
        %v8989 = vsel %vm3725, %v8987, %v8988
        %s8990 = scalar_lea.vmem %s1, 512
        %v8991 = vld [vmem:[%s8990] sm:$0xf]
        %v8992 = vld [vmem:[%s8990 + $0x4] sm:$0xf]
        %v8993 = vld [vmem:[%s8990 + $0x8] sm:$0xf]
        %v8994 = vld [vmem:[%s8990 + $0xc] sm:$0xf]
        %v8995 = vld [vmem:[%s8990 + $0x10] sm:$0xf]
        %v8996 = vld [vmem:[%s8990 + $0x14] sm:$0xf]
        %v8997 = vld [vmem:[%s8990 + $0x18] sm:$0xf]
        %v8998 = vld [vmem:[%s8990 + $0x1c] sm:$0xf]
        %v8999 = vld [vmem:[%s8990 + $0x20] sm:$0xf]
        %v9000 = vld [vmem:[%s8990 + $0x24] sm:$0xf]
        %v9001 = vld [vmem:[%s8990 + $0x28] sm:$0xf]
        %v9002 = vld [vmem:[%s8990 + $0x2c] sm:$0xf]
        %v9003 = vld [vmem:[%s8990 + $0x30] sm:$0xf]
        %v9004 = vld [vmem:[%s8990 + $0x34] sm:$0xf]
        %v9005 = vld [vmem:[%s8990 + $0x38] sm:$0xf]
        %v9006 = vld [vmem:[%s8990 + $0x3c] sm:$0xf]
        %v9007 = vunpack.c.l.b16 %v8980
        %v9008 = vunpack.c.l.b16 %v8983
        %v9009 = vunpack.c.l.b16 %v8986
        %v9010 = vunpack.c.l.b16 %v8989
        %v9011 = vpack.c.b16 %v9008, %v9007
        %v9012 = vpack.c.b16 %v9010, %v9009
        %v9031 = vunpack.c.l.b16 %v8991
        %v9032 = vunpack.c.l.b16 %v8992
        %v9033 = vunpack.c.l.b16 %v8993
        %v9034 = vunpack.c.l.b16 %v8994
        %v9035 = vunpack.c.l.b16 %v8995
        %v9036 = vunpack.c.l.b16 %v8996
        %v9037 = vunpack.c.l.b16 %v8997
        %v9038 = vunpack.c.l.b16 %v8998
        %v9039 = vunpack.c.l.b16 %v8999
        %v9040 = vunpack.c.l.b16 %v9000
        %v9041 = vunpack.c.l.b16 %v9001
        %v9042 = vunpack.c.l.b16 %v9002
        %v9043 = vunpack.c.l.b16 %v9003
        %v9044 = vunpack.c.l.b16 %v9004
        %v9045 = vunpack.c.l.b16 %v9005
        %v9046 = vunpack.c.l.b16 %v9006
        %v9047 = vpack.c.b16 %v9032, %v9031
        %v9048 = vpack.c.b16 %v9034, %v9033
        %v9049 = vpack.c.b16 %v9036, %v9035
        %v9050 = vpack.c.b16 %v9038, %v9037
        %v9051 = vpack.c.b16 %v9040, %v9039
        %v9052 = vpack.c.b16 %v9042, %v9041
        %v9053 = vpack.c.b16 %v9044, %v9043
        %v9054 = vpack.c.b16 %v9046, %v9045
        %9063 = vmatprep.subr.bf16.mxu0 0
        %9064 = vmatpush1.bf16.msra.mxu0 %v9047
        %9065 = vmatprep.subr.bf16.mxu0 0
        %9066 = vmatpush1.bf16.msra.mxu0 %v9048
        %9067 = vmatprep.subr.bf16.mxu0 0
        %9068 = vmatpush1.bf16.msra.mxu0 %v9049
        %9069 = vmatprep.subr.bf16.mxu0 0
        %9070 = vmatpush1.bf16.msra.mxu0 %v9050
        %9071 = vmatprep.subr.bf16.mxu0 0
        %9072 = vmatpush1.bf16.msra.mxu0 %v9051
        %9073 = vmatprep.subr.bf16.mxu0 0
        %9074 = vmatpush1.bf16.msra.mxu0 %v9052
        %9075 = vmatprep.subr.bf16.mxu0 0
        %9076 = vmatpush1.bf16.msra.mxu0 %v9053
        %9077 = vmatprep.subr.bf16.mxu0 0
        %9078 = vmatpush1.bf16.msra.mxu0 %v9054
        %9079 = vmatprep.subr.bf16.mxu0 0
        %9080 = vmatpush1.bf16.msra.mxu0 0
        %9081 = vmatprep.subr.bf16.mxu0 0
        %9082 = vmatpush1.bf16.msra.mxu0 0
        %9083 = vmatprep.subr.bf16.mxu0 0
        %9084 = vmatpush1.bf16.msra.mxu0 0
        %9085 = vmatprep.subr.bf16.mxu0 0
        %9086 = vmatpush1.bf16.msra.mxu0 0
        %9087 = vmatprep.subr.bf16.mxu0 0
        %9088 = vmatpush1.bf16.msra.mxu0 0
        %9089 = vmatprep.subr.bf16.mxu0 0
        %9090 = vmatpush1.bf16.msra.mxu0 0
        %9091 = vmatprep.subr.bf16.mxu0 0
        %9092 = vmatpush1.bf16.msra.mxu0 0
        %9093 = vmatprep.subr.bf16.mxu0 0
        %9094 = vmatpush1.bf16.msra.mxu0 0
        %9095 = vmatprep.mubr.bf16.mxu0 0
        %9096 = vmatmul.mubr.bf16.gmra.mrb[0].mxu0 %v4291
        %v9097 = vpop.f32.mrb[0].mxu0
        %v9098 = vadd.f32 0.0, %v9097
        %v9099 = vpop.f32.mrb[0].mxu0
        %v9100 = vpop.f32.mrb[0].mxu0
        %v9101 = vadd.f32 0.0, %v9100
        %v9102 = vpop.f32.mrb[0].mxu0
        %9103 = vmatprep.mubr.bf16.mxu0 0
        %9104 = vmatmul.mubr.bf16.gmra.mrb[0].mxu0 %v4292
        %v9105 = vpop.f32.mrb[0].mxu0
        %v9106 = vadd.f32 0.0, %v9105
        %v9107 = vpop.f32.mrb[0].mxu0
        %v9108 = vpop.f32.mrb[0].mxu0
        %v9109 = vadd.f32 0.0, %v9108
        %v9110 = vpop.f32.mrb[0].mxu0
        %9111 = vmatprep.mubr.bf16.mxu0 0
        %9112 = vmatmul.mubr.bf16.gmra.mrb[0].mxu0 %v4293
        %v9113 = vpop.f32.mrb[0].mxu0
        %v9114 = vadd.f32 0.0, %v9113
        %v9115 = vpop.f32.mrb[0].mxu0
        %v9116 = vpop.f32.mrb[0].mxu0
        %v9117 = vadd.f32 0.0, %v9116
        %v9118 = vpop.f32.mrb[0].mxu0
        %9119 = vmatprep.mubr.bf16.mxu0 0
        %9120 = vmatmul.mubr.bf16.gmra.mrb[0].mxu0 %v4294
        %v9121 = vpop.f32.mrb[0].mxu0
        %v9122 = vadd.f32 0.0, %v9121
        %v9123 = vpop.f32.mrb[0].mxu0
        %v9124 = vpop.f32.mrb[0].mxu0
        %v9125 = vadd.f32 0.0, %v9124
        %v9126 = vpop.f32.mrb[0].mxu0
        %9127 = vmatprep.mubr.bf16.mxu0 0
        %9128 = vmatmul.mubr.bf16.gmra.mrb[0].mxu0 %v4295
        %v9129 = vpop.f32.mrb[0].mxu0
        %v9130 = vadd.f32 0.0, %v9129
        %v9131 = vpop.f32.mrb[0].mxu0
        %v9132 = vpop.f32.mrb[0].mxu0
        %v9133 = vadd.f32 0.0, %v9132
        %v9134 = vpop.f32.mrb[0].mxu0
        %9135 = vmatprep.mubr.bf16.mxu0 0
        %9136 = vmatmul.mubr.bf16.gmra.mrb[0].mxu0 %v4296
        %v9137 = vpop.f32.mrb[0].mxu0
        %v9138 = vadd.f32 0.0, %v9137
        %v9139 = vpop.f32.mrb[0].mxu0
        %v9140 = vpop.f32.mrb[0].mxu0
        %v9141 = vadd.f32 0.0, %v9140
        %v9142 = vpop.f32.mrb[0].mxu0
        %9143 = vmatprep.mubr.bf16.mxu0 0
        %9144 = vmatmul.mubr.bf16.gmra.mrb[0].mxu0 %v4297
        %v9145 = vpop.f32.mrb[0].mxu0
        %v9146 = vadd.f32 0.0, %v9145
        %v9147 = vpop.f32.mrb[0].mxu0
        %v9148 = vpop.f32.mrb[0].mxu0
        %v9149 = vadd.f32 0.0, %v9148
        %v9150 = vpop.f32.mrb[0].mxu0
        %9151 = vmatprep.mubr.bf16.mxu0 0
        %9152 = vmatmul.mubr.bf16.gmra.mrb[0].mxu0 %v4298
        %v9153 = vpop.f32.mrb[0].mxu0
        %v9154 = vadd.f32 0.0, %v9153
        %v9155 = vpop.f32.mrb[0].mxu0
        %v9156 = vpop.f32.mrb[0].mxu0
        %v9157 = vadd.f32 0.0, %v9156
        %v9158 = vpop.f32.mrb[0].mxu0
        %9159 = vmatprep.mubr.bf16.mxu0 0
        %9160 = vmatmul.mubr.bf16.gmra.mrb[0].mxu0 %v4299
        %v9161 = vpop.f32.mrb[0].mxu0
        %v9162 = vadd.f32 0.0, %v9161
        %v9163 = vpop.f32.mrb[0].mxu0
        %v9164 = vpop.f32.mrb[0].mxu0
        %v9165 = vadd.f32 0.0, %v9164
        %v9166 = vpop.f32.mrb[0].mxu0
        %9167 = vmatprep.mubr.bf16.mxu0 0
        %9168 = vmatmul.mubr.bf16.gmra.mrb[0].mxu0 %v4300
        %v9169 = vpop.f32.mrb[0].mxu0
        %v9170 = vadd.f32 0.0, %v9169
        %v9171 = vpop.f32.mrb[0].mxu0
        %v9172 = vpop.f32.mrb[0].mxu0
        %v9173 = vadd.f32 0.0, %v9172
        %v9174 = vpop.f32.mrb[0].mxu0
        %9175 = vmatprep.mubr.bf16.mxu0 0
        %9176 = vmatmul.mubr.bf16.gmra.mrb[0].mxu0 %v4301
        %v9177 = vpop.f32.mrb[0].mxu0
        %v9178 = vadd.f32 0.0, %v9177
        %v9179 = vpop.f32.mrb[0].mxu0
        %v9180 = vpop.f32.mrb[0].mxu0
        %v9181 = vadd.f32 0.0, %v9180
        %v9182 = vpop.f32.mrb[0].mxu0
        %9183 = vmatprep.mubr.bf16.mxu0 0
        %9184 = vmatmul.mubr.bf16.gmra.mrb[0].mxu0 %v4302
        %v9185 = vpop.f32.mrb[0].mxu0
        %v9186 = vadd.f32 0.0, %v9185
        %v9187 = vpop.f32.mrb[0].mxu0
        %v9188 = vpop.f32.mrb[0].mxu0
        %v9189 = vadd.f32 0.0, %v9188
        %v9190 = vpop.f32.mrb[0].mxu0
        %9191 = vmatprep.mubr.bf16.mxu0 0
        %9192 = vmatmul.mubr.bf16.gmra.mrb[0].mxu0 %v4303
        %v9193 = vpop.f32.mrb[0].mxu0
        %v9194 = vadd.f32 0.0, %v9193
        %v9195 = vpop.f32.mrb[0].mxu0
        %v9196 = vpop.f32.mrb[0].mxu0
        %v9197 = vadd.f32 0.0, %v9196
        %v9198 = vpop.f32.mrb[0].mxu0
        %9199 = vmatprep.mubr.bf16.mxu0 0
        %9200 = vmatmul.mubr.bf16.gmra.mrb[0].mxu0 %v4304
        %v9201 = vpop.f32.mrb[0].mxu0
        %v9202 = vadd.f32 0.0, %v9201
        %v9203 = vpop.f32.mrb[0].mxu0
        %v9204 = vpop.f32.mrb[0].mxu0
        %v9205 = vadd.f32 0.0, %v9204
        %v9206 = vpop.f32.mrb[0].mxu0
        %9207 = vmatprep.mubr.bf16.mxu0 0
        %9208 = vmatmul.mubr.bf16.gmra.mrb[0].mxu0 %v4305
        %v9209 = vpop.f32.mrb[0].mxu0
        %v9210 = vadd.f32 0.0, %v9209
        %v9211 = vpop.f32.mrb[0].mxu0
        %v9212 = vpop.f32.mrb[0].mxu0
        %v9213 = vadd.f32 0.0, %v9212
        %v9214 = vpop.f32.mrb[0].mxu0
        %9215 = vmatprep.mubr.bf16.mxu0 0
        %9216 = vmatmul.mubr.bf16.gmra.mrb[0].mxu0 %v4306
        %v9217 = vpop.f32.mrb[0].mxu0
        %v9218 = vadd.f32 0.0, %v9217
        %v9219 = vpop.f32.mrb[0].mxu0
        %v9220 = vpop.f32.mrb[0].mxu0
        %v9221 = vadd.f32 0.0, %v9220
        %v9222 = vpop.f32.mrb[0].mxu0
        %9223 = vmatprep.mubr.bf16.mxu0 0
        %9224 = vmatmul.mubr.bf16.gmra.mrb[0].mxu0 %v4307
        %v9225 = vpop.f32.mrb[0].mxu0
        %v9226 = vadd.f32 0.0, %v9225
        %v9227 = vpop.f32.mrb[0].mxu0
        %v9228 = vpop.f32.mrb[0].mxu0
        %v9229 = vadd.f32 0.0, %v9228
        %v9230 = vpop.f32.mrb[0].mxu0
        %9231 = vmatprep.mubr.bf16.mxu0 0
        %9232 = vmatmul.mubr.bf16.gmra.mrb[0].mxu0 %v4308
        %v9233 = vpop.f32.mrb[0].mxu0
        %v9234 = vadd.f32 0.0, %v9233
        %v9235 = vpop.f32.mrb[0].mxu0
        %v9236 = vpop.f32.mrb[0].mxu0
        %v9237 = vadd.f32 0.0, %v9236
        %v9238 = vpop.f32.mrb[0].mxu0
        %9239 = vmatprep.mubr.bf16.mxu0 0
        %9240 = vmatmul.mubr.bf16.gmra.mrb[0].mxu0 %v4309
        %v9241 = vpop.f32.mrb[0].mxu0
        %v9242 = vadd.f32 0.0, %v9241
        %v9243 = vpop.f32.mrb[0].mxu0
        %v9244 = vpop.f32.mrb[0].mxu0
        %v9245 = vadd.f32 0.0, %v9244
        %v9246 = vpop.f32.mrb[0].mxu0
        %9247 = vmatprep.mubr.bf16.mxu0 0
        %9248 = vmatmul.mubr.bf16.gmra.mrb[0].mxu0 %v4310
        %v9249 = vpop.f32.mrb[0].mxu0
        %v9250 = vadd.f32 0.0, %v9249
        %v9251 = vpop.f32.mrb[0].mxu0
        %v9252 = vpop.f32.mrb[0].mxu0
        %v9253 = vadd.f32 0.0, %v9252
        %v9254 = vpop.f32.mrb[0].mxu0
        %9255 = vmatprep.mubr.bf16.mxu0 0
        %9256 = vmatmul.mubr.bf16.gmra.mrb[0].mxu0 %v4311
        %v9257 = vpop.f32.mrb[0].mxu0
        %v9258 = vadd.f32 0.0, %v9257
        %v9259 = vpop.f32.mrb[0].mxu0
        %v9260 = vpop.f32.mrb[0].mxu0
        %v9261 = vadd.f32 0.0, %v9260
        %v9262 = vpop.f32.mrb[0].mxu0
        %9263 = vmatprep.mubr.bf16.mxu0 0
        %9264 = vmatmul.mubr.bf16.gmra.mrb[0].mxu0 %v4312
        %v9265 = vpop.f32.mrb[0].mxu0
        %v9266 = vadd.f32 0.0, %v9265
        %v9267 = vpop.f32.mrb[0].mxu0
        %v9268 = vpop.f32.mrb[0].mxu0
        %v9269 = vadd.f32 0.0, %v9268
        %v9270 = vpop.f32.mrb[0].mxu0
        %9271 = vmatprep.mubr.bf16.mxu0 0
        %9272 = vmatmul.mubr.bf16.gmra.mrb[0].mxu0 %v4313
        %v9273 = vpop.f32.mrb[0].mxu0
        %v9274 = vadd.f32 0.0, %v9273
        %v9275 = vpop.f32.mrb[0].mxu0
        %v9276 = vpop.f32.mrb[0].mxu0
        %v9277 = vadd.f32 0.0, %v9276
        %v9278 = vpop.f32.mrb[0].mxu0
        %9279 = vmatprep.mubr.bf16.mxu0 0
        %9280 = vmatmul.mubr.bf16.gmra.mrb[0].mxu0 %v4314
        %v9281 = vpop.f32.mrb[0].mxu0
        %v9282 = vadd.f32 0.0, %v9281
        %v9283 = vpop.f32.mrb[0].mxu0
        %v9284 = vpop.f32.mrb[0].mxu0
        %v9285 = vadd.f32 0.0, %v9284
        %v9286 = vpop.f32.mrb[0].mxu0
        %9287 = vmatprep.mubr.bf16.mxu0 0
        %9288 = vmatmul.mubr.bf16.gmra.mrb[0].mxu0 %v4315
        %v9289 = vpop.f32.mrb[0].mxu0
        %v9290 = vadd.f32 0.0, %v9289
        %v9291 = vpop.f32.mrb[0].mxu0
        %v9292 = vpop.f32.mrb[0].mxu0
        %v9293 = vadd.f32 0.0, %v9292
        %v9294 = vpop.f32.mrb[0].mxu0
        %9295 = vmatprep.mubr.bf16.mxu0 0
        %9296 = vmatmul.mubr.bf16.gmra.mrb[0].mxu0 %v4316
        %v9297 = vpop.f32.mrb[0].mxu0
        %v9298 = vadd.f32 0.0, %v9297
        %v9299 = vpop.f32.mrb[0].mxu0
        %v9300 = vpop.f32.mrb[0].mxu0
        %v9301 = vadd.f32 0.0, %v9300
        %v9302 = vpop.f32.mrb[0].mxu0
        %9303 = vmatprep.mubr.bf16.mxu0 0
        %9304 = vmatmul.mubr.bf16.gmra.mrb[0].mxu0 %v4317
        %v9305 = vpop.f32.mrb[0].mxu0
        %v9306 = vadd.f32 0.0, %v9305
        %v9307 = vpop.f32.mrb[0].mxu0
        %v9308 = vpop.f32.mrb[0].mxu0
        %v9309 = vadd.f32 0.0, %v9308
        %v9310 = vpop.f32.mrb[0].mxu0
        %9311 = vmatprep.mubr.bf16.mxu0 0
        %9312 = vmatmul.mubr.bf16.gmra.mrb[0].mxu0 %v4318
        %v9313 = vpop.f32.mrb[0].mxu0
        %v9314 = vadd.f32 0.0, %v9313
        %v9315 = vpop.f32.mrb[0].mxu0
        %v9316 = vpop.f32.mrb[0].mxu0
        %v9317 = vadd.f32 0.0, %v9316
        %v9318 = vpop.f32.mrb[0].mxu0
        %9319 = vmatprep.mubr.bf16.mxu0 0
        %9320 = vmatmul.mubr.bf16.gmra.mrb[0].mxu0 %v4319
        %v9321 = vpop.f32.mrb[0].mxu0
        %v9322 = vadd.f32 0.0, %v9321
        %v9323 = vpop.f32.mrb[0].mxu0
        %v9324 = vpop.f32.mrb[0].mxu0
        %v9325 = vadd.f32 0.0, %v9324
        %v9326 = vpop.f32.mrb[0].mxu0
        %9327 = vmatprep.mubr.bf16.mxu0 0
        %9328 = vmatmul.mubr.bf16.gmra.mrb[0].mxu0 %v4320
        %v9329 = vpop.f32.mrb[0].mxu0
        %v9330 = vadd.f32 0.0, %v9329
        %v9331 = vpop.f32.mrb[0].mxu0
        %v9332 = vpop.f32.mrb[0].mxu0
        %v9333 = vadd.f32 0.0, %v9332
        %v9334 = vpop.f32.mrb[0].mxu0
        %9335 = vmatprep.mubr.bf16.mxu0 0
        %9336 = vmatmul.mubr.bf16.gmra.mrb[0].mxu0 %v4321
        %v9337 = vpop.f32.mrb[0].mxu0
        %v9338 = vadd.f32 0.0, %v9337
        %v9339 = vpop.f32.mrb[0].mxu0
        %v9340 = vpop.f32.mrb[0].mxu0
        %v9341 = vadd.f32 0.0, %v9340
        %v9342 = vpop.f32.mrb[0].mxu0
        %9343 = vmatprep.mubr.bf16.mxu0 0
        %9344 = vmatmul.mubr.bf16.gmra.mrb[0].mxu0 %v4322
        %v9345 = vpop.f32.mrb[0].mxu0
        %v9346 = vadd.f32 0.0, %v9345
        %v9347 = vpop.f32.mrb[0].mxu0
        %v9348 = vpop.f32.mrb[0].mxu0
        %v9349 = vadd.f32 0.0, %v9348
        %v9350 = vpop.f32.mrb[0].mxu0
        %9351 = vmatprep.mubr.bf16.mxu0 0
        %9352 = vmatmul.mubr.bf16.gmra.mrb[0].mxu0 %v4323
        %v9353 = vpop.f32.mrb[0].mxu0
        %v9354 = vadd.f32 0.0, %v9353
        %v9355 = vpop.f32.mrb[0].mxu0
        %v9356 = vpop.f32.mrb[0].mxu0
        %v9357 = vadd.f32 0.0, %v9356
        %v9358 = vpop.f32.mrb[0].mxu0
        %9359 = vmatprep.mubr.bf16.mxu0 0
        %9360 = vmatmul.mubr.bf16.gmra.mrb[0].mxu0 %v4324
        %v9361 = vpop.f32.mrb[0].mxu0
        %v9362 = vadd.f32 0.0, %v9361
        %v9363 = vpop.f32.mrb[0].mxu0
        %v9364 = vpop.f32.mrb[0].mxu0
        %v9365 = vadd.f32 0.0, %v9364
        %v9366 = vpop.f32.mrb[0].mxu0
        %9367 = vmatprep.mubr.bf16.mxu0 0
        %9368 = vmatmul.mubr.bf16.gmra.mrb[0].mxu0 %v4325
        %v9369 = vpop.f32.mrb[0].mxu0
        %v9370 = vadd.f32 0.0, %v9369
        %v9371 = vpop.f32.mrb[0].mxu0
        %v9372 = vpop.f32.mrb[0].mxu0
        %v9373 = vadd.f32 0.0, %v9372
        %v9374 = vpop.f32.mrb[0].mxu0
        %9375 = vmatprep.mubr.bf16.mxu0 0
        %9376 = vmatmul.mubr.bf16.gmra.mrb[0].mxu0 %v4326
        %v9377 = vpop.f32.mrb[0].mxu0
        %v9378 = vadd.f32 0.0, %v9377
        %v9379 = vpop.f32.mrb[0].mxu0
        %v9380 = vpop.f32.mrb[0].mxu0
        %v9381 = vadd.f32 0.0, %v9380
        %v9382 = vpop.f32.mrb[0].mxu0
        %9383 = vmatprep.mubr.bf16.mxu0 0
        %9384 = vmatmul.mubr.bf16.gmra.mrb[0].mxu0 %v4327
        %v9385 = vpop.f32.mrb[0].mxu0
        %v9386 = vadd.f32 0.0, %v9385
        %v9387 = vpop.f32.mrb[0].mxu0
        %v9388 = vpop.f32.mrb[0].mxu0
        %v9389 = vadd.f32 0.0, %v9388
        %v9390 = vpop.f32.mrb[0].mxu0
        %9391 = vmatprep.mubr.bf16.mxu0 0
        %9392 = vmatmul.mubr.bf16.gmra.mrb[0].mxu0 %v4328
        %v9393 = vpop.f32.mrb[0].mxu0
        %v9394 = vadd.f32 0.0, %v9393
        %v9395 = vpop.f32.mrb[0].mxu0
        %v9396 = vpop.f32.mrb[0].mxu0
        %v9397 = vadd.f32 0.0, %v9396
        %v9398 = vpop.f32.mrb[0].mxu0
        %9399 = vmatprep.mubr.bf16.mxu0 0
        %9400 = vmatmul.mubr.bf16.gmra.mrb[0].mxu0 %v4329
        %v9401 = vpop.f32.mrb[0].mxu0
        %v9402 = vadd.f32 0.0, %v9401
        %v9403 = vpop.f32.mrb[0].mxu0
        %v9404 = vpop.f32.mrb[0].mxu0
        %v9405 = vadd.f32 0.0, %v9404
        %v9406 = vpop.f32.mrb[0].mxu0
        %9407 = vmatprep.mubr.bf16.mxu0 0
        %9408 = vmatmul.mubr.bf16.gmra.mrb[0].mxu0 %v4330
        %v9409 = vpop.f32.mrb[0].mxu0
        %v9410 = vadd.f32 0.0, %v9409
        %v9411 = vpop.f32.mrb[0].mxu0
        %v9412 = vpop.f32.mrb[0].mxu0
        %v9413 = vadd.f32 0.0, %v9412
        %v9414 = vpop.f32.mrb[0].mxu0
        %9415 = vmatprep.mubr.bf16.mxu0 0
        %9416 = vmatmul.mubr.bf16.gmra.mrb[0].mxu0 %v4331
        %v9417 = vpop.f32.mrb[0].mxu0
        %v9418 = vadd.f32 0.0, %v9417
        %v9419 = vpop.f32.mrb[0].mxu0
        %v9420 = vpop.f32.mrb[0].mxu0
        %v9421 = vadd.f32 0.0, %v9420
        %v9422 = vpop.f32.mrb[0].mxu0
        %9423 = vmatprep.mubr.bf16.mxu0 0
        %9424 = vmatmul.mubr.bf16.gmra.mrb[0].mxu0 %v4332
        %v9425 = vpop.f32.mrb[0].mxu0
        %v9426 = vadd.f32 0.0, %v9425
        %v9427 = vpop.f32.mrb[0].mxu0
        %v9428 = vpop.f32.mrb[0].mxu0
        %v9429 = vadd.f32 0.0, %v9428
        %v9430 = vpop.f32.mrb[0].mxu0
        %9431 = vmatprep.mubr.bf16.mxu0 0
        %9432 = vmatmul.mubr.bf16.gmra.mrb[0].mxu0 %v4333
        %v9433 = vpop.f32.mrb[0].mxu0
        %v9434 = vadd.f32 0.0, %v9433
        %v9435 = vpop.f32.mrb[0].mxu0
        %v9436 = vpop.f32.mrb[0].mxu0
        %v9437 = vadd.f32 0.0, %v9436
        %v9438 = vpop.f32.mrb[0].mxu0
        %9439 = vmatprep.mubr.bf16.mxu0 0
        %9440 = vmatmul.mubr.bf16.gmra.mrb[0].mxu0 %v4334
        %v9441 = vpop.f32.mrb[0].mxu0
        %v9442 = vadd.f32 0.0, %v9441
        %v9443 = vpop.f32.mrb[0].mxu0
        %v9444 = vpop.f32.mrb[0].mxu0
        %v9445 = vadd.f32 0.0, %v9444
        %v9446 = vpop.f32.mrb[0].mxu0
        %9447 = vmatprep.mubr.bf16.mxu0 0
        %9448 = vmatmul.mubr.bf16.gmra.mrb[0].mxu0 %v4335
        %v9449 = vpop.f32.mrb[0].mxu0
        %v9450 = vadd.f32 0.0, %v9449
        %v9451 = vpop.f32.mrb[0].mxu0
        %v9452 = vpop.f32.mrb[0].mxu0
        %v9453 = vadd.f32 0.0, %v9452
        %v9454 = vpop.f32.mrb[0].mxu0
        %9455 = vmatprep.mubr.bf16.mxu0 0
        %9456 = vmatmul.mubr.bf16.gmra.mrb[0].mxu0 %v4336
        %v9457 = vpop.f32.mrb[0].mxu0
        %v9458 = vadd.f32 0.0, %v9457
        %v9459 = vpop.f32.mrb[0].mxu0
        %v9460 = vpop.f32.mrb[0].mxu0
        %v9461 = vadd.f32 0.0, %v9460
        %v9462 = vpop.f32.mrb[0].mxu0
        %9463 = vmatprep.mubr.bf16.mxu0 0
        %9464 = vmatmul.mubr.bf16.gmra.mrb[0].mxu0 %v4337
        %v9465 = vpop.f32.mrb[0].mxu0
        %v9466 = vadd.f32 0.0, %v9465
        %v9467 = vpop.f32.mrb[0].mxu0
        %v9468 = vpop.f32.mrb[0].mxu0
        %v9469 = vadd.f32 0.0, %v9468
        %v9470 = vpop.f32.mrb[0].mxu0
        %9471 = vmatprep.mubr.bf16.mxu0 0
        %9472 = vmatmul.mubr.bf16.gmra.mrb[0].mxu0 %v4338
        %v9473 = vpop.f32.mrb[0].mxu0
        %v9474 = vadd.f32 0.0, %v9473
        %v9475 = vpop.f32.mrb[0].mxu0
        %v9476 = vpop.f32.mrb[0].mxu0
        %v9477 = vadd.f32 0.0, %v9476
        %v9478 = vpop.f32.mrb[0].mxu0
        %9479 = vmatprep.mubr.bf16.mxu0 0
        %9480 = vmatmul.mubr.bf16.gmra.mrb[0].mxu0 %v4339
        %v9481 = vpop.f32.mrb[0].mxu0
        %v9482 = vadd.f32 0.0, %v9481
        %v9483 = vpop.f32.mrb[0].mxu0
        %v9484 = vpop.f32.mrb[0].mxu0
        %v9485 = vadd.f32 0.0, %v9484
        %v9486 = vpop.f32.mrb[0].mxu0
        %9487 = vmatprep.mubr.bf16.mxu0 0
        %9488 = vmatmul.mubr.bf16.gmra.mrb[0].mxu0 %v4340
        %v9489 = vpop.f32.mrb[0].mxu0
        %v9490 = vadd.f32 0.0, %v9489
        %v9491 = vpop.f32.mrb[0].mxu0
        %v9492 = vpop.f32.mrb[0].mxu0
        %v9493 = vadd.f32 0.0, %v9492
        %v9494 = vpop.f32.mrb[0].mxu0
        %9495 = vmatprep.mubr.bf16.mxu0 0
        %9496 = vmatmul.mubr.bf16.gmra.mrb[0].mxu0 %v4341
        %v9497 = vpop.f32.mrb[0].mxu0
        %v9498 = vadd.f32 0.0, %v9497
        %v9499 = vpop.f32.mrb[0].mxu0
        %v9500 = vpop.f32.mrb[0].mxu0
        %v9501 = vadd.f32 0.0, %v9500
        %v9502 = vpop.f32.mrb[0].mxu0
        %9503 = vmatprep.mubr.bf16.mxu0 0
        %9504 = vmatmul.mubr.bf16.gmra.mrb[0].mxu0 %v4342
        %v9505 = vpop.f32.mrb[0].mxu0
        %v9506 = vadd.f32 0.0, %v9505
        %v9507 = vpop.f32.mrb[0].mxu0
        %v9508 = vpop.f32.mrb[0].mxu0
        %v9509 = vadd.f32 0.0, %v9508
        %v9510 = vpop.f32.mrb[0].mxu0
        %9511 = vmatprep.mubr.bf16.mxu0 0
        %9512 = vmatmul.mubr.bf16.gmra.mrb[0].mxu0 %v4343
        %v9513 = vpop.f32.mrb[0].mxu0
        %v9514 = vadd.f32 0.0, %v9513
        %v9515 = vpop.f32.mrb[0].mxu0
        %v9516 = vpop.f32.mrb[0].mxu0
        %v9517 = vadd.f32 0.0, %v9516
        %v9518 = vpop.f32.mrb[0].mxu0
        %9519 = vmatprep.mubr.bf16.mxu0 0
        %9520 = vmatmul.mubr.bf16.gmra.mrb[0].mxu0 %v4344
        %v9521 = vpop.f32.mrb[0].mxu0
        %v9522 = vadd.f32 0.0, %v9521
        %v9523 = vpop.f32.mrb[0].mxu0
        %v9524 = vpop.f32.mrb[0].mxu0
        %v9525 = vadd.f32 0.0, %v9524
        %v9526 = vpop.f32.mrb[0].mxu0
        %9527 = vmatprep.mubr.bf16.mxu0 0
        %9528 = vmatmul.mubr.bf16.gmra.mrb[0].mxu0 %v4345
        %v9529 = vpop.f32.mrb[0].mxu0
        %v9530 = vadd.f32 0.0, %v9529
        %v9531 = vpop.f32.mrb[0].mxu0
        %v9532 = vpop.f32.mrb[0].mxu0
        %v9533 = vadd.f32 0.0, %v9532
        %v9534 = vpop.f32.mrb[0].mxu0
        %9535 = vmatprep.mubr.bf16.mxu0 0
        %9536 = vmatmul.mubr.bf16.gmra.mrb[0].mxu0 %v4346
        %v9537 = vpop.f32.mrb[0].mxu0
        %v9538 = vadd.f32 0.0, %v9537
        %v9539 = vpop.f32.mrb[0].mxu0
        %v9540 = vpop.f32.mrb[0].mxu0
        %v9541 = vadd.f32 0.0, %v9540
        %v9542 = vpop.f32.mrb[0].mxu0
        %9543 = vmatprep.mubr.bf16.mxu0 0
        %9544 = vmatmul.mubr.bf16.gmra.mrb[0].mxu0 %v4347
        %v9545 = vpop.f32.mrb[0].mxu0
        %v9546 = vadd.f32 0.0, %v9545
        %v9547 = vpop.f32.mrb[0].mxu0
        %v9548 = vpop.f32.mrb[0].mxu0
        %v9549 = vadd.f32 0.0, %v9548
        %v9550 = vpop.f32.mrb[0].mxu0
        %9551 = vmatprep.mubr.bf16.mxu0 0
        %9552 = vmatmul.mubr.bf16.gmra.mrb[0].mxu0 %v4348
        %v9553 = vpop.f32.mrb[0].mxu0
        %v9554 = vadd.f32 0.0, %v9553
        %v9555 = vpop.f32.mrb[0].mxu0
        %v9556 = vpop.f32.mrb[0].mxu0
        %v9557 = vadd.f32 0.0, %v9556
        %v9558 = vpop.f32.mrb[0].mxu0
        %9559 = vmatprep.mubr.bf16.mxu0 0
        %9560 = vmatmul.mubr.bf16.gmra.mrb[0].mxu0 %v4349
        %v9561 = vpop.f32.mrb[0].mxu0
        %v9562 = vadd.f32 0.0, %v9561
        %v9563 = vpop.f32.mrb[0].mxu0
        %v9564 = vpop.f32.mrb[0].mxu0
        %v9565 = vadd.f32 0.0, %v9564
        %v9566 = vpop.f32.mrb[0].mxu0
        %9567 = vmatprep.mubr.bf16.mxu0 0
        %9568 = vmatmul.mubr.bf16.gmra.mrb[0].mxu0 %v4350
        %v9569 = vpop.f32.mrb[0].mxu0
        %v9570 = vadd.f32 0.0, %v9569
        %v9571 = vpop.f32.mrb[0].mxu0
        %v9572 = vpop.f32.mrb[0].mxu0
        %v9573 = vadd.f32 0.0, %v9572
        %v9574 = vpop.f32.mrb[0].mxu0
        %9575 = vmatprep.mubr.bf16.mxu0 0
        %9576 = vmatmul.mubr.bf16.gmra.mrb[0].mxu0 %v6711
        %v9577 = vpop.f32.mrb[0].mxu0
        %v9578 = vadd.f32 0.0, %v9577
        %v9579 = vpop.f32.mrb[0].mxu0
        %v9580 = vpop.f32.mrb[0].mxu0
        %v9581 = vadd.f32 0.0, %v9580
        %v9582 = vpop.f32.mrb[0].mxu0
        %9583 = vmatprep.mubr.bf16.mxu0 0
        %9584 = vmatmul.mubr.bf16.gmra.mrb[0].mxu0 %v6712
        %v9585 = vpop.f32.mrb[0].mxu0
        %v9586 = vadd.f32 0.0, %v9585
        %v9587 = vpop.f32.mrb[0].mxu0
        %v9588 = vpop.f32.mrb[0].mxu0
        %v9589 = vadd.f32 0.0, %v9588
        %v9590 = vpop.f32.mrb[0].mxu0
        %9591 = vmatprep.mubr.bf16.mxu0 0
        %9592 = vmatmul.mubr.bf16.gmra.mrb[0].mxu0 %v9011
        %v9593 = vpop.f32.mrb[0].mxu0
        %v9594 = vadd.f32 0.0, %v9593
        %v9595 = vpop.f32.mrb[0].mxu0
        %v9596 = vpop.f32.mrb[0].mxu0
        %v9597 = vadd.f32 0.0, %v9596
        %v9598 = vpop.f32.mrb[0].mxu0
        %9599 = vmatprep.mubr.bf16.mxu0 0
        %9600 = vmatmul.mubr.bf16.gmra.mrb[0].mxu0 %v9012
        %v9601 = vpop.f32.mrb[0].mxu0
        %v9602 = vadd.f32 0.0, %v9601
        %v9603 = vpop.f32.mrb[0].mxu0
        %v9604 = vpop.f32.mrb[0].mxu0
        %v9605 = vadd.f32 0.0, %v9604
        %v9606 = vpop.f32.mrb[0].mxu0
        %9607 = vdwg.mxu0
        %v9608 = vadd.f32 %v8848, %v9098
        %v9609 = vadd.f32 %v8849, %v9101
        %v9610 = vadd.f32 %v8850, %v9106
        %v9611 = vadd.f32 %v8851, %v9109
        %v9612 = vadd.f32 %v8852, %v9114
        %v9613 = vadd.f32 %v8853, %v9117
        %v9614 = vadd.f32 %v8854, %v9122
        %v9615 = vadd.f32 %v8855, %v9125
        %v9616 = vadd.f32 %v8856, %v9130
        %v9617 = vadd.f32 %v8857, %v9133
        %v9618 = vadd.f32 %v8858, %v9138
        %v9619 = vadd.f32 %v8859, %v9141
        %v9620 = vadd.f32 %v8860, %v9146
        %v9621 = vadd.f32 %v8861, %v9149
        %v9622 = vadd.f32 %v8862, %v9154
        %v9623 = vadd.f32 %v8863, %v9157
        %v9624 = vadd.f32 %v8864, %v9162
        %v9625 = vadd.f32 %v8865, %v9165
        %v9626 = vadd.f32 %v8866, %v9170
        %v9627 = vadd.f32 %v8867, %v9173
        %v9628 = vadd.f32 %v8868, %v9178
        %v9629 = vadd.f32 %v8869, %v9181
        %v9630 = vadd.f32 %v8870, %v9186
        %v9631 = vadd.f32 %v8871, %v9189
        %v9632 = vadd.f32 %v8872, %v9194
        %v9633 = vadd.f32 %v8873, %v9197
        %v9634 = vadd.f32 %v8874, %v9202
        %v9635 = vadd.f32 %v8875, %v9205
        %v9636 = vadd.f32 %v8876, %v9210
        %v9637 = vadd.f32 %v8877, %v9213
        %v9638 = vadd.f32 %v8878, %v9218
        %v9639 = vadd.f32 %v8879, %v9221
        %v9640 = vadd.f32 %v8880, %v9226
        %v9641 = vadd.f32 %v8881, %v9229
        %v9642 = vadd.f32 %v8882, %v9234
        %v9643 = vadd.f32 %v8883, %v9237
        %v9644 = vadd.f32 %v8884, %v9242
        %v9645 = vadd.f32 %v8885, %v9245
        %v9646 = vadd.f32 %v8886, %v9250
        %v9647 = vadd.f32 %v8887, %v9253
        %v9648 = vadd.f32 %v8888, %v9258
        %v9649 = vadd.f32 %v8889, %v9261
        %v9650 = vadd.f32 %v8890, %v9266
        %v9651 = vadd.f32 %v8891, %v9269
        %v9652 = vadd.f32 %v8892, %v9274
        %v9653 = vadd.f32 %v8893, %v9277
        %v9654 = vadd.f32 %v8894, %v9282
        %v9655 = vadd.f32 %v8895, %v9285
        %v9656 = vadd.f32 %v8896, %v9290
        %v9657 = vadd.f32 %v8897, %v9293
        %v9658 = vadd.f32 %v8898, %v9298
        %v9659 = vadd.f32 %v8899, %v9301
        %v9660 = vadd.f32 %v8900, %v9306
        %v9661 = vadd.f32 %v8901, %v9309
        %v9662 = vadd.f32 %v8902, %v9314
        %v9663 = vadd.f32 %v8903, %v9317
        %v9664 = vadd.f32 %v8904, %v9322
        %v9665 = vadd.f32 %v8905, %v9325
        %v9666 = vadd.f32 %v8906, %v9330
        %v9667 = vadd.f32 %v8907, %v9333
        %v9668 = vadd.f32 %v8908, %v9338
        %v9669 = vadd.f32 %v8909, %v9341
        %v9670 = vadd.f32 %v8910, %v9346
        %v9671 = vadd.f32 %v8911, %v9349
        %v9672 = vadd.f32 %v8912, %v9354
        %v9673 = vadd.f32 %v8913, %v9357
        %v9674 = vadd.f32 %v8914, %v9362
        %v9675 = vadd.f32 %v8915, %v9365
        %v9676 = vadd.f32 %v8916, %v9370
        %v9677 = vadd.f32 %v8917, %v9373
        %v9678 = vadd.f32 %v8918, %v9378
        %v9679 = vadd.f32 %v8919, %v9381
        %v9680 = vadd.f32 %v8920, %v9386
        %v9681 = vadd.f32 %v8921, %v9389
        %v9682 = vadd.f32 %v8922, %v9394
        %v9683 = vadd.f32 %v8923, %v9397
        %v9684 = vadd.f32 %v8924, %v9402
        %v9685 = vadd.f32 %v8925, %v9405
        %v9686 = vadd.f32 %v8926, %v9410
        %v9687 = vadd.f32 %v8927, %v9413
        %v9688 = vadd.f32 %v8928, %v9418
        %v9689 = vadd.f32 %v8929, %v9421
        %v9690 = vadd.f32 %v8930, %v9426
        %v9691 = vadd.f32 %v8931, %v9429
        %v9692 = vadd.f32 %v8932, %v9434
        %v9693 = vadd.f32 %v8933, %v9437
        %v9694 = vadd.f32 %v8934, %v9442
        %v9695 = vadd.f32 %v8935, %v9445
        %v9696 = vadd.f32 %v8936, %v9450
        %v9697 = vadd.f32 %v8937, %v9453
        %v9698 = vadd.f32 %v8938, %v9458
        %v9699 = vadd.f32 %v8939, %v9461
        %v9700 = vadd.f32 %v8940, %v9466
        %v9701 = vadd.f32 %v8941, %v9469
        %v9702 = vadd.f32 %v8942, %v9474
        %v9703 = vadd.f32 %v8943, %v9477
        %v9704 = vadd.f32 %v8944, %v9482
        %v9705 = vadd.f32 %v8945, %v9485
        %v9706 = vadd.f32 %v8946, %v9490
        %v9707 = vadd.f32 %v8947, %v9493
        %v9708 = vadd.f32 %v8948, %v9498
        %v9709 = vadd.f32 %v8949, %v9501
        %v9710 = vadd.f32 %v8950, %v9506
        %v9711 = vadd.f32 %v8951, %v9509
        %v9712 = vadd.f32 %v8952, %v9514
        %v9713 = vadd.f32 %v8953, %v9517
        %v9714 = vadd.f32 %v8954, %v9522
        %v9715 = vadd.f32 %v8955, %v9525
        %v9716 = vadd.f32 %v8956, %v9530
        %v9717 = vadd.f32 %v8957, %v9533
        %v9718 = vadd.f32 %v8958, %v9538
        %v9719 = vadd.f32 %v8959, %v9541
        %v9720 = vadd.f32 %v8960, %v9546
        %v9721 = vadd.f32 %v8961, %v9549
        %v9722 = vadd.f32 %v8962, %v9554
        %v9723 = vadd.f32 %v8963, %v9557
        %v9724 = vadd.f32 %v8964, %v9562
        %v9725 = vadd.f32 %v8965, %v9565
        %v9726 = vadd.f32 %v8966, %v9570
        %v9727 = vadd.f32 %v8967, %v9573
        %v9728 = vadd.f32 %v8968, %v9578
        %v9729 = vadd.f32 %v8969, %v9581
        %v9730 = vadd.f32 %v8970, %v9586
        %v9731 = vadd.f32 %v8971, %v9589
        %v9732 = vadd.f32 %v8972, %v9594
        %v9733 = vadd.f32 %v8973, %v9597
        %v9734 = vadd.f32 %v8974, %v9602
        %v9735 = vadd.f32 %v8975, %v9605
        %v9736 = vld [vmem:[%s4] sm:$0x1]
        %v9738 = vlaneseq
        %v9739 = vshrl.u32 %v9738, 7
        %v9740 = vsub.s32 0, %v9739
        %v9741 = vrot.slane %v9736, %v9740
        %v9743 = vmul.f32 %v9608, %v9741
        %v9744 = vmul.f32 %v9609, %v9741
        %v9745 = vmul.f32 %v9610, %v9741
        %v9746 = vmul.f32 %v9611, %v9741
        %v9747 = vmul.f32 %v9612, %v9741
        %v9748 = vmul.f32 %v9613, %v9741
        %v9749 = vmul.f32 %v9614, %v9741
        %v9750 = vmul.f32 %v9615, %v9741
        %v9751 = vmul.f32 %v9616, %v9741
        %v9752 = vmul.f32 %v9617, %v9741
        %v9753 = vmul.f32 %v9618, %v9741
        %v9754 = vmul.f32 %v9619, %v9741
        %v9755 = vmul.f32 %v9620, %v9741
        %v9756 = vmul.f32 %v9621, %v9741
        %v9757 = vmul.f32 %v9622, %v9741
        %v9758 = vmul.f32 %v9623, %v9741
        %v9759 = vmul.f32 %v9624, %v9741
        %v9760 = vmul.f32 %v9625, %v9741
        %v9761 = vmul.f32 %v9626, %v9741
        %v9762 = vmul.f32 %v9627, %v9741
        %v9763 = vmul.f32 %v9628, %v9741
        %v9764 = vmul.f32 %v9629, %v9741
        %v9765 = vmul.f32 %v9630, %v9741
        %v9766 = vmul.f32 %v9631, %v9741
        %v9767 = vmul.f32 %v9632, %v9741
        %v9768 = vmul.f32 %v9633, %v9741
        %v9769 = vmul.f32 %v9634, %v9741
        %v9770 = vmul.f32 %v9635, %v9741
        %v9771 = vmul.f32 %v9636, %v9741
        %v9772 = vmul.f32 %v9637, %v9741
        %v9773 = vmul.f32 %v9638, %v9741
        %v9774 = vmul.f32 %v9639, %v9741
        %v9775 = vmul.f32 %v9640, %v9741
        %v9776 = vmul.f32 %v9641, %v9741
        %v9777 = vmul.f32 %v9642, %v9741
        %v9778 = vmul.f32 %v9643, %v9741
        %v9779 = vmul.f32 %v9644, %v9741
        %v9780 = vmul.f32 %v9645, %v9741
        %v9781 = vmul.f32 %v9646, %v9741
        %v9782 = vmul.f32 %v9647, %v9741
        %v9783 = vmul.f32 %v9648, %v9741
        %v9784 = vmul.f32 %v9649, %v9741
        %v9785 = vmul.f32 %v9650, %v9741
        %v9786 = vmul.f32 %v9651, %v9741
        %v9787 = vmul.f32 %v9652, %v9741
        %v9788 = vmul.f32 %v9653, %v9741
        %v9789 = vmul.f32 %v9654, %v9741
        %v9790 = vmul.f32 %v9655, %v9741
        %v9791 = vmul.f32 %v9656, %v9741
        %v9792 = vmul.f32 %v9657, %v9741
        %v9793 = vmul.f32 %v9658, %v9741
        %v9794 = vmul.f32 %v9659, %v9741
        %v9795 = vmul.f32 %v9660, %v9741
        %v9796 = vmul.f32 %v9661, %v9741
        %v9797 = vmul.f32 %v9662, %v9741
        %v9798 = vmul.f32 %v9663, %v9741
        %v9799 = vmul.f32 %v9664, %v9741
        %v9800 = vmul.f32 %v9665, %v9741
        %v9801 = vmul.f32 %v9666, %v9741
        %v9802 = vmul.f32 %v9667, %v9741
        %v9803 = vmul.f32 %v9668, %v9741
        %v9804 = vmul.f32 %v9669, %v9741
        %v9805 = vmul.f32 %v9670, %v9741
        %v9806 = vmul.f32 %v9671, %v9741
        %v9807 = vmul.f32 %v9672, %v9741
        %v9808 = vmul.f32 %v9673, %v9741
        %v9809 = vmul.f32 %v9674, %v9741
        %v9810 = vmul.f32 %v9675, %v9741
        %v9811 = vmul.f32 %v9676, %v9741
        %v9812 = vmul.f32 %v9677, %v9741
        %v9813 = vmul.f32 %v9678, %v9741
        %v9814 = vmul.f32 %v9679, %v9741
        %v9815 = vmul.f32 %v9680, %v9741
        %v9816 = vmul.f32 %v9681, %v9741
        %v9817 = vmul.f32 %v9682, %v9741
        %v9818 = vmul.f32 %v9683, %v9741
        %v9819 = vmul.f32 %v9684, %v9741
        %v9820 = vmul.f32 %v9685, %v9741
        %v9821 = vmul.f32 %v9686, %v9741
        %v9822 = vmul.f32 %v9687, %v9741
        %v9823 = vmul.f32 %v9688, %v9741
        %v9824 = vmul.f32 %v9689, %v9741
        %v9825 = vmul.f32 %v9690, %v9741
        %v9826 = vmul.f32 %v9691, %v9741
        %v9827 = vmul.f32 %v9692, %v9741
        %v9828 = vmul.f32 %v9693, %v9741
        %v9829 = vmul.f32 %v9694, %v9741
        %v9830 = vmul.f32 %v9695, %v9741
        %v9831 = vmul.f32 %v9696, %v9741
        %v9832 = vmul.f32 %v9697, %v9741
        %v9833 = vmul.f32 %v9698, %v9741
        %v9834 = vmul.f32 %v9699, %v9741
        %v9835 = vmul.f32 %v9700, %v9741
        %v9836 = vmul.f32 %v9701, %v9741
        %v9837 = vmul.f32 %v9702, %v9741
        %v9838 = vmul.f32 %v9703, %v9741
        %v9839 = vmul.f32 %v9704, %v9741
        %v9840 = vmul.f32 %v9705, %v9741
        %v9841 = vmul.f32 %v9706, %v9741
        %v9842 = vmul.f32 %v9707, %v9741
        %v9843 = vmul.f32 %v9708, %v9741
        %v9844 = vmul.f32 %v9709, %v9741
        %v9845 = vmul.f32 %v9710, %v9741
        %v9846 = vmul.f32 %v9711, %v9741
        %v9847 = vmul.f32 %v9712, %v9741
        %v9848 = vmul.f32 %v9713, %v9741
        %v9849 = vmul.f32 %v9714, %v9741
        %v9850 = vmul.f32 %v9715, %v9741
        %v9851 = vmul.f32 %v9716, %v9741
        %v9852 = vmul.f32 %v9717, %v9741
        %v9853 = vmul.f32 %v9718, %v9741
        %v9854 = vmul.f32 %v9719, %v9741
        %v9855 = vmul.f32 %v9720, %v9741
        %v9856 = vmul.f32 %v9721, %v9741
        %v9857 = vmul.f32 %v9722, %v9741
        %v9858 = vmul.f32 %v9723, %v9741
        %v9859 = vmul.f32 %v9724, %v9741
        %v9860 = vmul.f32 %v9725, %v9741
        %v9861 = vmul.f32 %v9726, %v9741
        %v9862 = vmul.f32 %v9727, %v9741
        %v9863 = vmul.f32 %v9728, %v9741
        %v9864 = vmul.f32 %v9729, %v9741
        %v9865 = vmul.f32 %v9730, %v9741
        %v9866 = vmul.f32 %v9731, %v9741
        %v9867 = vmul.f32 %v9732, %v9741
        %v9868 = vmul.f32 %v9733, %v9741
        %v9869 = vmul.f32 %v9734, %v9741
        %v9870 = vmul.f32 %v9735, %v9741
        %v9871 = vld [vmem:[%s5] sm:$0x1]
        %v9873 = vlaneseq
        %v9874 = vshrl.u32 %v9873, 7
        %v9875 = vsub.s32 0, %v9874
        %v9876 = vrot.slane %v9871, %v9875
        %v9878 = vadd.f32 %v9743, %v9876
        %v9879 = vadd.f32 %v9744, %v9876
        %v9880 = vadd.f32 %v9745, %v9876
        %v9881 = vadd.f32 %v9746, %v9876
        %v9882 = vadd.f32 %v9747, %v9876
        %v9883 = vadd.f32 %v9748, %v9876
        %v9884 = vadd.f32 %v9749, %v9876
        %v9885 = vadd.f32 %v9750, %v9876
        %v9886 = vadd.f32 %v9751, %v9876
        %v9887 = vadd.f32 %v9752, %v9876
        %v9888 = vadd.f32 %v9753, %v9876
        %v9889 = vadd.f32 %v9754, %v9876
        %v9890 = vadd.f32 %v9755, %v9876
        %v9891 = vadd.f32 %v9756, %v9876
        %v9892 = vadd.f32 %v9757, %v9876
        %v9893 = vadd.f32 %v9758, %v9876
        %v9894 = vadd.f32 %v9759, %v9876
        %v9895 = vadd.f32 %v9760, %v9876
        %v9896 = vadd.f32 %v9761, %v9876
        %v9897 = vadd.f32 %v9762, %v9876
        %v9898 = vadd.f32 %v9763, %v9876
        %v9899 = vadd.f32 %v9764, %v9876
        %v9900 = vadd.f32 %v9765, %v9876
        %v9901 = vadd.f32 %v9766, %v9876
        %v9902 = vadd.f32 %v9767, %v9876
        %v9903 = vadd.f32 %v9768, %v9876
        %v9904 = vadd.f32 %v9769, %v9876
        %v9905 = vadd.f32 %v9770, %v9876
        %v9906 = vadd.f32 %v9771, %v9876
        %v9907 = vadd.f32 %v9772, %v9876
        %v9908 = vadd.f32 %v9773, %v9876
        %v9909 = vadd.f32 %v9774, %v9876
        %v9910 = vadd.f32 %v9775, %v9876
        %v9911 = vadd.f32 %v9776, %v9876
        %v9912 = vadd.f32 %v9777, %v9876
        %v9913 = vadd.f32 %v9778, %v9876
        %v9914 = vadd.f32 %v9779, %v9876
        %v9915 = vadd.f32 %v9780, %v9876
        %v9916 = vadd.f32 %v9781, %v9876
        %v9917 = vadd.f32 %v9782, %v9876
        %v9918 = vadd.f32 %v9783, %v9876
        %v9919 = vadd.f32 %v9784, %v9876
        %v9920 = vadd.f32 %v9785, %v9876
        %v9921 = vadd.f32 %v9786, %v9876
        %v9922 = vadd.f32 %v9787, %v9876
        %v9923 = vadd.f32 %v9788, %v9876
        %v9924 = vadd.f32 %v9789, %v9876
        %v9925 = vadd.f32 %v9790, %v9876
        %v9926 = vadd.f32 %v9791, %v9876
        %v9927 = vadd.f32 %v9792, %v9876
        %v9928 = vadd.f32 %v9793, %v9876
        %v9929 = vadd.f32 %v9794, %v9876
        %v9930 = vadd.f32 %v9795, %v9876
        %v9931 = vadd.f32 %v9796, %v9876
        %v9932 = vadd.f32 %v9797, %v9876
        %v9933 = vadd.f32 %v9798, %v9876
        %v9934 = vadd.f32 %v9799, %v9876
        %v9935 = vadd.f32 %v9800, %v9876
        %v9936 = vadd.f32 %v9801, %v9876
        %v9937 = vadd.f32 %v9802, %v9876
        %v9938 = vadd.f32 %v9803, %v9876
        %v9939 = vadd.f32 %v9804, %v9876
        %v9940 = vadd.f32 %v9805, %v9876
        %v9941 = vadd.f32 %v9806, %v9876
        %v9942 = vadd.f32 %v9807, %v9876
        %v9943 = vadd.f32 %v9808, %v9876
        %v9944 = vadd.f32 %v9809, %v9876
        %v9945 = vadd.f32 %v9810, %v9876
        %v9946 = vadd.f32 %v9811, %v9876
        %v9947 = vadd.f32 %v9812, %v9876
        %v9948 = vadd.f32 %v9813, %v9876
        %v9949 = vadd.f32 %v9814, %v9876
        %v9950 = vadd.f32 %v9815, %v9876
        %v9951 = vadd.f32 %v9816, %v9876
        %v9952 = vadd.f32 %v9817, %v9876
        %v9953 = vadd.f32 %v9818, %v9876
        %v9954 = vadd.f32 %v9819, %v9876
        %v9955 = vadd.f32 %v9820, %v9876
        %v9956 = vadd.f32 %v9821, %v9876
        %v9957 = vadd.f32 %v9822, %v9876
        %v9958 = vadd.f32 %v9823, %v9876
        %v9959 = vadd.f32 %v9824, %v9876
        %v9960 = vadd.f32 %v9825, %v9876
        %v9961 = vadd.f32 %v9826, %v9876
        %v9962 = vadd.f32 %v9827, %v9876
        %v9963 = vadd.f32 %v9828, %v9876
        %v9964 = vadd.f32 %v9829, %v9876
        %v9965 = vadd.f32 %v9830, %v9876
        %v9966 = vadd.f32 %v9831, %v9876
        %v9967 = vadd.f32 %v9832, %v9876
        %v9968 = vadd.f32 %v9833, %v9876
        %v9969 = vadd.f32 %v9834, %v9876
        %v9970 = vadd.f32 %v9835, %v9876
        %v9971 = vadd.f32 %v9836, %v9876
        %v9972 = vadd.f32 %v9837, %v9876
        %v9973 = vadd.f32 %v9838, %v9876
        %v9974 = vadd.f32 %v9839, %v9876
        %v9975 = vadd.f32 %v9840, %v9876
        %v9976 = vadd.f32 %v9841, %v9876
        %v9977 = vadd.f32 %v9842, %v9876
        %v9978 = vadd.f32 %v9843, %v9876
        %v9979 = vadd.f32 %v9844, %v9876
        %v9980 = vadd.f32 %v9845, %v9876
        %v9981 = vadd.f32 %v9846, %v9876
        %v9982 = vadd.f32 %v9847, %v9876
        %v9983 = vadd.f32 %v9848, %v9876
        %v9984 = vadd.f32 %v9849, %v9876
        %v9985 = vadd.f32 %v9850, %v9876
        %v9986 = vadd.f32 %v9851, %v9876
        %v9987 = vadd.f32 %v9852, %v9876
        %v9988 = vadd.f32 %v9853, %v9876
        %v9989 = vadd.f32 %v9854, %v9876
        %v9990 = vadd.f32 %v9855, %v9876
        %v9991 = vadd.f32 %v9856, %v9876
        %v9992 = vadd.f32 %v9857, %v9876
        %v9993 = vadd.f32 %v9858, %v9876
        %v9994 = vadd.f32 %v9859, %v9876
        %v9995 = vadd.f32 %v9860, %v9876
        %v9996 = vadd.f32 %v9861, %v9876
        %v9997 = vadd.f32 %v9862, %v9876
        %v9998 = vadd.f32 %v9863, %v9876
        %v9999 = vadd.f32 %v9864, %v9876
        %v10000 = vadd.f32 %v9865, %v9876
        %v10001 = vadd.f32 %v9866, %v9876
        %v10002 = vadd.f32 %v9867, %v9876
        %v10003 = vadd.f32 %v9868, %v9876
        %v10004 = vadd.f32 %v9869, %v9876
        %v10005 = vadd.f32 %v9870, %v9876
        %v10006 = vpack.c.bf16 %v9879, %v9878
        %v10007 = vpack.c.bf16 %v9881, %v9880
        %v10008 = vpack.c.bf16 %v9883, %v9882
        %v10009 = vpack.c.bf16 %v9885, %v9884
        %v10010 = vpack.c.bf16 %v9887, %v9886
        %v10011 = vpack.c.bf16 %v9889, %v9888
        %v10012 = vpack.c.bf16 %v9891, %v9890
        %v10013 = vpack.c.bf16 %v9893, %v9892
        %v10014 = vpack.c.bf16 %v9895, %v9894
        %v10015 = vpack.c.bf16 %v9897, %v9896
        %v10016 = vpack.c.bf16 %v9899, %v9898
        %v10017 = vpack.c.bf16 %v9901, %v9900
        %v10018 = vpack.c.bf16 %v9903, %v9902
        %v10019 = vpack.c.bf16 %v9905, %v9904
        %v10020 = vpack.c.bf16 %v9907, %v9906
        %v10021 = vpack.c.bf16 %v9909, %v9908
        %v10022 = vpack.c.bf16 %v9911, %v9910
        %v10023 = vpack.c.bf16 %v9913, %v9912
        %v10024 = vpack.c.bf16 %v9915, %v9914
        %v10025 = vpack.c.bf16 %v9917, %v9916
        %v10026 = vpack.c.bf16 %v9919, %v9918
        %v10027 = vpack.c.bf16 %v9921, %v9920
        %v10028 = vpack.c.bf16 %v9923, %v9922
        %v10029 = vpack.c.bf16 %v9925, %v9924
        %v10030 = vpack.c.bf16 %v9927, %v9926
        %v10031 = vpack.c.bf16 %v9929, %v9928
        %v10032 = vpack.c.bf16 %v9931, %v9930
        %v10033 = vpack.c.bf16 %v9933, %v9932
        %v10034 = vpack.c.bf16 %v9935, %v9934
        %v10035 = vpack.c.bf16 %v9937, %v9936
        %v10036 = vpack.c.bf16 %v9939, %v9938
        %v10037 = vpack.c.bf16 %v9941, %v9940
        %v10038 = vpack.c.bf16 %v9943, %v9942
        %v10039 = vpack.c.bf16 %v9945, %v9944
        %v10040 = vpack.c.bf16 %v9947, %v9946
        %v10041 = vpack.c.bf16 %v9949, %v9948
        %v10042 = vpack.c.bf16 %v9951, %v9950
        %v10043 = vpack.c.bf16 %v9953, %v9952
        %v10044 = vpack.c.bf16 %v9955, %v9954
        %v10045 = vpack.c.bf16 %v9957, %v9956
        %v10046 = vpack.c.bf16 %v9959, %v9958
        %v10047 = vpack.c.bf16 %v9961, %v9960
        %v10048 = vpack.c.bf16 %v9963, %v9962
        %v10049 = vpack.c.bf16 %v9965, %v9964
        %v10050 = vpack.c.bf16 %v9967, %v9966
        %v10051 = vpack.c.bf16 %v9969, %v9968
        %v10052 = vpack.c.bf16 %v9971, %v9970
        %v10053 = vpack.c.bf16 %v9973, %v9972
        %v10054 = vpack.c.bf16 %v9975, %v9974
        %v10055 = vpack.c.bf16 %v9977, %v9976
        %v10056 = vpack.c.bf16 %v9979, %v9978
        %v10057 = vpack.c.bf16 %v9981, %v9980
        %v10058 = vpack.c.bf16 %v9983, %v9982
        %v10059 = vpack.c.bf16 %v9985, %v9984
        %v10060 = vpack.c.bf16 %v9987, %v9986
        %v10061 = vpack.c.bf16 %v9989, %v9988
        %v10062 = vpack.c.bf16 %v9991, %v9990
        %v10063 = vpack.c.bf16 %v9993, %v9992
        %v10064 = vpack.c.bf16 %v9995, %v9994
        %v10065 = vpack.c.bf16 %v9997, %v9996
        %v10066 = vpack.c.bf16 %v9999, %v9998
        %v10067 = vpack.c.bf16 %v10001, %v10000
        %v10068 = vpack.c.bf16 %v10003, %v10002
        %v10069 = vpack.c.bf16 %v10005, %v10004
        %v10134 = vunpack.c.l.b16 %v10006
        %v10135 = vunpack.c.h.b16 %v10006
        %v10136 = vunpack.c.l.b16 %v10007
        %v10137 = vunpack.c.h.b16 %v10007
        %v10138 = vunpack.c.l.b16 %v10008
        %v10139 = vunpack.c.h.b16 %v10008
        %v10140 = vunpack.c.l.b16 %v10009
        %v10141 = vunpack.c.h.b16 %v10009
        %v10142 = vunpack.c.l.b16 %v10010
        %v10143 = vunpack.c.h.b16 %v10010
        %v10144 = vunpack.c.l.b16 %v10011
        %v10145 = vunpack.c.h.b16 %v10011
        %v10146 = vunpack.c.l.b16 %v10012
        %v10147 = vunpack.c.h.b16 %v10012
        %v10148 = vunpack.c.l.b16 %v10013
        %v10149 = vunpack.c.h.b16 %v10013
        %v10150 = vunpack.c.l.b16 %v10014
        %v10151 = vunpack.c.h.b16 %v10014
        %v10152 = vunpack.c.l.b16 %v10015
        %v10153 = vunpack.c.h.b16 %v10015
        %v10154 = vunpack.c.l.b16 %v10016
        %v10155 = vunpack.c.h.b16 %v10016
        %v10156 = vunpack.c.l.b16 %v10017
        %v10157 = vunpack.c.h.b16 %v10017
        %v10158 = vunpack.c.l.b16 %v10018
        %v10159 = vunpack.c.h.b16 %v10018
        %v10160 = vunpack.c.l.b16 %v10019
        %v10161 = vunpack.c.h.b16 %v10019
        %v10162 = vunpack.c.l.b16 %v10020
        %v10163 = vunpack.c.h.b16 %v10020
        %v10164 = vunpack.c.l.b16 %v10021
        %v10165 = vunpack.c.h.b16 %v10021
        %v10166 = vunpack.c.l.b16 %v10022
        %v10167 = vunpack.c.h.b16 %v10022
        %v10168 = vunpack.c.l.b16 %v10023
        %v10169 = vunpack.c.h.b16 %v10023
        %v10170 = vunpack.c.l.b16 %v10024
        %v10171 = vunpack.c.h.b16 %v10024
        %v10172 = vunpack.c.l.b16 %v10025
        %v10173 = vunpack.c.h.b16 %v10025
        %v10174 = vunpack.c.l.b16 %v10026
        %v10175 = vunpack.c.h.b16 %v10026
        %v10176 = vunpack.c.l.b16 %v10027
        %v10177 = vunpack.c.h.b16 %v10027
        %v10178 = vunpack.c.l.b16 %v10028
        %v10179 = vunpack.c.h.b16 %v10028
        %v10180 = vunpack.c.l.b16 %v10029
        %v10181 = vunpack.c.h.b16 %v10029
        %v10182 = vunpack.c.l.b16 %v10030
        %v10183 = vunpack.c.h.b16 %v10030
        %v10184 = vunpack.c.l.b16 %v10031
        %v10185 = vunpack.c.h.b16 %v10031
        %v10186 = vunpack.c.l.b16 %v10032
        %v10187 = vunpack.c.h.b16 %v10032
        %v10188 = vunpack.c.l.b16 %v10033
        %v10189 = vunpack.c.h.b16 %v10033
        %v10190 = vunpack.c.l.b16 %v10034
        %v10191 = vunpack.c.h.b16 %v10034
        %v10192 = vunpack.c.l.b16 %v10035
        %v10193 = vunpack.c.h.b16 %v10035
        %v10194 = vunpack.c.l.b16 %v10036
        %v10195 = vunpack.c.h.b16 %v10036
        %v10196 = vunpack.c.l.b16 %v10037
        %v10197 = vunpack.c.h.b16 %v10037
        %v10198 = vunpack.c.l.b16 %v10038
        %v10199 = vunpack.c.h.b16 %v10038
        %v10200 = vunpack.c.l.b16 %v10039
        %v10201 = vunpack.c.h.b16 %v10039
        %v10202 = vunpack.c.l.b16 %v10040
        %v10203 = vunpack.c.h.b16 %v10040
        %v10204 = vunpack.c.l.b16 %v10041
        %v10205 = vunpack.c.h.b16 %v10041
        %v10206 = vunpack.c.l.b16 %v10042
        %v10207 = vunpack.c.h.b16 %v10042
        %v10208 = vunpack.c.l.b16 %v10043
        %v10209 = vunpack.c.h.b16 %v10043
        %v10210 = vunpack.c.l.b16 %v10044
        %v10211 = vunpack.c.h.b16 %v10044
        %v10212 = vunpack.c.l.b16 %v10045
        %v10213 = vunpack.c.h.b16 %v10045
        %v10214 = vunpack.c.l.b16 %v10046
        %v10215 = vunpack.c.h.b16 %v10046
        %v10216 = vunpack.c.l.b16 %v10047
        %v10217 = vunpack.c.h.b16 %v10047
        %v10218 = vunpack.c.l.b16 %v10048
        %v10219 = vunpack.c.h.b16 %v10048
        %v10220 = vunpack.c.l.b16 %v10049
        %v10221 = vunpack.c.h.b16 %v10049
        %v10222 = vunpack.c.l.b16 %v10050
        %v10223 = vunpack.c.h.b16 %v10050
        %v10224 = vunpack.c.l.b16 %v10051
        %v10225 = vunpack.c.h.b16 %v10051
        %v10226 = vunpack.c.l.b16 %v10052
        %v10227 = vunpack.c.h.b16 %v10052
        %v10228 = vunpack.c.l.b16 %v10053
        %v10229 = vunpack.c.h.b16 %v10053
        %v10230 = vunpack.c.l.b16 %v10054
        %v10231 = vunpack.c.h.b16 %v10054
        %v10232 = vunpack.c.l.b16 %v10055
        %v10233 = vunpack.c.h.b16 %v10055
        %v10234 = vunpack.c.l.b16 %v10056
        %v10235 = vunpack.c.h.b16 %v10056
        %v10236 = vunpack.c.l.b16 %v10057
        %v10237 = vunpack.c.h.b16 %v10057
        %v10238 = vunpack.c.l.b16 %v10058
        %v10239 = vunpack.c.h.b16 %v10058
        %v10240 = vunpack.c.l.b16 %v10059
        %v10241 = vunpack.c.h.b16 %v10059
        %v10242 = vunpack.c.l.b16 %v10060
        %v10243 = vunpack.c.h.b16 %v10060
        %v10244 = vunpack.c.l.b16 %v10061
        %v10245 = vunpack.c.h.b16 %v10061
        %v10246 = vunpack.c.l.b16 %v10062
        %v10247 = vunpack.c.h.b16 %v10062
        %v10248 = vunpack.c.l.b16 %v10063
        %v10249 = vunpack.c.h.b16 %v10063
        %v10250 = vunpack.c.l.b16 %v10064
        %v10251 = vunpack.c.h.b16 %v10064
        %v10252 = vunpack.c.l.b16 %v10065
        %v10253 = vunpack.c.h.b16 %v10065
        %v10254 = vunpack.c.l.b16 %v10066
        %v10255 = vunpack.c.h.b16 %v10066
        %v10256 = vunpack.c.l.b16 %v10067
        %v10257 = vunpack.c.h.b16 %v10067
        %v10258 = vunpack.c.l.b16 %v10068
        %v10259 = vunpack.c.h.b16 %v10068
        %v10260 = vunpack.c.l.b16 %v10069
        %v10261 = vunpack.c.h.b16 %v10069
        %v10262 = vpack.c.b16 %v10134, %v10134
        %v10263 = vpack.c.b16 %v10135, %v10135
        %v10264 = vpack.c.b16 %v10136, %v10136
        %v10265 = vpack.c.b16 %v10137, %v10137
        %v10266 = vpack.c.b16 %v10138, %v10138
        %v10267 = vpack.c.b16 %v10139, %v10139
        %v10268 = vpack.c.b16 %v10140, %v10140
        %v10269 = vpack.c.b16 %v10141, %v10141
        %v10270 = vpack.c.b16 %v10142, %v10142
        %v10271 = vpack.c.b16 %v10143, %v10143
        %v10272 = vpack.c.b16 %v10144, %v10144
        %v10273 = vpack.c.b16 %v10145, %v10145
        %v10274 = vpack.c.b16 %v10146, %v10146
        %v10275 = vpack.c.b16 %v10147, %v10147
        %v10276 = vpack.c.b16 %v10148, %v10148
        %v10277 = vpack.c.b16 %v10149, %v10149
        %v10278 = vpack.c.b16 %v10150, %v10150
        %v10279 = vpack.c.b16 %v10151, %v10151
        %v10280 = vpack.c.b16 %v10152, %v10152
        %v10281 = vpack.c.b16 %v10153, %v10153
        %v10282 = vpack.c.b16 %v10154, %v10154
        %v10283 = vpack.c.b16 %v10155, %v10155
        %v10284 = vpack.c.b16 %v10156, %v10156
        %v10285 = vpack.c.b16 %v10157, %v10157
        %v10286 = vpack.c.b16 %v10158, %v10158
        %v10287 = vpack.c.b16 %v10159, %v10159
        %v10288 = vpack.c.b16 %v10160, %v10160
        %v10289 = vpack.c.b16 %v10161, %v10161
        %v10290 = vpack.c.b16 %v10162, %v10162
        %v10291 = vpack.c.b16 %v10163, %v10163
        %v10292 = vpack.c.b16 %v10164, %v10164
        %v10293 = vpack.c.b16 %v10165, %v10165
        %v10294 = vpack.c.b16 %v10166, %v10166
        %v10295 = vpack.c.b16 %v10167, %v10167
        %v10296 = vpack.c.b16 %v10168, %v10168
        %v10297 = vpack.c.b16 %v10169, %v10169
        %v10298 = vpack.c.b16 %v10170, %v10170
        %v10299 = vpack.c.b16 %v10171, %v10171
        %v10300 = vpack.c.b16 %v10172, %v10172
        %v10301 = vpack.c.b16 %v10173, %v10173
        %v10302 = vpack.c.b16 %v10174, %v10174
        %v10303 = vpack.c.b16 %v10175, %v10175
        %v10304 = vpack.c.b16 %v10176, %v10176
        %v10305 = vpack.c.b16 %v10177, %v10177
        %v10306 = vpack.c.b16 %v10178, %v10178
        %v10307 = vpack.c.b16 %v10179, %v10179
        %v10308 = vpack.c.b16 %v10180, %v10180
        %v10309 = vpack.c.b16 %v10181, %v10181
        %v10310 = vpack.c.b16 %v10182, %v10182
        %v10311 = vpack.c.b16 %v10183, %v10183
        %v10312 = vpack.c.b16 %v10184, %v10184
        %v10313 = vpack.c.b16 %v10185, %v10185
        %v10314 = vpack.c.b16 %v10186, %v10186
        %v10315 = vpack.c.b16 %v10187, %v10187
        %v10316 = vpack.c.b16 %v10188, %v10188
        %v10317 = vpack.c.b16 %v10189, %v10189
        %v10318 = vpack.c.b16 %v10190, %v10190
        %v10319 = vpack.c.b16 %v10191, %v10191
        %v10320 = vpack.c.b16 %v10192, %v10192
        %v10321 = vpack.c.b16 %v10193, %v10193
        %v10322 = vpack.c.b16 %v10194, %v10194
        %v10323 = vpack.c.b16 %v10195, %v10195
        %v10324 = vpack.c.b16 %v10196, %v10196
        %v10325 = vpack.c.b16 %v10197, %v10197
        %v10326 = vpack.c.b16 %v10198, %v10198
        %v10327 = vpack.c.b16 %v10199, %v10199
        %v10328 = vpack.c.b16 %v10200, %v10200
        %v10329 = vpack.c.b16 %v10201, %v10201
        %v10330 = vpack.c.b16 %v10202, %v10202
        %v10331 = vpack.c.b16 %v10203, %v10203
        %v10332 = vpack.c.b16 %v10204, %v10204
        %v10333 = vpack.c.b16 %v10205, %v10205
        %v10334 = vpack.c.b16 %v10206, %v10206
        %v10335 = vpack.c.b16 %v10207, %v10207
        %v10336 = vpack.c.b16 %v10208, %v10208
        %v10337 = vpack.c.b16 %v10209, %v10209
        %v10338 = vpack.c.b16 %v10210, %v10210
        %v10339 = vpack.c.b16 %v10211, %v10211
        %v10340 = vpack.c.b16 %v10212, %v10212
        %v10341 = vpack.c.b16 %v10213, %v10213
        %v10342 = vpack.c.b16 %v10214, %v10214
        %v10343 = vpack.c.b16 %v10215, %v10215
        %v10344 = vpack.c.b16 %v10216, %v10216
        %v10345 = vpack.c.b16 %v10217, %v10217
        %v10346 = vpack.c.b16 %v10218, %v10218
        %v10347 = vpack.c.b16 %v10219, %v10219
        %v10348 = vpack.c.b16 %v10220, %v10220
        %v10349 = vpack.c.b16 %v10221, %v10221
        %v10350 = vpack.c.b16 %v10222, %v10222
        %v10351 = vpack.c.b16 %v10223, %v10223
        %v10352 = vpack.c.b16 %v10224, %v10224
        %v10353 = vpack.c.b16 %v10225, %v10225
        %v10354 = vpack.c.b16 %v10226, %v10226
        %v10355 = vpack.c.b16 %v10227, %v10227
        %v10356 = vpack.c.b16 %v10228, %v10228
        %v10357 = vpack.c.b16 %v10229, %v10229
        %v10358 = vpack.c.b16 %v10230, %v10230
        %v10359 = vpack.c.b16 %v10231, %v10231
        %v10360 = vpack.c.b16 %v10232, %v10232
        %v10361 = vpack.c.b16 %v10233, %v10233
        %v10362 = vpack.c.b16 %v10234, %v10234
        %v10363 = vpack.c.b16 %v10235, %v10235
        %v10364 = vpack.c.b16 %v10236, %v10236
        %v10365 = vpack.c.b16 %v10237, %v10237
        %v10366 = vpack.c.b16 %v10238, %v10238
        %v10367 = vpack.c.b16 %v10239, %v10239
        %v10368 = vpack.c.b16 %v10240, %v10240
        %v10369 = vpack.c.b16 %v10241, %v10241
        %v10370 = vpack.c.b16 %v10242, %v10242
        %v10371 = vpack.c.b16 %v10243, %v10243
        %v10372 = vpack.c.b16 %v10244, %v10244
        %v10373 = vpack.c.b16 %v10245, %v10245
        %v10374 = vpack.c.b16 %v10246, %v10246
        %v10375 = vpack.c.b16 %v10247, %v10247
        %v10376 = vpack.c.b16 %v10248, %v10248
        %v10377 = vpack.c.b16 %v10249, %v10249
        %v10378 = vpack.c.b16 %v10250, %v10250
        %v10379 = vpack.c.b16 %v10251, %v10251
        %v10380 = vpack.c.b16 %v10252, %v10252
        %v10381 = vpack.c.b16 %v10253, %v10253
        %v10382 = vpack.c.b16 %v10254, %v10254
        %v10383 = vpack.c.b16 %v10255, %v10255
        %v10384 = vpack.c.b16 %v10256, %v10256
        %v10385 = vpack.c.b16 %v10257, %v10257
        %v10386 = vpack.c.b16 %v10258, %v10258
        %v10387 = vpack.c.b16 %v10259, %v10259
        %v10388 = vpack.c.b16 %v10260, %v10260
        %v10389 = vpack.c.b16 %v10261, %v10261
        %10518 = vst [vmem:[%s244] sm:$0xf] %v10262
        %10519 = vst [vmem:[%s244 + $0x4] sm:$0xf] %v10263
        %10520 = vst [vmem:[%s244 + $0x8] sm:$0xf] %v10264
        %10521 = vst [vmem:[%s244 + $0xc] sm:$0xf] %v10265
        %10522 = vst [vmem:[%s244 + $0x10] sm:$0xf] %v10266
        %10523 = vst [vmem:[%s244 + $0x14] sm:$0xf] %v10267
        %10524 = vst [vmem:[%s244 + $0x18] sm:$0xf] %v10268
        %10525 = vst [vmem:[%s244 + $0x1c] sm:$0xf] %v10269
        %10526 = vst [vmem:[%s244 + $0x20] sm:$0xf] %v10270
        %10527 = vst [vmem:[%s244 + $0x24] sm:$0xf] %v10271
        %10528 = vst [vmem:[%s244 + $0x28] sm:$0xf] %v10272
        %10529 = vst [vmem:[%s244 + $0x2c] sm:$0xf] %v10273
        %10530 = vst [vmem:[%s244 + $0x30] sm:$0xf] %v10274
        %10531 = vst [vmem:[%s244 + $0x34] sm:$0xf] %v10275
        %10532 = vst [vmem:[%s244 + $0x38] sm:$0xf] %v10276
        %10533 = vst [vmem:[%s244 + $0x3c] sm:$0xf] %v10277
        %10534 = vst [vmem:[%s244 + $0x40] sm:$0xf] %v10278
        %10535 = vst [vmem:[%s244 + $0x44] sm:$0xf] %v10279
        %10536 = vst [vmem:[%s244 + $0x48] sm:$0xf] %v10280
        %10537 = vst [vmem:[%s244 + $0x4c] sm:$0xf] %v10281
        %10538 = vst [vmem:[%s244 + $0x50] sm:$0xf] %v10282
        %10539 = vst [vmem:[%s244 + $0x54] sm:$0xf] %v10283
        %10540 = vst [vmem:[%s244 + $0x58] sm:$0xf] %v10284
        %10541 = vst [vmem:[%s244 + $0x5c] sm:$0xf] %v10285
        %10542 = vst [vmem:[%s244 + $0x60] sm:$0xf] %v10286
        %10543 = vst [vmem:[%s244 + $0x64] sm:$0xf] %v10287
        %10544 = vst [vmem:[%s244 + $0x68] sm:$0xf] %v10288
        %10545 = vst [vmem:[%s244 + $0x6c] sm:$0xf] %v10289
        %10546 = vst [vmem:[%s244 + $0x70] sm:$0xf] %v10290
        %10547 = vst [vmem:[%s244 + $0x74] sm:$0xf] %v10291
        %10548 = vst [vmem:[%s244 + $0x78] sm:$0xf] %v10292
        %10549 = vst [vmem:[%s244 + $0x7c] sm:$0xf] %v10293
        %10550 = vst [vmem:[%s244 + $0x80] sm:$0xf] %v10294
        %10551 = vst [vmem:[%s244 + $0x84] sm:$0xf] %v10295
        %10552 = vst [vmem:[%s244 + $0x88] sm:$0xf] %v10296
        %10553 = vst [vmem:[%s244 + $0x8c] sm:$0xf] %v10297
        %10554 = vst [vmem:[%s244 + $0x90] sm:$0xf] %v10298
        %10555 = vst [vmem:[%s244 + $0x94] sm:$0xf] %v10299
        %10556 = vst [vmem:[%s244 + $0x98] sm:$0xf] %v10300
        %10557 = vst [vmem:[%s244 + $0x9c] sm:$0xf] %v10301
        %10558 = vst [vmem:[%s244 + $0xa0] sm:$0xf] %v10302
        %10559 = vst [vmem:[%s244 + $0xa4] sm:$0xf] %v10303
        %10560 = vst [vmem:[%s244 + $0xa8] sm:$0xf] %v10304
        %10561 = vst [vmem:[%s244 + $0xac] sm:$0xf] %v10305
        %10562 = vst [vmem:[%s244 + $0xb0] sm:$0xf] %v10306
        %10563 = vst [vmem:[%s244 + $0xb4] sm:$0xf] %v10307
        %10564 = vst [vmem:[%s244 + $0xb8] sm:$0xf] %v10308
        %10565 = vst [vmem:[%s244 + $0xbc] sm:$0xf] %v10309
        %10566 = vst [vmem:[%s244 + $0xc0] sm:$0xf] %v10310
        %10567 = vst [vmem:[%s244 + $0xc4] sm:$0xf] %v10311
        %10568 = vst [vmem:[%s244 + $0xc8] sm:$0xf] %v10312
        %10569 = vst [vmem:[%s244 + $0xcc] sm:$0xf] %v10313
        %10570 = vst [vmem:[%s244 + $0xd0] sm:$0xf] %v10314
        %10571 = vst [vmem:[%s244 + $0xd4] sm:$0xf] %v10315
        %10572 = vst [vmem:[%s244 + $0xd8] sm:$0xf] %v10316
        %10573 = vst [vmem:[%s244 + $0xdc] sm:$0xf] %v10317
        %10574 = vst [vmem:[%s244 + $0xe0] sm:$0xf] %v10318
        %10575 = vst [vmem:[%s244 + $0xe4] sm:$0xf] %v10319
        %10576 = vst [vmem:[%s244 + $0xe8] sm:$0xf] %v10320
        %10577 = vst [vmem:[%s244 + $0xec] sm:$0xf] %v10321
        %10578 = vst [vmem:[%s244 + $0xf0] sm:$0xf] %v10322
        %10579 = vst [vmem:[%s244 + $0xf4] sm:$0xf] %v10323
        %10580 = vst [vmem:[%s244 + $0xf8] sm:$0xf] %v10324
        %10581 = vst [vmem:[%s244 + $0xfc] sm:$0xf] %v10325
        %10582 = vst [vmem:[%s244 + $0x100] sm:$0xf] %v10326
        %10583 = vst [vmem:[%s244 + $0x104] sm:$0xf] %v10327
        %10584 = vst [vmem:[%s244 + $0x108] sm:$0xf] %v10328
        %10585 = vst [vmem:[%s244 + $0x10c] sm:$0xf] %v10329
        %10586 = vst [vmem:[%s244 + $0x110] sm:$0xf] %v10330
        %10587 = vst [vmem:[%s244 + $0x114] sm:$0xf] %v10331
        %10588 = vst [vmem:[%s244 + $0x118] sm:$0xf] %v10332
        %10589 = vst [vmem:[%s244 + $0x11c] sm:$0xf] %v10333
        %10590 = vst [vmem:[%s244 + $0x120] sm:$0xf] %v10334
        %10591 = vst [vmem:[%s244 + $0x124] sm:$0xf] %v10335
        %10592 = vst [vmem:[%s244 + $0x128] sm:$0xf] %v10336
        %10593 = vst [vmem:[%s244 + $0x12c] sm:$0xf] %v10337
        %10594 = vst [vmem:[%s244 + $0x130] sm:$0xf] %v10338
        %10595 = vst [vmem:[%s244 + $0x134] sm:$0xf] %v10339
        %10596 = vst [vmem:[%s244 + $0x138] sm:$0xf] %v10340
        %10597 = vst [vmem:[%s244 + $0x13c] sm:$0xf] %v10341
        %10598 = vst [vmem:[%s244 + $0x140] sm:$0xf] %v10342
        %10599 = vst [vmem:[%s244 + $0x144] sm:$0xf] %v10343
        %10600 = vst [vmem:[%s244 + $0x148] sm:$0xf] %v10344
        %10601 = vst [vmem:[%s244 + $0x14c] sm:$0xf] %v10345
        %10602 = vst [vmem:[%s244 + $0x150] sm:$0xf] %v10346
        %10603 = vst [vmem:[%s244 + $0x154] sm:$0xf] %v10347
        %10604 = vst [vmem:[%s244 + $0x158] sm:$0xf] %v10348
        %10605 = vst [vmem:[%s244 + $0x15c] sm:$0xf] %v10349
        %10606 = vst [vmem:[%s244 + $0x160] sm:$0xf] %v10350
        %10607 = vst [vmem:[%s244 + $0x164] sm:$0xf] %v10351
        %10608 = vst [vmem:[%s244 + $0x168] sm:$0xf] %v10352
        %10609 = vst [vmem:[%s244 + $0x16c] sm:$0xf] %v10353
        %10610 = vst [vmem:[%s244 + $0x170] sm:$0xf] %v10354
        %10611 = vst [vmem:[%s244 + $0x174] sm:$0xf] %v10355
        %10612 = vst [vmem:[%s244 + $0x178] sm:$0xf] %v10356
        %10613 = vst [vmem:[%s244 + $0x17c] sm:$0xf] %v10357
        %10614 = vst [vmem:[%s244 + $0x180] sm:$0xf] %v10358
        %10615 = vst [vmem:[%s244 + $0x184] sm:$0xf] %v10359
        %10616 = vst [vmem:[%s244 + $0x188] sm:$0xf] %v10360
        %10617 = vst [vmem:[%s244 + $0x18c] sm:$0xf] %v10361
        %10618 = vst [vmem:[%s244 + $0x190] sm:$0xf] %v10362
        %10619 = vst [vmem:[%s244 + $0x194] sm:$0xf] %v10363
        %10620 = vst [vmem:[%s244 + $0x198] sm:$0xf] %v10364
        %10621 = vst [vmem:[%s244 + $0x19c] sm:$0xf] %v10365
        %10622 = vst [vmem:[%s244 + $0x1a0] sm:$0xf] %v10366
        %10623 = vst [vmem:[%s244 + $0x1a4] sm:$0xf] %v10367
        %10624 = vst [vmem:[%s244 + $0x1a8] sm:$0xf] %v10368
        %10625 = vst [vmem:[%s244 + $0x1ac] sm:$0xf] %v10369
        %10626 = vst [vmem:[%s244 + $0x1b0] sm:$0xf] %v10370
        %10627 = vst [vmem:[%s244 + $0x1b4] sm:$0xf] %v10371
        %10628 = vst [vmem:[%s244 + $0x1b8] sm:$0xf] %v10372
        %10629 = vst [vmem:[%s244 + $0x1bc] sm:$0xf] %v10373
        %10630 = vst [vmem:[%s244 + $0x1c0] sm:$0xf] %v10374
        %10631 = vst [vmem:[%s244 + $0x1c4] sm:$0xf] %v10375
        %10632 = vst [vmem:[%s244 + $0x1c8] sm:$0xf] %v10376
        %10633 = vst [vmem:[%s244 + $0x1cc] sm:$0xf] %v10377
        %10634 = vst [vmem:[%s244 + $0x1d0] sm:$0xf] %v10378
        %10635 = vst [vmem:[%s244 + $0x1d4] sm:$0xf] %v10379
        %10636 = vst [vmem:[%s244 + $0x1d8] sm:$0xf] %v10380
        %10637 = vst [vmem:[%s244 + $0x1dc] sm:$0xf] %v10381
        %10638 = vst [vmem:[%s244 + $0x1e0] sm:$0xf] %v10382
        %10639 = vst [vmem:[%s244 + $0x1e4] sm:$0xf] %v10383
        %10640 = vst [vmem:[%s244 + $0x1e8] sm:$0xf] %v10384
        %10641 = vst [vmem:[%s244 + $0x1ec] sm:$0xf] %v10385
        %10642 = vst [vmem:[%s244 + $0x1f0] sm:$0xf] %v10386
        %10643 = vst [vmem:[%s244 + $0x1f4] sm:$0xf] %v10387
        %10644 = vst [vmem:[%s244 + $0x1f8] sm:$0xf] %v10388
        %10645 = vst [vmem:[%s244 + $0x1fc] sm:$0xf] %v10389
        %s10646 = sand.u32 %s159, 1
        %s10647 = scalar_lea.sflag [#allocation3], %s10646
        %s10648 = sand.u32 %s159, 1
        %s10649 = smul.addr %s10648, 512
        %s10650 = scalar_lea.vmem [#allocation2], %s10649
        // Predicated region
        $region45: #{tpu_custom_call.1} parent=43 // pred_check
          %p10651 = pneg %p169
        $region46: #{tpu_custom_call.1} parent=43 // pred_check_branch
          %10653 = sbr.rel (%p10651) target = $region48
        $region47: #{tpu_custom_call.1} parent=43 // pred_region
          %s10655 = ssub.s32 8192, 8192
          %10656 = vsyncadd %s10647, %s10655
          %s10657 = smul.addr %s20, 128
          %s10658 = smul.addr %s10657, 64
          %s10659 = scalar_lea.hbm %s6, %s10658
          %s10660 = sshll.u32 %s10650, 4
          %s10661 = int_to_ptr.vmem [resolvable:$true] %s10660
          %10666 = dma.vmem_to_hbm [thread:$0]  %s10661, 8192, %s10659, %s10647, 64, 64, 4
        $region48: #{tpu_custom_call.1} parent=43 // pred_fallthru
          _
      $region44: #{tpu_custom_call.1} parent=5 // pred_fallthru
        _
      %p10667 = scmp.le.s32.totalorder 2, %s15
      // Predicated region
      $region49: #{tpu_custom_call.1} parent=5 // pred_check
        %p10668 = pneg %p10667
      $region50: #{tpu_custom_call.1} parent=5 // pred_check_branch
        %10670 = sbr.rel (%p10668) target = $region52
      $region51: #{tpu_custom_call.1} parent=5 // pred_region
        %s10671 = ssub.s32 %s15, 2
        // Predicated region
        $region53: #{tpu_custom_call.1} parent=51 // pred_check
          %p10672 = pneg %p175
        $region54: #{tpu_custom_call.1} parent=51 // pred_check_branch
          %10674 = sbr.rel (%p10672) target = $region56
        $region55: #{tpu_custom_call.1} parent=51 // pred_region
          %s10675 = sand.u32 %s160, 1
          %s10676 = scalar_lea.sflag [#allocation3], %s10675
          %s10677 = sand.u32 %s160, 1
          %s10678 = smul.addr %s10677, 512
          %s10679 = scalar_lea.vmem [#allocation2], %s10678
          %10680 = dma.done %s10676, 8192
        $region56: #{tpu_custom_call.1} parent=51 // pred_fallthru
          _
      $region52: #{tpu_custom_call.1} parent=5 // pred_fallthru
        _
    $region6: #{tpu_custom_call.1} parent=1 // loop_footer
      %s19 = sadd.s32 1, %s15
    $region7: #{tpu_custom_call.1} parent=1 // loop_footer_branch
      %14 = sbr.rel target = $region3
    $region8: #{tpu_custom_call.1} parent=1 // loop_exit
      _
    %10681 = vsyncpa [#allocation3], 1
    %s10682 = scalar_lea.sflag [#allocation3], 1
    %10683 = vsyncpa %s10682, 1

</llo_original>
